<compile_context>
chip_gen: v7x
topology: tpu7x:2x2x1
jax: 0.10.0
libtpu: 0.0.40
codegen_flags: <defaults>
</compile_context>

<pallas_src>
import jax
import jax.numpy as jnp
from jax.experimental import pallas as pl
from jax.experimental.pallas import tpu as pltpu  # noqa: F401  (TPU backend assumed)

GROUPS = 25
CIN = 400
COUT = 400
KH = KW = 3
PAD = 1


def prepare_weights(w, groups=GROUPS):
    """One-time weight re-layout (hoisted out of the per-call hot path).

    (COUT, cin_g, KH, KW) -> (G, cout_g, KH*KW*cin_g), k ordered (kh, kw, ci).
    """
    cout, cig, kh, kw = w.shape
    cog = cout // groups
    return (w.reshape(groups, cog, cig, kh, kw)
             .transpose(0, 1, 3, 4, 2)
             .reshape(groups, cog, kh * kw * cig))


@jax.jit
def relu_grouped_conv(x, wg):
    """x: (N, CIN, H, W) f32, wg: (G, cout_g, KH*KW*cin_g) f32 (from prepare_weights)."""
    N, C, H, W = x.shape
    G, cog, kkc = wg.shape
    cig = C // G
    hp, wp = H + 2 * PAD, W + 2 * PAD                 # padded spatial (9, 9)
    q_out = 128 * pl.cdiv(hp * wp, 128)               # lane-dense output columns (128)
    max_shift = (KH - 1) * wp + (KW - 1)              # largest tap offset in q-space (20)
    lpad = 128 * pl.cdiv(q_out + max_shift, 128)      # padded input columns (256)

    # --- cheap glue (no 9x im2col in HBM): group split, zero-pad borders,
    #     flatten (hp, wp) -> hp*wp, lane-pad with zeros to `lpad`. ---
    xg = x.reshape(N, G, cig, H, W)
    xp = jnp.pad(xg, ((0, 0), (0, 0), (0, 0), (PAD, PAD), (PAD, PAD)))
    xf = jnp.pad(xp.reshape(N, G, cig, hp * wp),
                 ((0, 0), (0, 0), (0, 0), (0, lpad - hp * wp)))

    def kernel(w_ref, x_ref, o_ref):
        # w_ref: (G, cog, kkc)       resident per-group filters
        # x_ref: (1, G, cig, lpad)   padded+flattened input for this batch element
        # o_ref: (1, G, cog, q_out)  q = h*wp + w on the padded grid
        for g in range(G):                                   # unrolled group loop
            taps = [x_ref[0, g, :, kh * wp + kw: kh * wp + kw + q_out]
                    for kh in range(KH) for kw in range(KW)]  # 9 x (cig, q_out)
            p = jnp.maximum(jnp.concatenate(taps, axis=0), 0.0)  # fused ReLU + im2col
            o_ref[0, g] = jnp.dot(w_ref[g], p,                   # (cog, q_out) on MXU
                                  preferred_element_type=jnp.float32)

    flops = 2 * N * G * cog * kkc * q_out
    bytes_accessed = 4 * (wg.size + N * G * cig * lpad + N * G * cog * q_out)

    out = pl.pallas_call(
        kernel,
        out_shape=jax.ShapeDtypeStruct((N, G, cog, q_out), jnp.float32),
        grid=(N,),
        in_specs=[
            pl.BlockSpec((G, cog, kkc), lambda n: (0, 0, 0)),        # batch-invariant
            pl.BlockSpec((1, G, cig, lpad), lambda n: (n, 0, 0, 0)),
        ],
        out_specs=pl.BlockSpec((1, G, cog, q_out), lambda n: (n, 0, 0, 0)),
        cost_estimate=pl.CostEstimate(flops=flops, transcendentals=0,
                                      bytes_accessed=bytes_accessed),
    )(wg, xf)

    # crop valid window: q = h*wp + w with h < H, w < W
    out = out[..., : hp * wp].reshape(N, G, cog, hp, wp)[:, :, :, :H, :W]
    return out.reshape(N, G * cog, H, W)


if __name__ == "__main__":
    key = jax.random.PRNGKey(0)
    kx, kw_ = jax.random.split(key)

    # Shapes from the module: x133 = (1, 400, 7, 7); conv weight = (400, 16, 3, 3)
    x = jax.random.normal(kx, (1, CIN, 7, 7), dtype=jnp.float32)
    w = jax.random.normal(kw_, (COUT, CIN // GROUPS, KH, KW), dtype=jnp.float32) * 0.1

    wg = prepare_weights(w)                      # done once (static weights)
    out = jax.block_until_ready(relu_grouped_conv(x, wg))

    # Reference: relu -> grouped conv via XLA.
    ref = jax.lax.conv_general_dilated(
        jnp.maximum(x, 0.0), w,
        window_strides=(1, 1),
        padding=((PAD, PAD), (PAD, PAD)),
        dimension_numbers=("NCHW", "OIHW", "NCHW"),
        feature_group_count=GROUPS,
    )
    assert out.shape == (1, COUT, 7, 7), out.shape
    max_err = float(jnp.max(jnp.abs(out - ref)))
    assert jnp.allclose(out, ref, atol=1e-3, rtol=1e-3), max_err

    print("KERNEL_OK")
</pallas_src>

<mosaic_0001>
module attributes {stable_mosaic.version = 11 : i64} {
  func.func @kernel(%arg0: i32, %arg1: memref<25x16x144xf32, #tpu.memory_space<vmem>>, %arg2: memref<1x25x16x256xf32, #tpu.memory_space<vmem>>, %arg3: memref<1x25x16x128xf32, #tpu.memory_space<vmem>>) attributes {dimension_semantics = [#tpu.dimension_semantics<arbitrary>], iteration_bounds = array<i64: 1>, scalar_prefetch = 0 : i64, scratch_operands = 0 : i64, tpu.core_type = #tpu.core_type<tc>, window_params = [{pipeline_mode = #tpu.pipeline_mode<synchronous>, transform_indices = @transform_0, window_bounds = array<i64: 25, 16, 144>}, {transform_indices = @transform_1, window_bounds = array<i64: 1, 25, 16, 256>}, {transform_indices = @transform_2, window_bounds = array<i64: 1, 25, 16, 128>}]} {
    %c0 = arith.constant 0 : index
    %c0_0 = arith.constant 0 : index
    %c0_1 = arith.constant 0 : index
    %c0_2 = arith.constant 0 : index
    %0 = vector.load %arg2[%c0, %c0_0, %c0_1, %c0_2] : memref<1x25x16x256xf32, #tpu.memory_space<vmem>>, vector<1x1x16x128xf32>
    %1 = vector.shape_cast %0 : vector<1x1x16x128xf32> to vector<16x128xf32>
    %c0_3 = arith.constant 0 : index
    %c0_4 = arith.constant 0 : index
    %c0_5 = arith.constant 0 : index
    %c1 = arith.constant 1 : index
    %2 = vector.load %arg2[%c0_3, %c0_4, %c0_5, %c1] : memref<1x25x16x256xf32, #tpu.memory_space<vmem>>, vector<1x1x16x128xf32>
    %3 = vector.shape_cast %2 : vector<1x1x16x128xf32> to vector<16x128xf32>
    %c0_6 = arith.constant 0 : index
    %c0_7 = arith.constant 0 : index
    %c0_8 = arith.constant 0 : index
    %c2 = arith.constant 2 : index
    %4 = vector.load %arg2[%c0_6, %c0_7, %c0_8, %c2] : memref<1x25x16x256xf32, #tpu.memory_space<vmem>>, vector<1x1x16x128xf32>
    %5 = vector.shape_cast %4 : vector<1x1x16x128xf32> to vector<16x128xf32>
    %c0_9 = arith.constant 0 : index
    %c0_10 = arith.constant 0 : index
    %c0_11 = arith.constant 0 : index
    %c9 = arith.constant 9 : index
    %6 = vector.load %arg2[%c0_9, %c0_10, %c0_11, %c9] : memref<1x25x16x256xf32, #tpu.memory_space<vmem>>, vector<1x1x16x128xf32>
    %7 = vector.shape_cast %6 : vector<1x1x16x128xf32> to vector<16x128xf32>
    %c0_12 = arith.constant 0 : index
    %c0_13 = arith.constant 0 : index
    %c0_14 = arith.constant 0 : index
    %c10 = arith.constant 10 : index
    %8 = vector.load %arg2[%c0_12, %c0_13, %c0_14, %c10] : memref<1x25x16x256xf32, #tpu.memory_space<vmem>>, vector<1x1x16x128xf32>
    %9 = vector.shape_cast %8 : vector<1x1x16x128xf32> to vector<16x128xf32>
    %c0_15 = arith.constant 0 : index
    %c0_16 = arith.constant 0 : index
    %c0_17 = arith.constant 0 : index
    %c11 = arith.constant 11 : index
    %10 = vector.load %arg2[%c0_15, %c0_16, %c0_17, %c11] : memref<1x25x16x256xf32, #tpu.memory_space<vmem>>, vector<1x1x16x128xf32>
    %11 = vector.shape_cast %10 : vector<1x1x16x128xf32> to vector<16x128xf32>
    %c0_18 = arith.constant 0 : index
    %c0_19 = arith.constant 0 : index
    %c0_20 = arith.constant 0 : index
    %c18 = arith.constant 18 : index
    %12 = vector.load %arg2[%c0_18, %c0_19, %c0_20, %c18] : memref<1x25x16x256xf32, #tpu.memory_space<vmem>>, vector<1x1x16x128xf32>
    %13 = vector.shape_cast %12 : vector<1x1x16x128xf32> to vector<16x128xf32>
    %c0_21 = arith.constant 0 : index
    %c0_22 = arith.constant 0 : index
    %c0_23 = arith.constant 0 : index
    %c19 = arith.constant 19 : index
    %14 = vector.load %arg2[%c0_21, %c0_22, %c0_23, %c19] : memref<1x25x16x256xf32, #tpu.memory_space<vmem>>, vector<1x1x16x128xf32>
    %15 = vector.shape_cast %14 : vector<1x1x16x128xf32> to vector<16x128xf32>
    %c0_24 = arith.constant 0 : index
    %c0_25 = arith.constant 0 : index
    %c0_26 = arith.constant 0 : index
    %c20 = arith.constant 20 : index
    %16 = vector.load %arg2[%c0_24, %c0_25, %c0_26, %c20] : memref<1x25x16x256xf32, #tpu.memory_space<vmem>>, vector<1x1x16x128xf32>
    %17 = vector.shape_cast %16 : vector<1x1x16x128xf32> to vector<16x128xf32>
    %18 = tpu.concatenate %1, %3, %5, %7, %9, %11, %13, %15, %17 in 0 : vector<16x128xf32>, vector<16x128xf32>, vector<16x128xf32>, vector<16x128xf32>, vector<16x128xf32>, vector<16x128xf32>, vector<16x128xf32>, vector<16x128xf32>, vector<16x128xf32> -> vector<144x128xf32>
    %cst = arith.constant 0.000000e+00 : f32
    %19 = vector.broadcast %cst : f32 to vector<144x128xf32>
    %20 = arith.maximumf %18, %19 : vector<144x128xf32>
    %c0_27 = arith.constant 0 : index
    %c0_28 = arith.constant 0 : index
    %c0_29 = arith.constant 0 : index
    %21 = vector.load %arg1[%c0_27, %c0_28, %c0_29] : memref<25x16x144xf32, #tpu.memory_space<vmem>>, vector<1x16x144xf32>
    %22 = vector.shape_cast %21 : vector<1x16x144xf32> to vector<16x144xf32>
    %cst_30 = arith.constant dense<0.000000e+00> : vector<16x128xf32>
    %23 = tpu.matmul %22, %20, %cst_30 {dimension_numbers = #tpu.dot_dimension_numbers<[1], [0], [0], [1], [0, 0, 1, 1], [], []>} : vector<16x144xf32>, vector<144x128xf32>, vector<16x128xf32> -> vector<16x128xf32>
    %c0_31 = arith.constant 0 : index
    %c0_32 = arith.constant 0 : index
    %c0_33 = arith.constant 0 : index
    %c0_34 = arith.constant 0 : index
    %24 = vector.load %arg3[%c0_31, %c0_32, %c0_33, %c0_34] : memref<1x25x16x128xf32, #tpu.memory_space<vmem>>, vector<1x1x16x128xf32>
    %25 = vector.shape_cast %24 : vector<1x1x16x128xf32> to vector<16x128xf32>
    %26 = vector.shape_cast %23 : vector<16x128xf32> to vector<1x1x16x128xf32>
    tpu.vector_store %arg3[%c0_31, %c0_32, %c0_33, %c0_34], %26 {strides = array<i32>} : memref<1x25x16x128xf32, #tpu.memory_space<vmem>>, vector<1x1x16x128xf32>,
    %c0_35 = arith.constant 0 : index
    %c1_36 = arith.constant 1 : index
    %c0_37 = arith.constant 0 : index
    %c0_38 = arith.constant 0 : index
    %27 = vector.load %arg2[%c0_35, %c1_36, %c0_37, %c0_38] : memref<1x25x16x256xf32, #tpu.memory_space<vmem>>, vector<1x1x16x128xf32>
    %28 = vector.shape_cast %27 : vector<1x1x16x128xf32> to vector<16x128xf32>
    %c0_39 = arith.constant 0 : index
    %c1_40 = arith.constant 1 : index
    %c0_41 = arith.constant 0 : index
    %c1_42 = arith.constant 1 : index
    %29 = vector.load %arg2[%c0_39, %c1_40, %c0_41, %c1_42] : memref<1x25x16x256xf32, #tpu.memory_space<vmem>>, vector<1x1x16x128xf32>
    %30 = vector.shape_cast %29 : vector<1x1x16x128xf32> to vector<16x128xf32>
    %c0_43 = arith.constant 0 : index
    %c1_44 = arith.constant 1 : index
    %c0_45 = arith.constant 0 : index
    %c2_46 = arith.constant 2 : index
    %31 = vector.load %arg2[%c0_43, %c1_44, %c0_45, %c2_46] : memref<1x25x16x256xf32, #tpu.memory_space<vmem>>, vector<1x1x16x128xf32>
    %32 = vector.shape_cast %31 : vector<1x1x16x128xf32> to vector<16x128xf32>
    %c0_47 = arith.constant 0 : index
    %c1_48 = arith.constant 1 : index
    %c0_49 = arith.constant 0 : index
    %c9_50 = arith.constant 9 : index
    %33 = vector.load %arg2[%c0_47, %c1_48, %c0_49, %c9_50] : memref<1x25x16x256xf32, #tpu.memory_space<vmem>>, vector<1x1x16x128xf32>
    %34 = vector.shape_cast %33 : vector<1x1x16x128xf32> to vector<16x128xf32>
    %c0_51 = arith.constant 0 : index
    %c1_52 = arith.constant 1 : index
    %c0_53 = arith.constant 0 : index
    %c10_54 = arith.constant 10 : index
    %35 = vector.load %arg2[%c0_51, %c1_52, %c0_53, %c10_54] : memref<1x25x16x256xf32, #tpu.memory_space<vmem>>, vector<1x1x16x128xf32>
    %36 = vector.shape_cast %35 : vector<1x1x16x128xf32> to vector<16x128xf32>
    %c0_55 = arith.constant 0 : index
    %c1_56 = arith.constant 1 : index
    %c0_57 = arith.constant 0 : index
    %c11_58 = arith.constant 11 : index
    %37 = vector.load %arg2[%c0_55, %c1_56, %c0_57, %c11_58] : memref<1x25x16x256xf32, #tpu.memory_space<vmem>>, vector<1x1x16x128xf32>
    %38 = vector.shape_cast %37 : vector<1x1x16x128xf32> to vector<16x128xf32>
    %c0_59 = arith.constant 0 : index
    %c1_60 = arith.constant 1 : index
    %c0_61 = arith.constant 0 : index
    %c18_62 = arith.constant 18 : index
    %39 = vector.load %arg2[%c0_59, %c1_60, %c0_61, %c18_62] : memref<1x25x16x256xf32, #tpu.memory_space<vmem>>, vector<1x1x16x128xf32>
    %40 = vector.shape_cast %39 : vector<1x1x16x128xf32> to vector<16x128xf32>
    %c0_63 = arith.constant 0 : index
    %c1_64 = arith.constant 1 : index
    %c0_65 = arith.constant 0 : index
    %c19_66 = arith.constant 19 : index
    %41 = vector.load %arg2[%c0_63, %c1_64, %c0_65, %c19_66] : memref<1x25x16x256xf32, #tpu.memory_space<vmem>>, vector<1x1x16x128xf32>
    %42 = vector.shape_cast %41 : vector<1x1x16x128xf32> to vector<16x128xf32>
    %c0_67 = arith.constant 0 : index
    %c1_68 = arith.constant 1 : index
    %c0_69 = arith.constant 0 : index
    %c20_70 = arith.constant 20 : index
    %43 = vector.load %arg2[%c0_67, %c1_68, %c0_69, %c20_70] : memref<1x25x16x256xf32, #tpu.memory_space<vmem>>, vector<1x1x16x128xf32>
    %44 = vector.shape_cast %43 : vector<1x1x16x128xf32> to vector<16x128xf32>
    %45 = tpu.concatenate %28, %30, %32, %34, %36, %38, %40, %42, %44 in 0 : vector<16x128xf32>, vector<16x128xf32>, vector<16x128xf32>, vector<16x128xf32>, vector<16x128xf32>, vector<16x128xf32>, vector<16x128xf32>, vector<16x128xf32>, vector<16x128xf32> -> vector<144x128xf32>
    %cst_71 = arith.constant 0.000000e+00 : f32
    %46 = vector.broadcast %cst_71 : f32 to vector<144x128xf32>
    %47 = arith.maximumf %45, %46 : vector<144x128xf32>
    %c1_72 = arith.constant 1 : index
    %c0_73 = arith.constant 0 : index
    %c0_74 = arith.constant 0 : index
    %48 = vector.load %arg1[%c1_72, %c0_73, %c0_74] : memref<25x16x144xf32, #tpu.memory_space<vmem>>, vector<1x16x144xf32>
    %49 = vector.shape_cast %48 : vector<1x16x144xf32> to vector<16x144xf32>
    %cst_75 = arith.constant dense<0.000000e+00> : vector<16x128xf32>
    %50 = tpu.matmul %49, %47, %cst_75 {dimension_numbers = #tpu.dot_dimension_numbers<[1], [0], [0], [1], [0, 0, 1, 1], [], []>} : vector<16x144xf32>, vector<144x128xf32>, vector<16x128xf32> -> vector<16x128xf32>
    %c0_76 = arith.constant 0 : index
    %c1_77 = arith.constant 1 : index
    %c0_78 = arith.constant 0 : index
    %c0_79 = arith.constant 0 : index
    %51 = vector.load %arg3[%c0_76, %c1_77, %c0_78, %c0_79] : memref<1x25x16x128xf32, #tpu.memory_space<vmem>>, vector<1x1x16x128xf32>
    %52 = vector.shape_cast %51 : vector<1x1x16x128xf32> to vector<16x128xf32>
    %53 = vector.shape_cast %50 : vector<16x128xf32> to vector<1x1x16x128xf32>
    tpu.vector_store %arg3[%c0_76, %c1_77, %c0_78, %c0_79], %53 {strides = array<i32>} : memref<1x25x16x128xf32, #tpu.memory_space<vmem>>, vector<1x1x16x128xf32>,
    %c0_80 = arith.constant 0 : index
    %c2_81 = arith.constant 2 : index
    %c0_82 = arith.constant 0 : index
    %c0_83 = arith.constant 0 : index
    %54 = vector.load %arg2[%c0_80, %c2_81, %c0_82, %c0_83] : memref<1x25x16x256xf32, #tpu.memory_space<vmem>>, vector<1x1x16x128xf32>
    %55 = vector.shape_cast %54 : vector<1x1x16x128xf32> to vector<16x128xf32>
    %c0_84 = arith.constant 0 : index
    %c2_85 = arith.constant 2 : index
    %c0_86 = arith.constant 0 : index
    %c1_87 = arith.constant 1 : index
    %56 = vector.load %arg2[%c0_84, %c2_85, %c0_86, %c1_87] : memref<1x25x16x256xf32, #tpu.memory_space<vmem>>, vector<1x1x16x128xf32>
    %57 = vector.shape_cast %56 : vector<1x1x16x128xf32> to vector<16x128xf32>
    %c0_88 = arith.constant 0 : index
    %c2_89 = arith.constant 2 : index
    %c0_90 = arith.constant 0 : index
    %c2_91 = arith.constant 2 : index
    %58 = vector.load %arg2[%c0_88, %c2_89, %c0_90, %c2_91] : memref<1x25x16x256xf32, #tpu.memory_space<vmem>>, vector<1x1x16x128xf32>
    %59 = vector.shape_cast %58 : vector<1x1x16x128xf32> to vector<16x128xf32>
    %c0_92 = arith.constant 0 : index
    %c2_93 = arith.constant 2 : index
    %c0_94 = arith.constant 0 : index
    %c9_95 = arith.constant 9 : index
    %60 = vector.load %arg2[%c0_92, %c2_93, %c0_94, %c9_95] : memref<1x25x16x256xf32, #tpu.memory_space<vmem>>, vector<1x1x16x128xf32>
    %61 = vector.shape_cast %60 : vector<1x1x16x128xf32> to vector<16x128xf32>
    %c0_96 = arith.constant 0 : index
    %c2_97 = arith.constant 2 : index
    %c0_98 = arith.constant 0 : index
    %c10_99 = arith.constant 10 : index
    %62 = vector.load %arg2[%c0_96, %c2_97, %c0_98, %c10_99] : memref<1x25x16x256xf32, #tpu.memory_space<vmem>>, vector<1x1x16x128xf32>
    %63 = vector.shape_cast %62 : vector<1x1x16x128xf32> to vector<16x128xf32>
    %c0_100 = arith.constant 0 : index
    %c2_101 = arith.constant 2 : index
    %c0_102 = arith.constant 0 : index
    %c11_103 = arith.constant 11 : index
    %64 = vector.load %arg2[%c0_100, %c2_101, %c0_102, %c11_103] : memref<1x25x16x256xf32, #tpu.memory_space<vmem>>, vector<1x1x16x128xf32>
    %65 = vector.shape_cast %64 : vector<1x1x16x128xf32> to vector<16x128xf32>
    %c0_104 = arith.constant 0 : index
    %c2_105 = arith.constant 2 : index
    %c0_106 = arith.constant 0 : index
    %c18_107 = arith.constant 18 : index
    %66 = vector.load %arg2[%c0_104, %c2_105, %c0_106, %c18_107] : memref<1x25x16x256xf32, #tpu.memory_space<vmem>>, vector<1x1x16x128xf32>
    %67 = vector.shape_cast %66 : vector<1x1x16x128xf32> to vector<16x128xf32>
    %c0_108 = arith.constant 0 : index
    %c2_109 = arith.constant 2 : index
    %c0_110 = arith.constant 0 : index
    %c19_111 = arith.constant 19 : index
    %68 = vector.load %arg2[%c0_108, %c2_109, %c0_110, %c19_111] : memref<1x25x16x256xf32, #tpu.memory_space<vmem>>, vector<1x1x16x128xf32>
    %69 = vector.shape_cast %68 : vector<1x1x16x128xf32> to vector<16x128xf32>
    %c0_112 = arith.constant 0 : index
    %c2_113 = arith.constant 2 : index
    %c0_114 = arith.constant 0 : index
    %c20_115 = arith.constant 20 : index
    %70 = vector.load %arg2[%c0_112, %c2_113, %c0_114, %c20_115] : memref<1x25x16x256xf32, #tpu.memory_space<vmem>>, vector<1x1x16x128xf32>
    %71 = vector.shape_cast %70 : vector<1x1x16x128xf32> to vector<16x128xf32>
    %72 = tpu.concatenate %55, %57, %59, %61, %63, %65, %67, %69, %71 in 0 : vector<16x128xf32>, vector<16x128xf32>, vector<16x128xf32>, vector<16x128xf32>, vector<16x128xf32>, vector<16x128xf32>, vector<16x128xf32>, vector<16x128xf32>, vector<16x128xf32> -> vector<144x128xf32>
    %cst_116 = arith.constant 0.000000e+00 : f32
    %73 = vector.broadcast %cst_116 : f32 to vector<144x128xf32>
    %74 = arith.maximumf %72, %73 : vector<144x128xf32>
    %c2_117 = arith.constant 2 : index
    %c0_118 = arith.constant 0 : index
    %c0_119 = arith.constant 0 : index
    %75 = vector.load %arg1[%c2_117, %c0_118, %c0_119] : memref<25x16x144xf32, #tpu.memory_space<vmem>>, vector<1x16x144xf32>
    %76 = vector.shape_cast %75 : vector<1x16x144xf32> to vector<16x144xf32>
    %cst_120 = arith.constant dense<0.000000e+00> : vector<16x128xf32>
    %77 = tpu.matmul %76, %74, %cst_120 {dimension_numbers = #tpu.dot_dimension_numbers<[1], [0], [0], [1], [0, 0, 1, 1], [], []>} : vector<16x144xf32>, vector<144x128xf32>, vector<16x128xf32> -> vector<16x128xf32>
    %c0_121 = arith.constant 0 : index
    %c2_122 = arith.constant 2 : index
    %c0_123 = arith.constant 0 : index
    %c0_124 = arith.constant 0 : index
    %78 = vector.load %arg3[%c0_121, %c2_122, %c0_123, %c0_124] : memref<1x25x16x128xf32, #tpu.memory_space<vmem>>, vector<1x1x16x128xf32>
    %79 = vector.shape_cast %78 : vector<1x1x16x128xf32> to vector<16x128xf32>
    %80 = vector.shape_cast %77 : vector<16x128xf32> to vector<1x1x16x128xf32>
    tpu.vector_store %arg3[%c0_121, %c2_122, %c0_123, %c0_124], %80 {strides = array<i32>} : memref<1x25x16x128xf32, #tpu.memory_space<vmem>>, vector<1x1x16x128xf32>,
    %c0_125 = arith.constant 0 : index
    %c3 = arith.constant 3 : index
    %c0_126 = arith.constant 0 : index
    %c0_127 = arith.constant 0 : index
    %81 = vector.load %arg2[%c0_125, %c3, %c0_126, %c0_127] : memref<1x25x16x256xf32, #tpu.memory_space<vmem>>, vector<1x1x16x128xf32>
    %82 = vector.shape_cast %81 : vector<1x1x16x128xf32> to vector<16x128xf32>
    %c0_128 = arith.constant 0 : index
    %c3_129 = arith.constant 3 : index
    %c0_130 = arith.constant 0 : index
    %c1_131 = arith.constant 1 : index
    %83 = vector.load %arg2[%c0_128, %c3_129, %c0_130, %c1_131] : memref<1x25x16x256xf32, #tpu.memory_space<vmem>>, vector<1x1x16x128xf32>
    %84 = vector.shape_cast %83 : vector<1x1x16x128xf32> to vector<16x128xf32>
    %c0_132 = arith.constant 0 : index
    %c3_133 = arith.constant 3 : index
    %c0_134 = arith.constant 0 : index
    %c2_135 = arith.constant 2 : index
    %85 = vector.load %arg2[%c0_132, %c3_133, %c0_134, %c2_135] : memref<1x25x16x256xf32, #tpu.memory_space<vmem>>, vector<1x1x16x128xf32>
    %86 = vector.shape_cast %85 : vector<1x1x16x128xf32> to vector<16x128xf32>
    %c0_136 = arith.constant 0 : index
    %c3_137 = arith.constant 3 : index
    %c0_138 = arith.constant 0 : index
    %c9_139 = arith.constant 9 : index
    %87 = vector.load %arg2[%c0_136, %c3_137, %c0_138, %c9_139] : memref<1x25x16x256xf32, #tpu.memory_space<vmem>>, vector<1x1x16x128xf32>
    %88 = vector.shape_cast %87 : vector<1x1x16x128xf32> to vector<16x128xf32>
    %c0_140 = arith.constant 0 : index
    %c3_141 = arith.constant 3 : index
    %c0_142 = arith.constant 0 : index
    %c10_143 = arith.constant 10 : index
    %89 = vector.load %arg2[%c0_140, %c3_141, %c0_142, %c10_143] : memref<1x25x16x256xf32, #tpu.memory_space<vmem>>, vector<1x1x16x128xf32>
    %90 = vector.shape_cast %89 : vector<1x1x16x128xf32> to vector<16x128xf32>
    %c0_144 = arith.constant 0 : index
    %c3_145 = arith.constant 3 : index
    %c0_146 = arith.constant 0 : index
    %c11_147 = arith.constant 11 : index
    %91 = vector.load %arg2[%c0_144, %c3_145, %c0_146, %c11_147] : memref<1x25x16x256xf32, #tpu.memory_space<vmem>>, vector<1x1x16x128xf32>
    %92 = vector.shape_cast %91 : vector<1x1x16x128xf32> to vector<16x128xf32>
    %c0_148 = arith.constant 0 : index
    %c3_149 = arith.constant 3 : index
    %c0_150 = arith.constant 0 : index
    %c18_151 = arith.constant 18 : index
    %93 = vector.load %arg2[%c0_148, %c3_149, %c0_150, %c18_151] : memref<1x25x16x256xf32, #tpu.memory_space<vmem>>, vector<1x1x16x128xf32>
    %94 = vector.shape_cast %93 : vector<1x1x16x128xf32> to vector<16x128xf32>
    %c0_152 = arith.constant 0 : index
    %c3_153 = arith.constant 3 : index
    %c0_154 = arith.constant 0 : index
    %c19_155 = arith.constant 19 : index
    %95 = vector.load %arg2[%c0_152, %c3_153, %c0_154, %c19_155] : memref<1x25x16x256xf32, #tpu.memory_space<vmem>>, vector<1x1x16x128xf32>
    %96 = vector.shape_cast %95 : vector<1x1x16x128xf32> to vector<16x128xf32>
    %c0_156 = arith.constant 0 : index
    %c3_157 = arith.constant 3 : index
    %c0_158 = arith.constant 0 : index
    %c20_159 = arith.constant 20 : index
    %97 = vector.load %arg2[%c0_156, %c3_157, %c0_158, %c20_159] : memref<1x25x16x256xf32, #tpu.memory_space<vmem>>, vector<1x1x16x128xf32>
    %98 = vector.shape_cast %97 : vector<1x1x16x128xf32> to vector<16x128xf32>
    %99 = tpu.concatenate %82, %84, %86, %88, %90, %92, %94, %96, %98 in 0 : vector<16x128xf32>, vector<16x128xf32>, vector<16x128xf32>, vector<16x128xf32>, vector<16x128xf32>, vector<16x128xf32>, vector<16x128xf32>, vector<16x128xf32>, vector<16x128xf32> -> vector<144x128xf32>
    %cst_160 = arith.constant 0.000000e+00 : f32
    %100 = vector.broadcast %cst_160 : f32 to vector<144x128xf32>
    %101 = arith.maximumf %99, %100 : vector<144x128xf32>
    %c3_161 = arith.constant 3 : index
    %c0_162 = arith.constant 0 : index
    %c0_163 = arith.constant 0 : index
    %102 = vector.load %arg1[%c3_161, %c0_162, %c0_163] : memref<25x16x144xf32, #tpu.memory_space<vmem>>, vector<1x16x144xf32>
    %103 = vector.shape_cast %102 : vector<1x16x144xf32> to vector<16x144xf32>
    %cst_164 = arith.constant dense<0.000000e+00> : vector<16x128xf32>
    %104 = tpu.matmul %103, %101, %cst_164 {dimension_numbers = #tpu.dot_dimension_numbers<[1], [0], [0], [1], [0, 0, 1, 1], [], []>} : vector<16x144xf32>, vector<144x128xf32>, vector<16x128xf32> -> vector<16x128xf32>
    %c0_165 = arith.constant 0 : index
    %c3_166 = arith.constant 3 : index
    %c0_167 = arith.constant 0 : index
    %c0_168 = arith.constant 0 : index
    %105 = vector.load %arg3[%c0_165, %c3_166, %c0_167, %c0_168] : memref<1x25x16x128xf32, #tpu.memory_space<vmem>>, vector<1x1x16x128xf32>
    %106 = vector.shape_cast %105 : vector<1x1x16x128xf32> to vector<16x128xf32>
    %107 = vector.shape_cast %104 : vector<16x128xf32> to vector<1x1x16x128xf32>
    tpu.vector_store %arg3[%c0_165, %c3_166, %c0_167, %c0_168], %107 {strides = array<i32>} : memref<1x25x16x128xf32, #tpu.memory_space<vmem>>, vector<1x1x16x128xf32>,
    %c0_169 = arith.constant 0 : index
    %c4 = arith.constant 4 : index
    %c0_170 = arith.constant 0 : index
    %c0_171 = arith.constant 0 : index
    %108 = vector.load %arg2[%c0_169, %c4, %c0_170, %c0_171] : memref<1x25x16x256xf32, #tpu.memory_space<vmem>>, vector<1x1x16x128xf32>
    %109 = vector.shape_cast %108 : vector<1x1x16x128xf32> to vector<16x128xf32>
    %c0_172 = arith.constant 0 : index
    %c4_173 = arith.constant 4 : index
    %c0_174 = arith.constant 0 : index
    %c1_175 = arith.constant 1 : index
    %110 = vector.load %arg2[%c0_172, %c4_173, %c0_174, %c1_175] : memref<1x25x16x256xf32, #tpu.memory_space<vmem>>, vector<1x1x16x128xf32>
    %111 = vector.shape_cast %110 : vector<1x1x16x128xf32> to vector<16x128xf32>
    %c0_176 = arith.constant 0 : index
    %c4_177 = arith.constant 4 : index
    %c0_178 = arith.constant 0 : index
    %c2_179 = arith.constant 2 : index
    %112 = vector.load %arg2[%c0_176, %c4_177, %c0_178, %c2_179] : memref<1x25x16x256xf32, #tpu.memory_space<vmem>>, vector<1x1x16x128xf32>
    %113 = vector.shape_cast %112 : vector<1x1x16x128xf32> to vector<16x128xf32>
    %c0_180 = arith.constant 0 : index
    %c4_181 = arith.constant 4 : index
    %c0_182 = arith.constant 0 : index
    %c9_183 = arith.constant 9 : index
    %114 = vector.load %arg2[%c0_180, %c4_181, %c0_182, %c9_183] : memref<1x25x16x256xf32, #tpu.memory_space<vmem>>, vector<1x1x16x128xf32>
    %115 = vector.shape_cast %114 : vector<1x1x16x128xf32> to vector<16x128xf32>
    %c0_184 = arith.constant 0 : index
    %c4_185 = arith.constant 4 : index
    %c0_186 = arith.constant 0 : index
    %c10_187 = arith.constant 10 : index
    %116 = vector.load %arg2[%c0_184, %c4_185, %c0_186, %c10_187] : memref<1x25x16x256xf32, #tpu.memory_space<vmem>>, vector<1x1x16x128xf32>
    %117 = vector.shape_cast %116 : vector<1x1x16x128xf32> to vector<16x128xf32>
    %c0_188 = arith.constant 0 : index
    %c4_189 = arith.constant 4 : index
    %c0_190 = arith.constant 0 : index
    %c11_191 = arith.constant 11 : index
    %118 = vector.load %arg2[%c0_188, %c4_189, %c0_190, %c11_191] : memref<1x25x16x256xf32, #tpu.memory_space<vmem>>, vector<1x1x16x128xf32>
    %119 = vector.shape_cast %118 : vector<1x1x16x128xf32> to vector<16x128xf32>
    %c0_192 = arith.constant 0 : index
    %c4_193 = arith.constant 4 : index
    %c0_194 = arith.constant 0 : index
    %c18_195 = arith.constant 18 : index
    %120 = vector.load %arg2[%c0_192, %c4_193, %c0_194, %c18_195] : memref<1x25x16x256xf32, #tpu.memory_space<vmem>>, vector<1x1x16x128xf32>
    %121 = vector.shape_cast %120 : vector<1x1x16x128xf32> to vector<16x128xf32>
    %c0_196 = arith.constant 0 : index
    %c4_197 = arith.constant 4 : index
    %c0_198 = arith.constant 0 : index
    %c19_199 = arith.constant 19 : index
    %122 = vector.load %arg2[%c0_196, %c4_197, %c0_198, %c19_199] : memref<1x25x16x256xf32, #tpu.memory_space<vmem>>, vector<1x1x16x128xf32>
    %123 = vector.shape_cast %122 : vector<1x1x16x128xf32> to vector<16x128xf32>
    %c0_200 = arith.constant 0 : index
    %c4_201 = arith.constant 4 : index
    %c0_202 = arith.constant 0 : index
    %c20_203 = arith.constant 20 : index
    %124 = vector.load %arg2[%c0_200, %c4_201, %c0_202, %c20_203] : memref<1x25x16x256xf32, #tpu.memory_space<vmem>>, vector<1x1x16x128xf32>
    %125 = vector.shape_cast %124 : vector<1x1x16x128xf32> to vector<16x128xf32>
    %126 = tpu.concatenate %109, %111, %113, %115, %117, %119, %121, %123, %125 in 0 : vector<16x128xf32>, vector<16x128xf32>, vector<16x128xf32>, vector<16x128xf32>, vector<16x128xf32>, vector<16x128xf32>, vector<16x128xf32>, vector<16x128xf32>, vector<16x128xf32> -> vector<144x128xf32>
    %cst_204 = arith.constant 0.000000e+00 : f32
    %127 = vector.broadcast %cst_204 : f32 to vector<144x128xf32>
    %128 = arith.maximumf %126, %127 : vector<144x128xf32>
    %c4_205 = arith.constant 4 : index
    %c0_206 = arith.constant 0 : index
    %c0_207 = arith.constant 0 : index
    %129 = vector.load %arg1[%c4_205, %c0_206, %c0_207] : memref<25x16x144xf32, #tpu.memory_space<vmem>>, vector<1x16x144xf32>
    %130 = vector.shape_cast %129 : vector<1x16x144xf32> to vector<16x144xf32>
    %cst_208 = arith.constant dense<0.000000e+00> : vector<16x128xf32>
    %131 = tpu.matmul %130, %128, %cst_208 {dimension_numbers = #tpu.dot_dimension_numbers<[1], [0], [0], [1], [0, 0, 1, 1], [], []>} : vector<16x144xf32>, vector<144x128xf32>, vector<16x128xf32> -> vector<16x128xf32>
    %c0_209 = arith.constant 0 : index
    %c4_210 = arith.constant 4 : index
    %c0_211 = arith.constant 0 : index
    %c0_212 = arith.constant 0 : index
    %132 = vector.load %arg3[%c0_209, %c4_210, %c0_211, %c0_212] : memref<1x25x16x128xf32, #tpu.memory_space<vmem>>, vector<1x1x16x128xf32>
    %133 = vector.shape_cast %132 : vector<1x1x16x128xf32> to vector<16x128xf32>
    %134 = vector.shape_cast %131 : vector<16x128xf32> to vector<1x1x16x128xf32>
    tpu.vector_store %arg3[%c0_209, %c4_210, %c0_211, %c0_212], %134 {strides = array<i32>} : memref<1x25x16x128xf32, #tpu.memory_space<vmem>>, vector<1x1x16x128xf32>,
    %c0_213 = arith.constant 0 : index
    %c5 = arith.constant 5 : index
    %c0_214 = arith.constant 0 : index
    %c0_215 = arith.constant 0 : index
    %135 = vector.load %arg2[%c0_213, %c5, %c0_214, %c0_215] : memref<1x25x16x256xf32, #tpu.memory_space<vmem>>, vector<1x1x16x128xf32>
    %136 = vector.shape_cast %135 : vector<1x1x16x128xf32> to vector<16x128xf32>
    %c0_216 = arith.constant 0 : index
    %c5_217 = arith.constant 5 : index
    %c0_218 = arith.constant 0 : index
    %c1_219 = arith.constant 1 : index
    %137 = vector.load %arg2[%c0_216, %c5_217, %c0_218, %c1_219] : memref<1x25x16x256xf32, #tpu.memory_space<vmem>>, vector<1x1x16x128xf32>
    %138 = vector.shape_cast %137 : vector<1x1x16x128xf32> to vector<16x128xf32>
    %c0_220 = arith.constant 0 : index
    %c5_221 = arith.constant 5 : index
    %c0_222 = arith.constant 0 : index
    %c2_223 = arith.constant 2 : index
    %139 = vector.load %arg2[%c0_220, %c5_221, %c0_222, %c2_223] : memref<1x25x16x256xf32, #tpu.memory_space<vmem>>, vector<1x1x16x128xf32>
    %140 = vector.shape_cast %139 : vector<1x1x16x128xf32> to vector<16x128xf32>
    %c0_224 = arith.constant 0 : index
    %c5_225 = arith.constant 5 : index
    %c0_226 = arith.constant 0 : index
    %c9_227 = arith.constant 9 : index
    %141 = vector.load %arg2[%c0_224, %c5_225, %c0_226, %c9_227] : memref<1x25x16x256xf32, #tpu.memory_space<vmem>>, vector<1x1x16x128xf32>
    %142 = vector.shape_cast %141 : vector<1x1x16x128xf32> to vector<16x128xf32>
    %c0_228 = arith.constant 0 : index
    %c5_229 = arith.constant 5 : index
    %c0_230 = arith.constant 0 : index
    %c10_231 = arith.constant 10 : index
    %143 = vector.load %arg2[%c0_228, %c5_229, %c0_230, %c10_231] : memref<1x25x16x256xf32, #tpu.memory_space<vmem>>, vector<1x1x16x128xf32>
    %144 = vector.shape_cast %143 : vector<1x1x16x128xf32> to vector<16x128xf32>
    %c0_232 = arith.constant 0 : index
    %c5_233 = arith.constant 5 : index
    %c0_234 = arith.constant 0 : index
    %c11_235 = arith.constant 11 : index
    %145 = vector.load %arg2[%c0_232, %c5_233, %c0_234, %c11_235] : memref<1x25x16x256xf32, #tpu.memory_space<vmem>>, vector<1x1x16x128xf32>
    %146 = vector.shape_cast %145 : vector<1x1x16x128xf32> to vector<16x128xf32>
    %c0_236 = arith.constant 0 : index
    %c5_237 = arith.constant 5 : index
    %c0_238 = arith.constant 0 : index
    %c18_239 = arith.constant 18 : index
    %147 = vector.load %arg2[%c0_236, %c5_237, %c0_238, %c18_239] : memref<1x25x16x256xf32, #tpu.memory_space<vmem>>, vector<1x1x16x128xf32>
    %148 = vector.shape_cast %147 : vector<1x1x16x128xf32> to vector<16x128xf32>
    %c0_240 = arith.constant 0 : index
    %c5_241 = arith.constant 5 : index
    %c0_242 = arith.constant 0 : index
    %c19_243 = arith.constant 19 : index
    %149 = vector.load %arg2[%c0_240, %c5_241, %c0_242, %c19_243] : memref<1x25x16x256xf32, #tpu.memory_space<vmem>>, vector<1x1x16x128xf32>
    %150 = vector.shape_cast %149 : vector<1x1x16x128xf32> to vector<16x128xf32>
    %c0_244 = arith.constant 0 : index
    %c5_245 = arith.constant 5 : index
    %c0_246 = arith.constant 0 : index
    %c20_247 = arith.constant 20 : index
    %151 = vector.load %arg2[%c0_244, %c5_245, %c0_246, %c20_247] : memref<1x25x16x256xf32, #tpu.memory_space<vmem>>, vector<1x1x16x128xf32>
    %152 = vector.shape_cast %151 : vector<1x1x16x128xf32> to vector<16x128xf32>
    %153 = tpu.concatenate %136, %138, %140, %142, %144, %146, %148, %150, %152 in 0 : vector<16x128xf32>, vector<16x128xf32>, vector<16x128xf32>, vector<16x128xf32>, vector<16x128xf32>, vector<16x128xf32>, vector<16x128xf32>, vector<16x128xf32>, vector<16x128xf32> -> vector<144x128xf32>
    %cst_248 = arith.constant 0.000000e+00 : f32
    %154 = vector.broadcast %cst_248 : f32 to vector<144x128xf32>
    %155 = arith.maximumf %153, %154 : vector<144x128xf32>
    %c5_249 = arith.constant 5 : index
    %c0_250 = arith.constant 0 : index
    %c0_251 = arith.constant 0 : index
    %156 = vector.load %arg1[%c5_249, %c0_250, %c0_251] : memref<25x16x144xf32, #tpu.memory_space<vmem>>, vector<1x16x144xf32>
    %157 = vector.shape_cast %156 : vector<1x16x144xf32> to vector<16x144xf32>
    %cst_252 = arith.constant dense<0.000000e+00> : vector<16x128xf32>
    %158 = tpu.matmul %157, %155, %cst_252 {dimension_numbers = #tpu.dot_dimension_numbers<[1], [0], [0], [1], [0, 0, 1, 1], [], []>} : vector<16x144xf32>, vector<144x128xf32>, vector<16x128xf32> -> vector<16x128xf32>
    %c0_253 = arith.constant 0 : index
    %c5_254 = arith.constant 5 : index
    %c0_255 = arith.constant 0 : index
    %c0_256 = arith.constant 0 : index
    %159 = vector.load %arg3[%c0_253, %c5_254, %c0_255, %c0_256] : memref<1x25x16x128xf32, #tpu.memory_space<vmem>>, vector<1x1x16x128xf32>
    %160 = vector.shape_cast %159 : vector<1x1x16x128xf32> to vector<16x128xf32>
    %161 = vector.shape_cast %158 : vector<16x128xf32> to vector<1x1x16x128xf32>
    tpu.vector_store %arg3[%c0_253, %c5_254, %c0_255, %c0_256], %161 {strides = array<i32>} : memref<1x25x16x128xf32, #tpu.memory_space<vmem>>, vector<1x1x16x128xf32>,
    %c0_257 = arith.constant 0 : index
    %c6 = arith.constant 6 : index
    %c0_258 = arith.constant 0 : index
    %c0_259 = arith.constant 0 : index
    %162 = vector.load %arg2[%c0_257, %c6, %c0_258, %c0_259] : memref<1x25x16x256xf32, #tpu.memory_space<vmem>>, vector<1x1x16x128xf32>
    %163 = vector.shape_cast %162 : vector<1x1x16x128xf32> to vector<16x128xf32>
    %c0_260 = arith.constant 0 : index
    %c6_261 = arith.constant 6 : index
    %c0_262 = arith.constant 0 : index
    %c1_263 = arith.constant 1 : index
    %164 = vector.load %arg2[%c0_260, %c6_261, %c0_262, %c1_263] : memref<1x25x16x256xf32, #tpu.memory_space<vmem>>, vector<1x1x16x128xf32>
    %165 = vector.shape_cast %164 : vector<1x1x16x128xf32> to vector<16x128xf32>
    %c0_264 = arith.constant 0 : index
    %c6_265 = arith.constant 6 : index
    %c0_266 = arith.constant 0 : index
    %c2_267 = arith.constant 2 : index
    %166 = vector.load %arg2[%c0_264, %c6_265, %c0_266, %c2_267] : memref<1x25x16x256xf32, #tpu.memory_space<vmem>>, vector<1x1x16x128xf32>
    %167 = vector.shape_cast %166 : vector<1x1x16x128xf32> to vector<16x128xf32>
    %c0_268 = arith.constant 0 : index
    %c6_269 = arith.constant 6 : index
    %c0_270 = arith.constant 0 : index
    %c9_271 = arith.constant 9 : index
    %168 = vector.load %arg2[%c0_268, %c6_269, %c0_270, %c9_271] : memref<1x25x16x256xf32, #tpu.memory_space<vmem>>, vector<1x1x16x128xf32>
    %169 = vector.shape_cast %168 : vector<1x1x16x128xf32> to vector<16x128xf32>
    %c0_272 = arith.constant 0 : index
    %c6_273 = arith.constant 6 : index
    %c0_274 = arith.constant 0 : index
    %c10_275 = arith.constant 10 : index
    %170 = vector.load %arg2[%c0_272, %c6_273, %c0_274, %c10_275] : memref<1x25x16x256xf32, #tpu.memory_space<vmem>>, vector<1x1x16x128xf32>
    %171 = vector.shape_cast %170 : vector<1x1x16x128xf32> to vector<16x128xf32>
    %c0_276 = arith.constant 0 : index
    %c6_277 = arith.constant 6 : index
    %c0_278 = arith.constant 0 : index
    %c11_279 = arith.constant 11 : index
    %172 = vector.load %arg2[%c0_276, %c6_277, %c0_278, %c11_279] : memref<1x25x16x256xf32, #tpu.memory_space<vmem>>, vector<1x1x16x128xf32>
    %173 = vector.shape_cast %172 : vector<1x1x16x128xf32> to vector<16x128xf32>
    %c0_280 = arith.constant 0 : index
    %c6_281 = arith.constant 6 : index
    %c0_282 = arith.constant 0 : index
    %c18_283 = arith.constant 18 : index
    %174 = vector.load %arg2[%c0_280, %c6_281, %c0_282, %c18_283] : memref<1x25x16x256xf32, #tpu.memory_space<vmem>>, vector<1x1x16x128xf32>
    %175 = vector.shape_cast %174 : vector<1x1x16x128xf32> to vector<16x128xf32>
    %c0_284 = arith.constant 0 : index
    %c6_285 = arith.constant 6 : index
    %c0_286 = arith.constant 0 : index
    %c19_287 = arith.constant 19 : index
    %176 = vector.load %arg2[%c0_284, %c6_285, %c0_286, %c19_287] : memref<1x25x16x256xf32, #tpu.memory_space<vmem>>, vector<1x1x16x128xf32>
    %177 = vector.shape_cast %176 : vector<1x1x16x128xf32> to vector<16x128xf32>
    %c0_288 = arith.constant 0 : index
    %c6_289 = arith.constant 6 : index
    %c0_290 = arith.constant 0 : index
    %c20_291 = arith.constant 20 : index
    %178 = vector.load %arg2[%c0_288, %c6_289, %c0_290, %c20_291] : memref<1x25x16x256xf32, #tpu.memory_space<vmem>>, vector<1x1x16x128xf32>
    %179 = vector.shape_cast %178 : vector<1x1x16x128xf32> to vector<16x128xf32>
    %180 = tpu.concatenate %163, %165, %167, %169, %171, %173, %175, %177, %179 in 0 : vector<16x128xf32>, vector<16x128xf32>, vector<16x128xf32>, vector<16x128xf32>, vector<16x128xf32>, vector<16x128xf32>, vector<16x128xf32>, vector<16x128xf32>, vector<16x128xf32> -> vector<144x128xf32>
    %cst_292 = arith.constant 0.000000e+00 : f32
    %181 = vector.broadcast %cst_292 : f32 to vector<144x128xf32>
    %182 = arith.maximumf %180, %181 : vector<144x128xf32>
    %c6_293 = arith.constant 6 : index
    %c0_294 = arith.constant 0 : index
    %c0_295 = arith.constant 0 : index
    %183 = vector.load %arg1[%c6_293, %c0_294, %c0_295] : memref<25x16x144xf32, #tpu.memory_space<vmem>>, vector<1x16x144xf32>
    %184 = vector.shape_cast %183 : vector<1x16x144xf32> to vector<16x144xf32>
    %cst_296 = arith.constant dense<0.000000e+00> : vector<16x128xf32>
    %185 = tpu.matmul %184, %182, %cst_296 {dimension_numbers = #tpu.dot_dimension_numbers<[1], [0], [0], [1], [0, 0, 1, 1], [], []>} : vector<16x144xf32>, vector<144x128xf32>, vector<16x128xf32> -> vector<16x128xf32>
    %c0_297 = arith.constant 0 : index
    %c6_298 = arith.constant 6 : index
    %c0_299 = arith.constant 0 : index
    %c0_300 = arith.constant 0 : index
    %186 = vector.load %arg3[%c0_297, %c6_298, %c0_299, %c0_300] : memref<1x25x16x128xf32, #tpu.memory_space<vmem>>, vector<1x1x16x128xf32>
    %187 = vector.shape_cast %186 : vector<1x1x16x128xf32> to vector<16x128xf32>
    %188 = vector.shape_cast %185 : vector<16x128xf32> to vector<1x1x16x128xf32>
    tpu.vector_store %arg3[%c0_297, %c6_298, %c0_299, %c0_300], %188 {strides = array<i32>} : memref<1x25x16x128xf32, #tpu.memory_space<vmem>>, vector<1x1x16x128xf32>,
    %c0_301 = arith.constant 0 : index
    %c7 = arith.constant 7 : index
    %c0_302 = arith.constant 0 : index
    %c0_303 = arith.constant 0 : index
    %189 = vector.load %arg2[%c0_301, %c7, %c0_302, %c0_303] : memref<1x25x16x256xf32, #tpu.memory_space<vmem>>, vector<1x1x16x128xf32>
    %190 = vector.shape_cast %189 : vector<1x1x16x128xf32> to vector<16x128xf32>
    %c0_304 = arith.constant 0 : index
    %c7_305 = arith.constant 7 : index
    %c0_306 = arith.constant 0 : index
    %c1_307 = arith.constant 1 : index
    %191 = vector.load %arg2[%c0_304, %c7_305, %c0_306, %c1_307] : memref<1x25x16x256xf32, #tpu.memory_space<vmem>>, vector<1x1x16x128xf32>
    %192 = vector.shape_cast %191 : vector<1x1x16x128xf32> to vector<16x128xf32>
    %c0_308 = arith.constant 0 : index
    %c7_309 = arith.constant 7 : index
    %c0_310 = arith.constant 0 : index
    %c2_311 = arith.constant 2 : index
    %193 = vector.load %arg2[%c0_308, %c7_309, %c0_310, %c2_311] : memref<1x25x16x256xf32, #tpu.memory_space<vmem>>, vector<1x1x16x128xf32>
    %194 = vector.shape_cast %193 : vector<1x1x16x128xf32> to vector<16x128xf32>
    %c0_312 = arith.constant 0 : index
    %c7_313 = arith.constant 7 : index
    %c0_314 = arith.constant 0 : index
    %c9_315 = arith.constant 9 : index
    %195 = vector.load %arg2[%c0_312, %c7_313, %c0_314, %c9_315] : memref<1x25x16x256xf32, #tpu.memory_space<vmem>>, vector<1x1x16x128xf32>
    %196 = vector.shape_cast %195 : vector<1x1x16x128xf32> to vector<16x128xf32>
    %c0_316 = arith.constant 0 : index
    %c7_317 = arith.constant 7 : index
    %c0_318 = arith.constant 0 : index
    %c10_319 = arith.constant 10 : index
    %197 = vector.load %arg2[%c0_316, %c7_317, %c0_318, %c10_319] : memref<1x25x16x256xf32, #tpu.memory_space<vmem>>, vector<1x1x16x128xf32>
    %198 = vector.shape_cast %197 : vector<1x1x16x128xf32> to vector<16x128xf32>
    %c0_320 = arith.constant 0 : index
    %c7_321 = arith.constant 7 : index
    %c0_322 = arith.constant 0 : index
    %c11_323 = arith.constant 11 : index
    %199 = vector.load %arg2[%c0_320, %c7_321, %c0_322, %c11_323] : memref<1x25x16x256xf32, #tpu.memory_space<vmem>>, vector<1x1x16x128xf32>
    %200 = vector.shape_cast %199 : vector<1x1x16x128xf32> to vector<16x128xf32>
    %c0_324 = arith.constant 0 : index
    %c7_325 = arith.constant 7 : index
    %c0_326 = arith.constant 0 : index
    %c18_327 = arith.constant 18 : index
    %201 = vector.load %arg2[%c0_324, %c7_325, %c0_326, %c18_327] : memref<1x25x16x256xf32, #tpu.memory_space<vmem>>, vector<1x1x16x128xf32>
    %202 = vector.shape_cast %201 : vector<1x1x16x128xf32> to vector<16x128xf32>
    %c0_328 = arith.constant 0 : index
    %c7_329 = arith.constant 7 : index
    %c0_330 = arith.constant 0 : index
    %c19_331 = arith.constant 19 : index
    %203 = vector.load %arg2[%c0_328, %c7_329, %c0_330, %c19_331] : memref<1x25x16x256xf32, #tpu.memory_space<vmem>>, vector<1x1x16x128xf32>
    %204 = vector.shape_cast %203 : vector<1x1x16x128xf32> to vector<16x128xf32>
    %c0_332 = arith.constant 0 : index
    %c7_333 = arith.constant 7 : index
    %c0_334 = arith.constant 0 : index
    %c20_335 = arith.constant 20 : index
    %205 = vector.load %arg2[%c0_332, %c7_333, %c0_334, %c20_335] : memref<1x25x16x256xf32, #tpu.memory_space<vmem>>, vector<1x1x16x128xf32>
    %206 = vector.shape_cast %205 : vector<1x1x16x128xf32> to vector<16x128xf32>
    %207 = tpu.concatenate %190, %192, %194, %196, %198, %200, %202, %204, %206 in 0 : vector<16x128xf32>, vector<16x128xf32>, vector<16x128xf32>, vector<16x128xf32>, vector<16x128xf32>, vector<16x128xf32>, vector<16x128xf32>, vector<16x128xf32>, vector<16x128xf32> -> vector<144x128xf32>
    %cst_336 = arith.constant 0.000000e+00 : f32
    %208 = vector.broadcast %cst_336 : f32 to vector<144x128xf32>
    %209 = arith.maximumf %207, %208 : vector<144x128xf32>
    %c7_337 = arith.constant 7 : index
    %c0_338 = arith.constant 0 : index
    %c0_339 = arith.constant 0 : index
    %210 = vector.load %arg1[%c7_337, %c0_338, %c0_339] : memref<25x16x144xf32, #tpu.memory_space<vmem>>, vector<1x16x144xf32>
    %211 = vector.shape_cast %210 : vector<1x16x144xf32> to vector<16x144xf32>
    %cst_340 = arith.constant dense<0.000000e+00> : vector<16x128xf32>
    %212 = tpu.matmul %211, %209, %cst_340 {dimension_numbers = #tpu.dot_dimension_numbers<[1], [0], [0], [1], [0, 0, 1, 1], [], []>} : vector<16x144xf32>, vector<144x128xf32>, vector<16x128xf32> -> vector<16x128xf32>
    %c0_341 = arith.constant 0 : index
    %c7_342 = arith.constant 7 : index
    %c0_343 = arith.constant 0 : index
    %c0_344 = arith.constant 0 : index
    %213 = vector.load %arg3[%c0_341, %c7_342, %c0_343, %c0_344] : memref<1x25x16x128xf32, #tpu.memory_space<vmem>>, vector<1x1x16x128xf32>
    %214 = vector.shape_cast %213 : vector<1x1x16x128xf32> to vector<16x128xf32>
    %215 = vector.shape_cast %212 : vector<16x128xf32> to vector<1x1x16x128xf32>
    tpu.vector_store %arg3[%c0_341, %c7_342, %c0_343, %c0_344], %215 {strides = array<i32>} : memref<1x25x16x128xf32, #tpu.memory_space<vmem>>, vector<1x1x16x128xf32>,
    %c0_345 = arith.constant 0 : index
    %c8 = arith.constant 8 : index
    %c0_346 = arith.constant 0 : index
    %c0_347 = arith.constant 0 : index
    %216 = vector.load %arg2[%c0_345, %c8, %c0_346, %c0_347] : memref<1x25x16x256xf32, #tpu.memory_space<vmem>>, vector<1x1x16x128xf32>
    %217 = vector.shape_cast %216 : vector<1x1x16x128xf32> to vector<16x128xf32>
    %c0_348 = arith.constant 0 : index
    %c8_349 = arith.constant 8 : index
    %c0_350 = arith.constant 0 : index
    %c1_351 = arith.constant 1 : index
    %218 = vector.load %arg2[%c0_348, %c8_349, %c0_350, %c1_351] : memref<1x25x16x256xf32, #tpu.memory_space<vmem>>, vector<1x1x16x128xf32>
    %219 = vector.shape_cast %218 : vector<1x1x16x128xf32> to vector<16x128xf32>
    %c0_352 = arith.constant 0 : index
    %c8_353 = arith.constant 8 : index
    %c0_354 = arith.constant 0 : index
    %c2_355 = arith.constant 2 : index
    %220 = vector.load %arg2[%c0_352, %c8_353, %c0_354, %c2_355] : memref<1x25x16x256xf32, #tpu.memory_space<vmem>>, vector<1x1x16x128xf32>
    %221 = vector.shape_cast %220 : vector<1x1x16x128xf32> to vector<16x128xf32>
    %c0_356 = arith.constant 0 : index
    %c8_357 = arith.constant 8 : index
    %c0_358 = arith.constant 0 : index
    %c9_359 = arith.constant 9 : index
    %222 = vector.load %arg2[%c0_356, %c8_357, %c0_358, %c9_359] : memref<1x25x16x256xf32, #tpu.memory_space<vmem>>, vector<1x1x16x128xf32>
    %223 = vector.shape_cast %222 : vector<1x1x16x128xf32> to vector<16x128xf32>
    %c0_360 = arith.constant 0 : index
    %c8_361 = arith.constant 8 : index
    %c0_362 = arith.constant 0 : index
    %c10_363 = arith.constant 10 : index
    %224 = vector.load %arg2[%c0_360, %c8_361, %c0_362, %c10_363] : memref<1x25x16x256xf32, #tpu.memory_space<vmem>>, vector<1x1x16x128xf32>
    %225 = vector.shape_cast %224 : vector<1x1x16x128xf32> to vector<16x128xf32>
    %c0_364 = arith.constant 0 : index
    %c8_365 = arith.constant 8 : index
    %c0_366 = arith.constant 0 : index
    %c11_367 = arith.constant 11 : index
    %226 = vector.load %arg2[%c0_364, %c8_365, %c0_366, %c11_367] : memref<1x25x16x256xf32, #tpu.memory_space<vmem>>, vector<1x1x16x128xf32>
    %227 = vector.shape_cast %226 : vector<1x1x16x128xf32> to vector<16x128xf32>
    %c0_368 = arith.constant 0 : index
    %c8_369 = arith.constant 8 : index
    %c0_370 = arith.constant 0 : index
    %c18_371 = arith.constant 18 : index
    %228 = vector.load %arg2[%c0_368, %c8_369, %c0_370, %c18_371] : memref<1x25x16x256xf32, #tpu.memory_space<vmem>>, vector<1x1x16x128xf32>
    %229 = vector.shape_cast %228 : vector<1x1x16x128xf32> to vector<16x128xf32>
    %c0_372 = arith.constant 0 : index
    %c8_373 = arith.constant 8 : index
    %c0_374 = arith.constant 0 : index
    %c19_375 = arith.constant 19 : index
    %230 = vector.load %arg2[%c0_372, %c8_373, %c0_374, %c19_375] : memref<1x25x16x256xf32, #tpu.memory_space<vmem>>, vector<1x1x16x128xf32>
    %231 = vector.shape_cast %230 : vector<1x1x16x128xf32> to vector<16x128xf32>
    %c0_376 = arith.constant 0 : index
    %c8_377 = arith.constant 8 : index
    %c0_378 = arith.constant 0 : index
    %c20_379 = arith.constant 20 : index
    %232 = vector.load %arg2[%c0_376, %c8_377, %c0_378, %c20_379] : memref<1x25x16x256xf32, #tpu.memory_space<vmem>>, vector<1x1x16x128xf32>
    %233 = vector.shape_cast %232 : vector<1x1x16x128xf32> to vector<16x128xf32>
    %234 = tpu.concatenate %217, %219, %221, %223, %225, %227, %229, %231, %233 in 0 : vector<16x128xf32>, vector<16x128xf32>, vector<16x128xf32>, vector<16x128xf32>, vector<16x128xf32>, vector<16x128xf32>, vector<16x128xf32>, vector<16x128xf32>, vector<16x128xf32> -> vector<144x128xf32>
    %cst_380 = arith.constant 0.000000e+00 : f32
    %235 = vector.broadcast %cst_380 : f32 to vector<144x128xf32>
    %236 = arith.maximumf %234, %235 : vector<144x128xf32>
    %c8_381 = arith.constant 8 : index
    %c0_382 = arith.constant 0 : index
    %c0_383 = arith.constant 0 : index
    %237 = vector.load %arg1[%c8_381, %c0_382, %c0_383] : memref<25x16x144xf32, #tpu.memory_space<vmem>>, vector<1x16x144xf32>
    %238 = vector.shape_cast %237 : vector<1x16x144xf32> to vector<16x144xf32>
    %cst_384 = arith.constant dense<0.000000e+00> : vector<16x128xf32>
    %239 = tpu.matmul %238, %236, %cst_384 {dimension_numbers = #tpu.dot_dimension_numbers<[1], [0], [0], [1], [0, 0, 1, 1], [], []>} : vector<16x144xf32>, vector<144x128xf32>, vector<16x128xf32> -> vector<16x128xf32>
    %c0_385 = arith.constant 0 : index
    %c8_386 = arith.constant 8 : index
    %c0_387 = arith.constant 0 : index
    %c0_388 = arith.constant 0 : index
    %240 = vector.load %arg3[%c0_385, %c8_386, %c0_387, %c0_388] : memref<1x25x16x128xf32, #tpu.memory_space<vmem>>, vector<1x1x16x128xf32>
    %241 = vector.shape_cast %240 : vector<1x1x16x128xf32> to vector<16x128xf32>
    %242 = vector.shape_cast %239 : vector<16x128xf32> to vector<1x1x16x128xf32>
    tpu.vector_store %arg3[%c0_385, %c8_386, %c0_387, %c0_388], %242 {strides = array<i32>} : memref<1x25x16x128xf32, #tpu.memory_space<vmem>>, vector<1x1x16x128xf32>,
    %c0_389 = arith.constant 0 : index
    %c9_390 = arith.constant 9 : index
    %c0_391 = arith.constant 0 : index
    %c0_392 = arith.constant 0 : index
    %243 = vector.load %arg2[%c0_389, %c9_390, %c0_391, %c0_392] : memref<1x25x16x256xf32, #tpu.memory_space<vmem>>, vector<1x1x16x128xf32>
    %244 = vector.shape_cast %243 : vector<1x1x16x128xf32> to vector<16x128xf32>
    %c0_393 = arith.constant 0 : index
    %c9_394 = arith.constant 9 : index
    %c0_395 = arith.constant 0 : index
    %c1_396 = arith.constant 1 : index
    %245 = vector.load %arg2[%c0_393, %c9_394, %c0_395, %c1_396] : memref<1x25x16x256xf32, #tpu.memory_space<vmem>>, vector<1x1x16x128xf32>
    %246 = vector.shape_cast %245 : vector<1x1x16x128xf32> to vector<16x128xf32>
    %c0_397 = arith.constant 0 : index
    %c9_398 = arith.constant 9 : index
    %c0_399 = arith.constant 0 : index
    %c2_400 = arith.constant 2 : index
    %247 = vector.load %arg2[%c0_397, %c9_398, %c0_399, %c2_400] : memref<1x25x16x256xf32, #tpu.memory_space<vmem>>, vector<1x1x16x128xf32>
    %248 = vector.shape_cast %247 : vector<1x1x16x128xf32> to vector<16x128xf32>
    %c0_401 = arith.constant 0 : index
    %c9_402 = arith.constant 9 : index
    %c0_403 = arith.constant 0 : index
    %c9_404 = arith.constant 9 : index
    %249 = vector.load %arg2[%c0_401, %c9_402, %c0_403, %c9_404] : memref<1x25x16x256xf32, #tpu.memory_space<vmem>>, vector<1x1x16x128xf32>
    %250 = vector.shape_cast %249 : vector<1x1x16x128xf32> to vector<16x128xf32>
    %c0_405 = arith.constant 0 : index
    %c9_406 = arith.constant 9 : index
    %c0_407 = arith.constant 0 : index
    %c10_408 = arith.constant 10 : index
    %251 = vector.load %arg2[%c0_405, %c9_406, %c0_407, %c10_408] : memref<1x25x16x256xf32, #tpu.memory_space<vmem>>, vector<1x1x16x128xf32>
    %252 = vector.shape_cast %251 : vector<1x1x16x128xf32> to vector<16x128xf32>
    %c0_409 = arith.constant 0 : index
    %c9_410 = arith.constant 9 : index
    %c0_411 = arith.constant 0 : index
    %c11_412 = arith.constant 11 : index
    %253 = vector.load %arg2[%c0_409, %c9_410, %c0_411, %c11_412] : memref<1x25x16x256xf32, #tpu.memory_space<vmem>>, vector<1x1x16x128xf32>
    %254 = vector.shape_cast %253 : vector<1x1x16x128xf32> to vector<16x128xf32>
    %c0_413 = arith.constant 0 : index
    %c9_414 = arith.constant 9 : index
    %c0_415 = arith.constant 0 : index
    %c18_416 = arith.constant 18 : index
    %255 = vector.load %arg2[%c0_413, %c9_414, %c0_415, %c18_416] : memref<1x25x16x256xf32, #tpu.memory_space<vmem>>, vector<1x1x16x128xf32>
    %256 = vector.shape_cast %255 : vector<1x1x16x128xf32> to vector<16x128xf32>
    %c0_417 = arith.constant 0 : index
    %c9_418 = arith.constant 9 : index
    %c0_419 = arith.constant 0 : index
    %c19_420 = arith.constant 19 : index
    %257 = vector.load %arg2[%c0_417, %c9_418, %c0_419, %c19_420] : memref<1x25x16x256xf32, #tpu.memory_space<vmem>>, vector<1x1x16x128xf32>
    %258 = vector.shape_cast %257 : vector<1x1x16x128xf32> to vector<16x128xf32>
    %c0_421 = arith.constant 0 : index
    %c9_422 = arith.constant 9 : index
    %c0_423 = arith.constant 0 : index
    %c20_424 = arith.constant 20 : index
    %259 = vector.load %arg2[%c0_421, %c9_422, %c0_423, %c20_424] : memref<1x25x16x256xf32, #tpu.memory_space<vmem>>, vector<1x1x16x128xf32>
    %260 = vector.shape_cast %259 : vector<1x1x16x128xf32> to vector<16x128xf32>
    %261 = tpu.concatenate %244, %246, %248, %250, %252, %254, %256, %258, %260 in 0 : vector<16x128xf32>, vector<16x128xf32>, vector<16x128xf32>, vector<16x128xf32>, vector<16x128xf32>, vector<16x128xf32>, vector<16x128xf32>, vector<16x128xf32>, vector<16x128xf32> -> vector<144x128xf32>
    %cst_425 = arith.constant 0.000000e+00 : f32
    %262 = vector.broadcast %cst_425 : f32 to vector<144x128xf32>
    %263 = arith.maximumf %261, %262 : vector<144x128xf32>
    %c9_426 = arith.constant 9 : index
    %c0_427 = arith.constant 0 : index
    %c0_428 = arith.constant 0 : index
    %264 = vector.load %arg1[%c9_426, %c0_427, %c0_428] : memref<25x16x144xf32, #tpu.memory_space<vmem>>, vector<1x16x144xf32>
    %265 = vector.shape_cast %264 : vector<1x16x144xf32> to vector<16x144xf32>
    %cst_429 = arith.constant dense<0.000000e+00> : vector<16x128xf32>
    %266 = tpu.matmul %265, %263, %cst_429 {dimension_numbers = #tpu.dot_dimension_numbers<[1], [0], [0], [1], [0, 0, 1, 1], [], []>} : vector<16x144xf32>, vector<144x128xf32>, vector<16x128xf32> -> vector<16x128xf32>
    %c0_430 = arith.constant 0 : index
    %c9_431 = arith.constant 9 : index
    %c0_432 = arith.constant 0 : index
    %c0_433 = arith.constant 0 : index
    %267 = vector.load %arg3[%c0_430, %c9_431, %c0_432, %c0_433] : memref<1x25x16x128xf32, #tpu.memory_space<vmem>>, vector<1x1x16x128xf32>
    %268 = vector.shape_cast %267 : vector<1x1x16x128xf32> to vector<16x128xf32>
    %269 = vector.shape_cast %266 : vector<16x128xf32> to vector<1x1x16x128xf32>
    tpu.vector_store %arg3[%c0_430, %c9_431, %c0_432, %c0_433], %269 {strides = array<i32>} : memref<1x25x16x128xf32, #tpu.memory_space<vmem>>, vector<1x1x16x128xf32>,
    %c0_434 = arith.constant 0 : index
    %c10_435 = arith.constant 10 : index
    %c0_436 = arith.constant 0 : index
    %c0_437 = arith.constant 0 : index
    %270 = vector.load %arg2[%c0_434, %c10_435, %c0_436, %c0_437] : memref<1x25x16x256xf32, #tpu.memory_space<vmem>>, vector<1x1x16x128xf32>
    %271 = vector.shape_cast %270 : vector<1x1x16x128xf32> to vector<16x128xf32>
    %c0_438 = arith.constant 0 : index
    %c10_439 = arith.constant 10 : index
    %c0_440 = arith.constant 0 : index
    %c1_441 = arith.constant 1 : index
    %272 = vector.load %arg2[%c0_438, %c10_439, %c0_440, %c1_441] : memref<1x25x16x256xf32, #tpu.memory_space<vmem>>, vector<1x1x16x128xf32>
    %273 = vector.shape_cast %272 : vector<1x1x16x128xf32> to vector<16x128xf32>
    %c0_442 = arith.constant 0 : index
    %c10_443 = arith.constant 10 : index
    %c0_444 = arith.constant 0 : index
    %c2_445 = arith.constant 2 : index
    %274 = vector.load %arg2[%c0_442, %c10_443, %c0_444, %c2_445] : memref<1x25x16x256xf32, #tpu.memory_space<vmem>>, vector<1x1x16x128xf32>
    %275 = vector.shape_cast %274 : vector<1x1x16x128xf32> to vector<16x128xf32>
    %c0_446 = arith.constant 0 : index
    %c10_447 = arith.constant 10 : index
    %c0_448 = arith.constant 0 : index
    %c9_449 = arith.constant 9 : index
    %276 = vector.load %arg2[%c0_446, %c10_447, %c0_448, %c9_449] : memref<1x25x16x256xf32, #tpu.memory_space<vmem>>, vector<1x1x16x128xf32>
    %277 = vector.shape_cast %276 : vector<1x1x16x128xf32> to vector<16x128xf32>
    %c0_450 = arith.constant 0 : index
    %c10_451 = arith.constant 10 : index
    %c0_452 = arith.constant 0 : index
    %c10_453 = arith.constant 10 : index
    %278 = vector.load %arg2[%c0_450, %c10_451, %c0_452, %c10_453] : memref<1x25x16x256xf32, #tpu.memory_space<vmem>>, vector<1x1x16x128xf32>
    %279 = vector.shape_cast %278 : vector<1x1x16x128xf32> to vector<16x128xf32>
    %c0_454 = arith.constant 0 : index
    %c10_455 = arith.constant 10 : index
    %c0_456 = arith.constant 0 : index
    %c11_457 = arith.constant 11 : index
    %280 = vector.load %arg2[%c0_454, %c10_455, %c0_456, %c11_457] : memref<1x25x16x256xf32, #tpu.memory_space<vmem>>, vector<1x1x16x128xf32>
    %281 = vector.shape_cast %280 : vector<1x1x16x128xf32> to vector<16x128xf32>
    %c0_458 = arith.constant 0 : index
    %c10_459 = arith.constant 10 : index
    %c0_460 = arith.constant 0 : index
    %c18_461 = arith.constant 18 : index
    %282 = vector.load %arg2[%c0_458, %c10_459, %c0_460, %c18_461] : memref<1x25x16x256xf32, #tpu.memory_space<vmem>>, vector<1x1x16x128xf32>
    %283 = vector.shape_cast %282 : vector<1x1x16x128xf32> to vector<16x128xf32>
    %c0_462 = arith.constant 0 : index
    %c10_463 = arith.constant 10 : index
    %c0_464 = arith.constant 0 : index
    %c19_465 = arith.constant 19 : index
    %284 = vector.load %arg2[%c0_462, %c10_463, %c0_464, %c19_465] : memref<1x25x16x256xf32, #tpu.memory_space<vmem>>, vector<1x1x16x128xf32>
    %285 = vector.shape_cast %284 : vector<1x1x16x128xf32> to vector<16x128xf32>
    %c0_466 = arith.constant 0 : index
    %c10_467 = arith.constant 10 : index
    %c0_468 = arith.constant 0 : index
    %c20_469 = arith.constant 20 : index
    %286 = vector.load %arg2[%c0_466, %c10_467, %c0_468, %c20_469] : memref<1x25x16x256xf32, #tpu.memory_space<vmem>>, vector<1x1x16x128xf32>
    %287 = vector.shape_cast %286 : vector<1x1x16x128xf32> to vector<16x128xf32>
    %288 = tpu.concatenate %271, %273, %275, %277, %279, %281, %283, %285, %287 in 0 : vector<16x128xf32>, vector<16x128xf32>, vector<16x128xf32>, vector<16x128xf32>, vector<16x128xf32>, vector<16x128xf32>, vector<16x128xf32>, vector<16x128xf32>, vector<16x128xf32> -> vector<144x128xf32>
    %cst_470 = arith.constant 0.000000e+00 : f32
    %289 = vector.broadcast %cst_470 : f32 to vector<144x128xf32>
    %290 = arith.maximumf %288, %289 : vector<144x128xf32>
    %c10_471 = arith.constant 10 : index
    %c0_472 = arith.constant 0 : index
    %c0_473 = arith.constant 0 : index
    %291 = vector.load %arg1[%c10_471, %c0_472, %c0_473] : memref<25x16x144xf32, #tpu.memory_space<vmem>>, vector<1x16x144xf32>
    %292 = vector.shape_cast %291 : vector<1x16x144xf32> to vector<16x144xf32>
    %cst_474 = arith.constant dense<0.000000e+00> : vector<16x128xf32>
    %293 = tpu.matmul %292, %290, %cst_474 {dimension_numbers = #tpu.dot_dimension_numbers<[1], [0], [0], [1], [0, 0, 1, 1], [], []>} : vector<16x144xf32>, vector<144x128xf32>, vector<16x128xf32> -> vector<16x128xf32>
    %c0_475 = arith.constant 0 : index
    %c10_476 = arith.constant 10 : index
    %c0_477 = arith.constant 0 : index
    %c0_478 = arith.constant 0 : index
    %294 = vector.load %arg3[%c0_475, %c10_476, %c0_477, %c0_478] : memref<1x25x16x128xf32, #tpu.memory_space<vmem>>, vector<1x1x16x128xf32>
    %295 = vector.shape_cast %294 : vector<1x1x16x128xf32> to vector<16x128xf32>
    %296 = vector.shape_cast %293 : vector<16x128xf32> to vector<1x1x16x128xf32>
    tpu.vector_store %arg3[%c0_475, %c10_476, %c0_477, %c0_478], %296 {strides = array<i32>} : memref<1x25x16x128xf32, #tpu.memory_space<vmem>>, vector<1x1x16x128xf32>,
    %c0_479 = arith.constant 0 : index
    %c11_480 = arith.constant 11 : index
    %c0_481 = arith.constant 0 : index
    %c0_482 = arith.constant 0 : index
    %297 = vector.load %arg2[%c0_479, %c11_480, %c0_481, %c0_482] : memref<1x25x16x256xf32, #tpu.memory_space<vmem>>, vector<1x1x16x128xf32>
    %298 = vector.shape_cast %297 : vector<1x1x16x128xf32> to vector<16x128xf32>
    %c0_483 = arith.constant 0 : index
    %c11_484 = arith.constant 11 : index
    %c0_485 = arith.constant 0 : index
    %c1_486 = arith.constant 1 : index
    %299 = vector.load %arg2[%c0_483, %c11_484, %c0_485, %c1_486] : memref<1x25x16x256xf32, #tpu.memory_space<vmem>>, vector<1x1x16x128xf32>
    %300 = vector.shape_cast %299 : vector<1x1x16x128xf32> to vector<16x128xf32>
    %c0_487 = arith.constant 0 : index
    %c11_488 = arith.constant 11 : index
    %c0_489 = arith.constant 0 : index
    %c2_490 = arith.constant 2 : index
    %301 = vector.load %arg2[%c0_487, %c11_488, %c0_489, %c2_490] : memref<1x25x16x256xf32, #tpu.memory_space<vmem>>, vector<1x1x16x128xf32>
    %302 = vector.shape_cast %301 : vector<1x1x16x128xf32> to vector<16x128xf32>
    %c0_491 = arith.constant 0 : index
    %c11_492 = arith.constant 11 : index
    %c0_493 = arith.constant 0 : index
    %c9_494 = arith.constant 9 : index
    %303 = vector.load %arg2[%c0_491, %c11_492, %c0_493, %c9_494] : memref<1x25x16x256xf32, #tpu.memory_space<vmem>>, vector<1x1x16x128xf32>
    %304 = vector.shape_cast %303 : vector<1x1x16x128xf32> to vector<16x128xf32>
    %c0_495 = arith.constant 0 : index
    %c11_496 = arith.constant 11 : index
    %c0_497 = arith.constant 0 : index
    %c10_498 = arith.constant 10 : index
    %305 = vector.load %arg2[%c0_495, %c11_496, %c0_497, %c10_498] : memref<1x25x16x256xf32, #tpu.memory_space<vmem>>, vector<1x1x16x128xf32>
    %306 = vector.shape_cast %305 : vector<1x1x16x128xf32> to vector<16x128xf32>
    %c0_499 = arith.constant 0 : index
    %c11_500 = arith.constant 11 : index
    %c0_501 = arith.constant 0 : index
    %c11_502 = arith.constant 11 : index
    %307 = vector.load %arg2[%c0_499, %c11_500, %c0_501, %c11_502] : memref<1x25x16x256xf32, #tpu.memory_space<vmem>>, vector<1x1x16x128xf32>
    %308 = vector.shape_cast %307 : vector<1x1x16x128xf32> to vector<16x128xf32>
    %c0_503 = arith.constant 0 : index
    %c11_504 = arith.constant 11 : index
    %c0_505 = arith.constant 0 : index
    %c18_506 = arith.constant 18 : index
    %309 = vector.load %arg2[%c0_503, %c11_504, %c0_505, %c18_506] : memref<1x25x16x256xf32, #tpu.memory_space<vmem>>, vector<1x1x16x128xf32>
    %310 = vector.shape_cast %309 : vector<1x1x16x128xf32> to vector<16x128xf32>
    %c0_507 = arith.constant 0 : index
    %c11_508 = arith.constant 11 : index
    %c0_509 = arith.constant 0 : index
    %c19_510 = arith.constant 19 : index
    %311 = vector.load %arg2[%c0_507, %c11_508, %c0_509, %c19_510] : memref<1x25x16x256xf32, #tpu.memory_space<vmem>>, vector<1x1x16x128xf32>
    %312 = vector.shape_cast %311 : vector<1x1x16x128xf32> to vector<16x128xf32>
    %c0_511 = arith.constant 0 : index
    %c11_512 = arith.constant 11 : index
    %c0_513 = arith.constant 0 : index
    %c20_514 = arith.constant 20 : index
    %313 = vector.load %arg2[%c0_511, %c11_512, %c0_513, %c20_514] : memref<1x25x16x256xf32, #tpu.memory_space<vmem>>, vector<1x1x16x128xf32>
    %314 = vector.shape_cast %313 : vector<1x1x16x128xf32> to vector<16x128xf32>
    %315 = tpu.concatenate %298, %300, %302, %304, %306, %308, %310, %312, %314 in 0 : vector<16x128xf32>, vector<16x128xf32>, vector<16x128xf32>, vector<16x128xf32>, vector<16x128xf32>, vector<16x128xf32>, vector<16x128xf32>, vector<16x128xf32>, vector<16x128xf32> -> vector<144x128xf32>
    %cst_515 = arith.constant 0.000000e+00 : f32
    %316 = vector.broadcast %cst_515 : f32 to vector<144x128xf32>
    %317 = arith.maximumf %315, %316 : vector<144x128xf32>
    %c11_516 = arith.constant 11 : index
    %c0_517 = arith.constant 0 : index
    %c0_518 = arith.constant 0 : index
    %318 = vector.load %arg1[%c11_516, %c0_517, %c0_518] : memref<25x16x144xf32, #tpu.memory_space<vmem>>, vector<1x16x144xf32>
    %319 = vector.shape_cast %318 : vector<1x16x144xf32> to vector<16x144xf32>
    %cst_519 = arith.constant dense<0.000000e+00> : vector<16x128xf32>
    %320 = tpu.matmul %319, %317, %cst_519 {dimension_numbers = #tpu.dot_dimension_numbers<[1], [0], [0], [1], [0, 0, 1, 1], [], []>} : vector<16x144xf32>, vector<144x128xf32>, vector<16x128xf32> -> vector<16x128xf32>
    %c0_520 = arith.constant 0 : index
    %c11_521 = arith.constant 11 : index
    %c0_522 = arith.constant 0 : index
    %c0_523 = arith.constant 0 : index
    %321 = vector.load %arg3[%c0_520, %c11_521, %c0_522, %c0_523] : memref<1x25x16x128xf32, #tpu.memory_space<vmem>>, vector<1x1x16x128xf32>
    %322 = vector.shape_cast %321 : vector<1x1x16x128xf32> to vector<16x128xf32>
    %323 = vector.shape_cast %320 : vector<16x128xf32> to vector<1x1x16x128xf32>
    tpu.vector_store %arg3[%c0_520, %c11_521, %c0_522, %c0_523], %323 {strides = array<i32>} : memref<1x25x16x128xf32, #tpu.memory_space<vmem>>, vector<1x1x16x128xf32>,
    %c0_524 = arith.constant 0 : index
    %c12 = arith.constant 12 : index
    %c0_525 = arith.constant 0 : index
    %c0_526 = arith.constant 0 : index
    %324 = vector.load %arg2[%c0_524, %c12, %c0_525, %c0_526] : memref<1x25x16x256xf32, #tpu.memory_space<vmem>>, vector<1x1x16x128xf32>
    %325 = vector.shape_cast %324 : vector<1x1x16x128xf32> to vector<16x128xf32>
    %c0_527 = arith.constant 0 : index
    %c12_528 = arith.constant 12 : index
    %c0_529 = arith.constant 0 : index
    %c1_530 = arith.constant 1 : index
    %326 = vector.load %arg2[%c0_527, %c12_528, %c0_529, %c1_530] : memref<1x25x16x256xf32, #tpu.memory_space<vmem>>, vector<1x1x16x128xf32>
    %327 = vector.shape_cast %326 : vector<1x1x16x128xf32> to vector<16x128xf32>
    %c0_531 = arith.constant 0 : index
    %c12_532 = arith.constant 12 : index
    %c0_533 = arith.constant 0 : index
    %c2_534 = arith.constant 2 : index
    %328 = vector.load %arg2[%c0_531, %c12_532, %c0_533, %c2_534] : memref<1x25x16x256xf32, #tpu.memory_space<vmem>>, vector<1x1x16x128xf32>
    %329 = vector.shape_cast %328 : vector<1x1x16x128xf32> to vector<16x128xf32>
    %c0_535 = arith.constant 0 : index
    %c12_536 = arith.constant 12 : index
    %c0_537 = arith.constant 0 : index
    %c9_538 = arith.constant 9 : index
    %330 = vector.load %arg2[%c0_535, %c12_536, %c0_537, %c9_538] : memref<1x25x16x256xf32, #tpu.memory_space<vmem>>, vector<1x1x16x128xf32>
    %331 = vector.shape_cast %330 : vector<1x1x16x128xf32> to vector<16x128xf32>
    %c0_539 = arith.constant 0 : index
    %c12_540 = arith.constant 12 : index
    %c0_541 = arith.constant 0 : index
    %c10_542 = arith.constant 10 : index
    %332 = vector.load %arg2[%c0_539, %c12_540, %c0_541, %c10_542] : memref<1x25x16x256xf32, #tpu.memory_space<vmem>>, vector<1x1x16x128xf32>
    %333 = vector.shape_cast %332 : vector<1x1x16x128xf32> to vector<16x128xf32>
    %c0_543 = arith.constant 0 : index
    %c12_544 = arith.constant 12 : index
    %c0_545 = arith.constant 0 : index
    %c11_546 = arith.constant 11 : index
    %334 = vector.load %arg2[%c0_543, %c12_544, %c0_545, %c11_546] : memref<1x25x16x256xf32, #tpu.memory_space<vmem>>, vector<1x1x16x128xf32>
    %335 = vector.shape_cast %334 : vector<1x1x16x128xf32> to vector<16x128xf32>
    %c0_547 = arith.constant 0 : index
    %c12_548 = arith.constant 12 : index
    %c0_549 = arith.constant 0 : index
    %c18_550 = arith.constant 18 : index
    %336 = vector.load %arg2[%c0_547, %c12_548, %c0_549, %c18_550] : memref<1x25x16x256xf32, #tpu.memory_space<vmem>>, vector<1x1x16x128xf32>
    %337 = vector.shape_cast %336 : vector<1x1x16x128xf32> to vector<16x128xf32>
    %c0_551 = arith.constant 0 : index
    %c12_552 = arith.constant 12 : index
    %c0_553 = arith.constant 0 : index
    %c19_554 = arith.constant 19 : index
    %338 = vector.load %arg2[%c0_551, %c12_552, %c0_553, %c19_554] : memref<1x25x16x256xf32, #tpu.memory_space<vmem>>, vector<1x1x16x128xf32>
    %339 = vector.shape_cast %338 : vector<1x1x16x128xf32> to vector<16x128xf32>
    %c0_555 = arith.constant 0 : index
    %c12_556 = arith.constant 12 : index
    %c0_557 = arith.constant 0 : index
    %c20_558 = arith.constant 20 : index
    %340 = vector.load %arg2[%c0_555, %c12_556, %c0_557, %c20_558] : memref<1x25x16x256xf32, #tpu.memory_space<vmem>>, vector<1x1x16x128xf32>
    %341 = vector.shape_cast %340 : vector<1x1x16x128xf32> to vector<16x128xf32>
    %342 = tpu.concatenate %325, %327, %329, %331, %333, %335, %337, %339, %341 in 0 : vector<16x128xf32>, vector<16x128xf32>, vector<16x128xf32>, vector<16x128xf32>, vector<16x128xf32>, vector<16x128xf32>, vector<16x128xf32>, vector<16x128xf32>, vector<16x128xf32> -> vector<144x128xf32>
    %cst_559 = arith.constant 0.000000e+00 : f32
    %343 = vector.broadcast %cst_559 : f32 to vector<144x128xf32>
    %344 = arith.maximumf %342, %343 : vector<144x128xf32>
    %c12_560 = arith.constant 12 : index
    %c0_561 = arith.constant 0 : index
    %c0_562 = arith.constant 0 : index
    %345 = vector.load %arg1[%c12_560, %c0_561, %c0_562] : memref<25x16x144xf32, #tpu.memory_space<vmem>>, vector<1x16x144xf32>
    %346 = vector.shape_cast %345 : vector<1x16x144xf32> to vector<16x144xf32>
    %cst_563 = arith.constant dense<0.000000e+00> : vector<16x128xf32>
    %347 = tpu.matmul %346, %344, %cst_563 {dimension_numbers = #tpu.dot_dimension_numbers<[1], [0], [0], [1], [0, 0, 1, 1], [], []>} : vector<16x144xf32>, vector<144x128xf32>, vector<16x128xf32> -> vector<16x128xf32>
    %c0_564 = arith.constant 0 : index
    %c12_565 = arith.constant 12 : index
    %c0_566 = arith.constant 0 : index
    %c0_567 = arith.constant 0 : index
    %348 = vector.load %arg3[%c0_564, %c12_565, %c0_566, %c0_567] : memref<1x25x16x128xf32, #tpu.memory_space<vmem>>, vector<1x1x16x128xf32>
    %349 = vector.shape_cast %348 : vector<1x1x16x128xf32> to vector<16x128xf32>
    %350 = vector.shape_cast %347 : vector<16x128xf32> to vector<1x1x16x128xf32>
    tpu.vector_store %arg3[%c0_564, %c12_565, %c0_566, %c0_567], %350 {strides = array<i32>} : memref<1x25x16x128xf32, #tpu.memory_space<vmem>>, vector<1x1x16x128xf32>,
    %c0_568 = arith.constant 0 : index
    %c13 = arith.constant 13 : index
    %c0_569 = arith.constant 0 : index
    %c0_570 = arith.constant 0 : index
    %351 = vector.load %arg2[%c0_568, %c13, %c0_569, %c0_570] : memref<1x25x16x256xf32, #tpu.memory_space<vmem>>, vector<1x1x16x128xf32>
    %352 = vector.shape_cast %351 : vector<1x1x16x128xf32> to vector<16x128xf32>
    %c0_571 = arith.constant 0 : index
    %c13_572 = arith.constant 13 : index
    %c0_573 = arith.constant 0 : index
    %c1_574 = arith.constant 1 : index
    %353 = vector.load %arg2[%c0_571, %c13_572, %c0_573, %c1_574] : memref<1x25x16x256xf32, #tpu.memory_space<vmem>>, vector<1x1x16x128xf32>
    %354 = vector.shape_cast %353 : vector<1x1x16x128xf32> to vector<16x128xf32>
    %c0_575 = arith.constant 0 : index
    %c13_576 = arith.constant 13 : index
    %c0_577 = arith.constant 0 : index
    %c2_578 = arith.constant 2 : index
    %355 = vector.load %arg2[%c0_575, %c13_576, %c0_577, %c2_578] : memref<1x25x16x256xf32, #tpu.memory_space<vmem>>, vector<1x1x16x128xf32>
    %356 = vector.shape_cast %355 : vector<1x1x16x128xf32> to vector<16x128xf32>
    %c0_579 = arith.constant 0 : index
    %c13_580 = arith.constant 13 : index
    %c0_581 = arith.constant 0 : index
    %c9_582 = arith.constant 9 : index
    %357 = vector.load %arg2[%c0_579, %c13_580, %c0_581, %c9_582] : memref<1x25x16x256xf32, #tpu.memory_space<vmem>>, vector<1x1x16x128xf32>
    %358 = vector.shape_cast %357 : vector<1x1x16x128xf32> to vector<16x128xf32>
    %c0_583 = arith.constant 0 : index
    %c13_584 = arith.constant 13 : index
    %c0_585 = arith.constant 0 : index
    %c10_586 = arith.constant 10 : index
    %359 = vector.load %arg2[%c0_583, %c13_584, %c0_585, %c10_586] : memref<1x25x16x256xf32, #tpu.memory_space<vmem>>, vector<1x1x16x128xf32>
    %360 = vector.shape_cast %359 : vector<1x1x16x128xf32> to vector<16x128xf32>
    %c0_587 = arith.constant 0 : index
    %c13_588 = arith.constant 13 : index
    %c0_589 = arith.constant 0 : index
    %c11_590 = arith.constant 11 : index
    %361 = vector.load %arg2[%c0_587, %c13_588, %c0_589, %c11_590] : memref<1x25x16x256xf32, #tpu.memory_space<vmem>>, vector<1x1x16x128xf32>
    %362 = vector.shape_cast %361 : vector<1x1x16x128xf32> to vector<16x128xf32>
    %c0_591 = arith.constant 0 : index
    %c13_592 = arith.constant 13 : index
    %c0_593 = arith.constant 0 : index
    %c18_594 = arith.constant 18 : index
    %363 = vector.load %arg2[%c0_591, %c13_592, %c0_593, %c18_594] : memref<1x25x16x256xf32, #tpu.memory_space<vmem>>, vector<1x1x16x128xf32>
    %364 = vector.shape_cast %363 : vector<1x1x16x128xf32> to vector<16x128xf32>
    %c0_595 = arith.constant 0 : index
    %c13_596 = arith.constant 13 : index
    %c0_597 = arith.constant 0 : index
    %c19_598 = arith.constant 19 : index
    %365 = vector.load %arg2[%c0_595, %c13_596, %c0_597, %c19_598] : memref<1x25x16x256xf32, #tpu.memory_space<vmem>>, vector<1x1x16x128xf32>
    %366 = vector.shape_cast %365 : vector<1x1x16x128xf32> to vector<16x128xf32>
    %c0_599 = arith.constant 0 : index
    %c13_600 = arith.constant 13 : index
    %c0_601 = arith.constant 0 : index
    %c20_602 = arith.constant 20 : index
    %367 = vector.load %arg2[%c0_599, %c13_600, %c0_601, %c20_602] : memref<1x25x16x256xf32, #tpu.memory_space<vmem>>, vector<1x1x16x128xf32>
    %368 = vector.shape_cast %367 : vector<1x1x16x128xf32> to vector<16x128xf32>
    %369 = tpu.concatenate %352, %354, %356, %358, %360, %362, %364, %366, %368 in 0 : vector<16x128xf32>, vector<16x128xf32>, vector<16x128xf32>, vector<16x128xf32>, vector<16x128xf32>, vector<16x128xf32>, vector<16x128xf32>, vector<16x128xf32>, vector<16x128xf32> -> vector<144x128xf32>
    %cst_603 = arith.constant 0.000000e+00 : f32
    %370 = vector.broadcast %cst_603 : f32 to vector<144x128xf32>
    %371 = arith.maximumf %369, %370 : vector<144x128xf32>
    %c13_604 = arith.constant 13 : index
    %c0_605 = arith.constant 0 : index
    %c0_606 = arith.constant 0 : index
    %372 = vector.load %arg1[%c13_604, %c0_605, %c0_606] : memref<25x16x144xf32, #tpu.memory_space<vmem>>, vector<1x16x144xf32>
    %373 = vector.shape_cast %372 : vector<1x16x144xf32> to vector<16x144xf32>
    %cst_607 = arith.constant dense<0.000000e+00> : vector<16x128xf32>
    %374 = tpu.matmul %373, %371, %cst_607 {dimension_numbers = #tpu.dot_dimension_numbers<[1], [0], [0], [1], [0, 0, 1, 1], [], []>} : vector<16x144xf32>, vector<144x128xf32>, vector<16x128xf32> -> vector<16x128xf32>
    %c0_608 = arith.constant 0 : index
    %c13_609 = arith.constant 13 : index
    %c0_610 = arith.constant 0 : index
    %c0_611 = arith.constant 0 : index
    %375 = vector.load %arg3[%c0_608, %c13_609, %c0_610, %c0_611] : memref<1x25x16x128xf32, #tpu.memory_space<vmem>>, vector<1x1x16x128xf32>
    %376 = vector.shape_cast %375 : vector<1x1x16x128xf32> to vector<16x128xf32>
    %377 = vector.shape_cast %374 : vector<16x128xf32> to vector<1x1x16x128xf32>
    tpu.vector_store %arg3[%c0_608, %c13_609, %c0_610, %c0_611], %377 {strides = array<i32>} : memref<1x25x16x128xf32, #tpu.memory_space<vmem>>, vector<1x1x16x128xf32>,
    %c0_612 = arith.constant 0 : index
    %c14 = arith.constant 14 : index
    %c0_613 = arith.constant 0 : index
    %c0_614 = arith.constant 0 : index
    %378 = vector.load %arg2[%c0_612, %c14, %c0_613, %c0_614] : memref<1x25x16x256xf32, #tpu.memory_space<vmem>>, vector<1x1x16x128xf32>
    %379 = vector.shape_cast %378 : vector<1x1x16x128xf32> to vector<16x128xf32>
    %c0_615 = arith.constant 0 : index
    %c14_616 = arith.constant 14 : index
    %c0_617 = arith.constant 0 : index
    %c1_618 = arith.constant 1 : index
    %380 = vector.load %arg2[%c0_615, %c14_616, %c0_617, %c1_618] : memref<1x25x16x256xf32, #tpu.memory_space<vmem>>, vector<1x1x16x128xf32>
    %381 = vector.shape_cast %380 : vector<1x1x16x128xf32> to vector<16x128xf32>
    %c0_619 = arith.constant 0 : index
    %c14_620 = arith.constant 14 : index
    %c0_621 = arith.constant 0 : index
    %c2_622 = arith.constant 2 : index
    %382 = vector.load %arg2[%c0_619, %c14_620, %c0_621, %c2_622] : memref<1x25x16x256xf32, #tpu.memory_space<vmem>>, vector<1x1x16x128xf32>
    %383 = vector.shape_cast %382 : vector<1x1x16x128xf32> to vector<16x128xf32>
    %c0_623 = arith.constant 0 : index
    %c14_624 = arith.constant 14 : index
    %c0_625 = arith.constant 0 : index
    %c9_626 = arith.constant 9 : index
    %384 = vector.load %arg2[%c0_623, %c14_624, %c0_625, %c9_626] : memref<1x25x16x256xf32, #tpu.memory_space<vmem>>, vector<1x1x16x128xf32>
    %385 = vector.shape_cast %384 : vector<1x1x16x128xf32> to vector<16x128xf32>
    %c0_627 = arith.constant 0 : index
    %c14_628 = arith.constant 14 : index
    %c0_629 = arith.constant 0 : index
    %c10_630 = arith.constant 10 : index
    %386 = vector.load %arg2[%c0_627, %c14_628, %c0_629, %c10_630] : memref<1x25x16x256xf32, #tpu.memory_space<vmem>>, vector<1x1x16x128xf32>
    %387 = vector.shape_cast %386 : vector<1x1x16x128xf32> to vector<16x128xf32>
    %c0_631 = arith.constant 0 : index
    %c14_632 = arith.constant 14 : index
    %c0_633 = arith.constant 0 : index
    %c11_634 = arith.constant 11 : index
    %388 = vector.load %arg2[%c0_631, %c14_632, %c0_633, %c11_634] : memref<1x25x16x256xf32, #tpu.memory_space<vmem>>, vector<1x1x16x128xf32>
    %389 = vector.shape_cast %388 : vector<1x1x16x128xf32> to vector<16x128xf32>
    %c0_635 = arith.constant 0 : index
    %c14_636 = arith.constant 14 : index
    %c0_637 = arith.constant 0 : index
    %c18_638 = arith.constant 18 : index
    %390 = vector.load %arg2[%c0_635, %c14_636, %c0_637, %c18_638] : memref<1x25x16x256xf32, #tpu.memory_space<vmem>>, vector<1x1x16x128xf32>
    %391 = vector.shape_cast %390 : vector<1x1x16x128xf32> to vector<16x128xf32>
    %c0_639 = arith.constant 0 : index
    %c14_640 = arith.constant 14 : index
    %c0_641 = arith.constant 0 : index
    %c19_642 = arith.constant 19 : index
    %392 = vector.load %arg2[%c0_639, %c14_640, %c0_641, %c19_642] : memref<1x25x16x256xf32, #tpu.memory_space<vmem>>, vector<1x1x16x128xf32>
    %393 = vector.shape_cast %392 : vector<1x1x16x128xf32> to vector<16x128xf32>
    %c0_643 = arith.constant 0 : index
    %c14_644 = arith.constant 14 : index
    %c0_645 = arith.constant 0 : index
    %c20_646 = arith.constant 20 : index
    %394 = vector.load %arg2[%c0_643, %c14_644, %c0_645, %c20_646] : memref<1x25x16x256xf32, #tpu.memory_space<vmem>>, vector<1x1x16x128xf32>
    %395 = vector.shape_cast %394 : vector<1x1x16x128xf32> to vector<16x128xf32>
    %396 = tpu.concatenate %379, %381, %383, %385, %387, %389, %391, %393, %395 in 0 : vector<16x128xf32>, vector<16x128xf32>, vector<16x128xf32>, vector<16x128xf32>, vector<16x128xf32>, vector<16x128xf32>, vector<16x128xf32>, vector<16x128xf32>, vector<16x128xf32> -> vector<144x128xf32>
    %cst_647 = arith.constant 0.000000e+00 : f32
    %397 = vector.broadcast %cst_647 : f32 to vector<144x128xf32>
    %398 = arith.maximumf %396, %397 : vector<144x128xf32>
    %c14_648 = arith.constant 14 : index
    %c0_649 = arith.constant 0 : index
    %c0_650 = arith.constant 0 : index
    %399 = vector.load %arg1[%c14_648, %c0_649, %c0_650] : memref<25x16x144xf32, #tpu.memory_space<vmem>>, vector<1x16x144xf32>
    %400 = vector.shape_cast %399 : vector<1x16x144xf32> to vector<16x144xf32>
    %cst_651 = arith.constant dense<0.000000e+00> : vector<16x128xf32>
    %401 = tpu.matmul %400, %398, %cst_651 {dimension_numbers = #tpu.dot_dimension_numbers<[1], [0], [0], [1], [0, 0, 1, 1], [], []>} : vector<16x144xf32>, vector<144x128xf32>, vector<16x128xf32> -> vector<16x128xf32>
    %c0_652 = arith.constant 0 : index
    %c14_653 = arith.constant 14 : index
    %c0_654 = arith.constant 0 : index
    %c0_655 = arith.constant 0 : index
    %402 = vector.load %arg3[%c0_652, %c14_653, %c0_654, %c0_655] : memref<1x25x16x128xf32, #tpu.memory_space<vmem>>, vector<1x1x16x128xf32>
    %403 = vector.shape_cast %402 : vector<1x1x16x128xf32> to vector<16x128xf32>
    %404 = vector.shape_cast %401 : vector<16x128xf32> to vector<1x1x16x128xf32>
    tpu.vector_store %arg3[%c0_652, %c14_653, %c0_654, %c0_655], %404 {strides = array<i32>} : memref<1x25x16x128xf32, #tpu.memory_space<vmem>>, vector<1x1x16x128xf32>,
    %c0_656 = arith.constant 0 : index
    %c15 = arith.constant 15 : index
    %c0_657 = arith.constant 0 : index
    %c0_658 = arith.constant 0 : index
    %405 = vector.load %arg2[%c0_656, %c15, %c0_657, %c0_658] : memref<1x25x16x256xf32, #tpu.memory_space<vmem>>, vector<1x1x16x128xf32>
    %406 = vector.shape_cast %405 : vector<1x1x16x128xf32> to vector<16x128xf32>
    %c0_659 = arith.constant 0 : index
    %c15_660 = arith.constant 15 : index
    %c0_661 = arith.constant 0 : index
    %c1_662 = arith.constant 1 : index
    %407 = vector.load %arg2[%c0_659, %c15_660, %c0_661, %c1_662] : memref<1x25x16x256xf32, #tpu.memory_space<vmem>>, vector<1x1x16x128xf32>
    %408 = vector.shape_cast %407 : vector<1x1x16x128xf32> to vector<16x128xf32>
    %c0_663 = arith.constant 0 : index
    %c15_664 = arith.constant 15 : index
    %c0_665 = arith.constant 0 : index
    %c2_666 = arith.constant 2 : index
    %409 = vector.load %arg2[%c0_663, %c15_664, %c0_665, %c2_666] : memref<1x25x16x256xf32, #tpu.memory_space<vmem>>, vector<1x1x16x128xf32>
    %410 = vector.shape_cast %409 : vector<1x1x16x128xf32> to vector<16x128xf32>
    %c0_667 = arith.constant 0 : index
    %c15_668 = arith.constant 15 : index
    %c0_669 = arith.constant 0 : index
    %c9_670 = arith.constant 9 : index
    %411 = vector.load %arg2[%c0_667, %c15_668, %c0_669, %c9_670] : memref<1x25x16x256xf32, #tpu.memory_space<vmem>>, vector<1x1x16x128xf32>
    %412 = vector.shape_cast %411 : vector<1x1x16x128xf32> to vector<16x128xf32>
    %c0_671 = arith.constant 0 : index
    %c15_672 = arith.constant 15 : index
    %c0_673 = arith.constant 0 : index
    %c10_674 = arith.constant 10 : index
    %413 = vector.load %arg2[%c0_671, %c15_672, %c0_673, %c10_674] : memref<1x25x16x256xf32, #tpu.memory_space<vmem>>, vector<1x1x16x128xf32>
    %414 = vector.shape_cast %413 : vector<1x1x16x128xf32> to vector<16x128xf32>
    %c0_675 = arith.constant 0 : index
    %c15_676 = arith.constant 15 : index
    %c0_677 = arith.constant 0 : index
    %c11_678 = arith.constant 11 : index
    %415 = vector.load %arg2[%c0_675, %c15_676, %c0_677, %c11_678] : memref<1x25x16x256xf32, #tpu.memory_space<vmem>>, vector<1x1x16x128xf32>
    %416 = vector.shape_cast %415 : vector<1x1x16x128xf32> to vector<16x128xf32>
    %c0_679 = arith.constant 0 : index
    %c15_680 = arith.constant 15 : index
    %c0_681 = arith.constant 0 : index
    %c18_682 = arith.constant 18 : index
    %417 = vector.load %arg2[%c0_679, %c15_680, %c0_681, %c18_682] : memref<1x25x16x256xf32, #tpu.memory_space<vmem>>, vector<1x1x16x128xf32>
    %418 = vector.shape_cast %417 : vector<1x1x16x128xf32> to vector<16x128xf32>
    %c0_683 = arith.constant 0 : index
    %c15_684 = arith.constant 15 : index
    %c0_685 = arith.constant 0 : index
    %c19_686 = arith.constant 19 : index
    %419 = vector.load %arg2[%c0_683, %c15_684, %c0_685, %c19_686] : memref<1x25x16x256xf32, #tpu.memory_space<vmem>>, vector<1x1x16x128xf32>
    %420 = vector.shape_cast %419 : vector<1x1x16x128xf32> to vector<16x128xf32>
    %c0_687 = arith.constant 0 : index
    %c15_688 = arith.constant 15 : index
    %c0_689 = arith.constant 0 : index
    %c20_690 = arith.constant 20 : index
    %421 = vector.load %arg2[%c0_687, %c15_688, %c0_689, %c20_690] : memref<1x25x16x256xf32, #tpu.memory_space<vmem>>, vector<1x1x16x128xf32>
    %422 = vector.shape_cast %421 : vector<1x1x16x128xf32> to vector<16x128xf32>
    %423 = tpu.concatenate %406, %408, %410, %412, %414, %416, %418, %420, %422 in 0 : vector<16x128xf32>, vector<16x128xf32>, vector<16x128xf32>, vector<16x128xf32>, vector<16x128xf32>, vector<16x128xf32>, vector<16x128xf32>, vector<16x128xf32>, vector<16x128xf32> -> vector<144x128xf32>
    %cst_691 = arith.constant 0.000000e+00 : f32
    %424 = vector.broadcast %cst_691 : f32 to vector<144x128xf32>
    %425 = arith.maximumf %423, %424 : vector<144x128xf32>
    %c15_692 = arith.constant 15 : index
    %c0_693 = arith.constant 0 : index
    %c0_694 = arith.constant 0 : index
    %426 = vector.load %arg1[%c15_692, %c0_693, %c0_694] : memref<25x16x144xf32, #tpu.memory_space<vmem>>, vector<1x16x144xf32>
    %427 = vector.shape_cast %426 : vector<1x16x144xf32> to vector<16x144xf32>
    %cst_695 = arith.constant dense<0.000000e+00> : vector<16x128xf32>
    %428 = tpu.matmul %427, %425, %cst_695 {dimension_numbers = #tpu.dot_dimension_numbers<[1], [0], [0], [1], [0, 0, 1, 1], [], []>} : vector<16x144xf32>, vector<144x128xf32>, vector<16x128xf32> -> vector<16x128xf32>
    %c0_696 = arith.constant 0 : index
    %c15_697 = arith.constant 15 : index
    %c0_698 = arith.constant 0 : index
    %c0_699 = arith.constant 0 : index
    %429 = vector.load %arg3[%c0_696, %c15_697, %c0_698, %c0_699] : memref<1x25x16x128xf32, #tpu.memory_space<vmem>>, vector<1x1x16x128xf32>
    %430 = vector.shape_cast %429 : vector<1x1x16x128xf32> to vector<16x128xf32>
    %431 = vector.shape_cast %428 : vector<16x128xf32> to vector<1x1x16x128xf32>
    tpu.vector_store %arg3[%c0_696, %c15_697, %c0_698, %c0_699], %431 {strides = array<i32>} : memref<1x25x16x128xf32, #tpu.memory_space<vmem>>, vector<1x1x16x128xf32>,
    %c0_700 = arith.constant 0 : index
    %c16 = arith.constant 16 : index
    %c0_701 = arith.constant 0 : index
    %c0_702 = arith.constant 0 : index
    %432 = vector.load %arg2[%c0_700, %c16, %c0_701, %c0_702] : memref<1x25x16x256xf32, #tpu.memory_space<vmem>>, vector<1x1x16x128xf32>
    %433 = vector.shape_cast %432 : vector<1x1x16x128xf32> to vector<16x128xf32>
    %c0_703 = arith.constant 0 : index
    %c16_704 = arith.constant 16 : index
    %c0_705 = arith.constant 0 : index
    %c1_706 = arith.constant 1 : index
    %434 = vector.load %arg2[%c0_703, %c16_704, %c0_705, %c1_706] : memref<1x25x16x256xf32, #tpu.memory_space<vmem>>, vector<1x1x16x128xf32>
    %435 = vector.shape_cast %434 : vector<1x1x16x128xf32> to vector<16x128xf32>
    %c0_707 = arith.constant 0 : index
    %c16_708 = arith.constant 16 : index
    %c0_709 = arith.constant 0 : index
    %c2_710 = arith.constant 2 : index
    %436 = vector.load %arg2[%c0_707, %c16_708, %c0_709, %c2_710] : memref<1x25x16x256xf32, #tpu.memory_space<vmem>>, vector<1x1x16x128xf32>
    %437 = vector.shape_cast %436 : vector<1x1x16x128xf32> to vector<16x128xf32>
    %c0_711 = arith.constant 0 : index
    %c16_712 = arith.constant 16 : index
    %c0_713 = arith.constant 0 : index
    %c9_714 = arith.constant 9 : index
    %438 = vector.load %arg2[%c0_711, %c16_712, %c0_713, %c9_714] : memref<1x25x16x256xf32, #tpu.memory_space<vmem>>, vector<1x1x16x128xf32>
    %439 = vector.shape_cast %438 : vector<1x1x16x128xf32> to vector<16x128xf32>
    %c0_715 = arith.constant 0 : index
    %c16_716 = arith.constant 16 : index
    %c0_717 = arith.constant 0 : index
    %c10_718 = arith.constant 10 : index
    %440 = vector.load %arg2[%c0_715, %c16_716, %c0_717, %c10_718] : memref<1x25x16x256xf32, #tpu.memory_space<vmem>>, vector<1x1x16x128xf32>
    %441 = vector.shape_cast %440 : vector<1x1x16x128xf32> to vector<16x128xf32>
    %c0_719 = arith.constant 0 : index
    %c16_720 = arith.constant 16 : index
    %c0_721 = arith.constant 0 : index
    %c11_722 = arith.constant 11 : index
    %442 = vector.load %arg2[%c0_719, %c16_720, %c0_721, %c11_722] : memref<1x25x16x256xf32, #tpu.memory_space<vmem>>, vector<1x1x16x128xf32>
    %443 = vector.shape_cast %442 : vector<1x1x16x128xf32> to vector<16x128xf32>
    %c0_723 = arith.constant 0 : index
    %c16_724 = arith.constant 16 : index
    %c0_725 = arith.constant 0 : index
    %c18_726 = arith.constant 18 : index
    %444 = vector.load %arg2[%c0_723, %c16_724, %c0_725, %c18_726] : memref<1x25x16x256xf32, #tpu.memory_space<vmem>>, vector<1x1x16x128xf32>
    %445 = vector.shape_cast %444 : vector<1x1x16x128xf32> to vector<16x128xf32>
    %c0_727 = arith.constant 0 : index
    %c16_728 = arith.constant 16 : index
    %c0_729 = arith.constant 0 : index
    %c19_730 = arith.constant 19 : index
    %446 = vector.load %arg2[%c0_727, %c16_728, %c0_729, %c19_730] : memref<1x25x16x256xf32, #tpu.memory_space<vmem>>, vector<1x1x16x128xf32>
    %447 = vector.shape_cast %446 : vector<1x1x16x128xf32> to vector<16x128xf32>
    %c0_731 = arith.constant 0 : index
    %c16_732 = arith.constant 16 : index
    %c0_733 = arith.constant 0 : index
    %c20_734 = arith.constant 20 : index
    %448 = vector.load %arg2[%c0_731, %c16_732, %c0_733, %c20_734] : memref<1x25x16x256xf32, #tpu.memory_space<vmem>>, vector<1x1x16x128xf32>
    %449 = vector.shape_cast %448 : vector<1x1x16x128xf32> to vector<16x128xf32>
    %450 = tpu.concatenate %433, %435, %437, %439, %441, %443, %445, %447, %449 in 0 : vector<16x128xf32>, vector<16x128xf32>, vector<16x128xf32>, vector<16x128xf32>, vector<16x128xf32>, vector<16x128xf32>, vector<16x128xf32>, vector<16x128xf32>, vector<16x128xf32> -> vector<144x128xf32>
    %cst_735 = arith.constant 0.000000e+00 : f32
    %451 = vector.broadcast %cst_735 : f32 to vector<144x128xf32>
    %452 = arith.maximumf %450, %451 : vector<144x128xf32>
    %c16_736 = arith.constant 16 : index
    %c0_737 = arith.constant 0 : index
    %c0_738 = arith.constant 0 : index
    %453 = vector.load %arg1[%c16_736, %c0_737, %c0_738] : memref<25x16x144xf32, #tpu.memory_space<vmem>>, vector<1x16x144xf32>
    %454 = vector.shape_cast %453 : vector<1x16x144xf32> to vector<16x144xf32>
    %cst_739 = arith.constant dense<0.000000e+00> : vector<16x128xf32>
    %455 = tpu.matmul %454, %452, %cst_739 {dimension_numbers = #tpu.dot_dimension_numbers<[1], [0], [0], [1], [0, 0, 1, 1], [], []>} : vector<16x144xf32>, vector<144x128xf32>, vector<16x128xf32> -> vector<16x128xf32>
    %c0_740 = arith.constant 0 : index
    %c16_741 = arith.constant 16 : index
    %c0_742 = arith.constant 0 : index
    %c0_743 = arith.constant 0 : index
    %456 = vector.load %arg3[%c0_740, %c16_741, %c0_742, %c0_743] : memref<1x25x16x128xf32, #tpu.memory_space<vmem>>, vector<1x1x16x128xf32>
    %457 = vector.shape_cast %456 : vector<1x1x16x128xf32> to vector<16x128xf32>
    %458 = vector.shape_cast %455 : vector<16x128xf32> to vector<1x1x16x128xf32>
    tpu.vector_store %arg3[%c0_740, %c16_741, %c0_742, %c0_743], %458 {strides = array<i32>} : memref<1x25x16x128xf32, #tpu.memory_space<vmem>>, vector<1x1x16x128xf32>,
    %c0_744 = arith.constant 0 : index
    %c17 = arith.constant 17 : index
    %c0_745 = arith.constant 0 : index
    %c0_746 = arith.constant 0 : index
    %459 = vector.load %arg2[%c0_744, %c17, %c0_745, %c0_746] : memref<1x25x16x256xf32, #tpu.memory_space<vmem>>, vector<1x1x16x128xf32>
    %460 = vector.shape_cast %459 : vector<1x1x16x128xf32> to vector<16x128xf32>
    %c0_747 = arith.constant 0 : index
    %c17_748 = arith.constant 17 : index
    %c0_749 = arith.constant 0 : index
    %c1_750 = arith.constant 1 : index
    %461 = vector.load %arg2[%c0_747, %c17_748, %c0_749, %c1_750] : memref<1x25x16x256xf32, #tpu.memory_space<vmem>>, vector<1x1x16x128xf32>
    %462 = vector.shape_cast %461 : vector<1x1x16x128xf32> to vector<16x128xf32>
    %c0_751 = arith.constant 0 : index
    %c17_752 = arith.constant 17 : index
    %c0_753 = arith.constant 0 : index
    %c2_754 = arith.constant 2 : index
    %463 = vector.load %arg2[%c0_751, %c17_752, %c0_753, %c2_754] : memref<1x25x16x256xf32, #tpu.memory_space<vmem>>, vector<1x1x16x128xf32>
    %464 = vector.shape_cast %463 : vector<1x1x16x128xf32> to vector<16x128xf32>
    %c0_755 = arith.constant 0 : index
    %c17_756 = arith.constant 17 : index
    %c0_757 = arith.constant 0 : index
    %c9_758 = arith.constant 9 : index
    %465 = vector.load %arg2[%c0_755, %c17_756, %c0_757, %c9_758] : memref<1x25x16x256xf32, #tpu.memory_space<vmem>>, vector<1x1x16x128xf32>
    %466 = vector.shape_cast %465 : vector<1x1x16x128xf32> to vector<16x128xf32>
    %c0_759 = arith.constant 0 : index
    %c17_760 = arith.constant 17 : index
    %c0_761 = arith.constant 0 : index
    %c10_762 = arith.constant 10 : index
    %467 = vector.load %arg2[%c0_759, %c17_760, %c0_761, %c10_762] : memref<1x25x16x256xf32, #tpu.memory_space<vmem>>, vector<1x1x16x128xf32>
    %468 = vector.shape_cast %467 : vector<1x1x16x128xf32> to vector<16x128xf32>
    %c0_763 = arith.constant 0 : index
    %c17_764 = arith.constant 17 : index
    %c0_765 = arith.constant 0 : index
    %c11_766 = arith.constant 11 : index
    %469 = vector.load %arg2[%c0_763, %c17_764, %c0_765, %c11_766] : memref<1x25x16x256xf32, #tpu.memory_space<vmem>>, vector<1x1x16x128xf32>
    %470 = vector.shape_cast %469 : vector<1x1x16x128xf32> to vector<16x128xf32>
    %c0_767 = arith.constant 0 : index
    %c17_768 = arith.constant 17 : index
    %c0_769 = arith.constant 0 : index
    %c18_770 = arith.constant 18 : index
    %471 = vector.load %arg2[%c0_767, %c17_768, %c0_769, %c18_770] : memref<1x25x16x256xf32, #tpu.memory_space<vmem>>, vector<1x1x16x128xf32>
    %472 = vector.shape_cast %471 : vector<1x1x16x128xf32> to vector<16x128xf32>
    %c0_771 = arith.constant 0 : index
    %c17_772 = arith.constant 17 : index
    %c0_773 = arith.constant 0 : index
    %c19_774 = arith.constant 19 : index
    %473 = vector.load %arg2[%c0_771, %c17_772, %c0_773, %c19_774] : memref<1x25x16x256xf32, #tpu.memory_space<vmem>>, vector<1x1x16x128xf32>
    %474 = vector.shape_cast %473 : vector<1x1x16x128xf32> to vector<16x128xf32>
    %c0_775 = arith.constant 0 : index
    %c17_776 = arith.constant 17 : index
    %c0_777 = arith.constant 0 : index
    %c20_778 = arith.constant 20 : index
    %475 = vector.load %arg2[%c0_775, %c17_776, %c0_777, %c20_778] : memref<1x25x16x256xf32, #tpu.memory_space<vmem>>, vector<1x1x16x128xf32>
    %476 = vector.shape_cast %475 : vector<1x1x16x128xf32> to vector<16x128xf32>
    %477 = tpu.concatenate %460, %462, %464, %466, %468, %470, %472, %474, %476 in 0 : vector<16x128xf32>, vector<16x128xf32>, vector<16x128xf32>, vector<16x128xf32>, vector<16x128xf32>, vector<16x128xf32>, vector<16x128xf32>, vector<16x128xf32>, vector<16x128xf32> -> vector<144x128xf32>
    %cst_779 = arith.constant 0.000000e+00 : f32
    %478 = vector.broadcast %cst_779 : f32 to vector<144x128xf32>
    %479 = arith.maximumf %477, %478 : vector<144x128xf32>
    %c17_780 = arith.constant 17 : index
    %c0_781 = arith.constant 0 : index
    %c0_782 = arith.constant 0 : index
    %480 = vector.load %arg1[%c17_780, %c0_781, %c0_782] : memref<25x16x144xf32, #tpu.memory_space<vmem>>, vector<1x16x144xf32>
    %481 = vector.shape_cast %480 : vector<1x16x144xf32> to vector<16x144xf32>
    %cst_783 = arith.constant dense<0.000000e+00> : vector<16x128xf32>
    %482 = tpu.matmul %481, %479, %cst_783 {dimension_numbers = #tpu.dot_dimension_numbers<[1], [0], [0], [1], [0, 0, 1, 1], [], []>} : vector<16x144xf32>, vector<144x128xf32>, vector<16x128xf32> -> vector<16x128xf32>
    %c0_784 = arith.constant 0 : index
    %c17_785 = arith.constant 17 : index
    %c0_786 = arith.constant 0 : index
    %c0_787 = arith.constant 0 : index
    %483 = vector.load %arg3[%c0_784, %c17_785, %c0_786, %c0_787] : memref<1x25x16x128xf32, #tpu.memory_space<vmem>>, vector<1x1x16x128xf32>
    %484 = vector.shape_cast %483 : vector<1x1x16x128xf32> to vector<16x128xf32>
    %485 = vector.shape_cast %482 : vector<16x128xf32> to vector<1x1x16x128xf32>
    tpu.vector_store %arg3[%c0_784, %c17_785, %c0_786, %c0_787], %485 {strides = array<i32>} : memref<1x25x16x128xf32, #tpu.memory_space<vmem>>, vector<1x1x16x128xf32>,
    %c0_788 = arith.constant 0 : index
    %c18_789 = arith.constant 18 : index
    %c0_790 = arith.constant 0 : index
    %c0_791 = arith.constant 0 : index
    %486 = vector.load %arg2[%c0_788, %c18_789, %c0_790, %c0_791] : memref<1x25x16x256xf32, #tpu.memory_space<vmem>>, vector<1x1x16x128xf32>
    %487 = vector.shape_cast %486 : vector<1x1x16x128xf32> to vector<16x128xf32>
    %c0_792 = arith.constant 0 : index
    %c18_793 = arith.constant 18 : index
    %c0_794 = arith.constant 0 : index
    %c1_795 = arith.constant 1 : index
    %488 = vector.load %arg2[%c0_792, %c18_793, %c0_794, %c1_795] : memref<1x25x16x256xf32, #tpu.memory_space<vmem>>, vector<1x1x16x128xf32>
    %489 = vector.shape_cast %488 : vector<1x1x16x128xf32> to vector<16x128xf32>
    %c0_796 = arith.constant 0 : index
    %c18_797 = arith.constant 18 : index
    %c0_798 = arith.constant 0 : index
    %c2_799 = arith.constant 2 : index
    %490 = vector.load %arg2[%c0_796, %c18_797, %c0_798, %c2_799] : memref<1x25x16x256xf32, #tpu.memory_space<vmem>>, vector<1x1x16x128xf32>
    %491 = vector.shape_cast %490 : vector<1x1x16x128xf32> to vector<16x128xf32>
    %c0_800 = arith.constant 0 : index
    %c18_801 = arith.constant 18 : index
    %c0_802 = arith.constant 0 : index
    %c9_803 = arith.constant 9 : index
    %492 = vector.load %arg2[%c0_800, %c18_801, %c0_802, %c9_803] : memref<1x25x16x256xf32, #tpu.memory_space<vmem>>, vector<1x1x16x128xf32>
    %493 = vector.shape_cast %492 : vector<1x1x16x128xf32> to vector<16x128xf32>
    %c0_804 = arith.constant 0 : index
    %c18_805 = arith.constant 18 : index
    %c0_806 = arith.constant 0 : index
    %c10_807 = arith.constant 10 : index
    %494 = vector.load %arg2[%c0_804, %c18_805, %c0_806, %c10_807] : memref<1x25x16x256xf32, #tpu.memory_space<vmem>>, vector<1x1x16x128xf32>
    %495 = vector.shape_cast %494 : vector<1x1x16x128xf32> to vector<16x128xf32>
    %c0_808 = arith.constant 0 : index
    %c18_809 = arith.constant 18 : index
    %c0_810 = arith.constant 0 : index
    %c11_811 = arith.constant 11 : index
    %496 = vector.load %arg2[%c0_808, %c18_809, %c0_810, %c11_811] : memref<1x25x16x256xf32, #tpu.memory_space<vmem>>, vector<1x1x16x128xf32>
    %497 = vector.shape_cast %496 : vector<1x1x16x128xf32> to vector<16x128xf32>
    %c0_812 = arith.constant 0 : index
    %c18_813 = arith.constant 18 : index
    %c0_814 = arith.constant 0 : index
    %c18_815 = arith.constant 18 : index
    %498 = vector.load %arg2[%c0_812, %c18_813, %c0_814, %c18_815] : memref<1x25x16x256xf32, #tpu.memory_space<vmem>>, vector<1x1x16x128xf32>
    %499 = vector.shape_cast %498 : vector<1x1x16x128xf32> to vector<16x128xf32>
    %c0_816 = arith.constant 0 : index
    %c18_817 = arith.constant 18 : index
    %c0_818 = arith.constant 0 : index
    %c19_819 = arith.constant 19 : index
    %500 = vector.load %arg2[%c0_816, %c18_817, %c0_818, %c19_819] : memref<1x25x16x256xf32, #tpu.memory_space<vmem>>, vector<1x1x16x128xf32>
    %501 = vector.shape_cast %500 : vector<1x1x16x128xf32> to vector<16x128xf32>
    %c0_820 = arith.constant 0 : index
    %c18_821 = arith.constant 18 : index
    %c0_822 = arith.constant 0 : index
    %c20_823 = arith.constant 20 : index
    %502 = vector.load %arg2[%c0_820, %c18_821, %c0_822, %c20_823] : memref<1x25x16x256xf32, #tpu.memory_space<vmem>>, vector<1x1x16x128xf32>
    %503 = vector.shape_cast %502 : vector<1x1x16x128xf32> to vector<16x128xf32>
    %504 = tpu.concatenate %487, %489, %491, %493, %495, %497, %499, %501, %503 in 0 : vector<16x128xf32>, vector<16x128xf32>, vector<16x128xf32>, vector<16x128xf32>, vector<16x128xf32>, vector<16x128xf32>, vector<16x128xf32>, vector<16x128xf32>, vector<16x128xf32> -> vector<144x128xf32>
    %cst_824 = arith.constant 0.000000e+00 : f32
    %505 = vector.broadcast %cst_824 : f32 to vector<144x128xf32>
    %506 = arith.maximumf %504, %505 : vector<144x128xf32>
    %c18_825 = arith.constant 18 : index
    %c0_826 = arith.constant 0 : index
    %c0_827 = arith.constant 0 : index
    %507 = vector.load %arg1[%c18_825, %c0_826, %c0_827] : memref<25x16x144xf32, #tpu.memory_space<vmem>>, vector<1x16x144xf32>
    %508 = vector.shape_cast %507 : vector<1x16x144xf32> to vector<16x144xf32>
    %cst_828 = arith.constant dense<0.000000e+00> : vector<16x128xf32>
    %509 = tpu.matmul %508, %506, %cst_828 {dimension_numbers = #tpu.dot_dimension_numbers<[1], [0], [0], [1], [0, 0, 1, 1], [], []>} : vector<16x144xf32>, vector<144x128xf32>, vector<16x128xf32> -> vector<16x128xf32>
    %c0_829 = arith.constant 0 : index
    %c18_830 = arith.constant 18 : index
    %c0_831 = arith.constant 0 : index
    %c0_832 = arith.constant 0 : index
    %510 = vector.load %arg3[%c0_829, %c18_830, %c0_831, %c0_832] : memref<1x25x16x128xf32, #tpu.memory_space<vmem>>, vector<1x1x16x128xf32>
    %511 = vector.shape_cast %510 : vector<1x1x16x128xf32> to vector<16x128xf32>
    %512 = vector.shape_cast %509 : vector<16x128xf32> to vector<1x1x16x128xf32>
    tpu.vector_store %arg3[%c0_829, %c18_830, %c0_831, %c0_832], %512 {strides = array<i32>} : memref<1x25x16x128xf32, #tpu.memory_space<vmem>>, vector<1x1x16x128xf32>,
    %c0_833 = arith.constant 0 : index
    %c19_834 = arith.constant 19 : index
    %c0_835 = arith.constant 0 : index
    %c0_836 = arith.constant 0 : index
    %513 = vector.load %arg2[%c0_833, %c19_834, %c0_835, %c0_836] : memref<1x25x16x256xf32, #tpu.memory_space<vmem>>, vector<1x1x16x128xf32>
    %514 = vector.shape_cast %513 : vector<1x1x16x128xf32> to vector<16x128xf32>
    %c0_837 = arith.constant 0 : index
    %c19_838 = arith.constant 19 : index
    %c0_839 = arith.constant 0 : index
    %c1_840 = arith.constant 1 : index
    %515 = vector.load %arg2[%c0_837, %c19_838, %c0_839, %c1_840] : memref<1x25x16x256xf32, #tpu.memory_space<vmem>>, vector<1x1x16x128xf32>
    %516 = vector.shape_cast %515 : vector<1x1x16x128xf32> to vector<16x128xf32>
    %c0_841 = arith.constant 0 : index
    %c19_842 = arith.constant 19 : index
    %c0_843 = arith.constant 0 : index
    %c2_844 = arith.constant 2 : index
    %517 = vector.load %arg2[%c0_841, %c19_842, %c0_843, %c2_844] : memref<1x25x16x256xf32, #tpu.memory_space<vmem>>, vector<1x1x16x128xf32>
    %518 = vector.shape_cast %517 : vector<1x1x16x128xf32> to vector<16x128xf32>
    %c0_845 = arith.constant 0 : index
    %c19_846 = arith.constant 19 : index
    %c0_847 = arith.constant 0 : index
    %c9_848 = arith.constant 9 : index
    %519 = vector.load %arg2[%c0_845, %c19_846, %c0_847, %c9_848] : memref<1x25x16x256xf32, #tpu.memory_space<vmem>>, vector<1x1x16x128xf32>
    %520 = vector.shape_cast %519 : vector<1x1x16x128xf32> to vector<16x128xf32>
    %c0_849 = arith.constant 0 : index
    %c19_850 = arith.constant 19 : index
    %c0_851 = arith.constant 0 : index
    %c10_852 = arith.constant 10 : index
    %521 = vector.load %arg2[%c0_849, %c19_850, %c0_851, %c10_852] : memref<1x25x16x256xf32, #tpu.memory_space<vmem>>, vector<1x1x16x128xf32>
    %522 = vector.shape_cast %521 : vector<1x1x16x128xf32> to vector<16x128xf32>
    %c0_853 = arith.constant 0 : index
    %c19_854 = arith.constant 19 : index
    %c0_855 = arith.constant 0 : index
    %c11_856 = arith.constant 11 : index
    %523 = vector.load %arg2[%c0_853, %c19_854, %c0_855, %c11_856] : memref<1x25x16x256xf32, #tpu.memory_space<vmem>>, vector<1x1x16x128xf32>
    %524 = vector.shape_cast %523 : vector<1x1x16x128xf32> to vector<16x128xf32>
    %c0_857 = arith.constant 0 : index
    %c19_858 = arith.constant 19 : index
    %c0_859 = arith.constant 0 : index
    %c18_860 = arith.constant 18 : index
    %525 = vector.load %arg2[%c0_857, %c19_858, %c0_859, %c18_860] : memref<1x25x16x256xf32, #tpu.memory_space<vmem>>, vector<1x1x16x128xf32>
    %526 = vector.shape_cast %525 : vector<1x1x16x128xf32> to vector<16x128xf32>
    %c0_861 = arith.constant 0 : index
    %c19_862 = arith.constant 19 : index
    %c0_863 = arith.constant 0 : index
    %c19_864 = arith.constant 19 : index
    %527 = vector.load %arg2[%c0_861, %c19_862, %c0_863, %c19_864] : memref<1x25x16x256xf32, #tpu.memory_space<vmem>>, vector<1x1x16x128xf32>
    %528 = vector.shape_cast %527 : vector<1x1x16x128xf32> to vector<16x128xf32>
    %c0_865 = arith.constant 0 : index
    %c19_866 = arith.constant 19 : index
    %c0_867 = arith.constant 0 : index
    %c20_868 = arith.constant 20 : index
    %529 = vector.load %arg2[%c0_865, %c19_866, %c0_867, %c20_868] : memref<1x25x16x256xf32, #tpu.memory_space<vmem>>, vector<1x1x16x128xf32>
    %530 = vector.shape_cast %529 : vector<1x1x16x128xf32> to vector<16x128xf32>
    %531 = tpu.concatenate %514, %516, %518, %520, %522, %524, %526, %528, %530 in 0 : vector<16x128xf32>, vector<16x128xf32>, vector<16x128xf32>, vector<16x128xf32>, vector<16x128xf32>, vector<16x128xf32>, vector<16x128xf32>, vector<16x128xf32>, vector<16x128xf32> -> vector<144x128xf32>
    %cst_869 = arith.constant 0.000000e+00 : f32
    %532 = vector.broadcast %cst_869 : f32 to vector<144x128xf32>
    %533 = arith.maximumf %531, %532 : vector<144x128xf32>
    %c19_870 = arith.constant 19 : index
    %c0_871 = arith.constant 0 : index
    %c0_872 = arith.constant 0 : index
    %534 = vector.load %arg1[%c19_870, %c0_871, %c0_872] : memref<25x16x144xf32, #tpu.memory_space<vmem>>, vector<1x16x144xf32>
    %535 = vector.shape_cast %534 : vector<1x16x144xf32> to vector<16x144xf32>
    %cst_873 = arith.constant dense<0.000000e+00> : vector<16x128xf32>
    %536 = tpu.matmul %535, %533, %cst_873 {dimension_numbers = #tpu.dot_dimension_numbers<[1], [0], [0], [1], [0, 0, 1, 1], [], []>} : vector<16x144xf32>, vector<144x128xf32>, vector<16x128xf32> -> vector<16x128xf32>
    %c0_874 = arith.constant 0 : index
    %c19_875 = arith.constant 19 : index
    %c0_876 = arith.constant 0 : index
    %c0_877 = arith.constant 0 : index
    %537 = vector.load %arg3[%c0_874, %c19_875, %c0_876, %c0_877] : memref<1x25x16x128xf32, #tpu.memory_space<vmem>>, vector<1x1x16x128xf32>
    %538 = vector.shape_cast %537 : vector<1x1x16x128xf32> to vector<16x128xf32>
    %539 = vector.shape_cast %536 : vector<16x128xf32> to vector<1x1x16x128xf32>
    tpu.vector_store %arg3[%c0_874, %c19_875, %c0_876, %c0_877], %539 {strides = array<i32>} : memref<1x25x16x128xf32, #tpu.memory_space<vmem>>, vector<1x1x16x128xf32>,
    %c0_878 = arith.constant 0 : index
    %c20_879 = arith.constant 20 : index
    %c0_880 = arith.constant 0 : index
    %c0_881 = arith.constant 0 : index
    %540 = vector.load %arg2[%c0_878, %c20_879, %c0_880, %c0_881] : memref<1x25x16x256xf32, #tpu.memory_space<vmem>>, vector<1x1x16x128xf32>
    %541 = vector.shape_cast %540 : vector<1x1x16x128xf32> to vector<16x128xf32>
    %c0_882 = arith.constant 0 : index
    %c20_883 = arith.constant 20 : index
    %c0_884 = arith.constant 0 : index
    %c1_885 = arith.constant 1 : index
    %542 = vector.load %arg2[%c0_882, %c20_883, %c0_884, %c1_885] : memref<1x25x16x256xf32, #tpu.memory_space<vmem>>, vector<1x1x16x128xf32>
    %543 = vector.shape_cast %542 : vector<1x1x16x128xf32> to vector<16x128xf32>
    %c0_886 = arith.constant 0 : index
    %c20_887 = arith.constant 20 : index
    %c0_888 = arith.constant 0 : index
    %c2_889 = arith.constant 2 : index
    %544 = vector.load %arg2[%c0_886, %c20_887, %c0_888, %c2_889] : memref<1x25x16x256xf32, #tpu.memory_space<vmem>>, vector<1x1x16x128xf32>
    %545 = vector.shape_cast %544 : vector<1x1x16x128xf32> to vector<16x128xf32>
    %c0_890 = arith.constant 0 : index
    %c20_891 = arith.constant 20 : index
    %c0_892 = arith.constant 0 : index
    %c9_893 = arith.constant 9 : index
    %546 = vector.load %arg2[%c0_890, %c20_891, %c0_892, %c9_893] : memref<1x25x16x256xf32, #tpu.memory_space<vmem>>, vector<1x1x16x128xf32>
    %547 = vector.shape_cast %546 : vector<1x1x16x128xf32> to vector<16x128xf32>
    %c0_894 = arith.constant 0 : index
    %c20_895 = arith.constant 20 : index
    %c0_896 = arith.constant 0 : index
    %c10_897 = arith.constant 10 : index
    %548 = vector.load %arg2[%c0_894, %c20_895, %c0_896, %c10_897] : memref<1x25x16x256xf32, #tpu.memory_space<vmem>>, vector<1x1x16x128xf32>
    %549 = vector.shape_cast %548 : vector<1x1x16x128xf32> to vector<16x128xf32>
    %c0_898 = arith.constant 0 : index
    %c20_899 = arith.constant 20 : index
    %c0_900 = arith.constant 0 : index
    %c11_901 = arith.constant 11 : index
    %550 = vector.load %arg2[%c0_898, %c20_899, %c0_900, %c11_901] : memref<1x25x16x256xf32, #tpu.memory_space<vmem>>, vector<1x1x16x128xf32>
    %551 = vector.shape_cast %550 : vector<1x1x16x128xf32> to vector<16x128xf32>
    %c0_902 = arith.constant 0 : index
    %c20_903 = arith.constant 20 : index
    %c0_904 = arith.constant 0 : index
    %c18_905 = arith.constant 18 : index
    %552 = vector.load %arg2[%c0_902, %c20_903, %c0_904, %c18_905] : memref<1x25x16x256xf32, #tpu.memory_space<vmem>>, vector<1x1x16x128xf32>
    %553 = vector.shape_cast %552 : vector<1x1x16x128xf32> to vector<16x128xf32>
    %c0_906 = arith.constant 0 : index
    %c20_907 = arith.constant 20 : index
    %c0_908 = arith.constant 0 : index
    %c19_909 = arith.constant 19 : index
    %554 = vector.load %arg2[%c0_906, %c20_907, %c0_908, %c19_909] : memref<1x25x16x256xf32, #tpu.memory_space<vmem>>, vector<1x1x16x128xf32>
    %555 = vector.shape_cast %554 : vector<1x1x16x128xf32> to vector<16x128xf32>
    %c0_910 = arith.constant 0 : index
    %c20_911 = arith.constant 20 : index
    %c0_912 = arith.constant 0 : index
    %c20_913 = arith.constant 20 : index
    %556 = vector.load %arg2[%c0_910, %c20_911, %c0_912, %c20_913] : memref<1x25x16x256xf32, #tpu.memory_space<vmem>>, vector<1x1x16x128xf32>
    %557 = vector.shape_cast %556 : vector<1x1x16x128xf32> to vector<16x128xf32>
    %558 = tpu.concatenate %541, %543, %545, %547, %549, %551, %553, %555, %557 in 0 : vector<16x128xf32>, vector<16x128xf32>, vector<16x128xf32>, vector<16x128xf32>, vector<16x128xf32>, vector<16x128xf32>, vector<16x128xf32>, vector<16x128xf32>, vector<16x128xf32> -> vector<144x128xf32>
    %cst_914 = arith.constant 0.000000e+00 : f32
    %559 = vector.broadcast %cst_914 : f32 to vector<144x128xf32>
    %560 = arith.maximumf %558, %559 : vector<144x128xf32>
    %c20_915 = arith.constant 20 : index
    %c0_916 = arith.constant 0 : index
    %c0_917 = arith.constant 0 : index
    %561 = vector.load %arg1[%c20_915, %c0_916, %c0_917] : memref<25x16x144xf32, #tpu.memory_space<vmem>>, vector<1x16x144xf32>
    %562 = vector.shape_cast %561 : vector<1x16x144xf32> to vector<16x144xf32>
    %cst_918 = arith.constant dense<0.000000e+00> : vector<16x128xf32>
    %563 = tpu.matmul %562, %560, %cst_918 {dimension_numbers = #tpu.dot_dimension_numbers<[1], [0], [0], [1], [0, 0, 1, 1], [], []>} : vector<16x144xf32>, vector<144x128xf32>, vector<16x128xf32> -> vector<16x128xf32>
    %c0_919 = arith.constant 0 : index
    %c20_920 = arith.constant 20 : index
    %c0_921 = arith.constant 0 : index
    %c0_922 = arith.constant 0 : index
    %564 = vector.load %arg3[%c0_919, %c20_920, %c0_921, %c0_922] : memref<1x25x16x128xf32, #tpu.memory_space<vmem>>, vector<1x1x16x128xf32>
    %565 = vector.shape_cast %564 : vector<1x1x16x128xf32> to vector<16x128xf32>
    %566 = vector.shape_cast %563 : vector<16x128xf32> to vector<1x1x16x128xf32>
    tpu.vector_store %arg3[%c0_919, %c20_920, %c0_921, %c0_922], %566 {strides = array<i32>} : memref<1x25x16x128xf32, #tpu.memory_space<vmem>>, vector<1x1x16x128xf32>,
    %c0_923 = arith.constant 0 : index
    %c21 = arith.constant 21 : index
    %c0_924 = arith.constant 0 : index
    %c0_925 = arith.constant 0 : index
    %567 = vector.load %arg2[%c0_923, %c21, %c0_924, %c0_925] : memref<1x25x16x256xf32, #tpu.memory_space<vmem>>, vector<1x1x16x128xf32>
    %568 = vector.shape_cast %567 : vector<1x1x16x128xf32> to vector<16x128xf32>
    %c0_926 = arith.constant 0 : index
    %c21_927 = arith.constant 21 : index
    %c0_928 = arith.constant 0 : index
    %c1_929 = arith.constant 1 : index
    %569 = vector.load %arg2[%c0_926, %c21_927, %c0_928, %c1_929] : memref<1x25x16x256xf32, #tpu.memory_space<vmem>>, vector<1x1x16x128xf32>
    %570 = vector.shape_cast %569 : vector<1x1x16x128xf32> to vector<16x128xf32>
    %c0_930 = arith.constant 0 : index
    %c21_931 = arith.constant 21 : index
    %c0_932 = arith.constant 0 : index
    %c2_933 = arith.constant 2 : index
    %571 = vector.load %arg2[%c0_930, %c21_931, %c0_932, %c2_933] : memref<1x25x16x256xf32, #tpu.memory_space<vmem>>, vector<1x1x16x128xf32>
    %572 = vector.shape_cast %571 : vector<1x1x16x128xf32> to vector<16x128xf32>
    %c0_934 = arith.constant 0 : index
    %c21_935 = arith.constant 21 : index
    %c0_936 = arith.constant 0 : index
    %c9_937 = arith.constant 9 : index
    %573 = vector.load %arg2[%c0_934, %c21_935, %c0_936, %c9_937] : memref<1x25x16x256xf32, #tpu.memory_space<vmem>>, vector<1x1x16x128xf32>
    %574 = vector.shape_cast %573 : vector<1x1x16x128xf32> to vector<16x128xf32>
    %c0_938 = arith.constant 0 : index
    %c21_939 = arith.constant 21 : index
    %c0_940 = arith.constant 0 : index
    %c10_941 = arith.constant 10 : index
    %575 = vector.load %arg2[%c0_938, %c21_939, %c0_940, %c10_941] : memref<1x25x16x256xf32, #tpu.memory_space<vmem>>, vector<1x1x16x128xf32>
    %576 = vector.shape_cast %575 : vector<1x1x16x128xf32> to vector<16x128xf32>
    %c0_942 = arith.constant 0 : index
    %c21_943 = arith.constant 21 : index
    %c0_944 = arith.constant 0 : index
    %c11_945 = arith.constant 11 : index
    %577 = vector.load %arg2[%c0_942, %c21_943, %c0_944, %c11_945] : memref<1x25x16x256xf32, #tpu.memory_space<vmem>>, vector<1x1x16x128xf32>
    %578 = vector.shape_cast %577 : vector<1x1x16x128xf32> to vector<16x128xf32>
    %c0_946 = arith.constant 0 : index
    %c21_947 = arith.constant 21 : index
    %c0_948 = arith.constant 0 : index
    %c18_949 = arith.constant 18 : index
    %579 = vector.load %arg2[%c0_946, %c21_947, %c0_948, %c18_949] : memref<1x25x16x256xf32, #tpu.memory_space<vmem>>, vector<1x1x16x128xf32>
    %580 = vector.shape_cast %579 : vector<1x1x16x128xf32> to vector<16x128xf32>
    %c0_950 = arith.constant 0 : index
    %c21_951 = arith.constant 21 : index
    %c0_952 = arith.constant 0 : index
    %c19_953 = arith.constant 19 : index
    %581 = vector.load %arg2[%c0_950, %c21_951, %c0_952, %c19_953] : memref<1x25x16x256xf32, #tpu.memory_space<vmem>>, vector<1x1x16x128xf32>
    %582 = vector.shape_cast %581 : vector<1x1x16x128xf32> to vector<16x128xf32>
    %c0_954 = arith.constant 0 : index
    %c21_955 = arith.constant 21 : index
    %c0_956 = arith.constant 0 : index
    %c20_957 = arith.constant 20 : index
    %583 = vector.load %arg2[%c0_954, %c21_955, %c0_956, %c20_957] : memref<1x25x16x256xf32, #tpu.memory_space<vmem>>, vector<1x1x16x128xf32>
    %584 = vector.shape_cast %583 : vector<1x1x16x128xf32> to vector<16x128xf32>
    %585 = tpu.concatenate %568, %570, %572, %574, %576, %578, %580, %582, %584 in 0 : vector<16x128xf32>, vector<16x128xf32>, vector<16x128xf32>, vector<16x128xf32>, vector<16x128xf32>, vector<16x128xf32>, vector<16x128xf32>, vector<16x128xf32>, vector<16x128xf32> -> vector<144x128xf32>
    %cst_958 = arith.constant 0.000000e+00 : f32
    %586 = vector.broadcast %cst_958 : f32 to vector<144x128xf32>
    %587 = arith.maximumf %585, %586 : vector<144x128xf32>
    %c21_959 = arith.constant 21 : index
    %c0_960 = arith.constant 0 : index
    %c0_961 = arith.constant 0 : index
    %588 = vector.load %arg1[%c21_959, %c0_960, %c0_961] : memref<25x16x144xf32, #tpu.memory_space<vmem>>, vector<1x16x144xf32>
    %589 = vector.shape_cast %588 : vector<1x16x144xf32> to vector<16x144xf32>
    %cst_962 = arith.constant dense<0.000000e+00> : vector<16x128xf32>
    %590 = tpu.matmul %589, %587, %cst_962 {dimension_numbers = #tpu.dot_dimension_numbers<[1], [0], [0], [1], [0, 0, 1, 1], [], []>} : vector<16x144xf32>, vector<144x128xf32>, vector<16x128xf32> -> vector<16x128xf32>
    %c0_963 = arith.constant 0 : index
    %c21_964 = arith.constant 21 : index
    %c0_965 = arith.constant 0 : index
    %c0_966 = arith.constant 0 : index
    %591 = vector.load %arg3[%c0_963, %c21_964, %c0_965, %c0_966] : memref<1x25x16x128xf32, #tpu.memory_space<vmem>>, vector<1x1x16x128xf32>
    %592 = vector.shape_cast %591 : vector<1x1x16x128xf32> to vector<16x128xf32>
    %593 = vector.shape_cast %590 : vector<16x128xf32> to vector<1x1x16x128xf32>
    tpu.vector_store %arg3[%c0_963, %c21_964, %c0_965, %c0_966], %593 {strides = array<i32>} : memref<1x25x16x128xf32, #tpu.memory_space<vmem>>, vector<1x1x16x128xf32>,
    %c0_967 = arith.constant 0 : index
    %c22 = arith.constant 22 : index
    %c0_968 = arith.constant 0 : index
    %c0_969 = arith.constant 0 : index
    %594 = vector.load %arg2[%c0_967, %c22, %c0_968, %c0_969] : memref<1x25x16x256xf32, #tpu.memory_space<vmem>>, vector<1x1x16x128xf32>
    %595 = vector.shape_cast %594 : vector<1x1x16x128xf32> to vector<16x128xf32>
    %c0_970 = arith.constant 0 : index
    %c22_971 = arith.constant 22 : index
    %c0_972 = arith.constant 0 : index
    %c1_973 = arith.constant 1 : index
    %596 = vector.load %arg2[%c0_970, %c22_971, %c0_972, %c1_973] : memref<1x25x16x256xf32, #tpu.memory_space<vmem>>, vector<1x1x16x128xf32>
    %597 = vector.shape_cast %596 : vector<1x1x16x128xf32> to vector<16x128xf32>
    %c0_974 = arith.constant 0 : index
    %c22_975 = arith.constant 22 : index
    %c0_976 = arith.constant 0 : index
    %c2_977 = arith.constant 2 : index
    %598 = vector.load %arg2[%c0_974, %c22_975, %c0_976, %c2_977] : memref<1x25x16x256xf32, #tpu.memory_space<vmem>>, vector<1x1x16x128xf32>
    %599 = vector.shape_cast %598 : vector<1x1x16x128xf32> to vector<16x128xf32>
    %c0_978 = arith.constant 0 : index
    %c22_979 = arith.constant 22 : index
    %c0_980 = arith.constant 0 : index
    %c9_981 = arith.constant 9 : index
    %600 = vector.load %arg2[%c0_978, %c22_979, %c0_980, %c9_981] : memref<1x25x16x256xf32, #tpu.memory_space<vmem>>, vector<1x1x16x128xf32>
    %601 = vector.shape_cast %600 : vector<1x1x16x128xf32> to vector<16x128xf32>
    %c0_982 = arith.constant 0 : index
    %c22_983 = arith.constant 22 : index
    %c0_984 = arith.constant 0 : index
    %c10_985 = arith.constant 10 : index
    %602 = vector.load %arg2[%c0_982, %c22_983, %c0_984, %c10_985] : memref<1x25x16x256xf32, #tpu.memory_space<vmem>>, vector<1x1x16x128xf32>
    %603 = vector.shape_cast %602 : vector<1x1x16x128xf32> to vector<16x128xf32>
    %c0_986 = arith.constant 0 : index
    %c22_987 = arith.constant 22 : index
    %c0_988 = arith.constant 0 : index
    %c11_989 = arith.constant 11 : index
    %604 = vector.load %arg2[%c0_986, %c22_987, %c0_988, %c11_989] : memref<1x25x16x256xf32, #tpu.memory_space<vmem>>, vector<1x1x16x128xf32>
    %605 = vector.shape_cast %604 : vector<1x1x16x128xf32> to vector<16x128xf32>
    %c0_990 = arith.constant 0 : index
    %c22_991 = arith.constant 22 : index
    %c0_992 = arith.constant 0 : index
    %c18_993 = arith.constant 18 : index
    %606 = vector.load %arg2[%c0_990, %c22_991, %c0_992, %c18_993] : memref<1x25x16x256xf32, #tpu.memory_space<vmem>>, vector<1x1x16x128xf32>
    %607 = vector.shape_cast %606 : vector<1x1x16x128xf32> to vector<16x128xf32>
    %c0_994 = arith.constant 0 : index
    %c22_995 = arith.constant 22 : index
    %c0_996 = arith.constant 0 : index
    %c19_997 = arith.constant 19 : index
    %608 = vector.load %arg2[%c0_994, %c22_995, %c0_996, %c19_997] : memref<1x25x16x256xf32, #tpu.memory_space<vmem>>, vector<1x1x16x128xf32>
    %609 = vector.shape_cast %608 : vector<1x1x16x128xf32> to vector<16x128xf32>
    %c0_998 = arith.constant 0 : index
    %c22_999 = arith.constant 22 : index
    %c0_1000 = arith.constant 0 : index
    %c20_1001 = arith.constant 20 : index
    %610 = vector.load %arg2[%c0_998, %c22_999, %c0_1000, %c20_1001] : memref<1x25x16x256xf32, #tpu.memory_space<vmem>>, vector<1x1x16x128xf32>
    %611 = vector.shape_cast %610 : vector<1x1x16x128xf32> to vector<16x128xf32>
    %612 = tpu.concatenate %595, %597, %599, %601, %603, %605, %607, %609, %611 in 0 : vector<16x128xf32>, vector<16x128xf32>, vector<16x128xf32>, vector<16x128xf32>, vector<16x128xf32>, vector<16x128xf32>, vector<16x128xf32>, vector<16x128xf32>, vector<16x128xf32> -> vector<144x128xf32>
    %cst_1002 = arith.constant 0.000000e+00 : f32
    %613 = vector.broadcast %cst_1002 : f32 to vector<144x128xf32>
    %614 = arith.maximumf %612, %613 : vector<144x128xf32>
    %c22_1003 = arith.constant 22 : index
    %c0_1004 = arith.constant 0 : index
    %c0_1005 = arith.constant 0 : index
    %615 = vector.load %arg1[%c22_1003, %c0_1004, %c0_1005] : memref<25x16x144xf32, #tpu.memory_space<vmem>>, vector<1x16x144xf32>
    %616 = vector.shape_cast %615 : vector<1x16x144xf32> to vector<16x144xf32>
    %cst_1006 = arith.constant dense<0.000000e+00> : vector<16x128xf32>
    %617 = tpu.matmul %616, %614, %cst_1006 {dimension_numbers = #tpu.dot_dimension_numbers<[1], [0], [0], [1], [0, 0, 1, 1], [], []>} : vector<16x144xf32>, vector<144x128xf32>, vector<16x128xf32> -> vector<16x128xf32>
    %c0_1007 = arith.constant 0 : index
    %c22_1008 = arith.constant 22 : index
    %c0_1009 = arith.constant 0 : index
    %c0_1010 = arith.constant 0 : index
    %618 = vector.load %arg3[%c0_1007, %c22_1008, %c0_1009, %c0_1010] : memref<1x25x16x128xf32, #tpu.memory_space<vmem>>, vector<1x1x16x128xf32>
    %619 = vector.shape_cast %618 : vector<1x1x16x128xf32> to vector<16x128xf32>
    %620 = vector.shape_cast %617 : vector<16x128xf32> to vector<1x1x16x128xf32>
    tpu.vector_store %arg3[%c0_1007, %c22_1008, %c0_1009, %c0_1010], %620 {strides = array<i32>} : memref<1x25x16x128xf32, #tpu.memory_space<vmem>>, vector<1x1x16x128xf32>,
    %c0_1011 = arith.constant 0 : index
    %c23 = arith.constant 23 : index
    %c0_1012 = arith.constant 0 : index
    %c0_1013 = arith.constant 0 : index
    %621 = vector.load %arg2[%c0_1011, %c23, %c0_1012, %c0_1013] : memref<1x25x16x256xf32, #tpu.memory_space<vmem>>, vector<1x1x16x128xf32>
    %622 = vector.shape_cast %621 : vector<1x1x16x128xf32> to vector<16x128xf32>
    %c0_1014 = arith.constant 0 : index
    %c23_1015 = arith.constant 23 : index
    %c0_1016 = arith.constant 0 : index
    %c1_1017 = arith.constant 1 : index
    %623 = vector.load %arg2[%c0_1014, %c23_1015, %c0_1016, %c1_1017] : memref<1x25x16x256xf32, #tpu.memory_space<vmem>>, vector<1x1x16x128xf32>
    %624 = vector.shape_cast %623 : vector<1x1x16x128xf32> to vector<16x128xf32>
    %c0_1018 = arith.constant 0 : index
    %c23_1019 = arith.constant 23 : index
    %c0_1020 = arith.constant 0 : index
    %c2_1021 = arith.constant 2 : index
    %625 = vector.load %arg2[%c0_1018, %c23_1019, %c0_1020, %c2_1021] : memref<1x25x16x256xf32, #tpu.memory_space<vmem>>, vector<1x1x16x128xf32>
    %626 = vector.shape_cast %625 : vector<1x1x16x128xf32> to vector<16x128xf32>
    %c0_1022 = arith.constant 0 : index
    %c23_1023 = arith.constant 23 : index
    %c0_1024 = arith.constant 0 : index
    %c9_1025 = arith.constant 9 : index
    %627 = vector.load %arg2[%c0_1022, %c23_1023, %c0_1024, %c9_1025] : memref<1x25x16x256xf32, #tpu.memory_space<vmem>>, vector<1x1x16x128xf32>
    %628 = vector.shape_cast %627 : vector<1x1x16x128xf32> to vector<16x128xf32>
    %c0_1026 = arith.constant 0 : index
    %c23_1027 = arith.constant 23 : index
    %c0_1028 = arith.constant 0 : index
    %c10_1029 = arith.constant 10 : index
    %629 = vector.load %arg2[%c0_1026, %c23_1027, %c0_1028, %c10_1029] : memref<1x25x16x256xf32, #tpu.memory_space<vmem>>, vector<1x1x16x128xf32>
    %630 = vector.shape_cast %629 : vector<1x1x16x128xf32> to vector<16x128xf32>
    %c0_1030 = arith.constant 0 : index
    %c23_1031 = arith.constant 23 : index
    %c0_1032 = arith.constant 0 : index
    %c11_1033 = arith.constant 11 : index
    %631 = vector.load %arg2[%c0_1030, %c23_1031, %c0_1032, %c11_1033] : memref<1x25x16x256xf32, #tpu.memory_space<vmem>>, vector<1x1x16x128xf32>
    %632 = vector.shape_cast %631 : vector<1x1x16x128xf32> to vector<16x128xf32>
    %c0_1034 = arith.constant 0 : index
    %c23_1035 = arith.constant 23 : index
    %c0_1036 = arith.constant 0 : index
    %c18_1037 = arith.constant 18 : index
    %633 = vector.load %arg2[%c0_1034, %c23_1035, %c0_1036, %c18_1037] : memref<1x25x16x256xf32, #tpu.memory_space<vmem>>, vector<1x1x16x128xf32>
    %634 = vector.shape_cast %633 : vector<1x1x16x128xf32> to vector<16x128xf32>
    %c0_1038 = arith.constant 0 : index
    %c23_1039 = arith.constant 23 : index
    %c0_1040 = arith.constant 0 : index
    %c19_1041 = arith.constant 19 : index
    %635 = vector.load %arg2[%c0_1038, %c23_1039, %c0_1040, %c19_1041] : memref<1x25x16x256xf32, #tpu.memory_space<vmem>>, vector<1x1x16x128xf32>
    %636 = vector.shape_cast %635 : vector<1x1x16x128xf32> to vector<16x128xf32>
    %c0_1042 = arith.constant 0 : index
    %c23_1043 = arith.constant 23 : index
    %c0_1044 = arith.constant 0 : index
    %c20_1045 = arith.constant 20 : index
    %637 = vector.load %arg2[%c0_1042, %c23_1043, %c0_1044, %c20_1045] : memref<1x25x16x256xf32, #tpu.memory_space<vmem>>, vector<1x1x16x128xf32>
    %638 = vector.shape_cast %637 : vector<1x1x16x128xf32> to vector<16x128xf32>
    %639 = tpu.concatenate %622, %624, %626, %628, %630, %632, %634, %636, %638 in 0 : vector<16x128xf32>, vector<16x128xf32>, vector<16x128xf32>, vector<16x128xf32>, vector<16x128xf32>, vector<16x128xf32>, vector<16x128xf32>, vector<16x128xf32>, vector<16x128xf32> -> vector<144x128xf32>
    %cst_1046 = arith.constant 0.000000e+00 : f32
    %640 = vector.broadcast %cst_1046 : f32 to vector<144x128xf32>
    %641 = arith.maximumf %639, %640 : vector<144x128xf32>
    %c23_1047 = arith.constant 23 : index
    %c0_1048 = arith.constant 0 : index
    %c0_1049 = arith.constant 0 : index
    %642 = vector.load %arg1[%c23_1047, %c0_1048, %c0_1049] : memref<25x16x144xf32, #tpu.memory_space<vmem>>, vector<1x16x144xf32>
    %643 = vector.shape_cast %642 : vector<1x16x144xf32> to vector<16x144xf32>
    %cst_1050 = arith.constant dense<0.000000e+00> : vector<16x128xf32>
    %644 = tpu.matmul %643, %641, %cst_1050 {dimension_numbers = #tpu.dot_dimension_numbers<[1], [0], [0], [1], [0, 0, 1, 1], [], []>} : vector<16x144xf32>, vector<144x128xf32>, vector<16x128xf32> -> vector<16x128xf32>
    %c0_1051 = arith.constant 0 : index
    %c23_1052 = arith.constant 23 : index
    %c0_1053 = arith.constant 0 : index
    %c0_1054 = arith.constant 0 : index
    %645 = vector.load %arg3[%c0_1051, %c23_1052, %c0_1053, %c0_1054] : memref<1x25x16x128xf32, #tpu.memory_space<vmem>>, vector<1x1x16x128xf32>
    %646 = vector.shape_cast %645 : vector<1x1x16x128xf32> to vector<16x128xf32>
    %647 = vector.shape_cast %644 : vector<16x128xf32> to vector<1x1x16x128xf32>
    tpu.vector_store %arg3[%c0_1051, %c23_1052, %c0_1053, %c0_1054], %647 {strides = array<i32>} : memref<1x25x16x128xf32, #tpu.memory_space<vmem>>, vector<1x1x16x128xf32>,
    %c0_1055 = arith.constant 0 : index
    %c24 = arith.constant 24 : index
    %c0_1056 = arith.constant 0 : index
    %c0_1057 = arith.constant 0 : index
    %648 = vector.load %arg2[%c0_1055, %c24, %c0_1056, %c0_1057] : memref<1x25x16x256xf32, #tpu.memory_space<vmem>>, vector<1x1x16x128xf32>
    %649 = vector.shape_cast %648 : vector<1x1x16x128xf32> to vector<16x128xf32>
    %c0_1058 = arith.constant 0 : index
    %c24_1059 = arith.constant 24 : index
    %c0_1060 = arith.constant 0 : index
    %c1_1061 = arith.constant 1 : index
    %650 = vector.load %arg2[%c0_1058, %c24_1059, %c0_1060, %c1_1061] : memref<1x25x16x256xf32, #tpu.memory_space<vmem>>, vector<1x1x16x128xf32>
    %651 = vector.shape_cast %650 : vector<1x1x16x128xf32> to vector<16x128xf32>
    %c0_1062 = arith.constant 0 : index
    %c24_1063 = arith.constant 24 : index
    %c0_1064 = arith.constant 0 : index
    %c2_1065 = arith.constant 2 : index
    %652 = vector.load %arg2[%c0_1062, %c24_1063, %c0_1064, %c2_1065] : memref<1x25x16x256xf32, #tpu.memory_space<vmem>>, vector<1x1x16x128xf32>
    %653 = vector.shape_cast %652 : vector<1x1x16x128xf32> to vector<16x128xf32>
    %c0_1066 = arith.constant 0 : index
    %c24_1067 = arith.constant 24 : index
    %c0_1068 = arith.constant 0 : index
    %c9_1069 = arith.constant 9 : index
    %654 = vector.load %arg2[%c0_1066, %c24_1067, %c0_1068, %c9_1069] : memref<1x25x16x256xf32, #tpu.memory_space<vmem>>, vector<1x1x16x128xf32>
    %655 = vector.shape_cast %654 : vector<1x1x16x128xf32> to vector<16x128xf32>
    %c0_1070 = arith.constant 0 : index
    %c24_1071 = arith.constant 24 : index
    %c0_1072 = arith.constant 0 : index
    %c10_1073 = arith.constant 10 : index
    %656 = vector.load %arg2[%c0_1070, %c24_1071, %c0_1072, %c10_1073] : memref<1x25x16x256xf32, #tpu.memory_space<vmem>>, vector<1x1x16x128xf32>
    %657 = vector.shape_cast %656 : vector<1x1x16x128xf32> to vector<16x128xf32>
    %c0_1074 = arith.constant 0 : index
    %c24_1075 = arith.constant 24 : index
    %c0_1076 = arith.constant 0 : index
    %c11_1077 = arith.constant 11 : index
    %658 = vector.load %arg2[%c0_1074, %c24_1075, %c0_1076, %c11_1077] : memref<1x25x16x256xf32, #tpu.memory_space<vmem>>, vector<1x1x16x128xf32>
    %659 = vector.shape_cast %658 : vector<1x1x16x128xf32> to vector<16x128xf32>
    %c0_1078 = arith.constant 0 : index
    %c24_1079 = arith.constant 24 : index
    %c0_1080 = arith.constant 0 : index
    %c18_1081 = arith.constant 18 : index
    %660 = vector.load %arg2[%c0_1078, %c24_1079, %c0_1080, %c18_1081] : memref<1x25x16x256xf32, #tpu.memory_space<vmem>>, vector<1x1x16x128xf32>
    %661 = vector.shape_cast %660 : vector<1x1x16x128xf32> to vector<16x128xf32>
    %c0_1082 = arith.constant 0 : index
    %c24_1083 = arith.constant 24 : index
    %c0_1084 = arith.constant 0 : index
    %c19_1085 = arith.constant 19 : index
    %662 = vector.load %arg2[%c0_1082, %c24_1083, %c0_1084, %c19_1085] : memref<1x25x16x256xf32, #tpu.memory_space<vmem>>, vector<1x1x16x128xf32>
    %663 = vector.shape_cast %662 : vector<1x1x16x128xf32> to vector<16x128xf32>
    %c0_1086 = arith.constant 0 : index
    %c24_1087 = arith.constant 24 : index
    %c0_1088 = arith.constant 0 : index
    %c20_1089 = arith.constant 20 : index
    %664 = vector.load %arg2[%c0_1086, %c24_1087, %c0_1088, %c20_1089] : memref<1x25x16x256xf32, #tpu.memory_space<vmem>>, vector<1x1x16x128xf32>
    %665 = vector.shape_cast %664 : vector<1x1x16x128xf32> to vector<16x128xf32>
    %666 = tpu.concatenate %649, %651, %653, %655, %657, %659, %661, %663, %665 in 0 : vector<16x128xf32>, vector<16x128xf32>, vector<16x128xf32>, vector<16x128xf32>, vector<16x128xf32>, vector<16x128xf32>, vector<16x128xf32>, vector<16x128xf32>, vector<16x128xf32> -> vector<144x128xf32>
    %cst_1090 = arith.constant 0.000000e+00 : f32
    %667 = vector.broadcast %cst_1090 : f32 to vector<144x128xf32>
    %668 = arith.maximumf %666, %667 : vector<144x128xf32>
    %c24_1091 = arith.constant 24 : index
    %c0_1092 = arith.constant 0 : index
    %c0_1093 = arith.constant 0 : index
    %669 = vector.load %arg1[%c24_1091, %c0_1092, %c0_1093] : memref<25x16x144xf32, #tpu.memory_space<vmem>>, vector<1x16x144xf32>
    %670 = vector.shape_cast %669 : vector<1x16x144xf32> to vector<16x144xf32>
    %cst_1094 = arith.constant dense<0.000000e+00> : vector<16x128xf32>
    %671 = tpu.matmul %670, %668, %cst_1094 {dimension_numbers = #tpu.dot_dimension_numbers<[1], [0], [0], [1], [0, 0, 1, 1], [], []>} : vector<16x144xf32>, vector<144x128xf32>, vector<16x128xf32> -> vector<16x128xf32>
    %c0_1095 = arith.constant 0 : index
    %c24_1096 = arith.constant 24 : index
    %c0_1097 = arith.constant 0 : index
    %c0_1098 = arith.constant 0 : index
    %672 = vector.load %arg3[%c0_1095, %c24_1096, %c0_1097, %c0_1098] : memref<1x25x16x128xf32, #tpu.memory_space<vmem>>, vector<1x1x16x128xf32>
    %673 = vector.shape_cast %672 : vector<1x1x16x128xf32> to vector<16x128xf32>
    %674 = vector.shape_cast %671 : vector<16x128xf32> to vector<1x1x16x128xf32>
    tpu.vector_store %arg3[%c0_1095, %c24_1096, %c0_1097, %c0_1098], %674 {strides = array<i32>} : memref<1x25x16x128xf32, #tpu.memory_space<vmem>>, vector<1x1x16x128xf32>,
    return
  }
  func.func @transform_0(%arg0: i32) -> (i32, i32, i32) {
    %c0_i32 = arith.constant 0 : i32
    %c0_i32_0 = arith.constant 0 : i32
    %c0_i32_1 = arith.constant 0 : i32
    %c0_i32_2 = arith.constant 0 : i32
    return %c0_i32, %c0_i32_0, %c0_i32_1 : i32, i32, i32
  }
  func.func @transform_1(%arg0: i32) -> (i32, i32, i32, i32) {
    %c0_i32 = arith.constant 0 : i32
    %c0_i32_0 = arith.constant 0 : i32
    %c0_i32_1 = arith.constant 0 : i32
    %c0_i32_2 = arith.constant 0 : i32
    return %arg0, %c0_i32, %c0_i32_0, %c0_i32_1 : i32, i32, i32, i32
  }
  func.func @transform_2(%arg0: i32) -> (i32, i32, i32, i32) {
    %c0_i32 = arith.constant 0 : i32
    %c0_i32_0 = arith.constant 0 : i32
    %c0_i32_1 = arith.constant 0 : i32
    %c0_i32_2 = arith.constant 0 : i32
    return %arg0, %c0_i32, %c0_i32_0, %c0_i32_1 : i32, i32, i32, i32
  }
}

</mosaic_0001>

<llo_original>
// kernel: relu_grouped_conv.1
$region0: #{relu_grouped_conv.1}
  #allocation0 [shape = 'u32[]', space=smem, size = 0x4, offset = 0x4, fixed_abs, tag = 'smem constant byte address 0x4 - core index']
  #allocation1 [shape = 'u32[144,128]{1,0:T(1,128)}', space=vmem, size = 0x12000, scoped, tag = 'internal scratch']
  %s0 = inlined_call_operand.vmem [shape: f32[25,16,144], index: 0, kind: input, shape index: {}]
  %s1 = inlined_call_operand.vmem [shape: f32[1,25,16,256], index: 1, kind: input, shape index: {}]
  %s2 = inlined_call_operand.vmem [shape: f32[1,25,16,128], index: 2, kind: output, shape index: {}]
  %s3 = sld [smem:[#allocation0]]
  $region18: #{relu_grouped_conv.1} parent=0
    _
  %s5 = ssub.s32 1, %s3
  %s6 = scalar_select 0, %s5, %s3
  // Predicated region
  $region2: #{relu_grouped_conv.1} parent=0 // pred_check
    _
  $region3: #{relu_grouped_conv.1} parent=0 // pred_check_branch
    %8 = sbr.rel (0) target = $region5
  $region4: #{relu_grouped_conv.1} parent=0 // pred_region
    _
  $region5: #{relu_grouped_conv.1} parent=0 // pred_fallthru
    _
  // Predicated region
  $region6: #{relu_grouped_conv.1} parent=0 // pred_check
    _
  $region7: #{relu_grouped_conv.1} parent=0 // pred_check_branch
    %10 = sbr.rel (0) target = $region9
  $region8: #{relu_grouped_conv.1} parent=0 // pred_region
    _
  $region9: #{relu_grouped_conv.1} parent=0 // pred_fallthru
    _
  %v11 = vld [vmem:[%s1] sm:$0xff]
  %v12 = vld [vmem:[%s1 + $0x10] sm:$0xff]
  %v13 = vld [vmem:[%s1 + $0x8] sm:$0xff]
  %v14 = vld [vmem:[%s1 + $0x18] sm:$0xff]
  %19 = vrot.lane.b32.xlu0 %v11, 127
  %v20 = vpop.permute.xlu0 %19
  %21 = vrot.lane.b32.xlu0 %v13, 127
  %v22 = vpop.permute.xlu0 %21
  %23 = vrot.lane.b32.xlu0 %v12, 127
  %v24 = vpop.permute.xlu0 %23
  %25 = vrot.lane.b32.xlu0 %v14, 127
  %v26 = vpop.permute.xlu0 %25
  %vm27 = vcmask 1039360
  %v28 = vsel %vm27, %v20, %v22
  %v29 = vsel %vm27, %v24, %v26
  %32 = vrot.lane.b32.xlu0 %v11, 126
  %v33 = vpop.permute.xlu0 %32
  %34 = vrot.lane.b32.xlu0 %v13, 126
  %v35 = vpop.permute.xlu0 %34
  %36 = vrot.lane.b32.xlu0 %v12, 126
  %v37 = vpop.permute.xlu0 %36
  %38 = vrot.lane.b32.xlu0 %v14, 126
  %v39 = vpop.permute.xlu0 %38
  %vm40 = vcmask 1031168
  %v41 = vsel %vm40, %v33, %v35
  %v42 = vsel %vm40, %v37, %v39
  %45 = vrot.lane.b32.xlu0 %v11, 119
  %v46 = vpop.permute.xlu0 %45
  %47 = vrot.lane.b32.xlu0 %v13, 119
  %v48 = vpop.permute.xlu0 %47
  %49 = vrot.lane.b32.xlu0 %v12, 119
  %v50 = vpop.permute.xlu0 %49
  %51 = vrot.lane.b32.xlu0 %v14, 119
  %v52 = vpop.permute.xlu0 %51
  %vm53 = vcmask 973824
  %v54 = vsel %vm53, %v46, %v48
  %v55 = vsel %vm53, %v50, %v52
  %58 = vrot.lane.b32.xlu0 %v11, 118
  %v59 = vpop.permute.xlu0 %58
  %60 = vrot.lane.b32.xlu0 %v13, 118
  %v61 = vpop.permute.xlu0 %60
  %62 = vrot.lane.b32.xlu0 %v12, 118
  %v63 = vpop.permute.xlu0 %62
  %64 = vrot.lane.b32.xlu0 %v14, 118
  %v65 = vpop.permute.xlu0 %64
  %vm66 = vcmask 965632
  %v67 = vsel %vm66, %v59, %v61
  %v68 = vsel %vm66, %v63, %v65
  %71 = vrot.lane.b32.xlu0 %v11, 117
  %v72 = vpop.permute.xlu0 %71
  %73 = vrot.lane.b32.xlu0 %v13, 117
  %v74 = vpop.permute.xlu0 %73
  %75 = vrot.lane.b32.xlu0 %v12, 117
  %v76 = vpop.permute.xlu0 %75
  %77 = vrot.lane.b32.xlu0 %v14, 117
  %v78 = vpop.permute.xlu0 %77
  %vm79 = vcmask 957440
  %v80 = vsel %vm79, %v72, %v74
  %v81 = vsel %vm79, %v76, %v78
  %84 = vrot.lane.b32.xlu0 %v11, 110
  %v85 = vpop.permute.xlu0 %84
  %86 = vrot.lane.b32.xlu0 %v13, 110
  %v87 = vpop.permute.xlu0 %86
  %88 = vrot.lane.b32.xlu0 %v12, 110
  %v89 = vpop.permute.xlu0 %88
  %90 = vrot.lane.b32.xlu0 %v14, 110
  %v91 = vpop.permute.xlu0 %90
  %vm92 = vcmask 900096
  %v93 = vsel %vm92, %v85, %v87
  %v94 = vsel %vm92, %v89, %v91
  %97 = vrot.lane.b32.xlu0 %v11, 109
  %v98 = vpop.permute.xlu0 %97
  %99 = vrot.lane.b32.xlu0 %v13, 109
  %v100 = vpop.permute.xlu0 %99
  %101 = vrot.lane.b32.xlu0 %v12, 109
  %v102 = vpop.permute.xlu0 %101
  %103 = vrot.lane.b32.xlu0 %v14, 109
  %v104 = vpop.permute.xlu0 %103
  %vm105 = vcmask 891904
  %v106 = vsel %vm105, %v98, %v100
  %v107 = vsel %vm105, %v102, %v104
  %110 = vrot.lane.b32.xlu0 %v11, 108
  %v111 = vpop.permute.xlu0 %110
  %112 = vrot.lane.b32.xlu0 %v13, 108
  %v113 = vpop.permute.xlu0 %112
  %114 = vrot.lane.b32.xlu0 %v12, 108
  %v115 = vpop.permute.xlu0 %114
  %116 = vrot.lane.b32.xlu0 %v14, 108
  %v117 = vpop.permute.xlu0 %116
  %vm118 = vcmask 883712
  %v119 = vsel %vm118, %v111, %v113
  %v120 = vsel %vm118, %v115, %v117
  %v123 = vmax.f32 %v11, 0.0
  %v124 = vmax.f32 %v12, 0.0
  %v125 = vmax.f32 %v28, 0.0
  %v126 = vmax.f32 %v29, 0.0
  %v127 = vmax.f32 %v41, 0.0
  %v128 = vmax.f32 %v42, 0.0
  %v129 = vmax.f32 %v54, 0.0
  %v130 = vmax.f32 %v55, 0.0
  %v131 = vmax.f32 %v67, 0.0
  %v132 = vmax.f32 %v68, 0.0
  %v133 = vmax.f32 %v80, 0.0
  %v134 = vmax.f32 %v81, 0.0
  %v135 = vmax.f32 %v93, 0.0
  %v136 = vmax.f32 %v94, 0.0
  %v137 = vmax.f32 %v106, 0.0
  %v138 = vmax.f32 %v107, 0.0
  %v139 = vmax.f32 %v119, 0.0
  %v140 = vmax.f32 %v120, 0.0
  %v141 = vld [vmem:[%s0] sm:$0xff]
  %v142 = vld [vmem:[%s0 + $0x8] sm:$0xff]
  %v143 = vld [vmem:[%s0 + $0x10] sm:$0xff]
  %v144 = vld [vmem:[%s0 + $0x18] sm:$0xff]
  %vm145 = vcmask 130048
  %v147 = vsel %vm145, %v142, 0
  %v150 = vsel %vm145, %v144, 0
  %152 = vmatprep.subr.mxu0 0.0
  %153 = vmatpush1.msra.mxu0 %v123
  %154 = vmatprep.subr.mxu0 0.0
  %155 = vmatpush1.msra.mxu0 %v124
  %156 = vmatprep.subr.mxu0 0.0
  %157 = vmatpush1.msra.mxu0 %v125
  %158 = vmatprep.subr.mxu0 0.0
  %159 = vmatpush1.msra.mxu0 %v126
  %160 = vmatprep.subr.mxu0 0.0
  %161 = vmatpush1.msra.mxu0 %v127
  %162 = vmatprep.subr.mxu0 0.0
  %163 = vmatpush1.msra.mxu0 %v128
  %164 = vmatprep.subr.mxu0 0.0
  %165 = vmatpush1.msra.mxu0 %v129
  %166 = vmatprep.subr.mxu0 0.0
  %167 = vmatpush1.msra.mxu0 %v130
  %168 = vmatprep.subr.mxu0 0.0
  %169 = vmatpush1.msra.mxu0 %v131
  %170 = vmatprep.subr.mxu0 0.0
  %171 = vmatpush1.msra.mxu0 %v132
  %172 = vmatprep.subr.mxu0 0.0
  %173 = vmatpush1.msra.mxu0 %v133
  %174 = vmatprep.subr.mxu0 0.0
  %175 = vmatpush1.msra.mxu0 %v134
  %176 = vmatprep.subr.mxu0 0.0
  %177 = vmatpush1.msra.mxu0 %v135
  %178 = vmatprep.subr.mxu0 0.0
  %179 = vmatpush1.msra.mxu0 %v136
  %180 = vmatprep.subr.mxu0 0.0
  %181 = vmatpush1.msra.mxu0 %v137
  %182 = vmatprep.subr.mxu0 0.0
  %183 = vmatpush1.msra.mxu0 %v138
  %184 = vmatprep.subr.mxu0 0.0
  %185 = vmatpush1.msra.mxu0 %v139
  %186 = vmatprep.subr.mxu0 0.0
  %187 = vmatpush1.msra.mxu0 %v140
  %188 = vmatprep.subr.mxu0 0.0
  %189 = vmatpush1.msra.mxu0 0.0
  %190 = vmatprep.subr.mxu0 0.0
  %191 = vmatpush1.msra.mxu0 0.0
  %192 = vmatprep.subr.mxu0 0.0
  %193 = vmatpush1.msra.mxu0 0.0
  %194 = vmatprep.subr.mxu0 0.0
  %195 = vmatpush1.msra.mxu0 0.0
  %196 = vmatprep.subr.mxu0 0.0
  %197 = vmatpush1.msra.mxu0 0.0
  %198 = vmatprep.subr.mxu0 0.0
  %199 = vmatpush1.msra.mxu0 0.0
  %200 = vmatprep.subr.mxu0 0.0
  %201 = vmatpush1.msra.mxu0 0.0
  %202 = vmatprep.subr.mxu0 0.0
  %203 = vmatpush1.msra.mxu0 0.0
  %204 = vmatprep.subr.mxu0 0.0
  %205 = vmatpush1.msra.mxu0 0.0
  %206 = vmatprep.subr.mxu0 0.0
  %207 = vmatpush1.msra.mxu0 0.0
  %208 = vmatprep.subr.mxu0 0.0
  %209 = vmatpush1.msra.mxu0 0.0
  %210 = vmatprep.subr.mxu0 0.0
  %211 = vmatpush1.msra.mxu0 0.0
  %212 = vmatprep.subr.mxu0 0.0
  %213 = vmatpush1.msra.mxu0 0.0
  %214 = vmatprep.subr.mxu0 0.0
  %215 = vmatpush1.msra.mxu0 0.0
  %216 = vmatprep.mubr.f32.mxu0 %v147
  %217 = vmatmul.mubr.f32.gmra.mrb[0].mxu0 %v141
  %v218 = vpop.f32.mrb[0].mxu0
  %v219 = vadd.f32 0.0, %v218
  %v220 = vpop.f32.mrb[0].mxu0
  %221 = vmatprep.mubr.f32.mxu0 %v150
  %222 = vmatmul.mubr.f32.gmra.mrb[0].mxu0 %v143
  %v223 = vpop.f32.mrb[0].mxu0
  %v224 = vadd.f32 0.0, %v223
  %v225 = vpop.f32.mrb[0].mxu0
  %226 = vdwg.mxu0
  %227 = vst [vmem:[%s2] sm:$0xff] %v219
  %228 = vst [vmem:[%s2 + $0x8] sm:$0xff] %v224
  %s229 = scalar_lea.vmem %s1, 32
  %v230 = vld [vmem:[%s229] sm:$0xff]
  %v231 = vld [vmem:[%s229 + $0x10] sm:$0xff]
  %v232 = vld [vmem:[%s229 + $0x8] sm:$0xff]
  %v233 = vld [vmem:[%s229 + $0x18] sm:$0xff]
  %238 = vrot.lane.b32.xlu0 %v230, 127
  %v239 = vpop.permute.xlu0 %238
  %240 = vrot.lane.b32.xlu0 %v232, 127
  %v241 = vpop.permute.xlu0 %240
  %242 = vrot.lane.b32.xlu0 %v231, 127
  %v243 = vpop.permute.xlu0 %242
  %244 = vrot.lane.b32.xlu0 %v233, 127
  %v245 = vpop.permute.xlu0 %244
  %v246 = vsel %vm27, %v239, %v241
  %v247 = vsel %vm27, %v243, %v245
  %250 = vrot.lane.b32.xlu0 %v230, 126
  %v251 = vpop.permute.xlu0 %250
  %252 = vrot.lane.b32.xlu0 %v232, 126
  %v253 = vpop.permute.xlu0 %252
  %254 = vrot.lane.b32.xlu0 %v231, 126
  %v255 = vpop.permute.xlu0 %254
  %256 = vrot.lane.b32.xlu0 %v233, 126
  %v257 = vpop.permute.xlu0 %256
  %v258 = vsel %vm40, %v251, %v253
  %v259 = vsel %vm40, %v255, %v257
  %262 = vrot.lane.b32.xlu0 %v230, 119
  %v263 = vpop.permute.xlu0 %262
  %264 = vrot.lane.b32.xlu0 %v232, 119
  %v265 = vpop.permute.xlu0 %264
  %266 = vrot.lane.b32.xlu0 %v231, 119
  %v267 = vpop.permute.xlu0 %266
  %268 = vrot.lane.b32.xlu0 %v233, 119
  %v269 = vpop.permute.xlu0 %268
  %v270 = vsel %vm53, %v263, %v265
  %v271 = vsel %vm53, %v267, %v269
  %274 = vrot.lane.b32.xlu0 %v230, 118
  %v275 = vpop.permute.xlu0 %274
  %276 = vrot.lane.b32.xlu0 %v232, 118
  %v277 = vpop.permute.xlu0 %276
  %278 = vrot.lane.b32.xlu0 %v231, 118
  %v279 = vpop.permute.xlu0 %278
  %280 = vrot.lane.b32.xlu0 %v233, 118
  %v281 = vpop.permute.xlu0 %280
  %v282 = vsel %vm66, %v275, %v277
  %v283 = vsel %vm66, %v279, %v281
  %286 = vrot.lane.b32.xlu0 %v230, 117
  %v287 = vpop.permute.xlu0 %286
  %288 = vrot.lane.b32.xlu0 %v232, 117
  %v289 = vpop.permute.xlu0 %288
  %290 = vrot.lane.b32.xlu0 %v231, 117
  %v291 = vpop.permute.xlu0 %290
  %292 = vrot.lane.b32.xlu0 %v233, 117
  %v293 = vpop.permute.xlu0 %292
  %v294 = vsel %vm79, %v287, %v289
  %v295 = vsel %vm79, %v291, %v293
  %298 = vrot.lane.b32.xlu0 %v230, 110
  %v299 = vpop.permute.xlu0 %298
  %300 = vrot.lane.b32.xlu0 %v232, 110
  %v301 = vpop.permute.xlu0 %300
  %302 = vrot.lane.b32.xlu0 %v231, 110
  %v303 = vpop.permute.xlu0 %302
  %304 = vrot.lane.b32.xlu0 %v233, 110
  %v305 = vpop.permute.xlu0 %304
  %v306 = vsel %vm92, %v299, %v301
  %v307 = vsel %vm92, %v303, %v305
  %310 = vrot.lane.b32.xlu0 %v230, 109
  %v311 = vpop.permute.xlu0 %310
  %312 = vrot.lane.b32.xlu0 %v232, 109
  %v313 = vpop.permute.xlu0 %312
  %314 = vrot.lane.b32.xlu0 %v231, 109
  %v315 = vpop.permute.xlu0 %314
  %316 = vrot.lane.b32.xlu0 %v233, 109
  %v317 = vpop.permute.xlu0 %316
  %v318 = vsel %vm105, %v311, %v313
  %v319 = vsel %vm105, %v315, %v317
  %322 = vrot.lane.b32.xlu0 %v230, 108
  %v323 = vpop.permute.xlu0 %322
  %324 = vrot.lane.b32.xlu0 %v232, 108
  %v325 = vpop.permute.xlu0 %324
  %326 = vrot.lane.b32.xlu0 %v231, 108
  %v327 = vpop.permute.xlu0 %326
  %328 = vrot.lane.b32.xlu0 %v233, 108
  %v329 = vpop.permute.xlu0 %328
  %v330 = vsel %vm118, %v323, %v325
  %v331 = vsel %vm118, %v327, %v329
  %v334 = vmax.f32 %v230, 0.0
  %v335 = vmax.f32 %v231, 0.0
  %v336 = vmax.f32 %v246, 0.0
  %v337 = vmax.f32 %v247, 0.0
  %v338 = vmax.f32 %v258, 0.0
  %v339 = vmax.f32 %v259, 0.0
  %v340 = vmax.f32 %v270, 0.0
  %v341 = vmax.f32 %v271, 0.0
  %v342 = vmax.f32 %v282, 0.0
  %v343 = vmax.f32 %v283, 0.0
  %v344 = vmax.f32 %v294, 0.0
  %v345 = vmax.f32 %v295, 0.0
  %v346 = vmax.f32 %v306, 0.0
  %v347 = vmax.f32 %v307, 0.0
  %v348 = vmax.f32 %v318, 0.0
  %v349 = vmax.f32 %v319, 0.0
  %v350 = vmax.f32 %v330, 0.0
  %v351 = vmax.f32 %v331, 0.0
  %s352 = scalar_lea.vmem %s0, 32
  %v353 = vld [vmem:[%s352] sm:$0xff]
  %v354 = vld [vmem:[%s352 + $0x8] sm:$0xff]
  %v355 = vld [vmem:[%s352 + $0x10] sm:$0xff]
  %v356 = vld [vmem:[%s352 + $0x18] sm:$0xff]
  %v358 = vsel %vm145, %v354, 0
  %v361 = vsel %vm145, %v356, 0
  %363 = vmatprep.subr.mxu0 0.0
  %364 = vmatpush1.msra.mxu0 %v334
  %365 = vmatprep.subr.mxu0 0.0
  %366 = vmatpush1.msra.mxu0 %v335
  %367 = vmatprep.subr.mxu0 0.0
  %368 = vmatpush1.msra.mxu0 %v336
  %369 = vmatprep.subr.mxu0 0.0
  %370 = vmatpush1.msra.mxu0 %v337
  %371 = vmatprep.subr.mxu0 0.0
  %372 = vmatpush1.msra.mxu0 %v338
  %373 = vmatprep.subr.mxu0 0.0
  %374 = vmatpush1.msra.mxu0 %v339
  %375 = vmatprep.subr.mxu0 0.0
  %376 = vmatpush1.msra.mxu0 %v340
  %377 = vmatprep.subr.mxu0 0.0
  %378 = vmatpush1.msra.mxu0 %v341
  %379 = vmatprep.subr.mxu0 0.0
  %380 = vmatpush1.msra.mxu0 %v342
  %381 = vmatprep.subr.mxu0 0.0
  %382 = vmatpush1.msra.mxu0 %v343
  %383 = vmatprep.subr.mxu0 0.0
  %384 = vmatpush1.msra.mxu0 %v344
  %385 = vmatprep.subr.mxu0 0.0
  %386 = vmatpush1.msra.mxu0 %v345
  %387 = vmatprep.subr.mxu0 0.0
  %388 = vmatpush1.msra.mxu0 %v346
  %389 = vmatprep.subr.mxu0 0.0
  %390 = vmatpush1.msra.mxu0 %v347
  %391 = vmatprep.subr.mxu0 0.0
  %392 = vmatpush1.msra.mxu0 %v348
  %393 = vmatprep.subr.mxu0 0.0
  %394 = vmatpush1.msra.mxu0 %v349
  %395 = vmatprep.subr.mxu0 0.0
  %396 = vmatpush1.msra.mxu0 %v350
  %397 = vmatprep.subr.mxu0 0.0
  %398 = vmatpush1.msra.mxu0 %v351
  %399 = vmatprep.subr.mxu0 0.0
  %400 = vmatpush1.msra.mxu0 0.0
  %401 = vmatprep.subr.mxu0 0.0
  %402 = vmatpush1.msra.mxu0 0.0
  %403 = vmatprep.subr.mxu0 0.0
  %404 = vmatpush1.msra.mxu0 0.0
  %405 = vmatprep.subr.mxu0 0.0
  %406 = vmatpush1.msra.mxu0 0.0
  %407 = vmatprep.subr.mxu0 0.0
  %408 = vmatpush1.msra.mxu0 0.0
  %409 = vmatprep.subr.mxu0 0.0
  %410 = vmatpush1.msra.mxu0 0.0
  %411 = vmatprep.subr.mxu0 0.0
  %412 = vmatpush1.msra.mxu0 0.0
  %413 = vmatprep.subr.mxu0 0.0
  %414 = vmatpush1.msra.mxu0 0.0
  %415 = vmatprep.subr.mxu0 0.0
  %416 = vmatpush1.msra.mxu0 0.0
  %417 = vmatprep.subr.mxu0 0.0
  %418 = vmatpush1.msra.mxu0 0.0
  %419 = vmatprep.subr.mxu0 0.0
  %420 = vmatpush1.msra.mxu0 0.0
  %421 = vmatprep.subr.mxu0 0.0
  %422 = vmatpush1.msra.mxu0 0.0
  %423 = vmatprep.subr.mxu0 0.0
  %424 = vmatpush1.msra.mxu0 0.0
  %425 = vmatprep.subr.mxu0 0.0
  %426 = vmatpush1.msra.mxu0 0.0
  %427 = vmatprep.mubr.f32.mxu0 %v358
  %428 = vmatmul.mubr.f32.gmra.mrb[0].mxu0 %v353
  %v429 = vpop.f32.mrb[0].mxu0
  %v430 = vadd.f32 0.0, %v429
  %v431 = vpop.f32.mrb[0].mxu0
  %432 = vmatprep.mubr.f32.mxu0 %v361
  %433 = vmatmul.mubr.f32.gmra.mrb[0].mxu0 %v355
  %v434 = vpop.f32.mrb[0].mxu0
  %v435 = vadd.f32 0.0, %v434
  %v436 = vpop.f32.mrb[0].mxu0
  %437 = vdwg.mxu0
  %s438 = scalar_lea.vmem %s2, 16
  %439 = vst [vmem:[%s438] sm:$0xff] %v430
  %440 = vst [vmem:[%s438 + $0x8] sm:$0xff] %v435
  %s441 = scalar_lea.vmem %s1, 64
  %v442 = vld [vmem:[%s441] sm:$0xff]
  %v443 = vld [vmem:[%s441 + $0x10] sm:$0xff]
  %v444 = vld [vmem:[%s441 + $0x8] sm:$0xff]
  %v445 = vld [vmem:[%s441 + $0x18] sm:$0xff]
  %450 = vrot.lane.b32.xlu0 %v442, 127
  %v451 = vpop.permute.xlu0 %450
  %452 = vrot.lane.b32.xlu0 %v444, 127
  %v453 = vpop.permute.xlu0 %452
  %454 = vrot.lane.b32.xlu0 %v443, 127
  %v455 = vpop.permute.xlu0 %454
  %456 = vrot.lane.b32.xlu0 %v445, 127
  %v457 = vpop.permute.xlu0 %456
  %v458 = vsel %vm27, %v451, %v453
  %v459 = vsel %vm27, %v455, %v457
  %462 = vrot.lane.b32.xlu0 %v442, 126
  %v463 = vpop.permute.xlu0 %462
  %464 = vrot.lane.b32.xlu0 %v444, 126
  %v465 = vpop.permute.xlu0 %464
  %466 = vrot.lane.b32.xlu0 %v443, 126
  %v467 = vpop.permute.xlu0 %466
  %468 = vrot.lane.b32.xlu0 %v445, 126
  %v469 = vpop.permute.xlu0 %468
  %v470 = vsel %vm40, %v463, %v465
  %v471 = vsel %vm40, %v467, %v469
  %474 = vrot.lane.b32.xlu0 %v442, 119
  %v475 = vpop.permute.xlu0 %474
  %476 = vrot.lane.b32.xlu0 %v444, 119
  %v477 = vpop.permute.xlu0 %476
  %478 = vrot.lane.b32.xlu0 %v443, 119
  %v479 = vpop.permute.xlu0 %478
  %480 = vrot.lane.b32.xlu0 %v445, 119
  %v481 = vpop.permute.xlu0 %480
  %v482 = vsel %vm53, %v475, %v477
  %v483 = vsel %vm53, %v479, %v481
  %486 = vrot.lane.b32.xlu0 %v442, 118
  %v487 = vpop.permute.xlu0 %486
  %488 = vrot.lane.b32.xlu0 %v444, 118
  %v489 = vpop.permute.xlu0 %488
  %490 = vrot.lane.b32.xlu0 %v443, 118
  %v491 = vpop.permute.xlu0 %490
  %492 = vrot.lane.b32.xlu0 %v445, 118
  %v493 = vpop.permute.xlu0 %492
  %v494 = vsel %vm66, %v487, %v489
  %v495 = vsel %vm66, %v491, %v493
  %498 = vrot.lane.b32.xlu0 %v442, 117
  %v499 = vpop.permute.xlu0 %498
  %500 = vrot.lane.b32.xlu0 %v444, 117
  %v501 = vpop.permute.xlu0 %500
  %502 = vrot.lane.b32.xlu0 %v443, 117
  %v503 = vpop.permute.xlu0 %502
  %504 = vrot.lane.b32.xlu0 %v445, 117
  %v505 = vpop.permute.xlu0 %504
  %v506 = vsel %vm79, %v499, %v501
  %v507 = vsel %vm79, %v503, %v505
  %510 = vrot.lane.b32.xlu0 %v442, 110
  %v511 = vpop.permute.xlu0 %510
  %512 = vrot.lane.b32.xlu0 %v444, 110
  %v513 = vpop.permute.xlu0 %512
  %514 = vrot.lane.b32.xlu0 %v443, 110
  %v515 = vpop.permute.xlu0 %514
  %516 = vrot.lane.b32.xlu0 %v445, 110
  %v517 = vpop.permute.xlu0 %516
  %v518 = vsel %vm92, %v511, %v513
  %v519 = vsel %vm92, %v515, %v517
  %522 = vrot.lane.b32.xlu0 %v442, 109
  %v523 = vpop.permute.xlu0 %522
  %524 = vrot.lane.b32.xlu0 %v444, 109
  %v525 = vpop.permute.xlu0 %524
  %526 = vrot.lane.b32.xlu0 %v443, 109
  %v527 = vpop.permute.xlu0 %526
  %528 = vrot.lane.b32.xlu0 %v445, 109
  %v529 = vpop.permute.xlu0 %528
  %v530 = vsel %vm105, %v523, %v525
  %v531 = vsel %vm105, %v527, %v529
  %534 = vrot.lane.b32.xlu0 %v442, 108
  %v535 = vpop.permute.xlu0 %534
  %536 = vrot.lane.b32.xlu0 %v444, 108
  %v537 = vpop.permute.xlu0 %536
  %538 = vrot.lane.b32.xlu0 %v443, 108
  %v539 = vpop.permute.xlu0 %538
  %540 = vrot.lane.b32.xlu0 %v445, 108
  %v541 = vpop.permute.xlu0 %540
  %v542 = vsel %vm118, %v535, %v537
  %v543 = vsel %vm118, %v539, %v541
  %v546 = vmax.f32 %v442, 0.0
  %v547 = vmax.f32 %v443, 0.0
  %v548 = vmax.f32 %v458, 0.0
  %v549 = vmax.f32 %v459, 0.0
  %v550 = vmax.f32 %v470, 0.0
  %v551 = vmax.f32 %v471, 0.0
  %v552 = vmax.f32 %v482, 0.0
  %v553 = vmax.f32 %v483, 0.0
  %v554 = vmax.f32 %v494, 0.0
  %v555 = vmax.f32 %v495, 0.0
  %v556 = vmax.f32 %v506, 0.0
  %v557 = vmax.f32 %v507, 0.0
  %v558 = vmax.f32 %v518, 0.0
  %v559 = vmax.f32 %v519, 0.0
  %v560 = vmax.f32 %v530, 0.0
  %v561 = vmax.f32 %v531, 0.0
  %v562 = vmax.f32 %v542, 0.0
  %v563 = vmax.f32 %v543, 0.0
  %s564 = scalar_lea.vmem %s0, 64
  %v565 = vld [vmem:[%s564] sm:$0xff]
  %v566 = vld [vmem:[%s564 + $0x8] sm:$0xff]
  %v567 = vld [vmem:[%s564 + $0x10] sm:$0xff]
  %v568 = vld [vmem:[%s564 + $0x18] sm:$0xff]
  %v570 = vsel %vm145, %v566, 0
  %v573 = vsel %vm145, %v568, 0
  %575 = vmatprep.subr.mxu0 0.0
  %576 = vmatpush1.msra.mxu0 %v546
  %577 = vmatprep.subr.mxu0 0.0
  %578 = vmatpush1.msra.mxu0 %v547
  %579 = vmatprep.subr.mxu0 0.0
  %580 = vmatpush1.msra.mxu0 %v548
  %581 = vmatprep.subr.mxu0 0.0
  %582 = vmatpush1.msra.mxu0 %v549
  %583 = vmatprep.subr.mxu0 0.0
  %584 = vmatpush1.msra.mxu0 %v550
  %585 = vmatprep.subr.mxu0 0.0
  %586 = vmatpush1.msra.mxu0 %v551
  %587 = vmatprep.subr.mxu0 0.0
  %588 = vmatpush1.msra.mxu0 %v552
  %589 = vmatprep.subr.mxu0 0.0
  %590 = vmatpush1.msra.mxu0 %v553
  %591 = vmatprep.subr.mxu0 0.0
  %592 = vmatpush1.msra.mxu0 %v554
  %593 = vmatprep.subr.mxu0 0.0
  %594 = vmatpush1.msra.mxu0 %v555
  %595 = vmatprep.subr.mxu0 0.0
  %596 = vmatpush1.msra.mxu0 %v556
  %597 = vmatprep.subr.mxu0 0.0
  %598 = vmatpush1.msra.mxu0 %v557
  %599 = vmatprep.subr.mxu0 0.0
  %600 = vmatpush1.msra.mxu0 %v558
  %601 = vmatprep.subr.mxu0 0.0
  %602 = vmatpush1.msra.mxu0 %v559
  %603 = vmatprep.subr.mxu0 0.0
  %604 = vmatpush1.msra.mxu0 %v560
  %605 = vmatprep.subr.mxu0 0.0
  %606 = vmatpush1.msra.mxu0 %v561
  %607 = vmatprep.subr.mxu0 0.0
  %608 = vmatpush1.msra.mxu0 %v562
  %609 = vmatprep.subr.mxu0 0.0
  %610 = vmatpush1.msra.mxu0 %v563
  %611 = vmatprep.subr.mxu0 0.0
  %612 = vmatpush1.msra.mxu0 0.0
  %613 = vmatprep.subr.mxu0 0.0
  %614 = vmatpush1.msra.mxu0 0.0
  %615 = vmatprep.subr.mxu0 0.0
  %616 = vmatpush1.msra.mxu0 0.0
  %617 = vmatprep.subr.mxu0 0.0
  %618 = vmatpush1.msra.mxu0 0.0
  %619 = vmatprep.subr.mxu0 0.0
  %620 = vmatpush1.msra.mxu0 0.0
  %621 = vmatprep.subr.mxu0 0.0
  %622 = vmatpush1.msra.mxu0 0.0
  %623 = vmatprep.subr.mxu0 0.0
  %624 = vmatpush1.msra.mxu0 0.0
  %625 = vmatprep.subr.mxu0 0.0
  %626 = vmatpush1.msra.mxu0 0.0
  %627 = vmatprep.subr.mxu0 0.0
  %628 = vmatpush1.msra.mxu0 0.0
  %629 = vmatprep.subr.mxu0 0.0
  %630 = vmatpush1.msra.mxu0 0.0
  %631 = vmatprep.subr.mxu0 0.0
  %632 = vmatpush1.msra.mxu0 0.0
  %633 = vmatprep.subr.mxu0 0.0
  %634 = vmatpush1.msra.mxu0 0.0
  %635 = vmatprep.subr.mxu0 0.0
  %636 = vmatpush1.msra.mxu0 0.0
  %637 = vmatprep.subr.mxu0 0.0
  %638 = vmatpush1.msra.mxu0 0.0
  %639 = vmatprep.mubr.f32.mxu0 %v570
  %640 = vmatmul.mubr.f32.gmra.mrb[0].mxu0 %v565
  %v641 = vpop.f32.mrb[0].mxu0
  %v642 = vadd.f32 0.0, %v641
  %v643 = vpop.f32.mrb[0].mxu0
  %644 = vmatprep.mubr.f32.mxu0 %v573
  %645 = vmatmul.mubr.f32.gmra.mrb[0].mxu0 %v567
  %v646 = vpop.f32.mrb[0].mxu0
  %v647 = vadd.f32 0.0, %v646
  %v648 = vpop.f32.mrb[0].mxu0
  %649 = vdwg.mxu0
  %s650 = scalar_lea.vmem %s2, 32
  %651 = vst [vmem:[%s650] sm:$0xff] %v642
  %652 = vst [vmem:[%s650 + $0x8] sm:$0xff] %v647
  %s653 = scalar_lea.vmem %s1, 96
  %v654 = vld [vmem:[%s653] sm:$0xff]
  %v655 = vld [vmem:[%s653 + $0x10] sm:$0xff]
  %v656 = vld [vmem:[%s653 + $0x8] sm:$0xff]
  %v657 = vld [vmem:[%s653 + $0x18] sm:$0xff]
  %662 = vrot.lane.b32.xlu0 %v654, 127
  %v663 = vpop.permute.xlu0 %662
  %664 = vrot.lane.b32.xlu0 %v656, 127
  %v665 = vpop.permute.xlu0 %664
  %666 = vrot.lane.b32.xlu0 %v655, 127
  %v667 = vpop.permute.xlu0 %666
  %668 = vrot.lane.b32.xlu0 %v657, 127
  %v669 = vpop.permute.xlu0 %668
  %v670 = vsel %vm27, %v663, %v665
  %v671 = vsel %vm27, %v667, %v669
  %674 = vrot.lane.b32.xlu0 %v654, 126
  %v675 = vpop.permute.xlu0 %674
  %676 = vrot.lane.b32.xlu0 %v656, 126
  %v677 = vpop.permute.xlu0 %676
  %678 = vrot.lane.b32.xlu0 %v655, 126
  %v679 = vpop.permute.xlu0 %678
  %680 = vrot.lane.b32.xlu0 %v657, 126
  %v681 = vpop.permute.xlu0 %680
  %v682 = vsel %vm40, %v675, %v677
  %v683 = vsel %vm40, %v679, %v681
  %686 = vrot.lane.b32.xlu0 %v654, 119
  %v687 = vpop.permute.xlu0 %686
  %688 = vrot.lane.b32.xlu0 %v656, 119
  %v689 = vpop.permute.xlu0 %688
  %690 = vrot.lane.b32.xlu0 %v655, 119
  %v691 = vpop.permute.xlu0 %690
  %692 = vrot.lane.b32.xlu0 %v657, 119
  %v693 = vpop.permute.xlu0 %692
  %v694 = vsel %vm53, %v687, %v689
  %v695 = vsel %vm53, %v691, %v693
  %698 = vrot.lane.b32.xlu0 %v654, 118
  %v699 = vpop.permute.xlu0 %698
  %700 = vrot.lane.b32.xlu0 %v656, 118
  %v701 = vpop.permute.xlu0 %700
  %702 = vrot.lane.b32.xlu0 %v655, 118
  %v703 = vpop.permute.xlu0 %702
  %704 = vrot.lane.b32.xlu0 %v657, 118
  %v705 = vpop.permute.xlu0 %704
  %v706 = vsel %vm66, %v699, %v701
  %v707 = vsel %vm66, %v703, %v705
  %710 = vrot.lane.b32.xlu0 %v654, 117
  %v711 = vpop.permute.xlu0 %710
  %712 = vrot.lane.b32.xlu0 %v656, 117
  %v713 = vpop.permute.xlu0 %712
  %714 = vrot.lane.b32.xlu0 %v655, 117
  %v715 = vpop.permute.xlu0 %714
  %716 = vrot.lane.b32.xlu0 %v657, 117
  %v717 = vpop.permute.xlu0 %716
  %v718 = vsel %vm79, %v711, %v713
  %v719 = vsel %vm79, %v715, %v717
  %722 = vrot.lane.b32.xlu0 %v654, 110
  %v723 = vpop.permute.xlu0 %722
  %724 = vrot.lane.b32.xlu0 %v656, 110
  %v725 = vpop.permute.xlu0 %724
  %726 = vrot.lane.b32.xlu0 %v655, 110
  %v727 = vpop.permute.xlu0 %726
  %728 = vrot.lane.b32.xlu0 %v657, 110
  %v729 = vpop.permute.xlu0 %728
  %v730 = vsel %vm92, %v723, %v725
  %v731 = vsel %vm92, %v727, %v729
  %734 = vrot.lane.b32.xlu0 %v654, 109
  %v735 = vpop.permute.xlu0 %734
  %736 = vrot.lane.b32.xlu0 %v656, 109
  %v737 = vpop.permute.xlu0 %736
  %738 = vrot.lane.b32.xlu0 %v655, 109
  %v739 = vpop.permute.xlu0 %738
  %740 = vrot.lane.b32.xlu0 %v657, 109
  %v741 = vpop.permute.xlu0 %740
  %v742 = vsel %vm105, %v735, %v737
  %v743 = vsel %vm105, %v739, %v741
  %746 = vrot.lane.b32.xlu0 %v654, 108
  %v747 = vpop.permute.xlu0 %746
  %748 = vrot.lane.b32.xlu0 %v656, 108
  %v749 = vpop.permute.xlu0 %748
  %750 = vrot.lane.b32.xlu0 %v655, 108
  %v751 = vpop.permute.xlu0 %750
  %752 = vrot.lane.b32.xlu0 %v657, 108
  %v753 = vpop.permute.xlu0 %752
  %v754 = vsel %vm118, %v747, %v749
  %v755 = vsel %vm118, %v751, %v753
  %v758 = vmax.f32 %v654, 0.0
  %v759 = vmax.f32 %v655, 0.0
  %v760 = vmax.f32 %v670, 0.0
  %v761 = vmax.f32 %v671, 0.0
  %v762 = vmax.f32 %v682, 0.0
  %v763 = vmax.f32 %v683, 0.0
  %v764 = vmax.f32 %v694, 0.0
  %v765 = vmax.f32 %v695, 0.0
  %v766 = vmax.f32 %v706, 0.0
  %v767 = vmax.f32 %v707, 0.0
  %v768 = vmax.f32 %v718, 0.0
  %v769 = vmax.f32 %v719, 0.0
  %v770 = vmax.f32 %v730, 0.0
  %v771 = vmax.f32 %v731, 0.0
  %v772 = vmax.f32 %v742, 0.0
  %v773 = vmax.f32 %v743, 0.0
  %v774 = vmax.f32 %v754, 0.0
  %v775 = vmax.f32 %v755, 0.0
  %s776 = scalar_lea.vmem %s0, 96
  %v777 = vld [vmem:[%s776] sm:$0xff]
  %v778 = vld [vmem:[%s776 + $0x8] sm:$0xff]
  %v779 = vld [vmem:[%s776 + $0x10] sm:$0xff]
  %v780 = vld [vmem:[%s776 + $0x18] sm:$0xff]
  %v782 = vsel %vm145, %v778, 0
  %v785 = vsel %vm145, %v780, 0
  %787 = vmatprep.subr.mxu0 0.0
  %788 = vmatpush1.msra.mxu0 %v758
  %789 = vmatprep.subr.mxu0 0.0
  %790 = vmatpush1.msra.mxu0 %v759
  %791 = vmatprep.subr.mxu0 0.0
  %792 = vmatpush1.msra.mxu0 %v760
  %793 = vmatprep.subr.mxu0 0.0
  %794 = vmatpush1.msra.mxu0 %v761
  %795 = vmatprep.subr.mxu0 0.0
  %796 = vmatpush1.msra.mxu0 %v762
  %797 = vmatprep.subr.mxu0 0.0
  %798 = vmatpush1.msra.mxu0 %v763
  %799 = vmatprep.subr.mxu0 0.0
  %800 = vmatpush1.msra.mxu0 %v764
  %801 = vmatprep.subr.mxu0 0.0
  %802 = vmatpush1.msra.mxu0 %v765
  %803 = vmatprep.subr.mxu0 0.0
  %804 = vmatpush1.msra.mxu0 %v766
  %805 = vmatprep.subr.mxu0 0.0
  %806 = vmatpush1.msra.mxu0 %v767
  %807 = vmatprep.subr.mxu0 0.0
  %808 = vmatpush1.msra.mxu0 %v768
  %809 = vmatprep.subr.mxu0 0.0
  %810 = vmatpush1.msra.mxu0 %v769
  %811 = vmatprep.subr.mxu0 0.0
  %812 = vmatpush1.msra.mxu0 %v770
  %813 = vmatprep.subr.mxu0 0.0
  %814 = vmatpush1.msra.mxu0 %v771
  %815 = vmatprep.subr.mxu0 0.0
  %816 = vmatpush1.msra.mxu0 %v772
  %817 = vmatprep.subr.mxu0 0.0
  %818 = vmatpush1.msra.mxu0 %v773
  %819 = vmatprep.subr.mxu0 0.0
  %820 = vmatpush1.msra.mxu0 %v774
  %821 = vmatprep.subr.mxu0 0.0
  %822 = vmatpush1.msra.mxu0 %v775
  %823 = vmatprep.subr.mxu0 0.0
  %824 = vmatpush1.msra.mxu0 0.0
  %825 = vmatprep.subr.mxu0 0.0
  %826 = vmatpush1.msra.mxu0 0.0
  %827 = vmatprep.subr.mxu0 0.0
  %828 = vmatpush1.msra.mxu0 0.0
  %829 = vmatprep.subr.mxu0 0.0
  %830 = vmatpush1.msra.mxu0 0.0
  %831 = vmatprep.subr.mxu0 0.0
  %832 = vmatpush1.msra.mxu0 0.0
  %833 = vmatprep.subr.mxu0 0.0
  %834 = vmatpush1.msra.mxu0 0.0
  %835 = vmatprep.subr.mxu0 0.0
  %836 = vmatpush1.msra.mxu0 0.0
  %837 = vmatprep.subr.mxu0 0.0
  %838 = vmatpush1.msra.mxu0 0.0
  %839 = vmatprep.subr.mxu0 0.0
  %840 = vmatpush1.msra.mxu0 0.0
  %841 = vmatprep.subr.mxu0 0.0
  %842 = vmatpush1.msra.mxu0 0.0
  %843 = vmatprep.subr.mxu0 0.0
  %844 = vmatpush1.msra.mxu0 0.0
  %845 = vmatprep.subr.mxu0 0.0
  %846 = vmatpush1.msra.mxu0 0.0
  %847 = vmatprep.subr.mxu0 0.0
  %848 = vmatpush1.msra.mxu0 0.0
  %849 = vmatprep.subr.mxu0 0.0
  %850 = vmatpush1.msra.mxu0 0.0
  %851 = vmatprep.mubr.f32.mxu0 %v782
  %852 = vmatmul.mubr.f32.gmra.mrb[0].mxu0 %v777
  %v853 = vpop.f32.mrb[0].mxu0
  %v854 = vadd.f32 0.0, %v853
  %v855 = vpop.f32.mrb[0].mxu0
  %856 = vmatprep.mubr.f32.mxu0 %v785
  %857 = vmatmul.mubr.f32.gmra.mrb[0].mxu0 %v779
  %v858 = vpop.f32.mrb[0].mxu0
  %v859 = vadd.f32 0.0, %v858
  %v860 = vpop.f32.mrb[0].mxu0
  %861 = vdwg.mxu0
  %s862 = scalar_lea.vmem %s2, 48
  %863 = vst [vmem:[%s862] sm:$0xff] %v854
  %864 = vst [vmem:[%s862 + $0x8] sm:$0xff] %v859
  %s865 = scalar_lea.vmem %s1, 128
  %v866 = vld [vmem:[%s865] sm:$0xff]
  %v867 = vld [vmem:[%s865 + $0x10] sm:$0xff]
  %v868 = vld [vmem:[%s865 + $0x8] sm:$0xff]
  %v869 = vld [vmem:[%s865 + $0x18] sm:$0xff]
  %874 = vrot.lane.b32.xlu0 %v866, 127
  %v875 = vpop.permute.xlu0 %874
  %876 = vrot.lane.b32.xlu0 %v868, 127
  %v877 = vpop.permute.xlu0 %876
  %878 = vrot.lane.b32.xlu0 %v867, 127
  %v879 = vpop.permute.xlu0 %878
  %880 = vrot.lane.b32.xlu0 %v869, 127
  %v881 = vpop.permute.xlu0 %880
  %v882 = vsel %vm27, %v875, %v877
  %v883 = vsel %vm27, %v879, %v881
  %886 = vrot.lane.b32.xlu0 %v866, 126
  %v887 = vpop.permute.xlu0 %886
  %888 = vrot.lane.b32.xlu0 %v868, 126
  %v889 = vpop.permute.xlu0 %888
  %890 = vrot.lane.b32.xlu0 %v867, 126
  %v891 = vpop.permute.xlu0 %890
  %892 = vrot.lane.b32.xlu0 %v869, 126
  %v893 = vpop.permute.xlu0 %892
  %v894 = vsel %vm40, %v887, %v889
  %v895 = vsel %vm40, %v891, %v893
  %898 = vrot.lane.b32.xlu0 %v866, 119
  %v899 = vpop.permute.xlu0 %898
  %900 = vrot.lane.b32.xlu0 %v868, 119
  %v901 = vpop.permute.xlu0 %900
  %902 = vrot.lane.b32.xlu0 %v867, 119
  %v903 = vpop.permute.xlu0 %902
  %904 = vrot.lane.b32.xlu0 %v869, 119
  %v905 = vpop.permute.xlu0 %904
  %v906 = vsel %vm53, %v899, %v901
  %v907 = vsel %vm53, %v903, %v905
  %910 = vrot.lane.b32.xlu0 %v866, 118
  %v911 = vpop.permute.xlu0 %910
  %912 = vrot.lane.b32.xlu0 %v868, 118
  %v913 = vpop.permute.xlu0 %912
  %914 = vrot.lane.b32.xlu0 %v867, 118
  %v915 = vpop.permute.xlu0 %914
  %916 = vrot.lane.b32.xlu0 %v869, 118
  %v917 = vpop.permute.xlu0 %916
  %v918 = vsel %vm66, %v911, %v913
  %v919 = vsel %vm66, %v915, %v917
  %922 = vrot.lane.b32.xlu0 %v866, 117
  %v923 = vpop.permute.xlu0 %922
  %924 = vrot.lane.b32.xlu0 %v868, 117
  %v925 = vpop.permute.xlu0 %924
  %926 = vrot.lane.b32.xlu0 %v867, 117
  %v927 = vpop.permute.xlu0 %926
  %928 = vrot.lane.b32.xlu0 %v869, 117
  %v929 = vpop.permute.xlu0 %928
  %v930 = vsel %vm79, %v923, %v925
  %v931 = vsel %vm79, %v927, %v929
  %934 = vrot.lane.b32.xlu0 %v866, 110
  %v935 = vpop.permute.xlu0 %934
  %936 = vrot.lane.b32.xlu0 %v868, 110
  %v937 = vpop.permute.xlu0 %936
  %938 = vrot.lane.b32.xlu0 %v867, 110
  %v939 = vpop.permute.xlu0 %938
  %940 = vrot.lane.b32.xlu0 %v869, 110
  %v941 = vpop.permute.xlu0 %940
  %v942 = vsel %vm92, %v935, %v937
  %v943 = vsel %vm92, %v939, %v941
  %946 = vrot.lane.b32.xlu0 %v866, 109
  %v947 = vpop.permute.xlu0 %946
  %948 = vrot.lane.b32.xlu0 %v868, 109
  %v949 = vpop.permute.xlu0 %948
  %950 = vrot.lane.b32.xlu0 %v867, 109
  %v951 = vpop.permute.xlu0 %950
  %952 = vrot.lane.b32.xlu0 %v869, 109
  %v953 = vpop.permute.xlu0 %952
  %v954 = vsel %vm105, %v947, %v949
  %v955 = vsel %vm105, %v951, %v953
  %958 = vrot.lane.b32.xlu0 %v866, 108
  %v959 = vpop.permute.xlu0 %958
  %960 = vrot.lane.b32.xlu0 %v868, 108
  %v961 = vpop.permute.xlu0 %960
  %962 = vrot.lane.b32.xlu0 %v867, 108
  %v963 = vpop.permute.xlu0 %962
  %964 = vrot.lane.b32.xlu0 %v869, 108
  %v965 = vpop.permute.xlu0 %964
  %v966 = vsel %vm118, %v959, %v961
  %v967 = vsel %vm118, %v963, %v965
  %v970 = vmax.f32 %v866, 0.0
  %v971 = vmax.f32 %v867, 0.0
  %v972 = vmax.f32 %v882, 0.0
  %v973 = vmax.f32 %v883, 0.0
  %v974 = vmax.f32 %v894, 0.0
  %v975 = vmax.f32 %v895, 0.0
  %v976 = vmax.f32 %v906, 0.0
  %v977 = vmax.f32 %v907, 0.0
  %v978 = vmax.f32 %v918, 0.0
  %v979 = vmax.f32 %v919, 0.0
  %v980 = vmax.f32 %v930, 0.0
  %v981 = vmax.f32 %v931, 0.0
  %v982 = vmax.f32 %v942, 0.0
  %v983 = vmax.f32 %v943, 0.0
  %v984 = vmax.f32 %v954, 0.0
  %v985 = vmax.f32 %v955, 0.0
  %v986 = vmax.f32 %v966, 0.0
  %v987 = vmax.f32 %v967, 0.0
  %s988 = scalar_lea.vmem %s0, 128
  %v989 = vld [vmem:[%s988] sm:$0xff]
  %v990 = vld [vmem:[%s988 + $0x8] sm:$0xff]
  %v991 = vld [vmem:[%s988 + $0x10] sm:$0xff]
  %v992 = vld [vmem:[%s988 + $0x18] sm:$0xff]
  %v994 = vsel %vm145, %v990, 0
  %v997 = vsel %vm145, %v992, 0
  %999 = vmatprep.subr.mxu0 0.0
  %1000 = vmatpush1.msra.mxu0 %v970
  %1001 = vmatprep.subr.mxu0 0.0
  %1002 = vmatpush1.msra.mxu0 %v971
  %1003 = vmatprep.subr.mxu0 0.0
  %1004 = vmatpush1.msra.mxu0 %v972
  %1005 = vmatprep.subr.mxu0 0.0
  %1006 = vmatpush1.msra.mxu0 %v973
  %1007 = vmatprep.subr.mxu0 0.0
  %1008 = vmatpush1.msra.mxu0 %v974
  %1009 = vmatprep.subr.mxu0 0.0
  %1010 = vmatpush1.msra.mxu0 %v975
  %1011 = vmatprep.subr.mxu0 0.0
  %1012 = vmatpush1.msra.mxu0 %v976
  %1013 = vmatprep.subr.mxu0 0.0
  %1014 = vmatpush1.msra.mxu0 %v977
  %1015 = vmatprep.subr.mxu0 0.0
  %1016 = vmatpush1.msra.mxu0 %v978
  %1017 = vmatprep.subr.mxu0 0.0
  %1018 = vmatpush1.msra.mxu0 %v979
  %1019 = vmatprep.subr.mxu0 0.0
  %1020 = vmatpush1.msra.mxu0 %v980
  %1021 = vmatprep.subr.mxu0 0.0
  %1022 = vmatpush1.msra.mxu0 %v981
  %1023 = vmatprep.subr.mxu0 0.0
  %1024 = vmatpush1.msra.mxu0 %v982
  %1025 = vmatprep.subr.mxu0 0.0
  %1026 = vmatpush1.msra.mxu0 %v983
  %1027 = vmatprep.subr.mxu0 0.0
  %1028 = vmatpush1.msra.mxu0 %v984
  %1029 = vmatprep.subr.mxu0 0.0
  %1030 = vmatpush1.msra.mxu0 %v985
  %1031 = vmatprep.subr.mxu0 0.0
  %1032 = vmatpush1.msra.mxu0 %v986
  %1033 = vmatprep.subr.mxu0 0.0
  %1034 = vmatpush1.msra.mxu0 %v987
  %1035 = vmatprep.subr.mxu0 0.0
  %1036 = vmatpush1.msra.mxu0 0.0
  %1037 = vmatprep.subr.mxu0 0.0
  %1038 = vmatpush1.msra.mxu0 0.0
  %1039 = vmatprep.subr.mxu0 0.0
  %1040 = vmatpush1.msra.mxu0 0.0
  %1041 = vmatprep.subr.mxu0 0.0
  %1042 = vmatpush1.msra.mxu0 0.0
  %1043 = vmatprep.subr.mxu0 0.0
  %1044 = vmatpush1.msra.mxu0 0.0
  %1045 = vmatprep.subr.mxu0 0.0
  %1046 = vmatpush1.msra.mxu0 0.0
  %1047 = vmatprep.subr.mxu0 0.0
  %1048 = vmatpush1.msra.mxu0 0.0
  %1049 = vmatprep.subr.mxu0 0.0
  %1050 = vmatpush1.msra.mxu0 0.0
  %1051 = vmatprep.subr.mxu0 0.0
  %1052 = vmatpush1.msra.mxu0 0.0
  %1053 = vmatprep.subr.mxu0 0.0
  %1054 = vmatpush1.msra.mxu0 0.0
  %1055 = vmatprep.subr.mxu0 0.0
  %1056 = vmatpush1.msra.mxu0 0.0
  %1057 = vmatprep.subr.mxu0 0.0
  %1058 = vmatpush1.msra.mxu0 0.0
  %1059 = vmatprep.subr.mxu0 0.0
  %1060 = vmatpush1.msra.mxu0 0.0
  %1061 = vmatprep.subr.mxu0 0.0
  %1062 = vmatpush1.msra.mxu0 0.0
  %1063 = vmatprep.mubr.f32.mxu0 %v994
  %1064 = vmatmul.mubr.f32.gmra.mrb[0].mxu0 %v989
  %v1065 = vpop.f32.mrb[0].mxu0
  %v1066 = vadd.f32 0.0, %v1065
  %v1067 = vpop.f32.mrb[0].mxu0
  %1068 = vmatprep.mubr.f32.mxu0 %v997
  %1069 = vmatmul.mubr.f32.gmra.mrb[0].mxu0 %v991
  %v1070 = vpop.f32.mrb[0].mxu0
  %v1071 = vadd.f32 0.0, %v1070
  %v1072 = vpop.f32.mrb[0].mxu0
  %1073 = vdwg.mxu0
  %s1074 = scalar_lea.vmem %s2, 64
  %1075 = vst [vmem:[%s1074] sm:$0xff] %v1066
  %1076 = vst [vmem:[%s1074 + $0x8] sm:$0xff] %v1071
  %s1077 = scalar_lea.vmem %s1, 160
  %v1078 = vld [vmem:[%s1077] sm:$0xff]
  %v1079 = vld [vmem:[%s1077 + $0x10] sm:$0xff]
  %v1080 = vld [vmem:[%s1077 + $0x8] sm:$0xff]
  %v1081 = vld [vmem:[%s1077 + $0x18] sm:$0xff]
  %1086 = vrot.lane.b32.xlu0 %v1078, 127
  %v1087 = vpop.permute.xlu0 %1086
  %1088 = vrot.lane.b32.xlu0 %v1080, 127
  %v1089 = vpop.permute.xlu0 %1088
  %1090 = vrot.lane.b32.xlu0 %v1079, 127
  %v1091 = vpop.permute.xlu0 %1090
  %1092 = vrot.lane.b32.xlu0 %v1081, 127
  %v1093 = vpop.permute.xlu0 %1092
  %v1094 = vsel %vm27, %v1087, %v1089
  %v1095 = vsel %vm27, %v1091, %v1093
  %1098 = vrot.lane.b32.xlu0 %v1078, 126
  %v1099 = vpop.permute.xlu0 %1098
  %1100 = vrot.lane.b32.xlu0 %v1080, 126
  %v1101 = vpop.permute.xlu0 %1100
  %1102 = vrot.lane.b32.xlu0 %v1079, 126
  %v1103 = vpop.permute.xlu0 %1102
  %1104 = vrot.lane.b32.xlu0 %v1081, 126
  %v1105 = vpop.permute.xlu0 %1104
  %v1106 = vsel %vm40, %v1099, %v1101
  %v1107 = vsel %vm40, %v1103, %v1105
  %1110 = vrot.lane.b32.xlu0 %v1078, 119
  %v1111 = vpop.permute.xlu0 %1110
  %1112 = vrot.lane.b32.xlu0 %v1080, 119
  %v1113 = vpop.permute.xlu0 %1112
  %1114 = vrot.lane.b32.xlu0 %v1079, 119
  %v1115 = vpop.permute.xlu0 %1114
  %1116 = vrot.lane.b32.xlu0 %v1081, 119
  %v1117 = vpop.permute.xlu0 %1116
  %v1118 = vsel %vm53, %v1111, %v1113
  %v1119 = vsel %vm53, %v1115, %v1117
  %1122 = vrot.lane.b32.xlu0 %v1078, 118
  %v1123 = vpop.permute.xlu0 %1122
  %1124 = vrot.lane.b32.xlu0 %v1080, 118
  %v1125 = vpop.permute.xlu0 %1124
  %1126 = vrot.lane.b32.xlu0 %v1079, 118
  %v1127 = vpop.permute.xlu0 %1126
  %1128 = vrot.lane.b32.xlu0 %v1081, 118
  %v1129 = vpop.permute.xlu0 %1128
  %v1130 = vsel %vm66, %v1123, %v1125
  %v1131 = vsel %vm66, %v1127, %v1129
  %1134 = vrot.lane.b32.xlu0 %v1078, 117
  %v1135 = vpop.permute.xlu0 %1134
  %1136 = vrot.lane.b32.xlu0 %v1080, 117
  %v1137 = vpop.permute.xlu0 %1136
  %1138 = vrot.lane.b32.xlu0 %v1079, 117
  %v1139 = vpop.permute.xlu0 %1138
  %1140 = vrot.lane.b32.xlu0 %v1081, 117
  %v1141 = vpop.permute.xlu0 %1140
  %v1142 = vsel %vm79, %v1135, %v1137
  %v1143 = vsel %vm79, %v1139, %v1141
  %1146 = vrot.lane.b32.xlu0 %v1078, 110
  %v1147 = vpop.permute.xlu0 %1146
  %1148 = vrot.lane.b32.xlu0 %v1080, 110
  %v1149 = vpop.permute.xlu0 %1148
  %1150 = vrot.lane.b32.xlu0 %v1079, 110
  %v1151 = vpop.permute.xlu0 %1150
  %1152 = vrot.lane.b32.xlu0 %v1081, 110
  %v1153 = vpop.permute.xlu0 %1152
  %v1154 = vsel %vm92, %v1147, %v1149
  %v1155 = vsel %vm92, %v1151, %v1153
  %1158 = vrot.lane.b32.xlu0 %v1078, 109
  %v1159 = vpop.permute.xlu0 %1158
  %1160 = vrot.lane.b32.xlu0 %v1080, 109
  %v1161 = vpop.permute.xlu0 %1160
  %1162 = vrot.lane.b32.xlu0 %v1079, 109
  %v1163 = vpop.permute.xlu0 %1162
  %1164 = vrot.lane.b32.xlu0 %v1081, 109
  %v1165 = vpop.permute.xlu0 %1164
  %v1166 = vsel %vm105, %v1159, %v1161
  %v1167 = vsel %vm105, %v1163, %v1165
  %1170 = vrot.lane.b32.xlu0 %v1078, 108
  %v1171 = vpop.permute.xlu0 %1170
  %1172 = vrot.lane.b32.xlu0 %v1080, 108
  %v1173 = vpop.permute.xlu0 %1172
  %1174 = vrot.lane.b32.xlu0 %v1079, 108
  %v1175 = vpop.permute.xlu0 %1174
  %1176 = vrot.lane.b32.xlu0 %v1081, 108
  %v1177 = vpop.permute.xlu0 %1176
  %v1178 = vsel %vm118, %v1171, %v1173
  %v1179 = vsel %vm118, %v1175, %v1177
  %v1182 = vmax.f32 %v1078, 0.0
  %v1183 = vmax.f32 %v1079, 0.0
  %v1184 = vmax.f32 %v1094, 0.0
  %v1185 = vmax.f32 %v1095, 0.0
  %v1186 = vmax.f32 %v1106, 0.0
  %v1187 = vmax.f32 %v1107, 0.0
  %v1188 = vmax.f32 %v1118, 0.0
  %v1189 = vmax.f32 %v1119, 0.0
  %v1190 = vmax.f32 %v1130, 0.0
  %v1191 = vmax.f32 %v1131, 0.0
  %v1192 = vmax.f32 %v1142, 0.0
  %v1193 = vmax.f32 %v1143, 0.0
  %v1194 = vmax.f32 %v1154, 0.0
  %v1195 = vmax.f32 %v1155, 0.0
  %v1196 = vmax.f32 %v1166, 0.0
  %v1197 = vmax.f32 %v1167, 0.0
  %v1198 = vmax.f32 %v1178, 0.0
  %v1199 = vmax.f32 %v1179, 0.0
  %s1200 = scalar_lea.vmem %s0, 160
  %v1201 = vld [vmem:[%s1200] sm:$0xff]
  %v1202 = vld [vmem:[%s1200 + $0x8] sm:$0xff]
  %v1203 = vld [vmem:[%s1200 + $0x10] sm:$0xff]
  %v1204 = vld [vmem:[%s1200 + $0x18] sm:$0xff]
  %v1206 = vsel %vm145, %v1202, 0
  %v1209 = vsel %vm145, %v1204, 0
  %1211 = vmatprep.subr.mxu0 0.0
  %1212 = vmatpush1.msra.mxu0 %v1182
  %1213 = vmatprep.subr.mxu0 0.0
  %1214 = vmatpush1.msra.mxu0 %v1183
  %1215 = vmatprep.subr.mxu0 0.0
  %1216 = vmatpush1.msra.mxu0 %v1184
  %1217 = vmatprep.subr.mxu0 0.0
  %1218 = vmatpush1.msra.mxu0 %v1185
  %1219 = vmatprep.subr.mxu0 0.0
  %1220 = vmatpush1.msra.mxu0 %v1186
  %1221 = vmatprep.subr.mxu0 0.0
  %1222 = vmatpush1.msra.mxu0 %v1187
  %1223 = vmatprep.subr.mxu0 0.0
  %1224 = vmatpush1.msra.mxu0 %v1188
  %1225 = vmatprep.subr.mxu0 0.0
  %1226 = vmatpush1.msra.mxu0 %v1189
  %1227 = vmatprep.subr.mxu0 0.0
  %1228 = vmatpush1.msra.mxu0 %v1190
  %1229 = vmatprep.subr.mxu0 0.0
  %1230 = vmatpush1.msra.mxu0 %v1191
  %1231 = vmatprep.subr.mxu0 0.0
  %1232 = vmatpush1.msra.mxu0 %v1192
  %1233 = vmatprep.subr.mxu0 0.0
  %1234 = vmatpush1.msra.mxu0 %v1193
  %1235 = vmatprep.subr.mxu0 0.0
  %1236 = vmatpush1.msra.mxu0 %v1194
  %1237 = vmatprep.subr.mxu0 0.0
  %1238 = vmatpush1.msra.mxu0 %v1195
  %1239 = vmatprep.subr.mxu0 0.0
  %1240 = vmatpush1.msra.mxu0 %v1196
  %1241 = vmatprep.subr.mxu0 0.0
  %1242 = vmatpush1.msra.mxu0 %v1197
  %1243 = vmatprep.subr.mxu0 0.0
  %1244 = vmatpush1.msra.mxu0 %v1198
  %1245 = vmatprep.subr.mxu0 0.0
  %1246 = vmatpush1.msra.mxu0 %v1199
  %1247 = vmatprep.subr.mxu0 0.0
  %1248 = vmatpush1.msra.mxu0 0.0
  %1249 = vmatprep.subr.mxu0 0.0
  %1250 = vmatpush1.msra.mxu0 0.0
  %1251 = vmatprep.subr.mxu0 0.0
  %1252 = vmatpush1.msra.mxu0 0.0
  %1253 = vmatprep.subr.mxu0 0.0
  %1254 = vmatpush1.msra.mxu0 0.0
  %1255 = vmatprep.subr.mxu0 0.0
  %1256 = vmatpush1.msra.mxu0 0.0
  %1257 = vmatprep.subr.mxu0 0.0
  %1258 = vmatpush1.msra.mxu0 0.0
  %1259 = vmatprep.subr.mxu0 0.0
  %1260 = vmatpush1.msra.mxu0 0.0
  %1261 = vmatprep.subr.mxu0 0.0
  %1262 = vmatpush1.msra.mxu0 0.0
  %1263 = vmatprep.subr.mxu0 0.0
  %1264 = vmatpush1.msra.mxu0 0.0
  %1265 = vmatprep.subr.mxu0 0.0
  %1266 = vmatpush1.msra.mxu0 0.0
  %1267 = vmatprep.subr.mxu0 0.0
  %1268 = vmatpush1.msra.mxu0 0.0
  %1269 = vmatprep.subr.mxu0 0.0
  %1270 = vmatpush1.msra.mxu0 0.0
  %1271 = vmatprep.subr.mxu0 0.0
  %1272 = vmatpush1.msra.mxu0 0.0
  %1273 = vmatprep.subr.mxu0 0.0
  %1274 = vmatpush1.msra.mxu0 0.0
  %1275 = vmatprep.mubr.f32.mxu0 %v1206
  %1276 = vmatmul.mubr.f32.gmra.mrb[0].mxu0 %v1201
  %v1277 = vpop.f32.mrb[0].mxu0
  %v1278 = vadd.f32 0.0, %v1277
  %v1279 = vpop.f32.mrb[0].mxu0
  %1280 = vmatprep.mubr.f32.mxu0 %v1209
  %1281 = vmatmul.mubr.f32.gmra.mrb[0].mxu0 %v1203
  %v1282 = vpop.f32.mrb[0].mxu0
  %v1283 = vadd.f32 0.0, %v1282
  %v1284 = vpop.f32.mrb[0].mxu0
  %1285 = vdwg.mxu0
  %s1286 = scalar_lea.vmem %s2, 80
  %1287 = vst [vmem:[%s1286] sm:$0xff] %v1278
  %1288 = vst [vmem:[%s1286 + $0x8] sm:$0xff] %v1283
  %s1289 = scalar_lea.vmem %s1, 192
  %v1290 = vld [vmem:[%s1289] sm:$0xff]
  %v1291 = vld [vmem:[%s1289 + $0x10] sm:$0xff]
  %v1292 = vld [vmem:[%s1289 + $0x8] sm:$0xff]
  %v1293 = vld [vmem:[%s1289 + $0x18] sm:$0xff]
  %1298 = vrot.lane.b32.xlu0 %v1290, 127
  %v1299 = vpop.permute.xlu0 %1298
  %1300 = vrot.lane.b32.xlu0 %v1292, 127
  %v1301 = vpop.permute.xlu0 %1300
  %1302 = vrot.lane.b32.xlu0 %v1291, 127
  %v1303 = vpop.permute.xlu0 %1302
  %1304 = vrot.lane.b32.xlu0 %v1293, 127
  %v1305 = vpop.permute.xlu0 %1304
  %v1306 = vsel %vm27, %v1299, %v1301
  %v1307 = vsel %vm27, %v1303, %v1305
  %1310 = vrot.lane.b32.xlu0 %v1290, 126
  %v1311 = vpop.permute.xlu0 %1310
  %1312 = vrot.lane.b32.xlu0 %v1292, 126
  %v1313 = vpop.permute.xlu0 %1312
  %1314 = vrot.lane.b32.xlu0 %v1291, 126
  %v1315 = vpop.permute.xlu0 %1314
  %1316 = vrot.lane.b32.xlu0 %v1293, 126
  %v1317 = vpop.permute.xlu0 %1316
  %v1318 = vsel %vm40, %v1311, %v1313
  %v1319 = vsel %vm40, %v1315, %v1317
  %1322 = vrot.lane.b32.xlu0 %v1290, 119
  %v1323 = vpop.permute.xlu0 %1322
  %1324 = vrot.lane.b32.xlu0 %v1292, 119
  %v1325 = vpop.permute.xlu0 %1324
  %1326 = vrot.lane.b32.xlu0 %v1291, 119
  %v1327 = vpop.permute.xlu0 %1326
  %1328 = vrot.lane.b32.xlu0 %v1293, 119
  %v1329 = vpop.permute.xlu0 %1328
  %v1330 = vsel %vm53, %v1323, %v1325
  %v1331 = vsel %vm53, %v1327, %v1329
  %1334 = vrot.lane.b32.xlu0 %v1290, 118
  %v1335 = vpop.permute.xlu0 %1334
  %1336 = vrot.lane.b32.xlu0 %v1292, 118
  %v1337 = vpop.permute.xlu0 %1336
  %1338 = vrot.lane.b32.xlu0 %v1291, 118
  %v1339 = vpop.permute.xlu0 %1338
  %1340 = vrot.lane.b32.xlu0 %v1293, 118
  %v1341 = vpop.permute.xlu0 %1340
  %v1342 = vsel %vm66, %v1335, %v1337
  %v1343 = vsel %vm66, %v1339, %v1341
  %1346 = vrot.lane.b32.xlu0 %v1290, 117
  %v1347 = vpop.permute.xlu0 %1346
  %1348 = vrot.lane.b32.xlu0 %v1292, 117
  %v1349 = vpop.permute.xlu0 %1348
  %1350 = vrot.lane.b32.xlu0 %v1291, 117
  %v1351 = vpop.permute.xlu0 %1350
  %1352 = vrot.lane.b32.xlu0 %v1293, 117
  %v1353 = vpop.permute.xlu0 %1352
  %v1354 = vsel %vm79, %v1347, %v1349
  %v1355 = vsel %vm79, %v1351, %v1353
  %1358 = vrot.lane.b32.xlu0 %v1290, 110
  %v1359 = vpop.permute.xlu0 %1358
  %1360 = vrot.lane.b32.xlu0 %v1292, 110
  %v1361 = vpop.permute.xlu0 %1360
  %1362 = vrot.lane.b32.xlu0 %v1291, 110
  %v1363 = vpop.permute.xlu0 %1362
  %1364 = vrot.lane.b32.xlu0 %v1293, 110
  %v1365 = vpop.permute.xlu0 %1364
  %v1366 = vsel %vm92, %v1359, %v1361
  %v1367 = vsel %vm92, %v1363, %v1365
  %1370 = vrot.lane.b32.xlu0 %v1290, 109
  %v1371 = vpop.permute.xlu0 %1370
  %1372 = vrot.lane.b32.xlu0 %v1292, 109
  %v1373 = vpop.permute.xlu0 %1372
  %1374 = vrot.lane.b32.xlu0 %v1291, 109
  %v1375 = vpop.permute.xlu0 %1374
  %1376 = vrot.lane.b32.xlu0 %v1293, 109
  %v1377 = vpop.permute.xlu0 %1376
  %v1378 = vsel %vm105, %v1371, %v1373
  %v1379 = vsel %vm105, %v1375, %v1377
  %1382 = vrot.lane.b32.xlu0 %v1290, 108
  %v1383 = vpop.permute.xlu0 %1382
  %1384 = vrot.lane.b32.xlu0 %v1292, 108
  %v1385 = vpop.permute.xlu0 %1384
  %1386 = vrot.lane.b32.xlu0 %v1291, 108
  %v1387 = vpop.permute.xlu0 %1386
  %1388 = vrot.lane.b32.xlu0 %v1293, 108
  %v1389 = vpop.permute.xlu0 %1388
  %v1390 = vsel %vm118, %v1383, %v1385
  %v1391 = vsel %vm118, %v1387, %v1389
  %v1394 = vmax.f32 %v1290, 0.0
  %v1395 = vmax.f32 %v1291, 0.0
  %v1396 = vmax.f32 %v1306, 0.0
  %v1397 = vmax.f32 %v1307, 0.0
  %v1398 = vmax.f32 %v1318, 0.0
  %v1399 = vmax.f32 %v1319, 0.0
  %v1400 = vmax.f32 %v1330, 0.0
  %v1401 = vmax.f32 %v1331, 0.0
  %v1402 = vmax.f32 %v1342, 0.0
  %v1403 = vmax.f32 %v1343, 0.0
  %v1404 = vmax.f32 %v1354, 0.0
  %v1405 = vmax.f32 %v1355, 0.0
  %v1406 = vmax.f32 %v1366, 0.0
  %v1407 = vmax.f32 %v1367, 0.0
  %v1408 = vmax.f32 %v1378, 0.0
  %v1409 = vmax.f32 %v1379, 0.0
  %v1410 = vmax.f32 %v1390, 0.0
  %v1411 = vmax.f32 %v1391, 0.0
  %s1412 = scalar_lea.vmem %s0, 192
  %v1413 = vld [vmem:[%s1412] sm:$0xff]
  %v1414 = vld [vmem:[%s1412 + $0x8] sm:$0xff]
  %v1415 = vld [vmem:[%s1412 + $0x10] sm:$0xff]
  %v1416 = vld [vmem:[%s1412 + $0x18] sm:$0xff]
  %v1418 = vsel %vm145, %v1414, 0
  %v1421 = vsel %vm145, %v1416, 0
  %1423 = vmatprep.subr.mxu0 0.0
  %1424 = vmatpush1.msra.mxu0 %v1394
  %1425 = vmatprep.subr.mxu0 0.0
  %1426 = vmatpush1.msra.mxu0 %v1395
  %1427 = vmatprep.subr.mxu0 0.0
  %1428 = vmatpush1.msra.mxu0 %v1396
  %1429 = vmatprep.subr.mxu0 0.0
  %1430 = vmatpush1.msra.mxu0 %v1397
  %1431 = vmatprep.subr.mxu0 0.0
  %1432 = vmatpush1.msra.mxu0 %v1398
  %1433 = vmatprep.subr.mxu0 0.0
  %1434 = vmatpush1.msra.mxu0 %v1399
  %1435 = vmatprep.subr.mxu0 0.0
  %1436 = vmatpush1.msra.mxu0 %v1400
  %1437 = vmatprep.subr.mxu0 0.0
  %1438 = vmatpush1.msra.mxu0 %v1401
  %1439 = vmatprep.subr.mxu0 0.0
  %1440 = vmatpush1.msra.mxu0 %v1402
  %1441 = vmatprep.subr.mxu0 0.0
  %1442 = vmatpush1.msra.mxu0 %v1403
  %1443 = vmatprep.subr.mxu0 0.0
  %1444 = vmatpush1.msra.mxu0 %v1404
  %1445 = vmatprep.subr.mxu0 0.0
  %1446 = vmatpush1.msra.mxu0 %v1405
  %1447 = vmatprep.subr.mxu0 0.0
  %1448 = vmatpush1.msra.mxu0 %v1406
  %1449 = vmatprep.subr.mxu0 0.0
  %1450 = vmatpush1.msra.mxu0 %v1407
  %1451 = vmatprep.subr.mxu0 0.0
  %1452 = vmatpush1.msra.mxu0 %v1408
  %1453 = vmatprep.subr.mxu0 0.0
  %1454 = vmatpush1.msra.mxu0 %v1409
  %1455 = vmatprep.subr.mxu0 0.0
  %1456 = vmatpush1.msra.mxu0 %v1410
  %1457 = vmatprep.subr.mxu0 0.0
  %1458 = vmatpush1.msra.mxu0 %v1411
  %1459 = vmatprep.subr.mxu0 0.0
  %1460 = vmatpush1.msra.mxu0 0.0
  %1461 = vmatprep.subr.mxu0 0.0
  %1462 = vmatpush1.msra.mxu0 0.0
  %1463 = vmatprep.subr.mxu0 0.0
  %1464 = vmatpush1.msra.mxu0 0.0
  %1465 = vmatprep.subr.mxu0 0.0
  %1466 = vmatpush1.msra.mxu0 0.0
  %1467 = vmatprep.subr.mxu0 0.0
  %1468 = vmatpush1.msra.mxu0 0.0
  %1469 = vmatprep.subr.mxu0 0.0
  %1470 = vmatpush1.msra.mxu0 0.0
  %1471 = vmatprep.subr.mxu0 0.0
  %1472 = vmatpush1.msra.mxu0 0.0
  %1473 = vmatprep.subr.mxu0 0.0
  %1474 = vmatpush1.msra.mxu0 0.0
  %1475 = vmatprep.subr.mxu0 0.0
  %1476 = vmatpush1.msra.mxu0 0.0
  %1477 = vmatprep.subr.mxu0 0.0
  %1478 = vmatpush1.msra.mxu0 0.0
  %1479 = vmatprep.subr.mxu0 0.0
  %1480 = vmatpush1.msra.mxu0 0.0
  %1481 = vmatprep.subr.mxu0 0.0
  %1482 = vmatpush1.msra.mxu0 0.0
  %1483 = vmatprep.subr.mxu0 0.0
  %1484 = vmatpush1.msra.mxu0 0.0
  %1485 = vmatprep.subr.mxu0 0.0
  %1486 = vmatpush1.msra.mxu0 0.0
  %1487 = vmatprep.mubr.f32.mxu0 %v1418
  %1488 = vmatmul.mubr.f32.gmra.mrb[0].mxu0 %v1413
  %v1489 = vpop.f32.mrb[0].mxu0
  %v1490 = vadd.f32 0.0, %v1489
  %v1491 = vpop.f32.mrb[0].mxu0
  %1492 = vmatprep.mubr.f32.mxu0 %v1421
  %1493 = vmatmul.mubr.f32.gmra.mrb[0].mxu0 %v1415
  %v1494 = vpop.f32.mrb[0].mxu0
  %v1495 = vadd.f32 0.0, %v1494
  %v1496 = vpop.f32.mrb[0].mxu0
  %1497 = vdwg.mxu0
  %s1498 = scalar_lea.vmem %s2, 96
  %1499 = vst [vmem:[%s1498] sm:$0xff] %v1490
  %1500 = vst [vmem:[%s1498 + $0x8] sm:$0xff] %v1495
  %s1501 = scalar_lea.vmem %s1, 224
  %v1502 = vld [vmem:[%s1501] sm:$0xff]
  %v1503 = vld [vmem:[%s1501 + $0x10] sm:$0xff]
  %v1504 = vld [vmem:[%s1501 + $0x8] sm:$0xff]
  %v1505 = vld [vmem:[%s1501 + $0x18] sm:$0xff]
  %1510 = vrot.lane.b32.xlu0 %v1502, 127
  %v1511 = vpop.permute.xlu0 %1510
  %1512 = vrot.lane.b32.xlu0 %v1504, 127
  %v1513 = vpop.permute.xlu0 %1512
  %1514 = vrot.lane.b32.xlu0 %v1503, 127
  %v1515 = vpop.permute.xlu0 %1514
  %1516 = vrot.lane.b32.xlu0 %v1505, 127
  %v1517 = vpop.permute.xlu0 %1516
  %v1518 = vsel %vm27, %v1511, %v1513
  %v1519 = vsel %vm27, %v1515, %v1517
  %1522 = vrot.lane.b32.xlu0 %v1502, 126
  %v1523 = vpop.permute.xlu0 %1522
  %1524 = vrot.lane.b32.xlu0 %v1504, 126
  %v1525 = vpop.permute.xlu0 %1524
  %1526 = vrot.lane.b32.xlu0 %v1503, 126
  %v1527 = vpop.permute.xlu0 %1526
  %1528 = vrot.lane.b32.xlu0 %v1505, 126
  %v1529 = vpop.permute.xlu0 %1528
  %v1530 = vsel %vm40, %v1523, %v1525
  %v1531 = vsel %vm40, %v1527, %v1529
  %1534 = vrot.lane.b32.xlu0 %v1502, 119
  %v1535 = vpop.permute.xlu0 %1534
  %1536 = vrot.lane.b32.xlu0 %v1504, 119
  %v1537 = vpop.permute.xlu0 %1536
  %1538 = vrot.lane.b32.xlu0 %v1503, 119
  %v1539 = vpop.permute.xlu0 %1538
  %1540 = vrot.lane.b32.xlu0 %v1505, 119
  %v1541 = vpop.permute.xlu0 %1540
  %v1542 = vsel %vm53, %v1535, %v1537
  %v1543 = vsel %vm53, %v1539, %v1541
  %1546 = vrot.lane.b32.xlu0 %v1502, 118
  %v1547 = vpop.permute.xlu0 %1546
  %1548 = vrot.lane.b32.xlu0 %v1504, 118
  %v1549 = vpop.permute.xlu0 %1548
  %1550 = vrot.lane.b32.xlu0 %v1503, 118
  %v1551 = vpop.permute.xlu0 %1550
  %1552 = vrot.lane.b32.xlu0 %v1505, 118
  %v1553 = vpop.permute.xlu0 %1552
  %v1554 = vsel %vm66, %v1547, %v1549
  %v1555 = vsel %vm66, %v1551, %v1553
  %1558 = vrot.lane.b32.xlu0 %v1502, 117
  %v1559 = vpop.permute.xlu0 %1558
  %1560 = vrot.lane.b32.xlu0 %v1504, 117
  %v1561 = vpop.permute.xlu0 %1560
  %1562 = vrot.lane.b32.xlu0 %v1503, 117
  %v1563 = vpop.permute.xlu0 %1562
  %1564 = vrot.lane.b32.xlu0 %v1505, 117
  %v1565 = vpop.permute.xlu0 %1564
  %v1566 = vsel %vm79, %v1559, %v1561
  %v1567 = vsel %vm79, %v1563, %v1565
  %1570 = vrot.lane.b32.xlu0 %v1502, 110
  %v1571 = vpop.permute.xlu0 %1570
  %1572 = vrot.lane.b32.xlu0 %v1504, 110
  %v1573 = vpop.permute.xlu0 %1572
  %1574 = vrot.lane.b32.xlu0 %v1503, 110
  %v1575 = vpop.permute.xlu0 %1574
  %1576 = vrot.lane.b32.xlu0 %v1505, 110
  %v1577 = vpop.permute.xlu0 %1576
  %v1578 = vsel %vm92, %v1571, %v1573
  %v1579 = vsel %vm92, %v1575, %v1577
  %1582 = vrot.lane.b32.xlu0 %v1502, 109
  %v1583 = vpop.permute.xlu0 %1582
  %1584 = vrot.lane.b32.xlu0 %v1504, 109
  %v1585 = vpop.permute.xlu0 %1584
  %1586 = vrot.lane.b32.xlu0 %v1503, 109
  %v1587 = vpop.permute.xlu0 %1586
  %1588 = vrot.lane.b32.xlu0 %v1505, 109
  %v1589 = vpop.permute.xlu0 %1588
  %v1590 = vsel %vm105, %v1583, %v1585
  %v1591 = vsel %vm105, %v1587, %v1589
  %1594 = vrot.lane.b32.xlu0 %v1502, 108
  %v1595 = vpop.permute.xlu0 %1594
  %1596 = vrot.lane.b32.xlu0 %v1504, 108
  %v1597 = vpop.permute.xlu0 %1596
  %1598 = vrot.lane.b32.xlu0 %v1503, 108
  %v1599 = vpop.permute.xlu0 %1598
  %1600 = vrot.lane.b32.xlu0 %v1505, 108
  %v1601 = vpop.permute.xlu0 %1600
  %v1602 = vsel %vm118, %v1595, %v1597
  %v1603 = vsel %vm118, %v1599, %v1601
  %v1606 = vmax.f32 %v1502, 0.0
  %v1607 = vmax.f32 %v1503, 0.0
  %v1608 = vmax.f32 %v1518, 0.0
  %v1609 = vmax.f32 %v1519, 0.0
  %v1610 = vmax.f32 %v1530, 0.0
  %v1611 = vmax.f32 %v1531, 0.0
  %v1612 = vmax.f32 %v1542, 0.0
  %v1613 = vmax.f32 %v1543, 0.0
  %v1614 = vmax.f32 %v1554, 0.0
  %v1615 = vmax.f32 %v1555, 0.0
  %v1616 = vmax.f32 %v1566, 0.0
  %v1617 = vmax.f32 %v1567, 0.0
  %v1618 = vmax.f32 %v1578, 0.0
  %v1619 = vmax.f32 %v1579, 0.0
  %v1620 = vmax.f32 %v1590, 0.0
  %v1621 = vmax.f32 %v1591, 0.0
  %v1622 = vmax.f32 %v1602, 0.0
  %v1623 = vmax.f32 %v1603, 0.0
  %s1624 = scalar_lea.vmem %s0, 224
  %v1625 = vld [vmem:[%s1624] sm:$0xff]
  %v1626 = vld [vmem:[%s1624 + $0x8] sm:$0xff]
  %v1627 = vld [vmem:[%s1624 + $0x10] sm:$0xff]
  %v1628 = vld [vmem:[%s1624 + $0x18] sm:$0xff]
  %v1630 = vsel %vm145, %v1626, 0
  %v1633 = vsel %vm145, %v1628, 0
  %1635 = vmatprep.subr.mxu0 0.0
  %1636 = vmatpush1.msra.mxu0 %v1606
  %1637 = vmatprep.subr.mxu0 0.0
  %1638 = vmatpush1.msra.mxu0 %v1607
  %1639 = vmatprep.subr.mxu0 0.0
  %1640 = vmatpush1.msra.mxu0 %v1608
  %1641 = vmatprep.subr.mxu0 0.0
  %1642 = vmatpush1.msra.mxu0 %v1609
  %1643 = vmatprep.subr.mxu0 0.0
  %1644 = vmatpush1.msra.mxu0 %v1610
  %1645 = vmatprep.subr.mxu0 0.0
  %1646 = vmatpush1.msra.mxu0 %v1611
  %1647 = vmatprep.subr.mxu0 0.0
  %1648 = vmatpush1.msra.mxu0 %v1612
  %1649 = vmatprep.subr.mxu0 0.0
  %1650 = vmatpush1.msra.mxu0 %v1613
  %1651 = vmatprep.subr.mxu0 0.0
  %1652 = vmatpush1.msra.mxu0 %v1614
  %1653 = vmatprep.subr.mxu0 0.0
  %1654 = vmatpush1.msra.mxu0 %v1615
  %1655 = vmatprep.subr.mxu0 0.0
  %1656 = vmatpush1.msra.mxu0 %v1616
  %1657 = vmatprep.subr.mxu0 0.0
  %1658 = vmatpush1.msra.mxu0 %v1617
  %1659 = vmatprep.subr.mxu0 0.0
  %1660 = vmatpush1.msra.mxu0 %v1618
  %1661 = vmatprep.subr.mxu0 0.0
  %1662 = vmatpush1.msra.mxu0 %v1619
  %1663 = vmatprep.subr.mxu0 0.0
  %1664 = vmatpush1.msra.mxu0 %v1620
  %1665 = vmatprep.subr.mxu0 0.0
  %1666 = vmatpush1.msra.mxu0 %v1621
  %1667 = vmatprep.subr.mxu0 0.0
  %1668 = vmatpush1.msra.mxu0 %v1622
  %1669 = vmatprep.subr.mxu0 0.0
  %1670 = vmatpush1.msra.mxu0 %v1623
  %1671 = vmatprep.subr.mxu0 0.0
  %1672 = vmatpush1.msra.mxu0 0.0
  %1673 = vmatprep.subr.mxu0 0.0
  %1674 = vmatpush1.msra.mxu0 0.0
  %1675 = vmatprep.subr.mxu0 0.0
  %1676 = vmatpush1.msra.mxu0 0.0
  %1677 = vmatprep.subr.mxu0 0.0
  %1678 = vmatpush1.msra.mxu0 0.0
  %1679 = vmatprep.subr.mxu0 0.0
  %1680 = vmatpush1.msra.mxu0 0.0
  %1681 = vmatprep.subr.mxu0 0.0
  %1682 = vmatpush1.msra.mxu0 0.0
  %1683 = vmatprep.subr.mxu0 0.0
  %1684 = vmatpush1.msra.mxu0 0.0
  %1685 = vmatprep.subr.mxu0 0.0
  %1686 = vmatpush1.msra.mxu0 0.0
  %1687 = vmatprep.subr.mxu0 0.0
  %1688 = vmatpush1.msra.mxu0 0.0
  %1689 = vmatprep.subr.mxu0 0.0
  %1690 = vmatpush1.msra.mxu0 0.0
  %1691 = vmatprep.subr.mxu0 0.0
  %1692 = vmatpush1.msra.mxu0 0.0
  %1693 = vmatprep.subr.mxu0 0.0
  %1694 = vmatpush1.msra.mxu0 0.0
  %1695 = vmatprep.subr.mxu0 0.0
  %1696 = vmatpush1.msra.mxu0 0.0
  %1697 = vmatprep.subr.mxu0 0.0
  %1698 = vmatpush1.msra.mxu0 0.0
  %1699 = vmatprep.mubr.f32.mxu0 %v1630
  %1700 = vmatmul.mubr.f32.gmra.mrb[0].mxu0 %v1625
  %v1701 = vpop.f32.mrb[0].mxu0
  %v1702 = vadd.f32 0.0, %v1701
  %v1703 = vpop.f32.mrb[0].mxu0
  %1704 = vmatprep.mubr.f32.mxu0 %v1633
  %1705 = vmatmul.mubr.f32.gmra.mrb[0].mxu0 %v1627
  %v1706 = vpop.f32.mrb[0].mxu0
  %v1707 = vadd.f32 0.0, %v1706
  %v1708 = vpop.f32.mrb[0].mxu0
  %1709 = vdwg.mxu0
  %s1710 = scalar_lea.vmem %s2, 112
  %1711 = vst [vmem:[%s1710] sm:$0xff] %v1702
  %1712 = vst [vmem:[%s1710 + $0x8] sm:$0xff] %v1707
  %s1713 = scalar_lea.vmem %s1, 256
  %v1714 = vld [vmem:[%s1713] sm:$0xff]
  %v1715 = vld [vmem:[%s1713 + $0x10] sm:$0xff]
  %v1716 = vld [vmem:[%s1713 + $0x8] sm:$0xff]
  %v1717 = vld [vmem:[%s1713 + $0x18] sm:$0xff]
  %1722 = vrot.lane.b32.xlu0 %v1714, 127
  %v1723 = vpop.permute.xlu0 %1722
  %1724 = vrot.lane.b32.xlu0 %v1716, 127
  %v1725 = vpop.permute.xlu0 %1724
  %1726 = vrot.lane.b32.xlu0 %v1715, 127
  %v1727 = vpop.permute.xlu0 %1726
  %1728 = vrot.lane.b32.xlu0 %v1717, 127
  %v1729 = vpop.permute.xlu0 %1728
  %v1730 = vsel %vm27, %v1723, %v1725
  %v1731 = vsel %vm27, %v1727, %v1729
  %1734 = vrot.lane.b32.xlu0 %v1714, 126
  %v1735 = vpop.permute.xlu0 %1734
  %1736 = vrot.lane.b32.xlu0 %v1716, 126
  %v1737 = vpop.permute.xlu0 %1736
  %1738 = vrot.lane.b32.xlu0 %v1715, 126
  %v1739 = vpop.permute.xlu0 %1738
  %1740 = vrot.lane.b32.xlu0 %v1717, 126
  %v1741 = vpop.permute.xlu0 %1740
  %v1742 = vsel %vm40, %v1735, %v1737
  %v1743 = vsel %vm40, %v1739, %v1741
  %1746 = vrot.lane.b32.xlu0 %v1714, 119
  %v1747 = vpop.permute.xlu0 %1746
  %1748 = vrot.lane.b32.xlu0 %v1716, 119
  %v1749 = vpop.permute.xlu0 %1748
  %1750 = vrot.lane.b32.xlu0 %v1715, 119
  %v1751 = vpop.permute.xlu0 %1750
  %1752 = vrot.lane.b32.xlu0 %v1717, 119
  %v1753 = vpop.permute.xlu0 %1752
  %v1754 = vsel %vm53, %v1747, %v1749
  %v1755 = vsel %vm53, %v1751, %v1753
  %1758 = vrot.lane.b32.xlu0 %v1714, 118
  %v1759 = vpop.permute.xlu0 %1758
  %1760 = vrot.lane.b32.xlu0 %v1716, 118
  %v1761 = vpop.permute.xlu0 %1760
  %1762 = vrot.lane.b32.xlu0 %v1715, 118
  %v1763 = vpop.permute.xlu0 %1762
  %1764 = vrot.lane.b32.xlu0 %v1717, 118
  %v1765 = vpop.permute.xlu0 %1764
  %v1766 = vsel %vm66, %v1759, %v1761
  %v1767 = vsel %vm66, %v1763, %v1765
  %1770 = vrot.lane.b32.xlu0 %v1714, 117
  %v1771 = vpop.permute.xlu0 %1770
  %1772 = vrot.lane.b32.xlu0 %v1716, 117
  %v1773 = vpop.permute.xlu0 %1772
  %1774 = vrot.lane.b32.xlu0 %v1715, 117
  %v1775 = vpop.permute.xlu0 %1774
  %1776 = vrot.lane.b32.xlu0 %v1717, 117
  %v1777 = vpop.permute.xlu0 %1776
  %v1778 = vsel %vm79, %v1771, %v1773
  %v1779 = vsel %vm79, %v1775, %v1777
  %1782 = vrot.lane.b32.xlu0 %v1714, 110
  %v1783 = vpop.permute.xlu0 %1782
  %1784 = vrot.lane.b32.xlu0 %v1716, 110
  %v1785 = vpop.permute.xlu0 %1784
  %1786 = vrot.lane.b32.xlu0 %v1715, 110
  %v1787 = vpop.permute.xlu0 %1786
  %1788 = vrot.lane.b32.xlu0 %v1717, 110
  %v1789 = vpop.permute.xlu0 %1788
  %v1790 = vsel %vm92, %v1783, %v1785
  %v1791 = vsel %vm92, %v1787, %v1789
  %1794 = vrot.lane.b32.xlu0 %v1714, 109
  %v1795 = vpop.permute.xlu0 %1794
  %1796 = vrot.lane.b32.xlu0 %v1716, 109
  %v1797 = vpop.permute.xlu0 %1796
  %1798 = vrot.lane.b32.xlu0 %v1715, 109
  %v1799 = vpop.permute.xlu0 %1798
  %1800 = vrot.lane.b32.xlu0 %v1717, 109
  %v1801 = vpop.permute.xlu0 %1800
  %v1802 = vsel %vm105, %v1795, %v1797
  %v1803 = vsel %vm105, %v1799, %v1801
  %1806 = vrot.lane.b32.xlu0 %v1714, 108
  %v1807 = vpop.permute.xlu0 %1806
  %1808 = vrot.lane.b32.xlu0 %v1716, 108
  %v1809 = vpop.permute.xlu0 %1808
  %1810 = vrot.lane.b32.xlu0 %v1715, 108
  %v1811 = vpop.permute.xlu0 %1810
  %1812 = vrot.lane.b32.xlu0 %v1717, 108
  %v1813 = vpop.permute.xlu0 %1812
  %v1814 = vsel %vm118, %v1807, %v1809
  %v1815 = vsel %vm118, %v1811, %v1813
  %v1818 = vmax.f32 %v1714, 0.0
  %v1819 = vmax.f32 %v1715, 0.0
  %v1820 = vmax.f32 %v1730, 0.0
  %v1821 = vmax.f32 %v1731, 0.0
  %v1822 = vmax.f32 %v1742, 0.0
  %v1823 = vmax.f32 %v1743, 0.0
  %v1824 = vmax.f32 %v1754, 0.0
  %v1825 = vmax.f32 %v1755, 0.0
  %v1826 = vmax.f32 %v1766, 0.0
  %v1827 = vmax.f32 %v1767, 0.0
  %v1828 = vmax.f32 %v1778, 0.0
  %v1829 = vmax.f32 %v1779, 0.0
  %v1830 = vmax.f32 %v1790, 0.0
  %v1831 = vmax.f32 %v1791, 0.0
  %v1832 = vmax.f32 %v1802, 0.0
  %v1833 = vmax.f32 %v1803, 0.0
  %v1834 = vmax.f32 %v1814, 0.0
  %v1835 = vmax.f32 %v1815, 0.0
  %s1836 = scalar_lea.vmem %s0, 256
  %v1837 = vld [vmem:[%s1836] sm:$0xff]
  %v1838 = vld [vmem:[%s1836 + $0x8] sm:$0xff]
  %v1839 = vld [vmem:[%s1836 + $0x10] sm:$0xff]
  %v1840 = vld [vmem:[%s1836 + $0x18] sm:$0xff]
  %v1842 = vsel %vm145, %v1838, 0
  %v1845 = vsel %vm145, %v1840, 0
  %1847 = vmatprep.subr.mxu0 0.0
  %1848 = vmatpush1.msra.mxu0 %v1818
  %1849 = vmatprep.subr.mxu0 0.0
  %1850 = vmatpush1.msra.mxu0 %v1819
  %1851 = vmatprep.subr.mxu0 0.0
  %1852 = vmatpush1.msra.mxu0 %v1820
  %1853 = vmatprep.subr.mxu0 0.0
  %1854 = vmatpush1.msra.mxu0 %v1821
  %1855 = vmatprep.subr.mxu0 0.0
  %1856 = vmatpush1.msra.mxu0 %v1822
  %1857 = vmatprep.subr.mxu0 0.0
  %1858 = vmatpush1.msra.mxu0 %v1823
  %1859 = vmatprep.subr.mxu0 0.0
  %1860 = vmatpush1.msra.mxu0 %v1824
  %1861 = vmatprep.subr.mxu0 0.0
  %1862 = vmatpush1.msra.mxu0 %v1825
  %1863 = vmatprep.subr.mxu0 0.0
  %1864 = vmatpush1.msra.mxu0 %v1826
  %1865 = vmatprep.subr.mxu0 0.0
  %1866 = vmatpush1.msra.mxu0 %v1827
  %1867 = vmatprep.subr.mxu0 0.0
  %1868 = vmatpush1.msra.mxu0 %v1828
  %1869 = vmatprep.subr.mxu0 0.0
  %1870 = vmatpush1.msra.mxu0 %v1829
  %1871 = vmatprep.subr.mxu0 0.0
  %1872 = vmatpush1.msra.mxu0 %v1830
  %1873 = vmatprep.subr.mxu0 0.0
  %1874 = vmatpush1.msra.mxu0 %v1831
  %1875 = vmatprep.subr.mxu0 0.0
  %1876 = vmatpush1.msra.mxu0 %v1832
  %1877 = vmatprep.subr.mxu0 0.0
  %1878 = vmatpush1.msra.mxu0 %v1833
  %1879 = vmatprep.subr.mxu0 0.0
  %1880 = vmatpush1.msra.mxu0 %v1834
  %1881 = vmatprep.subr.mxu0 0.0
  %1882 = vmatpush1.msra.mxu0 %v1835
  %1883 = vmatprep.subr.mxu0 0.0
  %1884 = vmatpush1.msra.mxu0 0.0
  %1885 = vmatprep.subr.mxu0 0.0
  %1886 = vmatpush1.msra.mxu0 0.0
  %1887 = vmatprep.subr.mxu0 0.0
  %1888 = vmatpush1.msra.mxu0 0.0
  %1889 = vmatprep.subr.mxu0 0.0
  %1890 = vmatpush1.msra.mxu0 0.0
  %1891 = vmatprep.subr.mxu0 0.0
  %1892 = vmatpush1.msra.mxu0 0.0
  %1893 = vmatprep.subr.mxu0 0.0
  %1894 = vmatpush1.msra.mxu0 0.0
  %1895 = vmatprep.subr.mxu0 0.0
  %1896 = vmatpush1.msra.mxu0 0.0
  %1897 = vmatprep.subr.mxu0 0.0
  %1898 = vmatpush1.msra.mxu0 0.0
  %1899 = vmatprep.subr.mxu0 0.0
  %1900 = vmatpush1.msra.mxu0 0.0
  %1901 = vmatprep.subr.mxu0 0.0
  %1902 = vmatpush1.msra.mxu0 0.0
  %1903 = vmatprep.subr.mxu0 0.0
  %1904 = vmatpush1.msra.mxu0 0.0
  %1905 = vmatprep.subr.mxu0 0.0
  %1906 = vmatpush1.msra.mxu0 0.0
  %1907 = vmatprep.subr.mxu0 0.0
  %1908 = vmatpush1.msra.mxu0 0.0
  %1909 = vmatprep.subr.mxu0 0.0
  %1910 = vmatpush1.msra.mxu0 0.0
  %1911 = vmatprep.mubr.f32.mxu0 %v1842
  %1912 = vmatmul.mubr.f32.gmra.mrb[0].mxu0 %v1837
  %v1913 = vpop.f32.mrb[0].mxu0
  %v1914 = vadd.f32 0.0, %v1913
  %v1915 = vpop.f32.mrb[0].mxu0
  %1916 = vmatprep.mubr.f32.mxu0 %v1845
  %1917 = vmatmul.mubr.f32.gmra.mrb[0].mxu0 %v1839
  %v1918 = vpop.f32.mrb[0].mxu0
  %v1919 = vadd.f32 0.0, %v1918
  %v1920 = vpop.f32.mrb[0].mxu0
  %1921 = vdwg.mxu0
  %s1922 = scalar_lea.vmem %s2, 128
  %1923 = vst [vmem:[%s1922] sm:$0xff] %v1914
  %1924 = vst [vmem:[%s1922 + $0x8] sm:$0xff] %v1919
  %s1925 = scalar_lea.vmem %s1, 288
  %v1926 = vld [vmem:[%s1925] sm:$0xff]
  %v1927 = vld [vmem:[%s1925 + $0x10] sm:$0xff]
  %v1928 = vld [vmem:[%s1925 + $0x8] sm:$0xff]
  %v1929 = vld [vmem:[%s1925 + $0x18] sm:$0xff]
  %1934 = vrot.lane.b32.xlu0 %v1926, 127
  %v1935 = vpop.permute.xlu0 %1934
  %1936 = vrot.lane.b32.xlu0 %v1928, 127
  %v1937 = vpop.permute.xlu0 %1936
  %1938 = vrot.lane.b32.xlu0 %v1927, 127
  %v1939 = vpop.permute.xlu0 %1938
  %1940 = vrot.lane.b32.xlu0 %v1929, 127
  %v1941 = vpop.permute.xlu0 %1940
  %v1942 = vsel %vm27, %v1935, %v1937
  %v1943 = vsel %vm27, %v1939, %v1941
  %1946 = vrot.lane.b32.xlu0 %v1926, 126
  %v1947 = vpop.permute.xlu0 %1946
  %1948 = vrot.lane.b32.xlu0 %v1928, 126
  %v1949 = vpop.permute.xlu0 %1948
  %1950 = vrot.lane.b32.xlu0 %v1927, 126
  %v1951 = vpop.permute.xlu0 %1950
  %1952 = vrot.lane.b32.xlu0 %v1929, 126
  %v1953 = vpop.permute.xlu0 %1952
  %v1954 = vsel %vm40, %v1947, %v1949
  %v1955 = vsel %vm40, %v1951, %v1953
  %1958 = vrot.lane.b32.xlu0 %v1926, 119
  %v1959 = vpop.permute.xlu0 %1958
  %1960 = vrot.lane.b32.xlu0 %v1928, 119
  %v1961 = vpop.permute.xlu0 %1960
  %1962 = vrot.lane.b32.xlu0 %v1927, 119
  %v1963 = vpop.permute.xlu0 %1962
  %1964 = vrot.lane.b32.xlu0 %v1929, 119
  %v1965 = vpop.permute.xlu0 %1964
  %v1966 = vsel %vm53, %v1959, %v1961
  %v1967 = vsel %vm53, %v1963, %v1965
  %1970 = vrot.lane.b32.xlu0 %v1926, 118
  %v1971 = vpop.permute.xlu0 %1970
  %1972 = vrot.lane.b32.xlu0 %v1928, 118
  %v1973 = vpop.permute.xlu0 %1972
  %1974 = vrot.lane.b32.xlu0 %v1927, 118
  %v1975 = vpop.permute.xlu0 %1974
  %1976 = vrot.lane.b32.xlu0 %v1929, 118
  %v1977 = vpop.permute.xlu0 %1976
  %v1978 = vsel %vm66, %v1971, %v1973
  %v1979 = vsel %vm66, %v1975, %v1977
  %1982 = vrot.lane.b32.xlu0 %v1926, 117
  %v1983 = vpop.permute.xlu0 %1982
  %1984 = vrot.lane.b32.xlu0 %v1928, 117
  %v1985 = vpop.permute.xlu0 %1984
  %1986 = vrot.lane.b32.xlu0 %v1927, 117
  %v1987 = vpop.permute.xlu0 %1986
  %1988 = vrot.lane.b32.xlu0 %v1929, 117
  %v1989 = vpop.permute.xlu0 %1988
  %v1990 = vsel %vm79, %v1983, %v1985
  %v1991 = vsel %vm79, %v1987, %v1989
  %1994 = vrot.lane.b32.xlu0 %v1926, 110
  %v1995 = vpop.permute.xlu0 %1994
  %1996 = vrot.lane.b32.xlu0 %v1928, 110
  %v1997 = vpop.permute.xlu0 %1996
  %1998 = vrot.lane.b32.xlu0 %v1927, 110
  %v1999 = vpop.permute.xlu0 %1998
  %2000 = vrot.lane.b32.xlu0 %v1929, 110
  %v2001 = vpop.permute.xlu0 %2000
  %v2002 = vsel %vm92, %v1995, %v1997
  %v2003 = vsel %vm92, %v1999, %v2001
  %2006 = vrot.lane.b32.xlu0 %v1926, 109
  %v2007 = vpop.permute.xlu0 %2006
  %2008 = vrot.lane.b32.xlu0 %v1928, 109
  %v2009 = vpop.permute.xlu0 %2008
  %2010 = vrot.lane.b32.xlu0 %v1927, 109
  %v2011 = vpop.permute.xlu0 %2010
  %2012 = vrot.lane.b32.xlu0 %v1929, 109
  %v2013 = vpop.permute.xlu0 %2012
  %v2014 = vsel %vm105, %v2007, %v2009
  %v2015 = vsel %vm105, %v2011, %v2013
  %2018 = vrot.lane.b32.xlu0 %v1926, 108
  %v2019 = vpop.permute.xlu0 %2018
  %2020 = vrot.lane.b32.xlu0 %v1928, 108
  %v2021 = vpop.permute.xlu0 %2020
  %2022 = vrot.lane.b32.xlu0 %v1927, 108
  %v2023 = vpop.permute.xlu0 %2022
  %2024 = vrot.lane.b32.xlu0 %v1929, 108
  %v2025 = vpop.permute.xlu0 %2024
  %v2026 = vsel %vm118, %v2019, %v2021
  %v2027 = vsel %vm118, %v2023, %v2025
  %v2030 = vmax.f32 %v1926, 0.0
  %v2031 = vmax.f32 %v1927, 0.0
  %v2032 = vmax.f32 %v1942, 0.0
  %v2033 = vmax.f32 %v1943, 0.0
  %v2034 = vmax.f32 %v1954, 0.0
  %v2035 = vmax.f32 %v1955, 0.0
  %v2036 = vmax.f32 %v1966, 0.0
  %v2037 = vmax.f32 %v1967, 0.0
  %v2038 = vmax.f32 %v1978, 0.0
  %v2039 = vmax.f32 %v1979, 0.0
  %v2040 = vmax.f32 %v1990, 0.0
  %v2041 = vmax.f32 %v1991, 0.0
  %v2042 = vmax.f32 %v2002, 0.0
  %v2043 = vmax.f32 %v2003, 0.0
  %v2044 = vmax.f32 %v2014, 0.0
  %v2045 = vmax.f32 %v2015, 0.0
  %v2046 = vmax.f32 %v2026, 0.0
  %v2047 = vmax.f32 %v2027, 0.0
  %s2048 = scalar_lea.vmem %s0, 288
  %v2049 = vld [vmem:[%s2048] sm:$0xff]
  %v2050 = vld [vmem:[%s2048 + $0x8] sm:$0xff]
  %v2051 = vld [vmem:[%s2048 + $0x10] sm:$0xff]
  %v2052 = vld [vmem:[%s2048 + $0x18] sm:$0xff]
  %v2054 = vsel %vm145, %v2050, 0
  %v2057 = vsel %vm145, %v2052, 0
  %2059 = vmatprep.subr.mxu0 0.0
  %2060 = vmatpush1.msra.mxu0 %v2030
  %2061 = vmatprep.subr.mxu0 0.0
  %2062 = vmatpush1.msra.mxu0 %v2031
  %2063 = vmatprep.subr.mxu0 0.0
  %2064 = vmatpush1.msra.mxu0 %v2032
  %2065 = vmatprep.subr.mxu0 0.0
  %2066 = vmatpush1.msra.mxu0 %v2033
  %2067 = vmatprep.subr.mxu0 0.0
  %2068 = vmatpush1.msra.mxu0 %v2034
  %2069 = vmatprep.subr.mxu0 0.0
  %2070 = vmatpush1.msra.mxu0 %v2035
  %2071 = vmatprep.subr.mxu0 0.0
  %2072 = vmatpush1.msra.mxu0 %v2036
  %2073 = vmatprep.subr.mxu0 0.0
  %2074 = vmatpush1.msra.mxu0 %v2037
  %2075 = vmatprep.subr.mxu0 0.0
  %2076 = vmatpush1.msra.mxu0 %v2038
  %2077 = vmatprep.subr.mxu0 0.0
  %2078 = vmatpush1.msra.mxu0 %v2039
  %2079 = vmatprep.subr.mxu0 0.0
  %2080 = vmatpush1.msra.mxu0 %v2040
  %2081 = vmatprep.subr.mxu0 0.0
  %2082 = vmatpush1.msra.mxu0 %v2041
  %2083 = vmatprep.subr.mxu0 0.0
  %2084 = vmatpush1.msra.mxu0 %v2042
  %2085 = vmatprep.subr.mxu0 0.0
  %2086 = vmatpush1.msra.mxu0 %v2043
  %2087 = vmatprep.subr.mxu0 0.0
  %2088 = vmatpush1.msra.mxu0 %v2044
  %2089 = vmatprep.subr.mxu0 0.0
  %2090 = vmatpush1.msra.mxu0 %v2045
  %2091 = vmatprep.subr.mxu0 0.0
  %2092 = vmatpush1.msra.mxu0 %v2046
  %2093 = vmatprep.subr.mxu0 0.0
  %2094 = vmatpush1.msra.mxu0 %v2047
  %2095 = vmatprep.subr.mxu0 0.0
  %2096 = vmatpush1.msra.mxu0 0.0
  %2097 = vmatprep.subr.mxu0 0.0
  %2098 = vmatpush1.msra.mxu0 0.0
  %2099 = vmatprep.subr.mxu0 0.0
  %2100 = vmatpush1.msra.mxu0 0.0
  %2101 = vmatprep.subr.mxu0 0.0
  %2102 = vmatpush1.msra.mxu0 0.0
  %2103 = vmatprep.subr.mxu0 0.0
  %2104 = vmatpush1.msra.mxu0 0.0
  %2105 = vmatprep.subr.mxu0 0.0
  %2106 = vmatpush1.msra.mxu0 0.0
  %2107 = vmatprep.subr.mxu0 0.0
  %2108 = vmatpush1.msra.mxu0 0.0
  %2109 = vmatprep.subr.mxu0 0.0
  %2110 = vmatpush1.msra.mxu0 0.0
  %2111 = vmatprep.subr.mxu0 0.0
  %2112 = vmatpush1.msra.mxu0 0.0
  %2113 = vmatprep.subr.mxu0 0.0
  %2114 = vmatpush1.msra.mxu0 0.0
  %2115 = vmatprep.subr.mxu0 0.0
  %2116 = vmatpush1.msra.mxu0 0.0
  %2117 = vmatprep.subr.mxu0 0.0
  %2118 = vmatpush1.msra.mxu0 0.0
  %2119 = vmatprep.subr.mxu0 0.0
  %2120 = vmatpush1.msra.mxu0 0.0
  %2121 = vmatprep.subr.mxu0 0.0
  %2122 = vmatpush1.msra.mxu0 0.0
  %2123 = vmatprep.mubr.f32.mxu0 %v2054
  %2124 = vmatmul.mubr.f32.gmra.mrb[0].mxu0 %v2049
  %v2125 = vpop.f32.mrb[0].mxu0
  %v2126 = vadd.f32 0.0, %v2125
  %v2127 = vpop.f32.mrb[0].mxu0
  %2128 = vmatprep.mubr.f32.mxu0 %v2057
  %2129 = vmatmul.mubr.f32.gmra.mrb[0].mxu0 %v2051
  %v2130 = vpop.f32.mrb[0].mxu0
  %v2131 = vadd.f32 0.0, %v2130
  %v2132 = vpop.f32.mrb[0].mxu0
  %2133 = vdwg.mxu0
  %s2134 = scalar_lea.vmem %s2, 144
  %2135 = vst [vmem:[%s2134] sm:$0xff] %v2126
  %2136 = vst [vmem:[%s2134 + $0x8] sm:$0xff] %v2131
  %s2137 = scalar_lea.vmem %s1, 320
  %v2138 = vld [vmem:[%s2137] sm:$0xff]
  %v2139 = vld [vmem:[%s2137 + $0x10] sm:$0xff]
  %v2140 = vld [vmem:[%s2137 + $0x8] sm:$0xff]
  %v2141 = vld [vmem:[%s2137 + $0x18] sm:$0xff]
  %2146 = vrot.lane.b32.xlu0 %v2138, 127
  %v2147 = vpop.permute.xlu0 %2146
  %2148 = vrot.lane.b32.xlu0 %v2140, 127
  %v2149 = vpop.permute.xlu0 %2148
  %2150 = vrot.lane.b32.xlu0 %v2139, 127
  %v2151 = vpop.permute.xlu0 %2150
  %2152 = vrot.lane.b32.xlu0 %v2141, 127
  %v2153 = vpop.permute.xlu0 %2152
  %v2154 = vsel %vm27, %v2147, %v2149
  %v2155 = vsel %vm27, %v2151, %v2153
  %2158 = vrot.lane.b32.xlu0 %v2138, 126
  %v2159 = vpop.permute.xlu0 %2158
  %2160 = vrot.lane.b32.xlu0 %v2140, 126
  %v2161 = vpop.permute.xlu0 %2160
  %2162 = vrot.lane.b32.xlu0 %v2139, 126
  %v2163 = vpop.permute.xlu0 %2162
  %2164 = vrot.lane.b32.xlu0 %v2141, 126
  %v2165 = vpop.permute.xlu0 %2164
  %v2166 = vsel %vm40, %v2159, %v2161
  %v2167 = vsel %vm40, %v2163, %v2165
  %2170 = vrot.lane.b32.xlu0 %v2138, 119
  %v2171 = vpop.permute.xlu0 %2170
  %2172 = vrot.lane.b32.xlu0 %v2140, 119
  %v2173 = vpop.permute.xlu0 %2172
  %2174 = vrot.lane.b32.xlu0 %v2139, 119
  %v2175 = vpop.permute.xlu0 %2174
  %2176 = vrot.lane.b32.xlu0 %v2141, 119
  %v2177 = vpop.permute.xlu0 %2176
  %v2178 = vsel %vm53, %v2171, %v2173
  %v2179 = vsel %vm53, %v2175, %v2177
  %2182 = vrot.lane.b32.xlu0 %v2138, 118
  %v2183 = vpop.permute.xlu0 %2182
  %2184 = vrot.lane.b32.xlu0 %v2140, 118
  %v2185 = vpop.permute.xlu0 %2184
  %2186 = vrot.lane.b32.xlu0 %v2139, 118
  %v2187 = vpop.permute.xlu0 %2186
  %2188 = vrot.lane.b32.xlu0 %v2141, 118
  %v2189 = vpop.permute.xlu0 %2188
  %v2190 = vsel %vm66, %v2183, %v2185
  %v2191 = vsel %vm66, %v2187, %v2189
  %2194 = vrot.lane.b32.xlu0 %v2138, 117
  %v2195 = vpop.permute.xlu0 %2194
  %2196 = vrot.lane.b32.xlu0 %v2140, 117
  %v2197 = vpop.permute.xlu0 %2196
  %2198 = vrot.lane.b32.xlu0 %v2139, 117
  %v2199 = vpop.permute.xlu0 %2198
  %2200 = vrot.lane.b32.xlu0 %v2141, 117
  %v2201 = vpop.permute.xlu0 %2200
  %v2202 = vsel %vm79, %v2195, %v2197
  %v2203 = vsel %vm79, %v2199, %v2201
  %2206 = vrot.lane.b32.xlu0 %v2138, 110
  %v2207 = vpop.permute.xlu0 %2206
  %2208 = vrot.lane.b32.xlu0 %v2140, 110
  %v2209 = vpop.permute.xlu0 %2208
  %2210 = vrot.lane.b32.xlu0 %v2139, 110
  %v2211 = vpop.permute.xlu0 %2210
  %2212 = vrot.lane.b32.xlu0 %v2141, 110
  %v2213 = vpop.permute.xlu0 %2212
  %v2214 = vsel %vm92, %v2207, %v2209
  %v2215 = vsel %vm92, %v2211, %v2213
  %2218 = vrot.lane.b32.xlu0 %v2138, 109
  %v2219 = vpop.permute.xlu0 %2218
  %2220 = vrot.lane.b32.xlu0 %v2140, 109
  %v2221 = vpop.permute.xlu0 %2220
  %2222 = vrot.lane.b32.xlu0 %v2139, 109
  %v2223 = vpop.permute.xlu0 %2222
  %2224 = vrot.lane.b32.xlu0 %v2141, 109
  %v2225 = vpop.permute.xlu0 %2224
  %v2226 = vsel %vm105, %v2219, %v2221
  %v2227 = vsel %vm105, %v2223, %v2225
  %2230 = vrot.lane.b32.xlu0 %v2138, 108
  %v2231 = vpop.permute.xlu0 %2230
  %2232 = vrot.lane.b32.xlu0 %v2140, 108
  %v2233 = vpop.permute.xlu0 %2232
  %2234 = vrot.lane.b32.xlu0 %v2139, 108
  %v2235 = vpop.permute.xlu0 %2234
  %2236 = vrot.lane.b32.xlu0 %v2141, 108
  %v2237 = vpop.permute.xlu0 %2236
  %v2238 = vsel %vm118, %v2231, %v2233
  %v2239 = vsel %vm118, %v2235, %v2237
  %v2242 = vmax.f32 %v2138, 0.0
  %v2243 = vmax.f32 %v2139, 0.0
  %v2244 = vmax.f32 %v2154, 0.0
  %v2245 = vmax.f32 %v2155, 0.0
  %v2246 = vmax.f32 %v2166, 0.0
  %v2247 = vmax.f32 %v2167, 0.0
  %v2248 = vmax.f32 %v2178, 0.0
  %v2249 = vmax.f32 %v2179, 0.0
  %v2250 = vmax.f32 %v2190, 0.0
  %v2251 = vmax.f32 %v2191, 0.0
  %v2252 = vmax.f32 %v2202, 0.0
  %v2253 = vmax.f32 %v2203, 0.0
  %v2254 = vmax.f32 %v2214, 0.0
  %v2255 = vmax.f32 %v2215, 0.0
  %v2256 = vmax.f32 %v2226, 0.0
  %v2257 = vmax.f32 %v2227, 0.0
  %v2258 = vmax.f32 %v2238, 0.0
  %v2259 = vmax.f32 %v2239, 0.0
  %s2260 = scalar_lea.vmem %s0, 320
  %v2261 = vld [vmem:[%s2260] sm:$0xff]
  %v2262 = vld [vmem:[%s2260 + $0x8] sm:$0xff]
  %v2263 = vld [vmem:[%s2260 + $0x10] sm:$0xff]
  %v2264 = vld [vmem:[%s2260 + $0x18] sm:$0xff]
  %v2266 = vsel %vm145, %v2262, 0
  %v2269 = vsel %vm145, %v2264, 0
  %2271 = vmatprep.subr.mxu0 0.0
  %2272 = vmatpush1.msra.mxu0 %v2242
  %2273 = vmatprep.subr.mxu0 0.0
  %2274 = vmatpush1.msra.mxu0 %v2243
  %2275 = vmatprep.subr.mxu0 0.0
  %2276 = vmatpush1.msra.mxu0 %v2244
  %2277 = vmatprep.subr.mxu0 0.0
  %2278 = vmatpush1.msra.mxu0 %v2245
  %2279 = vmatprep.subr.mxu0 0.0
  %2280 = vmatpush1.msra.mxu0 %v2246
  %2281 = vmatprep.subr.mxu0 0.0
  %2282 = vmatpush1.msra.mxu0 %v2247
  %2283 = vmatprep.subr.mxu0 0.0
  %2284 = vmatpush1.msra.mxu0 %v2248
  %2285 = vmatprep.subr.mxu0 0.0
  %2286 = vmatpush1.msra.mxu0 %v2249
  %2287 = vmatprep.subr.mxu0 0.0
  %2288 = vmatpush1.msra.mxu0 %v2250
  %2289 = vmatprep.subr.mxu0 0.0
  %2290 = vmatpush1.msra.mxu0 %v2251
  %2291 = vmatprep.subr.mxu0 0.0
  %2292 = vmatpush1.msra.mxu0 %v2252
  %2293 = vmatprep.subr.mxu0 0.0
  %2294 = vmatpush1.msra.mxu0 %v2253
  %2295 = vmatprep.subr.mxu0 0.0
  %2296 = vmatpush1.msra.mxu0 %v2254
  %2297 = vmatprep.subr.mxu0 0.0
  %2298 = vmatpush1.msra.mxu0 %v2255
  %2299 = vmatprep.subr.mxu0 0.0
  %2300 = vmatpush1.msra.mxu0 %v2256
  %2301 = vmatprep.subr.mxu0 0.0
  %2302 = vmatpush1.msra.mxu0 %v2257
  %2303 = vmatprep.subr.mxu0 0.0
  %2304 = vmatpush1.msra.mxu0 %v2258
  %2305 = vmatprep.subr.mxu0 0.0
  %2306 = vmatpush1.msra.mxu0 %v2259
  %2307 = vmatprep.subr.mxu0 0.0
  %2308 = vmatpush1.msra.mxu0 0.0
  %2309 = vmatprep.subr.mxu0 0.0
  %2310 = vmatpush1.msra.mxu0 0.0
  %2311 = vmatprep.subr.mxu0 0.0
  %2312 = vmatpush1.msra.mxu0 0.0
  %2313 = vmatprep.subr.mxu0 0.0
  %2314 = vmatpush1.msra.mxu0 0.0
  %2315 = vmatprep.subr.mxu0 0.0
  %2316 = vmatpush1.msra.mxu0 0.0
  %2317 = vmatprep.subr.mxu0 0.0
  %2318 = vmatpush1.msra.mxu0 0.0
  %2319 = vmatprep.subr.mxu0 0.0
  %2320 = vmatpush1.msra.mxu0 0.0
  %2321 = vmatprep.subr.mxu0 0.0
  %2322 = vmatpush1.msra.mxu0 0.0
  %2323 = vmatprep.subr.mxu0 0.0
  %2324 = vmatpush1.msra.mxu0 0.0
  %2325 = vmatprep.subr.mxu0 0.0
  %2326 = vmatpush1.msra.mxu0 0.0
  %2327 = vmatprep.subr.mxu0 0.0
  %2328 = vmatpush1.msra.mxu0 0.0
  %2329 = vmatprep.subr.mxu0 0.0
  %2330 = vmatpush1.msra.mxu0 0.0
  %2331 = vmatprep.subr.mxu0 0.0
  %2332 = vmatpush1.msra.mxu0 0.0
  %2333 = vmatprep.subr.mxu0 0.0
  %2334 = vmatpush1.msra.mxu0 0.0
  %2335 = vmatprep.mubr.f32.mxu0 %v2266
  %2336 = vmatmul.mubr.f32.gmra.mrb[0].mxu0 %v2261
  %v2337 = vpop.f32.mrb[0].mxu0
  %v2338 = vadd.f32 0.0, %v2337
  %v2339 = vpop.f32.mrb[0].mxu0
  %2340 = vmatprep.mubr.f32.mxu0 %v2269
  %2341 = vmatmul.mubr.f32.gmra.mrb[0].mxu0 %v2263
  %v2342 = vpop.f32.mrb[0].mxu0
  %v2343 = vadd.f32 0.0, %v2342
  %v2344 = vpop.f32.mrb[0].mxu0
  %2345 = vdwg.mxu0
  %s2346 = scalar_lea.vmem %s2, 160
  %2347 = vst [vmem:[%s2346] sm:$0xff] %v2338
  %2348 = vst [vmem:[%s2346 + $0x8] sm:$0xff] %v2343
  %s2349 = scalar_lea.vmem %s1, 352
  %v2350 = vld [vmem:[%s2349] sm:$0xff]
  %v2351 = vld [vmem:[%s2349 + $0x10] sm:$0xff]
  %v2352 = vld [vmem:[%s2349 + $0x8] sm:$0xff]
  %v2353 = vld [vmem:[%s2349 + $0x18] sm:$0xff]
  %2358 = vrot.lane.b32.xlu0 %v2350, 127
  %v2359 = vpop.permute.xlu0 %2358
  %2360 = vrot.lane.b32.xlu0 %v2352, 127
  %v2361 = vpop.permute.xlu0 %2360
  %2362 = vrot.lane.b32.xlu0 %v2351, 127
  %v2363 = vpop.permute.xlu0 %2362
  %2364 = vrot.lane.b32.xlu0 %v2353, 127
  %v2365 = vpop.permute.xlu0 %2364
  %v2366 = vsel %vm27, %v2359, %v2361
  %v2367 = vsel %vm27, %v2363, %v2365
  %2370 = vrot.lane.b32.xlu0 %v2350, 126
  %v2371 = vpop.permute.xlu0 %2370
  %2372 = vrot.lane.b32.xlu0 %v2352, 126
  %v2373 = vpop.permute.xlu0 %2372
  %2374 = vrot.lane.b32.xlu0 %v2351, 126
  %v2375 = vpop.permute.xlu0 %2374
  %2376 = vrot.lane.b32.xlu0 %v2353, 126
  %v2377 = vpop.permute.xlu0 %2376
  %v2378 = vsel %vm40, %v2371, %v2373
  %v2379 = vsel %vm40, %v2375, %v2377
  %2382 = vrot.lane.b32.xlu0 %v2350, 119
  %v2383 = vpop.permute.xlu0 %2382
  %2384 = vrot.lane.b32.xlu0 %v2352, 119
  %v2385 = vpop.permute.xlu0 %2384
  %2386 = vrot.lane.b32.xlu0 %v2351, 119
  %v2387 = vpop.permute.xlu0 %2386
  %2388 = vrot.lane.b32.xlu0 %v2353, 119
  %v2389 = vpop.permute.xlu0 %2388
  %v2390 = vsel %vm53, %v2383, %v2385
  %v2391 = vsel %vm53, %v2387, %v2389
  %2394 = vrot.lane.b32.xlu0 %v2350, 118
  %v2395 = vpop.permute.xlu0 %2394
  %2396 = vrot.lane.b32.xlu0 %v2352, 118
  %v2397 = vpop.permute.xlu0 %2396
  %2398 = vrot.lane.b32.xlu0 %v2351, 118
  %v2399 = vpop.permute.xlu0 %2398
  %2400 = vrot.lane.b32.xlu0 %v2353, 118
  %v2401 = vpop.permute.xlu0 %2400
  %v2402 = vsel %vm66, %v2395, %v2397
  %v2403 = vsel %vm66, %v2399, %v2401
  %2406 = vrot.lane.b32.xlu0 %v2350, 117
  %v2407 = vpop.permute.xlu0 %2406
  %2408 = vrot.lane.b32.xlu0 %v2352, 117
  %v2409 = vpop.permute.xlu0 %2408
  %2410 = vrot.lane.b32.xlu0 %v2351, 117
  %v2411 = vpop.permute.xlu0 %2410
  %2412 = vrot.lane.b32.xlu0 %v2353, 117
  %v2413 = vpop.permute.xlu0 %2412
  %v2414 = vsel %vm79, %v2407, %v2409
  %v2415 = vsel %vm79, %v2411, %v2413
  %2418 = vrot.lane.b32.xlu0 %v2350, 110
  %v2419 = vpop.permute.xlu0 %2418
  %2420 = vrot.lane.b32.xlu0 %v2352, 110
  %v2421 = vpop.permute.xlu0 %2420
  %2422 = vrot.lane.b32.xlu0 %v2351, 110
  %v2423 = vpop.permute.xlu0 %2422
  %2424 = vrot.lane.b32.xlu0 %v2353, 110
  %v2425 = vpop.permute.xlu0 %2424
  %v2426 = vsel %vm92, %v2419, %v2421
  %v2427 = vsel %vm92, %v2423, %v2425
  %2430 = vrot.lane.b32.xlu0 %v2350, 109
  %v2431 = vpop.permute.xlu0 %2430
  %2432 = vrot.lane.b32.xlu0 %v2352, 109
  %v2433 = vpop.permute.xlu0 %2432
  %2434 = vrot.lane.b32.xlu0 %v2351, 109
  %v2435 = vpop.permute.xlu0 %2434
  %2436 = vrot.lane.b32.xlu0 %v2353, 109
  %v2437 = vpop.permute.xlu0 %2436
  %v2438 = vsel %vm105, %v2431, %v2433
  %v2439 = vsel %vm105, %v2435, %v2437
  %2442 = vrot.lane.b32.xlu0 %v2350, 108
  %v2443 = vpop.permute.xlu0 %2442
  %2444 = vrot.lane.b32.xlu0 %v2352, 108
  %v2445 = vpop.permute.xlu0 %2444
  %2446 = vrot.lane.b32.xlu0 %v2351, 108
  %v2447 = vpop.permute.xlu0 %2446
  %2448 = vrot.lane.b32.xlu0 %v2353, 108
  %v2449 = vpop.permute.xlu0 %2448
  %v2450 = vsel %vm118, %v2443, %v2445
  %v2451 = vsel %vm118, %v2447, %v2449
  %v2454 = vmax.f32 %v2350, 0.0
  %v2455 = vmax.f32 %v2351, 0.0
  %v2456 = vmax.f32 %v2366, 0.0
  %v2457 = vmax.f32 %v2367, 0.0
  %v2458 = vmax.f32 %v2378, 0.0
  %v2459 = vmax.f32 %v2379, 0.0
  %v2460 = vmax.f32 %v2390, 0.0
  %v2461 = vmax.f32 %v2391, 0.0
  %v2462 = vmax.f32 %v2402, 0.0
  %v2463 = vmax.f32 %v2403, 0.0
  %v2464 = vmax.f32 %v2414, 0.0
  %v2465 = vmax.f32 %v2415, 0.0
  %v2466 = vmax.f32 %v2426, 0.0
  %v2467 = vmax.f32 %v2427, 0.0
  %v2468 = vmax.f32 %v2438, 0.0
  %v2469 = vmax.f32 %v2439, 0.0
  %v2470 = vmax.f32 %v2450, 0.0
  %v2471 = vmax.f32 %v2451, 0.0
  %s2472 = scalar_lea.vmem %s0, 352
  %v2473 = vld [vmem:[%s2472] sm:$0xff]
  %v2474 = vld [vmem:[%s2472 + $0x8] sm:$0xff]
  %v2475 = vld [vmem:[%s2472 + $0x10] sm:$0xff]
  %v2476 = vld [vmem:[%s2472 + $0x18] sm:$0xff]
  %v2478 = vsel %vm145, %v2474, 0
  %v2481 = vsel %vm145, %v2476, 0
  %2483 = vmatprep.subr.mxu0 0.0
  %2484 = vmatpush1.msra.mxu0 %v2454
  %2485 = vmatprep.subr.mxu0 0.0
  %2486 = vmatpush1.msra.mxu0 %v2455
  %2487 = vmatprep.subr.mxu0 0.0
  %2488 = vmatpush1.msra.mxu0 %v2456
  %2489 = vmatprep.subr.mxu0 0.0
  %2490 = vmatpush1.msra.mxu0 %v2457
  %2491 = vmatprep.subr.mxu0 0.0
  %2492 = vmatpush1.msra.mxu0 %v2458
  %2493 = vmatprep.subr.mxu0 0.0
  %2494 = vmatpush1.msra.mxu0 %v2459
  %2495 = vmatprep.subr.mxu0 0.0
  %2496 = vmatpush1.msra.mxu0 %v2460
  %2497 = vmatprep.subr.mxu0 0.0
  %2498 = vmatpush1.msra.mxu0 %v2461
  %2499 = vmatprep.subr.mxu0 0.0
  %2500 = vmatpush1.msra.mxu0 %v2462
  %2501 = vmatprep.subr.mxu0 0.0
  %2502 = vmatpush1.msra.mxu0 %v2463
  %2503 = vmatprep.subr.mxu0 0.0
  %2504 = vmatpush1.msra.mxu0 %v2464
  %2505 = vmatprep.subr.mxu0 0.0
  %2506 = vmatpush1.msra.mxu0 %v2465
  %2507 = vmatprep.subr.mxu0 0.0
  %2508 = vmatpush1.msra.mxu0 %v2466
  %2509 = vmatprep.subr.mxu0 0.0
  %2510 = vmatpush1.msra.mxu0 %v2467
  %2511 = vmatprep.subr.mxu0 0.0
  %2512 = vmatpush1.msra.mxu0 %v2468
  %2513 = vmatprep.subr.mxu0 0.0
  %2514 = vmatpush1.msra.mxu0 %v2469
  %2515 = vmatprep.subr.mxu0 0.0
  %2516 = vmatpush1.msra.mxu0 %v2470
  %2517 = vmatprep.subr.mxu0 0.0
  %2518 = vmatpush1.msra.mxu0 %v2471
  %2519 = vmatprep.subr.mxu0 0.0
  %2520 = vmatpush1.msra.mxu0 0.0
  %2521 = vmatprep.subr.mxu0 0.0
  %2522 = vmatpush1.msra.mxu0 0.0
  %2523 = vmatprep.subr.mxu0 0.0
  %2524 = vmatpush1.msra.mxu0 0.0
  %2525 = vmatprep.subr.mxu0 0.0
  %2526 = vmatpush1.msra.mxu0 0.0
  %2527 = vmatprep.subr.mxu0 0.0
  %2528 = vmatpush1.msra.mxu0 0.0
  %2529 = vmatprep.subr.mxu0 0.0
  %2530 = vmatpush1.msra.mxu0 0.0
  %2531 = vmatprep.subr.mxu0 0.0
  %2532 = vmatpush1.msra.mxu0 0.0
  %2533 = vmatprep.subr.mxu0 0.0
  %2534 = vmatpush1.msra.mxu0 0.0
  %2535 = vmatprep.subr.mxu0 0.0
  %2536 = vmatpush1.msra.mxu0 0.0
  %2537 = vmatprep.subr.mxu0 0.0
  %2538 = vmatpush1.msra.mxu0 0.0
  %2539 = vmatprep.subr.mxu0 0.0
  %2540 = vmatpush1.msra.mxu0 0.0
  %2541 = vmatprep.subr.mxu0 0.0
  %2542 = vmatpush1.msra.mxu0 0.0
  %2543 = vmatprep.subr.mxu0 0.0
  %2544 = vmatpush1.msra.mxu0 0.0
  %2545 = vmatprep.subr.mxu0 0.0
  %2546 = vmatpush1.msra.mxu0 0.0
  %2547 = vmatprep.mubr.f32.mxu0 %v2478
  %2548 = vmatmul.mubr.f32.gmra.mrb[0].mxu0 %v2473
  %v2549 = vpop.f32.mrb[0].mxu0
  %v2550 = vadd.f32 0.0, %v2549
  %v2551 = vpop.f32.mrb[0].mxu0
  %2552 = vmatprep.mubr.f32.mxu0 %v2481
  %2553 = vmatmul.mubr.f32.gmra.mrb[0].mxu0 %v2475
  %v2554 = vpop.f32.mrb[0].mxu0
  %v2555 = vadd.f32 0.0, %v2554
  %v2556 = vpop.f32.mrb[0].mxu0
  %2557 = vdwg.mxu0
  %s2558 = scalar_lea.vmem %s2, 176
  %2559 = vst [vmem:[%s2558] sm:$0xff] %v2550
  %2560 = vst [vmem:[%s2558 + $0x8] sm:$0xff] %v2555
  %s2561 = scalar_lea.vmem %s1, 384
  %v2562 = vld [vmem:[%s2561] sm:$0xff]
  %v2563 = vld [vmem:[%s2561 + $0x10] sm:$0xff]
  %v2564 = vld [vmem:[%s2561 + $0x8] sm:$0xff]
  %v2565 = vld [vmem:[%s2561 + $0x18] sm:$0xff]
  %2570 = vrot.lane.b32.xlu0 %v2562, 127
  %v2571 = vpop.permute.xlu0 %2570
  %2572 = vrot.lane.b32.xlu0 %v2564, 127
  %v2573 = vpop.permute.xlu0 %2572
  %2574 = vrot.lane.b32.xlu0 %v2563, 127
  %v2575 = vpop.permute.xlu0 %2574
  %2576 = vrot.lane.b32.xlu0 %v2565, 127
  %v2577 = vpop.permute.xlu0 %2576
  %v2578 = vsel %vm27, %v2571, %v2573
  %v2579 = vsel %vm27, %v2575, %v2577
  %2582 = vrot.lane.b32.xlu0 %v2562, 126
  %v2583 = vpop.permute.xlu0 %2582
  %2584 = vrot.lane.b32.xlu0 %v2564, 126
  %v2585 = vpop.permute.xlu0 %2584
  %2586 = vrot.lane.b32.xlu0 %v2563, 126
  %v2587 = vpop.permute.xlu0 %2586
  %2588 = vrot.lane.b32.xlu0 %v2565, 126
  %v2589 = vpop.permute.xlu0 %2588
  %v2590 = vsel %vm40, %v2583, %v2585
  %v2591 = vsel %vm40, %v2587, %v2589
  %2594 = vrot.lane.b32.xlu0 %v2562, 119
  %v2595 = vpop.permute.xlu0 %2594
  %2596 = vrot.lane.b32.xlu0 %v2564, 119
  %v2597 = vpop.permute.xlu0 %2596
  %2598 = vrot.lane.b32.xlu0 %v2563, 119
  %v2599 = vpop.permute.xlu0 %2598
  %2600 = vrot.lane.b32.xlu0 %v2565, 119
  %v2601 = vpop.permute.xlu0 %2600
  %v2602 = vsel %vm53, %v2595, %v2597
  %v2603 = vsel %vm53, %v2599, %v2601
  %2606 = vrot.lane.b32.xlu0 %v2562, 118
  %v2607 = vpop.permute.xlu0 %2606
  %2608 = vrot.lane.b32.xlu0 %v2564, 118
  %v2609 = vpop.permute.xlu0 %2608
  %2610 = vrot.lane.b32.xlu0 %v2563, 118
  %v2611 = vpop.permute.xlu0 %2610
  %2612 = vrot.lane.b32.xlu0 %v2565, 118
  %v2613 = vpop.permute.xlu0 %2612
  %v2614 = vsel %vm66, %v2607, %v2609
  %v2615 = vsel %vm66, %v2611, %v2613
  %2618 = vrot.lane.b32.xlu0 %v2562, 117
  %v2619 = vpop.permute.xlu0 %2618
  %2620 = vrot.lane.b32.xlu0 %v2564, 117
  %v2621 = vpop.permute.xlu0 %2620
  %2622 = vrot.lane.b32.xlu0 %v2563, 117
  %v2623 = vpop.permute.xlu0 %2622
  %2624 = vrot.lane.b32.xlu0 %v2565, 117
  %v2625 = vpop.permute.xlu0 %2624
  %v2626 = vsel %vm79, %v2619, %v2621
  %v2627 = vsel %vm79, %v2623, %v2625
  %2630 = vrot.lane.b32.xlu0 %v2562, 110
  %v2631 = vpop.permute.xlu0 %2630
  %2632 = vrot.lane.b32.xlu0 %v2564, 110
  %v2633 = vpop.permute.xlu0 %2632
  %2634 = vrot.lane.b32.xlu0 %v2563, 110
  %v2635 = vpop.permute.xlu0 %2634
  %2636 = vrot.lane.b32.xlu0 %v2565, 110
  %v2637 = vpop.permute.xlu0 %2636
  %v2638 = vsel %vm92, %v2631, %v2633
  %v2639 = vsel %vm92, %v2635, %v2637
  %2642 = vrot.lane.b32.xlu0 %v2562, 109
  %v2643 = vpop.permute.xlu0 %2642
  %2644 = vrot.lane.b32.xlu0 %v2564, 109
  %v2645 = vpop.permute.xlu0 %2644
  %2646 = vrot.lane.b32.xlu0 %v2563, 109
  %v2647 = vpop.permute.xlu0 %2646
  %2648 = vrot.lane.b32.xlu0 %v2565, 109
  %v2649 = vpop.permute.xlu0 %2648
  %v2650 = vsel %vm105, %v2643, %v2645
  %v2651 = vsel %vm105, %v2647, %v2649
  %2654 = vrot.lane.b32.xlu0 %v2562, 108
  %v2655 = vpop.permute.xlu0 %2654
  %2656 = vrot.lane.b32.xlu0 %v2564, 108
  %v2657 = vpop.permute.xlu0 %2656
  %2658 = vrot.lane.b32.xlu0 %v2563, 108
  %v2659 = vpop.permute.xlu0 %2658
  %2660 = vrot.lane.b32.xlu0 %v2565, 108
  %v2661 = vpop.permute.xlu0 %2660
  %v2662 = vsel %vm118, %v2655, %v2657
  %v2663 = vsel %vm118, %v2659, %v2661
  %v2666 = vmax.f32 %v2562, 0.0
  %v2667 = vmax.f32 %v2563, 0.0
  %v2668 = vmax.f32 %v2578, 0.0
  %v2669 = vmax.f32 %v2579, 0.0
  %v2670 = vmax.f32 %v2590, 0.0
  %v2671 = vmax.f32 %v2591, 0.0
  %v2672 = vmax.f32 %v2602, 0.0
  %v2673 = vmax.f32 %v2603, 0.0
  %v2674 = vmax.f32 %v2614, 0.0
  %v2675 = vmax.f32 %v2615, 0.0
  %v2676 = vmax.f32 %v2626, 0.0
  %v2677 = vmax.f32 %v2627, 0.0
  %v2678 = vmax.f32 %v2638, 0.0
  %v2679 = vmax.f32 %v2639, 0.0
  %v2680 = vmax.f32 %v2650, 0.0
  %v2681 = vmax.f32 %v2651, 0.0
  %v2682 = vmax.f32 %v2662, 0.0
  %v2683 = vmax.f32 %v2663, 0.0
  %s2684 = scalar_lea.vmem %s0, 384
  %v2685 = vld [vmem:[%s2684] sm:$0xff]
  %v2686 = vld [vmem:[%s2684 + $0x8] sm:$0xff]
  %v2687 = vld [vmem:[%s2684 + $0x10] sm:$0xff]
  %v2688 = vld [vmem:[%s2684 + $0x18] sm:$0xff]
  %v2690 = vsel %vm145, %v2686, 0
  %v2693 = vsel %vm145, %v2688, 0
  %2695 = vmatprep.subr.mxu0 0.0
  %2696 = vmatpush1.msra.mxu0 %v2666
  %2697 = vmatprep.subr.mxu0 0.0
  %2698 = vmatpush1.msra.mxu0 %v2667
  %2699 = vmatprep.subr.mxu0 0.0
  %2700 = vmatpush1.msra.mxu0 %v2668
  %2701 = vmatprep.subr.mxu0 0.0
  %2702 = vmatpush1.msra.mxu0 %v2669
  %2703 = vmatprep.subr.mxu0 0.0
  %2704 = vmatpush1.msra.mxu0 %v2670
  %2705 = vmatprep.subr.mxu0 0.0
  %2706 = vmatpush1.msra.mxu0 %v2671
  %2707 = vmatprep.subr.mxu0 0.0
  %2708 = vmatpush1.msra.mxu0 %v2672
  %2709 = vmatprep.subr.mxu0 0.0
  %2710 = vmatpush1.msra.mxu0 %v2673
  %2711 = vmatprep.subr.mxu0 0.0
  %2712 = vmatpush1.msra.mxu0 %v2674
  %2713 = vmatprep.subr.mxu0 0.0
  %2714 = vmatpush1.msra.mxu0 %v2675
  %2715 = vmatprep.subr.mxu0 0.0
  %2716 = vmatpush1.msra.mxu0 %v2676
  %2717 = vmatprep.subr.mxu0 0.0
  %2718 = vmatpush1.msra.mxu0 %v2677
  %2719 = vmatprep.subr.mxu0 0.0
  %2720 = vmatpush1.msra.mxu0 %v2678
  %2721 = vmatprep.subr.mxu0 0.0
  %2722 = vmatpush1.msra.mxu0 %v2679
  %2723 = vmatprep.subr.mxu0 0.0
  %2724 = vmatpush1.msra.mxu0 %v2680
  %2725 = vmatprep.subr.mxu0 0.0
  %2726 = vmatpush1.msra.mxu0 %v2681
  %2727 = vmatprep.subr.mxu0 0.0
  %2728 = vmatpush1.msra.mxu0 %v2682
  %2729 = vmatprep.subr.mxu0 0.0
  %2730 = vmatpush1.msra.mxu0 %v2683
  %2731 = vmatprep.subr.mxu0 0.0
  %2732 = vmatpush1.msra.mxu0 0.0
  %2733 = vmatprep.subr.mxu0 0.0
  %2734 = vmatpush1.msra.mxu0 0.0
  %2735 = vmatprep.subr.mxu0 0.0
  %2736 = vmatpush1.msra.mxu0 0.0
  %2737 = vmatprep.subr.mxu0 0.0
  %2738 = vmatpush1.msra.mxu0 0.0
  %2739 = vmatprep.subr.mxu0 0.0
  %2740 = vmatpush1.msra.mxu0 0.0
  %2741 = vmatprep.subr.mxu0 0.0
  %2742 = vmatpush1.msra.mxu0 0.0
  %2743 = vmatprep.subr.mxu0 0.0
  %2744 = vmatpush1.msra.mxu0 0.0
  %2745 = vmatprep.subr.mxu0 0.0
  %2746 = vmatpush1.msra.mxu0 0.0
  %2747 = vmatprep.subr.mxu0 0.0
  %2748 = vmatpush1.msra.mxu0 0.0
  %2749 = vmatprep.subr.mxu0 0.0
  %2750 = vmatpush1.msra.mxu0 0.0
  %2751 = vmatprep.subr.mxu0 0.0
  %2752 = vmatpush1.msra.mxu0 0.0
  %2753 = vmatprep.subr.mxu0 0.0
  %2754 = vmatpush1.msra.mxu0 0.0
  %2755 = vmatprep.subr.mxu0 0.0
  %2756 = vmatpush1.msra.mxu0 0.0
  %2757 = vmatprep.subr.mxu0 0.0
  %2758 = vmatpush1.msra.mxu0 0.0
  %2759 = vmatprep.mubr.f32.mxu0 %v2690
  %2760 = vmatmul.mubr.f32.gmra.mrb[0].mxu0 %v2685
  %v2761 = vpop.f32.mrb[0].mxu0
  %v2762 = vadd.f32 0.0, %v2761
  %v2763 = vpop.f32.mrb[0].mxu0
  %2764 = vmatprep.mubr.f32.mxu0 %v2693
  %2765 = vmatmul.mubr.f32.gmra.mrb[0].mxu0 %v2687
  %v2766 = vpop.f32.mrb[0].mxu0
  %v2767 = vadd.f32 0.0, %v2766
  %v2768 = vpop.f32.mrb[0].mxu0
  %2769 = vdwg.mxu0
  %s2770 = scalar_lea.vmem %s2, 192
  %2771 = vst [vmem:[%s2770] sm:$0xff] %v2762
  %2772 = vst [vmem:[%s2770 + $0x8] sm:$0xff] %v2767
  %s2773 = scalar_lea.vmem %s1, 416
  %v2774 = vld [vmem:[%s2773] sm:$0xff]
  %v2775 = vld [vmem:[%s2773 + $0x10] sm:$0xff]
  %v2776 = vld [vmem:[%s2773 + $0x8] sm:$0xff]
  %v2777 = vld [vmem:[%s2773 + $0x18] sm:$0xff]
  %2782 = vrot.lane.b32.xlu0 %v2774, 127
  %v2783 = vpop.permute.xlu0 %2782
  %2784 = vrot.lane.b32.xlu0 %v2776, 127
  %v2785 = vpop.permute.xlu0 %2784
  %2786 = vrot.lane.b32.xlu0 %v2775, 127
  %v2787 = vpop.permute.xlu0 %2786
  %2788 = vrot.lane.b32.xlu0 %v2777, 127
  %v2789 = vpop.permute.xlu0 %2788
  %v2790 = vsel %vm27, %v2783, %v2785
  %v2791 = vsel %vm27, %v2787, %v2789
  %2794 = vrot.lane.b32.xlu0 %v2774, 126
  %v2795 = vpop.permute.xlu0 %2794
  %2796 = vrot.lane.b32.xlu0 %v2776, 126
  %v2797 = vpop.permute.xlu0 %2796
  %2798 = vrot.lane.b32.xlu0 %v2775, 126
  %v2799 = vpop.permute.xlu0 %2798
  %2800 = vrot.lane.b32.xlu0 %v2777, 126
  %v2801 = vpop.permute.xlu0 %2800
  %v2802 = vsel %vm40, %v2795, %v2797
  %v2803 = vsel %vm40, %v2799, %v2801
  %2806 = vrot.lane.b32.xlu0 %v2774, 119
  %v2807 = vpop.permute.xlu0 %2806
  %2808 = vrot.lane.b32.xlu0 %v2776, 119
  %v2809 = vpop.permute.xlu0 %2808
  %2810 = vrot.lane.b32.xlu0 %v2775, 119
  %v2811 = vpop.permute.xlu0 %2810
  %2812 = vrot.lane.b32.xlu0 %v2777, 119
  %v2813 = vpop.permute.xlu0 %2812
  %v2814 = vsel %vm53, %v2807, %v2809
  %v2815 = vsel %vm53, %v2811, %v2813
  %2818 = vrot.lane.b32.xlu0 %v2774, 118
  %v2819 = vpop.permute.xlu0 %2818
  %2820 = vrot.lane.b32.xlu0 %v2776, 118
  %v2821 = vpop.permute.xlu0 %2820
  %2822 = vrot.lane.b32.xlu0 %v2775, 118
  %v2823 = vpop.permute.xlu0 %2822
  %2824 = vrot.lane.b32.xlu0 %v2777, 118
  %v2825 = vpop.permute.xlu0 %2824
  %v2826 = vsel %vm66, %v2819, %v2821
  %v2827 = vsel %vm66, %v2823, %v2825
  %2830 = vrot.lane.b32.xlu0 %v2774, 117
  %v2831 = vpop.permute.xlu0 %2830
  %2832 = vrot.lane.b32.xlu0 %v2776, 117
  %v2833 = vpop.permute.xlu0 %2832
  %2834 = vrot.lane.b32.xlu0 %v2775, 117
  %v2835 = vpop.permute.xlu0 %2834
  %2836 = vrot.lane.b32.xlu0 %v2777, 117
  %v2837 = vpop.permute.xlu0 %2836
  %v2838 = vsel %vm79, %v2831, %v2833
  %v2839 = vsel %vm79, %v2835, %v2837
  %2842 = vrot.lane.b32.xlu0 %v2774, 110
  %v2843 = vpop.permute.xlu0 %2842
  %2844 = vrot.lane.b32.xlu0 %v2776, 110
  %v2845 = vpop.permute.xlu0 %2844
  %2846 = vrot.lane.b32.xlu0 %v2775, 110
  %v2847 = vpop.permute.xlu0 %2846
  %2848 = vrot.lane.b32.xlu0 %v2777, 110
  %v2849 = vpop.permute.xlu0 %2848
  %v2850 = vsel %vm92, %v2843, %v2845
  %v2851 = vsel %vm92, %v2847, %v2849
  %2854 = vrot.lane.b32.xlu0 %v2774, 109
  %v2855 = vpop.permute.xlu0 %2854
  %2856 = vrot.lane.b32.xlu0 %v2776, 109
  %v2857 = vpop.permute.xlu0 %2856
  %2858 = vrot.lane.b32.xlu0 %v2775, 109
  %v2859 = vpop.permute.xlu0 %2858
  %2860 = vrot.lane.b32.xlu0 %v2777, 109
  %v2861 = vpop.permute.xlu0 %2860
  %v2862 = vsel %vm105, %v2855, %v2857
  %v2863 = vsel %vm105, %v2859, %v2861
  %2866 = vrot.lane.b32.xlu0 %v2774, 108
  %v2867 = vpop.permute.xlu0 %2866
  %2868 = vrot.lane.b32.xlu0 %v2776, 108
  %v2869 = vpop.permute.xlu0 %2868
  %2870 = vrot.lane.b32.xlu0 %v2775, 108
  %v2871 = vpop.permute.xlu0 %2870
  %2872 = vrot.lane.b32.xlu0 %v2777, 108
  %v2873 = vpop.permute.xlu0 %2872
  %v2874 = vsel %vm118, %v2867, %v2869
  %v2875 = vsel %vm118, %v2871, %v2873
  %v2878 = vmax.f32 %v2774, 0.0
  %v2879 = vmax.f32 %v2775, 0.0
  %v2880 = vmax.f32 %v2790, 0.0
  %v2881 = vmax.f32 %v2791, 0.0
  %v2882 = vmax.f32 %v2802, 0.0
  %v2883 = vmax.f32 %v2803, 0.0
  %v2884 = vmax.f32 %v2814, 0.0
  %v2885 = vmax.f32 %v2815, 0.0
  %v2886 = vmax.f32 %v2826, 0.0
  %v2887 = vmax.f32 %v2827, 0.0
  %v2888 = vmax.f32 %v2838, 0.0
  %v2889 = vmax.f32 %v2839, 0.0
  %v2890 = vmax.f32 %v2850, 0.0
  %v2891 = vmax.f32 %v2851, 0.0
  %v2892 = vmax.f32 %v2862, 0.0
  %v2893 = vmax.f32 %v2863, 0.0
  %v2894 = vmax.f32 %v2874, 0.0
  %v2895 = vmax.f32 %v2875, 0.0
  %s2896 = scalar_lea.vmem %s0, 416
  %v2897 = vld [vmem:[%s2896] sm:$0xff]
  %v2898 = vld [vmem:[%s2896 + $0x8] sm:$0xff]
  %v2899 = vld [vmem:[%s2896 + $0x10] sm:$0xff]
  %v2900 = vld [vmem:[%s2896 + $0x18] sm:$0xff]
  %v2902 = vsel %vm145, %v2898, 0
  %v2905 = vsel %vm145, %v2900, 0
  %2907 = vmatprep.subr.mxu0 0.0
  %2908 = vmatpush1.msra.mxu0 %v2878
  %2909 = vmatprep.subr.mxu0 0.0
  %2910 = vmatpush1.msra.mxu0 %v2879
  %2911 = vmatprep.subr.mxu0 0.0
  %2912 = vmatpush1.msra.mxu0 %v2880
  %2913 = vmatprep.subr.mxu0 0.0
  %2914 = vmatpush1.msra.mxu0 %v2881
  %2915 = vmatprep.subr.mxu0 0.0
  %2916 = vmatpush1.msra.mxu0 %v2882
  %2917 = vmatprep.subr.mxu0 0.0
  %2918 = vmatpush1.msra.mxu0 %v2883
  %2919 = vmatprep.subr.mxu0 0.0
  %2920 = vmatpush1.msra.mxu0 %v2884
  %2921 = vmatprep.subr.mxu0 0.0
  %2922 = vmatpush1.msra.mxu0 %v2885
  %2923 = vmatprep.subr.mxu0 0.0
  %2924 = vmatpush1.msra.mxu0 %v2886
  %2925 = vmatprep.subr.mxu0 0.0
  %2926 = vmatpush1.msra.mxu0 %v2887
  %2927 = vmatprep.subr.mxu0 0.0
  %2928 = vmatpush1.msra.mxu0 %v2888
  %2929 = vmatprep.subr.mxu0 0.0
  %2930 = vmatpush1.msra.mxu0 %v2889
  %2931 = vmatprep.subr.mxu0 0.0
  %2932 = vmatpush1.msra.mxu0 %v2890
  %2933 = vmatprep.subr.mxu0 0.0
  %2934 = vmatpush1.msra.mxu0 %v2891
  %2935 = vmatprep.subr.mxu0 0.0
  %2936 = vmatpush1.msra.mxu0 %v2892
  %2937 = vmatprep.subr.mxu0 0.0
  %2938 = vmatpush1.msra.mxu0 %v2893
  %2939 = vmatprep.subr.mxu0 0.0
  %2940 = vmatpush1.msra.mxu0 %v2894
  %2941 = vmatprep.subr.mxu0 0.0
  %2942 = vmatpush1.msra.mxu0 %v2895
  %2943 = vmatprep.subr.mxu0 0.0
  %2944 = vmatpush1.msra.mxu0 0.0
  %2945 = vmatprep.subr.mxu0 0.0
  %2946 = vmatpush1.msra.mxu0 0.0
  %2947 = vmatprep.subr.mxu0 0.0
  %2948 = vmatpush1.msra.mxu0 0.0
  %2949 = vmatprep.subr.mxu0 0.0
  %2950 = vmatpush1.msra.mxu0 0.0
  %2951 = vmatprep.subr.mxu0 0.0
  %2952 = vmatpush1.msra.mxu0 0.0
  %2953 = vmatprep.subr.mxu0 0.0
  %2954 = vmatpush1.msra.mxu0 0.0
  %2955 = vmatprep.subr.mxu0 0.0
  %2956 = vmatpush1.msra.mxu0 0.0
  %2957 = vmatprep.subr.mxu0 0.0
  %2958 = vmatpush1.msra.mxu0 0.0
  %2959 = vmatprep.subr.mxu0 0.0
  %2960 = vmatpush1.msra.mxu0 0.0
  %2961 = vmatprep.subr.mxu0 0.0
  %2962 = vmatpush1.msra.mxu0 0.0
  %2963 = vmatprep.subr.mxu0 0.0
  %2964 = vmatpush1.msra.mxu0 0.0
  %2965 = vmatprep.subr.mxu0 0.0
  %2966 = vmatpush1.msra.mxu0 0.0
  %2967 = vmatprep.subr.mxu0 0.0
  %2968 = vmatpush1.msra.mxu0 0.0
  %2969 = vmatprep.subr.mxu0 0.0
  %2970 = vmatpush1.msra.mxu0 0.0
  %2971 = vmatprep.mubr.f32.mxu0 %v2902
  %2972 = vmatmul.mubr.f32.gmra.mrb[0].mxu0 %v2897
  %v2973 = vpop.f32.mrb[0].mxu0
  %v2974 = vadd.f32 0.0, %v2973
  %v2975 = vpop.f32.mrb[0].mxu0
  %2976 = vmatprep.mubr.f32.mxu0 %v2905
  %2977 = vmatmul.mubr.f32.gmra.mrb[0].mxu0 %v2899
  %v2978 = vpop.f32.mrb[0].mxu0
  %v2979 = vadd.f32 0.0, %v2978
  %v2980 = vpop.f32.mrb[0].mxu0
  %2981 = vdwg.mxu0
  %s2982 = scalar_lea.vmem %s2, 208
  %2983 = vst [vmem:[%s2982] sm:$0xff] %v2974
  %2984 = vst [vmem:[%s2982 + $0x8] sm:$0xff] %v2979
  %s2985 = scalar_lea.vmem %s1, 448
  %v2986 = vld [vmem:[%s2985] sm:$0xff]
  %v2987 = vld [vmem:[%s2985 + $0x10] sm:$0xff]
  %v2988 = vld [vmem:[%s2985 + $0x8] sm:$0xff]
  %v2989 = vld [vmem:[%s2985 + $0x18] sm:$0xff]
  %2994 = vrot.lane.b32.xlu0 %v2986, 127
  %v2995 = vpop.permute.xlu0 %2994
  %2996 = vrot.lane.b32.xlu0 %v2988, 127
  %v2997 = vpop.permute.xlu0 %2996
  %2998 = vrot.lane.b32.xlu0 %v2987, 127
  %v2999 = vpop.permute.xlu0 %2998
  %3000 = vrot.lane.b32.xlu0 %v2989, 127
  %v3001 = vpop.permute.xlu0 %3000
  %v3002 = vsel %vm27, %v2995, %v2997
  %v3003 = vsel %vm27, %v2999, %v3001
  %3006 = vrot.lane.b32.xlu0 %v2986, 126
  %v3007 = vpop.permute.xlu0 %3006
  %3008 = vrot.lane.b32.xlu0 %v2988, 126
  %v3009 = vpop.permute.xlu0 %3008
  %3010 = vrot.lane.b32.xlu0 %v2987, 126
  %v3011 = vpop.permute.xlu0 %3010
  %3012 = vrot.lane.b32.xlu0 %v2989, 126
  %v3013 = vpop.permute.xlu0 %3012
  %v3014 = vsel %vm40, %v3007, %v3009
  %v3015 = vsel %vm40, %v3011, %v3013
  %3018 = vrot.lane.b32.xlu0 %v2986, 119
  %v3019 = vpop.permute.xlu0 %3018
  %3020 = vrot.lane.b32.xlu0 %v2988, 119
  %v3021 = vpop.permute.xlu0 %3020
  %3022 = vrot.lane.b32.xlu0 %v2987, 119
  %v3023 = vpop.permute.xlu0 %3022
  %3024 = vrot.lane.b32.xlu0 %v2989, 119
  %v3025 = vpop.permute.xlu0 %3024
  %v3026 = vsel %vm53, %v3019, %v3021
  %v3027 = vsel %vm53, %v3023, %v3025
  %3030 = vrot.lane.b32.xlu0 %v2986, 118
  %v3031 = vpop.permute.xlu0 %3030
  %3032 = vrot.lane.b32.xlu0 %v2988, 118
  %v3033 = vpop.permute.xlu0 %3032
  %3034 = vrot.lane.b32.xlu0 %v2987, 118
  %v3035 = vpop.permute.xlu0 %3034
  %3036 = vrot.lane.b32.xlu0 %v2989, 118
  %v3037 = vpop.permute.xlu0 %3036
  %v3038 = vsel %vm66, %v3031, %v3033
  %v3039 = vsel %vm66, %v3035, %v3037
  %3042 = vrot.lane.b32.xlu0 %v2986, 117
  %v3043 = vpop.permute.xlu0 %3042
  %3044 = vrot.lane.b32.xlu0 %v2988, 117
  %v3045 = vpop.permute.xlu0 %3044
  %3046 = vrot.lane.b32.xlu0 %v2987, 117
  %v3047 = vpop.permute.xlu0 %3046
  %3048 = vrot.lane.b32.xlu0 %v2989, 117
  %v3049 = vpop.permute.xlu0 %3048
  %v3050 = vsel %vm79, %v3043, %v3045
  %v3051 = vsel %vm79, %v3047, %v3049
  %3054 = vrot.lane.b32.xlu0 %v2986, 110
  %v3055 = vpop.permute.xlu0 %3054
  %3056 = vrot.lane.b32.xlu0 %v2988, 110
  %v3057 = vpop.permute.xlu0 %3056
  %3058 = vrot.lane.b32.xlu0 %v2987, 110
  %v3059 = vpop.permute.xlu0 %3058
  %3060 = vrot.lane.b32.xlu0 %v2989, 110
  %v3061 = vpop.permute.xlu0 %3060
  %v3062 = vsel %vm92, %v3055, %v3057
  %v3063 = vsel %vm92, %v3059, %v3061
  %3066 = vrot.lane.b32.xlu0 %v2986, 109
  %v3067 = vpop.permute.xlu0 %3066
  %3068 = vrot.lane.b32.xlu0 %v2988, 109
  %v3069 = vpop.permute.xlu0 %3068
  %3070 = vrot.lane.b32.xlu0 %v2987, 109
  %v3071 = vpop.permute.xlu0 %3070
  %3072 = vrot.lane.b32.xlu0 %v2989, 109
  %v3073 = vpop.permute.xlu0 %3072
  %v3074 = vsel %vm105, %v3067, %v3069
  %v3075 = vsel %vm105, %v3071, %v3073
  %3078 = vrot.lane.b32.xlu0 %v2986, 108
  %v3079 = vpop.permute.xlu0 %3078
  %3080 = vrot.lane.b32.xlu0 %v2988, 108
  %v3081 = vpop.permute.xlu0 %3080
  %3082 = vrot.lane.b32.xlu0 %v2987, 108
  %v3083 = vpop.permute.xlu0 %3082
  %3084 = vrot.lane.b32.xlu0 %v2989, 108
  %v3085 = vpop.permute.xlu0 %3084
  %v3086 = vsel %vm118, %v3079, %v3081
  %v3087 = vsel %vm118, %v3083, %v3085
  %v3090 = vmax.f32 %v2986, 0.0
  %v3091 = vmax.f32 %v2987, 0.0
  %v3092 = vmax.f32 %v3002, 0.0
  %v3093 = vmax.f32 %v3003, 0.0
  %v3094 = vmax.f32 %v3014, 0.0
  %v3095 = vmax.f32 %v3015, 0.0
  %v3096 = vmax.f32 %v3026, 0.0
  %v3097 = vmax.f32 %v3027, 0.0
  %v3098 = vmax.f32 %v3038, 0.0
  %v3099 = vmax.f32 %v3039, 0.0
  %v3100 = vmax.f32 %v3050, 0.0
  %v3101 = vmax.f32 %v3051, 0.0
  %v3102 = vmax.f32 %v3062, 0.0
  %v3103 = vmax.f32 %v3063, 0.0
  %v3104 = vmax.f32 %v3074, 0.0
  %v3105 = vmax.f32 %v3075, 0.0
  %v3106 = vmax.f32 %v3086, 0.0
  %v3107 = vmax.f32 %v3087, 0.0
  %s3108 = scalar_lea.vmem %s0, 448
  %v3109 = vld [vmem:[%s3108] sm:$0xff]
  %v3110 = vld [vmem:[%s3108 + $0x8] sm:$0xff]
  %v3111 = vld [vmem:[%s3108 + $0x10] sm:$0xff]
  %v3112 = vld [vmem:[%s3108 + $0x18] sm:$0xff]
  %v3114 = vsel %vm145, %v3110, 0
  %v3117 = vsel %vm145, %v3112, 0
  %3119 = vmatprep.subr.mxu0 0.0
  %3120 = vmatpush1.msra.mxu0 %v3090
  %3121 = vmatprep.subr.mxu0 0.0
  %3122 = vmatpush1.msra.mxu0 %v3091
  %3123 = vmatprep.subr.mxu0 0.0
  %3124 = vmatpush1.msra.mxu0 %v3092
  %3125 = vmatprep.subr.mxu0 0.0
  %3126 = vmatpush1.msra.mxu0 %v3093
  %3127 = vmatprep.subr.mxu0 0.0
  %3128 = vmatpush1.msra.mxu0 %v3094
  %3129 = vmatprep.subr.mxu0 0.0
  %3130 = vmatpush1.msra.mxu0 %v3095
  %3131 = vmatprep.subr.mxu0 0.0
  %3132 = vmatpush1.msra.mxu0 %v3096
  %3133 = vmatprep.subr.mxu0 0.0
  %3134 = vmatpush1.msra.mxu0 %v3097
  %3135 = vmatprep.subr.mxu0 0.0
  %3136 = vmatpush1.msra.mxu0 %v3098
  %3137 = vmatprep.subr.mxu0 0.0
  %3138 = vmatpush1.msra.mxu0 %v3099
  %3139 = vmatprep.subr.mxu0 0.0
  %3140 = vmatpush1.msra.mxu0 %v3100
  %3141 = vmatprep.subr.mxu0 0.0
  %3142 = vmatpush1.msra.mxu0 %v3101
  %3143 = vmatprep.subr.mxu0 0.0
  %3144 = vmatpush1.msra.mxu0 %v3102
  %3145 = vmatprep.subr.mxu0 0.0
  %3146 = vmatpush1.msra.mxu0 %v3103
  %3147 = vmatprep.subr.mxu0 0.0
  %3148 = vmatpush1.msra.mxu0 %v3104
  %3149 = vmatprep.subr.mxu0 0.0
  %3150 = vmatpush1.msra.mxu0 %v3105
  %3151 = vmatprep.subr.mxu0 0.0
  %3152 = vmatpush1.msra.mxu0 %v3106
  %3153 = vmatprep.subr.mxu0 0.0
  %3154 = vmatpush1.msra.mxu0 %v3107
  %3155 = vmatprep.subr.mxu0 0.0
  %3156 = vmatpush1.msra.mxu0 0.0
  %3157 = vmatprep.subr.mxu0 0.0
  %3158 = vmatpush1.msra.mxu0 0.0
  %3159 = vmatprep.subr.mxu0 0.0
  %3160 = vmatpush1.msra.mxu0 0.0
  %3161 = vmatprep.subr.mxu0 0.0
  %3162 = vmatpush1.msra.mxu0 0.0
  %3163 = vmatprep.subr.mxu0 0.0
  %3164 = vmatpush1.msra.mxu0 0.0
  %3165 = vmatprep.subr.mxu0 0.0
  %3166 = vmatpush1.msra.mxu0 0.0
  %3167 = vmatprep.subr.mxu0 0.0
  %3168 = vmatpush1.msra.mxu0 0.0
  %3169 = vmatprep.subr.mxu0 0.0
  %3170 = vmatpush1.msra.mxu0 0.0
  %3171 = vmatprep.subr.mxu0 0.0
  %3172 = vmatpush1.msra.mxu0 0.0
  %3173 = vmatprep.subr.mxu0 0.0
  %3174 = vmatpush1.msra.mxu0 0.0
  %3175 = vmatprep.subr.mxu0 0.0
  %3176 = vmatpush1.msra.mxu0 0.0
  %3177 = vmatprep.subr.mxu0 0.0
  %3178 = vmatpush1.msra.mxu0 0.0
  %3179 = vmatprep.subr.mxu0 0.0
  %3180 = vmatpush1.msra.mxu0 0.0
  %3181 = vmatprep.subr.mxu0 0.0
  %3182 = vmatpush1.msra.mxu0 0.0
  %3183 = vmatprep.mubr.f32.mxu0 %v3114
  %3184 = vmatmul.mubr.f32.gmra.mrb[0].mxu0 %v3109
  %v3185 = vpop.f32.mrb[0].mxu0
  %v3186 = vadd.f32 0.0, %v3185
  %v3187 = vpop.f32.mrb[0].mxu0
  %3188 = vmatprep.mubr.f32.mxu0 %v3117
  %3189 = vmatmul.mubr.f32.gmra.mrb[0].mxu0 %v3111
  %v3190 = vpop.f32.mrb[0].mxu0
  %v3191 = vadd.f32 0.0, %v3190
  %v3192 = vpop.f32.mrb[0].mxu0
  %3193 = vdwg.mxu0
  %s3194 = scalar_lea.vmem %s2, 224
  %3195 = vst [vmem:[%s3194] sm:$0xff] %v3186
  %3196 = vst [vmem:[%s3194 + $0x8] sm:$0xff] %v3191
  %s3197 = scalar_lea.vmem %s1, 480
  %v3198 = vld [vmem:[%s3197] sm:$0xff]
  %v3199 = vld [vmem:[%s3197 + $0x10] sm:$0xff]
  %v3200 = vld [vmem:[%s3197 + $0x8] sm:$0xff]
  %v3201 = vld [vmem:[%s3197 + $0x18] sm:$0xff]
  %3206 = vrot.lane.b32.xlu0 %v3198, 127
  %v3207 = vpop.permute.xlu0 %3206
  %3208 = vrot.lane.b32.xlu0 %v3200, 127
  %v3209 = vpop.permute.xlu0 %3208
  %3210 = vrot.lane.b32.xlu0 %v3199, 127
  %v3211 = vpop.permute.xlu0 %3210
  %3212 = vrot.lane.b32.xlu0 %v3201, 127
  %v3213 = vpop.permute.xlu0 %3212
  %v3214 = vsel %vm27, %v3207, %v3209
  %v3215 = vsel %vm27, %v3211, %v3213
  %3218 = vrot.lane.b32.xlu0 %v3198, 126
  %v3219 = vpop.permute.xlu0 %3218
  %3220 = vrot.lane.b32.xlu0 %v3200, 126
  %v3221 = vpop.permute.xlu0 %3220
  %3222 = vrot.lane.b32.xlu0 %v3199, 126
  %v3223 = vpop.permute.xlu0 %3222
  %3224 = vrot.lane.b32.xlu0 %v3201, 126
  %v3225 = vpop.permute.xlu0 %3224
  %v3226 = vsel %vm40, %v3219, %v3221
  %v3227 = vsel %vm40, %v3223, %v3225
  %3230 = vrot.lane.b32.xlu0 %v3198, 119
  %v3231 = vpop.permute.xlu0 %3230
  %3232 = vrot.lane.b32.xlu0 %v3200, 119
  %v3233 = vpop.permute.xlu0 %3232
  %3234 = vrot.lane.b32.xlu0 %v3199, 119
  %v3235 = vpop.permute.xlu0 %3234
  %3236 = vrot.lane.b32.xlu0 %v3201, 119
  %v3237 = vpop.permute.xlu0 %3236
  %v3238 = vsel %vm53, %v3231, %v3233
  %v3239 = vsel %vm53, %v3235, %v3237
  %3242 = vrot.lane.b32.xlu0 %v3198, 118
  %v3243 = vpop.permute.xlu0 %3242
  %3244 = vrot.lane.b32.xlu0 %v3200, 118
  %v3245 = vpop.permute.xlu0 %3244
  %3246 = vrot.lane.b32.xlu0 %v3199, 118
  %v3247 = vpop.permute.xlu0 %3246
  %3248 = vrot.lane.b32.xlu0 %v3201, 118
  %v3249 = vpop.permute.xlu0 %3248
  %v3250 = vsel %vm66, %v3243, %v3245
  %v3251 = vsel %vm66, %v3247, %v3249
  %3254 = vrot.lane.b32.xlu0 %v3198, 117
  %v3255 = vpop.permute.xlu0 %3254
  %3256 = vrot.lane.b32.xlu0 %v3200, 117
  %v3257 = vpop.permute.xlu0 %3256
  %3258 = vrot.lane.b32.xlu0 %v3199, 117
  %v3259 = vpop.permute.xlu0 %3258
  %3260 = vrot.lane.b32.xlu0 %v3201, 117
  %v3261 = vpop.permute.xlu0 %3260
  %v3262 = vsel %vm79, %v3255, %v3257
  %v3263 = vsel %vm79, %v3259, %v3261
  %3266 = vrot.lane.b32.xlu0 %v3198, 110
  %v3267 = vpop.permute.xlu0 %3266
  %3268 = vrot.lane.b32.xlu0 %v3200, 110
  %v3269 = vpop.permute.xlu0 %3268
  %3270 = vrot.lane.b32.xlu0 %v3199, 110
  %v3271 = vpop.permute.xlu0 %3270
  %3272 = vrot.lane.b32.xlu0 %v3201, 110
  %v3273 = vpop.permute.xlu0 %3272
  %v3274 = vsel %vm92, %v3267, %v3269
  %v3275 = vsel %vm92, %v3271, %v3273
  %3278 = vrot.lane.b32.xlu0 %v3198, 109
  %v3279 = vpop.permute.xlu0 %3278
  %3280 = vrot.lane.b32.xlu0 %v3200, 109
  %v3281 = vpop.permute.xlu0 %3280
  %3282 = vrot.lane.b32.xlu0 %v3199, 109
  %v3283 = vpop.permute.xlu0 %3282
  %3284 = vrot.lane.b32.xlu0 %v3201, 109
  %v3285 = vpop.permute.xlu0 %3284
  %v3286 = vsel %vm105, %v3279, %v3281
  %v3287 = vsel %vm105, %v3283, %v3285
  %3290 = vrot.lane.b32.xlu0 %v3198, 108
  %v3291 = vpop.permute.xlu0 %3290
  %3292 = vrot.lane.b32.xlu0 %v3200, 108
  %v3293 = vpop.permute.xlu0 %3292
  %3294 = vrot.lane.b32.xlu0 %v3199, 108
  %v3295 = vpop.permute.xlu0 %3294
  %3296 = vrot.lane.b32.xlu0 %v3201, 108
  %v3297 = vpop.permute.xlu0 %3296
  %v3298 = vsel %vm118, %v3291, %v3293
  %v3299 = vsel %vm118, %v3295, %v3297
  %v3302 = vmax.f32 %v3198, 0.0
  %v3303 = vmax.f32 %v3199, 0.0
  %v3304 = vmax.f32 %v3214, 0.0
  %v3305 = vmax.f32 %v3215, 0.0
  %v3306 = vmax.f32 %v3226, 0.0
  %v3307 = vmax.f32 %v3227, 0.0
  %v3308 = vmax.f32 %v3238, 0.0
  %v3309 = vmax.f32 %v3239, 0.0
  %v3310 = vmax.f32 %v3250, 0.0
  %v3311 = vmax.f32 %v3251, 0.0
  %v3312 = vmax.f32 %v3262, 0.0
  %v3313 = vmax.f32 %v3263, 0.0
  %v3314 = vmax.f32 %v3274, 0.0
  %v3315 = vmax.f32 %v3275, 0.0
  %v3316 = vmax.f32 %v3286, 0.0
  %v3317 = vmax.f32 %v3287, 0.0
  %v3318 = vmax.f32 %v3298, 0.0
  %v3319 = vmax.f32 %v3299, 0.0
  %s3320 = scalar_lea.vmem %s0, 480
  %v3321 = vld [vmem:[%s3320] sm:$0xff]
  %v3322 = vld [vmem:[%s3320 + $0x8] sm:$0xff]
  %v3323 = vld [vmem:[%s3320 + $0x10] sm:$0xff]
  %v3324 = vld [vmem:[%s3320 + $0x18] sm:$0xff]
  %v3326 = vsel %vm145, %v3322, 0
  %v3329 = vsel %vm145, %v3324, 0
  %3331 = vmatprep.subr.mxu0 0.0
  %3332 = vmatpush1.msra.mxu0 %v3302
  %3333 = vmatprep.subr.mxu0 0.0
  %3334 = vmatpush1.msra.mxu0 %v3303
  %3335 = vmatprep.subr.mxu0 0.0
  %3336 = vmatpush1.msra.mxu0 %v3304
  %3337 = vmatprep.subr.mxu0 0.0
  %3338 = vmatpush1.msra.mxu0 %v3305
  %3339 = vmatprep.subr.mxu0 0.0
  %3340 = vmatpush1.msra.mxu0 %v3306
  %3341 = vmatprep.subr.mxu0 0.0
  %3342 = vmatpush1.msra.mxu0 %v3307
  %3343 = vmatprep.subr.mxu0 0.0
  %3344 = vmatpush1.msra.mxu0 %v3308
  %3345 = vmatprep.subr.mxu0 0.0
  %3346 = vmatpush1.msra.mxu0 %v3309
  %3347 = vmatprep.subr.mxu0 0.0
  %3348 = vmatpush1.msra.mxu0 %v3310
  %3349 = vmatprep.subr.mxu0 0.0
  %3350 = vmatpush1.msra.mxu0 %v3311
  %3351 = vmatprep.subr.mxu0 0.0
  %3352 = vmatpush1.msra.mxu0 %v3312
  %3353 = vmatprep.subr.mxu0 0.0
  %3354 = vmatpush1.msra.mxu0 %v3313
  %3355 = vmatprep.subr.mxu0 0.0
  %3356 = vmatpush1.msra.mxu0 %v3314
  %3357 = vmatprep.subr.mxu0 0.0
  %3358 = vmatpush1.msra.mxu0 %v3315
  %3359 = vmatprep.subr.mxu0 0.0
  %3360 = vmatpush1.msra.mxu0 %v3316
  %3361 = vmatprep.subr.mxu0 0.0
  %3362 = vmatpush1.msra.mxu0 %v3317
  %3363 = vmatprep.subr.mxu0 0.0
  %3364 = vmatpush1.msra.mxu0 %v3318
  %3365 = vmatprep.subr.mxu0 0.0
  %3366 = vmatpush1.msra.mxu0 %v3319
  %3367 = vmatprep.subr.mxu0 0.0
  %3368 = vmatpush1.msra.mxu0 0.0
  %3369 = vmatprep.subr.mxu0 0.0
  %3370 = vmatpush1.msra.mxu0 0.0
  %3371 = vmatprep.subr.mxu0 0.0
  %3372 = vmatpush1.msra.mxu0 0.0
  %3373 = vmatprep.subr.mxu0 0.0
  %3374 = vmatpush1.msra.mxu0 0.0
  %3375 = vmatprep.subr.mxu0 0.0
  %3376 = vmatpush1.msra.mxu0 0.0
  %3377 = vmatprep.subr.mxu0 0.0
  %3378 = vmatpush1.msra.mxu0 0.0
  %3379 = vmatprep.subr.mxu0 0.0
  %3380 = vmatpush1.msra.mxu0 0.0
  %3381 = vmatprep.subr.mxu0 0.0
  %3382 = vmatpush1.msra.mxu0 0.0
  %3383 = vmatprep.subr.mxu0 0.0
  %3384 = vmatpush1.msra.mxu0 0.0
  %3385 = vmatprep.subr.mxu0 0.0
  %3386 = vmatpush1.msra.mxu0 0.0
  %3387 = vmatprep.subr.mxu0 0.0
  %3388 = vmatpush1.msra.mxu0 0.0
  %3389 = vmatprep.subr.mxu0 0.0
  %3390 = vmatpush1.msra.mxu0 0.0
  %3391 = vmatprep.subr.mxu0 0.0
  %3392 = vmatpush1.msra.mxu0 0.0
  %3393 = vmatprep.subr.mxu0 0.0
  %3394 = vmatpush1.msra.mxu0 0.0
  %3395 = vmatprep.mubr.f32.mxu0 %v3326
  %3396 = vmatmul.mubr.f32.gmra.mrb[0].mxu0 %v3321
  %v3397 = vpop.f32.mrb[0].mxu0
  %v3398 = vadd.f32 0.0, %v3397
  %v3399 = vpop.f32.mrb[0].mxu0
  %3400 = vmatprep.mubr.f32.mxu0 %v3329
  %3401 = vmatmul.mubr.f32.gmra.mrb[0].mxu0 %v3323
  %v3402 = vpop.f32.mrb[0].mxu0
  %v3403 = vadd.f32 0.0, %v3402
  %v3404 = vpop.f32.mrb[0].mxu0
  %3405 = vdwg.mxu0
  %s3406 = scalar_lea.vmem %s2, 240
  %3407 = vst [vmem:[%s3406] sm:$0xff] %v3398
  %3408 = vst [vmem:[%s3406 + $0x8] sm:$0xff] %v3403
  %s3409 = scalar_lea.vmem %s1, 512
  %v3410 = vld [vmem:[%s3409] sm:$0xff]
  %v3411 = vld [vmem:[%s3409 + $0x10] sm:$0xff]
  %v3412 = vld [vmem:[%s3409 + $0x8] sm:$0xff]
  %v3413 = vld [vmem:[%s3409 + $0x18] sm:$0xff]
  %3418 = vrot.lane.b32.xlu0 %v3410, 127
  %v3419 = vpop.permute.xlu0 %3418
  %3420 = vrot.lane.b32.xlu0 %v3412, 127
  %v3421 = vpop.permute.xlu0 %3420
  %3422 = vrot.lane.b32.xlu0 %v3411, 127
  %v3423 = vpop.permute.xlu0 %3422
  %3424 = vrot.lane.b32.xlu0 %v3413, 127
  %v3425 = vpop.permute.xlu0 %3424
  %v3426 = vsel %vm27, %v3419, %v3421
  %v3427 = vsel %vm27, %v3423, %v3425
  %3430 = vrot.lane.b32.xlu0 %v3410, 126
  %v3431 = vpop.permute.xlu0 %3430
  %3432 = vrot.lane.b32.xlu0 %v3412, 126
  %v3433 = vpop.permute.xlu0 %3432
  %3434 = vrot.lane.b32.xlu0 %v3411, 126
  %v3435 = vpop.permute.xlu0 %3434
  %3436 = vrot.lane.b32.xlu0 %v3413, 126
  %v3437 = vpop.permute.xlu0 %3436
  %v3438 = vsel %vm40, %v3431, %v3433
  %v3439 = vsel %vm40, %v3435, %v3437
  %3442 = vrot.lane.b32.xlu0 %v3410, 119
  %v3443 = vpop.permute.xlu0 %3442
  %3444 = vrot.lane.b32.xlu0 %v3412, 119
  %v3445 = vpop.permute.xlu0 %3444
  %3446 = vrot.lane.b32.xlu0 %v3411, 119
  %v3447 = vpop.permute.xlu0 %3446
  %3448 = vrot.lane.b32.xlu0 %v3413, 119
  %v3449 = vpop.permute.xlu0 %3448
  %v3450 = vsel %vm53, %v3443, %v3445
  %v3451 = vsel %vm53, %v3447, %v3449
  %3454 = vrot.lane.b32.xlu0 %v3410, 118
  %v3455 = vpop.permute.xlu0 %3454
  %3456 = vrot.lane.b32.xlu0 %v3412, 118
  %v3457 = vpop.permute.xlu0 %3456
  %3458 = vrot.lane.b32.xlu0 %v3411, 118
  %v3459 = vpop.permute.xlu0 %3458
  %3460 = vrot.lane.b32.xlu0 %v3413, 118
  %v3461 = vpop.permute.xlu0 %3460
  %v3462 = vsel %vm66, %v3455, %v3457
  %v3463 = vsel %vm66, %v3459, %v3461
  %3466 = vrot.lane.b32.xlu0 %v3410, 117
  %v3467 = vpop.permute.xlu0 %3466
  %3468 = vrot.lane.b32.xlu0 %v3412, 117
  %v3469 = vpop.permute.xlu0 %3468
  %3470 = vrot.lane.b32.xlu0 %v3411, 117
  %v3471 = vpop.permute.xlu0 %3470
  %3472 = vrot.lane.b32.xlu0 %v3413, 117
  %v3473 = vpop.permute.xlu0 %3472
  %v3474 = vsel %vm79, %v3467, %v3469
  %v3475 = vsel %vm79, %v3471, %v3473
  %3478 = vrot.lane.b32.xlu0 %v3410, 110
  %v3479 = vpop.permute.xlu0 %3478
  %3480 = vrot.lane.b32.xlu0 %v3412, 110
  %v3481 = vpop.permute.xlu0 %3480
  %3482 = vrot.lane.b32.xlu0 %v3411, 110
  %v3483 = vpop.permute.xlu0 %3482
  %3484 = vrot.lane.b32.xlu0 %v3413, 110
  %v3485 = vpop.permute.xlu0 %3484
  %v3486 = vsel %vm92, %v3479, %v3481
  %v3487 = vsel %vm92, %v3483, %v3485
  %3490 = vrot.lane.b32.xlu0 %v3410, 109
  %v3491 = vpop.permute.xlu0 %3490
  %3492 = vrot.lane.b32.xlu0 %v3412, 109
  %v3493 = vpop.permute.xlu0 %3492
  %3494 = vrot.lane.b32.xlu0 %v3411, 109
  %v3495 = vpop.permute.xlu0 %3494
  %3496 = vrot.lane.b32.xlu0 %v3413, 109
  %v3497 = vpop.permute.xlu0 %3496
  %v3498 = vsel %vm105, %v3491, %v3493
  %v3499 = vsel %vm105, %v3495, %v3497
  %3502 = vrot.lane.b32.xlu0 %v3410, 108
  %v3503 = vpop.permute.xlu0 %3502
  %3504 = vrot.lane.b32.xlu0 %v3412, 108
  %v3505 = vpop.permute.xlu0 %3504
  %3506 = vrot.lane.b32.xlu0 %v3411, 108
  %v3507 = vpop.permute.xlu0 %3506
  %3508 = vrot.lane.b32.xlu0 %v3413, 108
  %v3509 = vpop.permute.xlu0 %3508
  %v3510 = vsel %vm118, %v3503, %v3505
  %v3511 = vsel %vm118, %v3507, %v3509
  %v3514 = vmax.f32 %v3410, 0.0
  %v3515 = vmax.f32 %v3411, 0.0
  %v3516 = vmax.f32 %v3426, 0.0
  %v3517 = vmax.f32 %v3427, 0.0
  %v3518 = vmax.f32 %v3438, 0.0
  %v3519 = vmax.f32 %v3439, 0.0
  %v3520 = vmax.f32 %v3450, 0.0
  %v3521 = vmax.f32 %v3451, 0.0
  %v3522 = vmax.f32 %v3462, 0.0
  %v3523 = vmax.f32 %v3463, 0.0
  %v3524 = vmax.f32 %v3474, 0.0
  %v3525 = vmax.f32 %v3475, 0.0
  %v3526 = vmax.f32 %v3486, 0.0
  %v3527 = vmax.f32 %v3487, 0.0
  %v3528 = vmax.f32 %v3498, 0.0
  %v3529 = vmax.f32 %v3499, 0.0
  %v3530 = vmax.f32 %v3510, 0.0
  %v3531 = vmax.f32 %v3511, 0.0
  %s3532 = scalar_lea.vmem %s0, 512
  %v3533 = vld [vmem:[%s3532] sm:$0xff]
  %v3534 = vld [vmem:[%s3532 + $0x8] sm:$0xff]
  %v3535 = vld [vmem:[%s3532 + $0x10] sm:$0xff]
  %v3536 = vld [vmem:[%s3532 + $0x18] sm:$0xff]
  %v3538 = vsel %vm145, %v3534, 0
  %v3541 = vsel %vm145, %v3536, 0
  %3543 = vmatprep.subr.mxu0 0.0
  %3544 = vmatpush1.msra.mxu0 %v3514
  %3545 = vmatprep.subr.mxu0 0.0
  %3546 = vmatpush1.msra.mxu0 %v3515
  %3547 = vmatprep.subr.mxu0 0.0
  %3548 = vmatpush1.msra.mxu0 %v3516
  %3549 = vmatprep.subr.mxu0 0.0
  %3550 = vmatpush1.msra.mxu0 %v3517
  %3551 = vmatprep.subr.mxu0 0.0
  %3552 = vmatpush1.msra.mxu0 %v3518
  %3553 = vmatprep.subr.mxu0 0.0
  %3554 = vmatpush1.msra.mxu0 %v3519
  %3555 = vmatprep.subr.mxu0 0.0
  %3556 = vmatpush1.msra.mxu0 %v3520
  %3557 = vmatprep.subr.mxu0 0.0
  %3558 = vmatpush1.msra.mxu0 %v3521
  %3559 = vmatprep.subr.mxu0 0.0
  %3560 = vmatpush1.msra.mxu0 %v3522
  %3561 = vmatprep.subr.mxu0 0.0
  %3562 = vmatpush1.msra.mxu0 %v3523
  %3563 = vmatprep.subr.mxu0 0.0
  %3564 = vmatpush1.msra.mxu0 %v3524
  %3565 = vmatprep.subr.mxu0 0.0
  %3566 = vmatpush1.msra.mxu0 %v3525
  %3567 = vmatprep.subr.mxu0 0.0
  %3568 = vmatpush1.msra.mxu0 %v3526
  %3569 = vmatprep.subr.mxu0 0.0
  %3570 = vmatpush1.msra.mxu0 %v3527
  %3571 = vmatprep.subr.mxu0 0.0
  %3572 = vmatpush1.msra.mxu0 %v3528
  %3573 = vmatprep.subr.mxu0 0.0
  %3574 = vmatpush1.msra.mxu0 %v3529
  %3575 = vmatprep.subr.mxu0 0.0
  %3576 = vmatpush1.msra.mxu0 %v3530
  %3577 = vmatprep.subr.mxu0 0.0
  %3578 = vmatpush1.msra.mxu0 %v3531
  %3579 = vmatprep.subr.mxu0 0.0
  %3580 = vmatpush1.msra.mxu0 0.0
  %3581 = vmatprep.subr.mxu0 0.0
  %3582 = vmatpush1.msra.mxu0 0.0
  %3583 = vmatprep.subr.mxu0 0.0
  %3584 = vmatpush1.msra.mxu0 0.0
  %3585 = vmatprep.subr.mxu0 0.0
  %3586 = vmatpush1.msra.mxu0 0.0
  %3587 = vmatprep.subr.mxu0 0.0
  %3588 = vmatpush1.msra.mxu0 0.0
  %3589 = vmatprep.subr.mxu0 0.0
  %3590 = vmatpush1.msra.mxu0 0.0
  %3591 = vmatprep.subr.mxu0 0.0
  %3592 = vmatpush1.msra.mxu0 0.0
  %3593 = vmatprep.subr.mxu0 0.0
  %3594 = vmatpush1.msra.mxu0 0.0
  %3595 = vmatprep.subr.mxu0 0.0
  %3596 = vmatpush1.msra.mxu0 0.0
  %3597 = vmatprep.subr.mxu0 0.0
  %3598 = vmatpush1.msra.mxu0 0.0
  %3599 = vmatprep.subr.mxu0 0.0
  %3600 = vmatpush1.msra.mxu0 0.0
  %3601 = vmatprep.subr.mxu0 0.0
  %3602 = vmatpush1.msra.mxu0 0.0
  %3603 = vmatprep.subr.mxu0 0.0
  %3604 = vmatpush1.msra.mxu0 0.0
  %3605 = vmatprep.subr.mxu0 0.0
  %3606 = vmatpush1.msra.mxu0 0.0
  %3607 = vmatprep.mubr.f32.mxu0 %v3538
  %3608 = vmatmul.mubr.f32.gmra.mrb[0].mxu0 %v3533
  %v3609 = vpop.f32.mrb[0].mxu0
  %v3610 = vadd.f32 0.0, %v3609
  %v3611 = vpop.f32.mrb[0].mxu0
  %3612 = vmatprep.mubr.f32.mxu0 %v3541
  %3613 = vmatmul.mubr.f32.gmra.mrb[0].mxu0 %v3535
  %v3614 = vpop.f32.mrb[0].mxu0
  %v3615 = vadd.f32 0.0, %v3614
  %v3616 = vpop.f32.mrb[0].mxu0
  %3617 = vdwg.mxu0
  %s3618 = scalar_lea.vmem %s2, 256
  %3619 = vst [vmem:[%s3618] sm:$0xff] %v3610
  %3620 = vst [vmem:[%s3618 + $0x8] sm:$0xff] %v3615
  %s3621 = scalar_lea.vmem %s1, 544
  %v3622 = vld [vmem:[%s3621] sm:$0xff]
  %v3623 = vld [vmem:[%s3621 + $0x10] sm:$0xff]
  %v3624 = vld [vmem:[%s3621 + $0x8] sm:$0xff]
  %v3625 = vld [vmem:[%s3621 + $0x18] sm:$0xff]
  %3630 = vrot.lane.b32.xlu0 %v3622, 127
  %v3631 = vpop.permute.xlu0 %3630
  %3632 = vrot.lane.b32.xlu0 %v3624, 127
  %v3633 = vpop.permute.xlu0 %3632
  %3634 = vrot.lane.b32.xlu0 %v3623, 127
  %v3635 = vpop.permute.xlu0 %3634
  %3636 = vrot.lane.b32.xlu0 %v3625, 127
  %v3637 = vpop.permute.xlu0 %3636
  %v3638 = vsel %vm27, %v3631, %v3633
  %v3639 = vsel %vm27, %v3635, %v3637
  %3642 = vrot.lane.b32.xlu0 %v3622, 126
  %v3643 = vpop.permute.xlu0 %3642
  %3644 = vrot.lane.b32.xlu0 %v3624, 126
  %v3645 = vpop.permute.xlu0 %3644
  %3646 = vrot.lane.b32.xlu0 %v3623, 126
  %v3647 = vpop.permute.xlu0 %3646
  %3648 = vrot.lane.b32.xlu0 %v3625, 126
  %v3649 = vpop.permute.xlu0 %3648
  %v3650 = vsel %vm40, %v3643, %v3645
  %v3651 = vsel %vm40, %v3647, %v3649
  %3654 = vrot.lane.b32.xlu0 %v3622, 119
  %v3655 = vpop.permute.xlu0 %3654
  %3656 = vrot.lane.b32.xlu0 %v3624, 119
  %v3657 = vpop.permute.xlu0 %3656
  %3658 = vrot.lane.b32.xlu0 %v3623, 119
  %v3659 = vpop.permute.xlu0 %3658
  %3660 = vrot.lane.b32.xlu0 %v3625, 119
  %v3661 = vpop.permute.xlu0 %3660
  %v3662 = vsel %vm53, %v3655, %v3657
  %v3663 = vsel %vm53, %v3659, %v3661
  %3666 = vrot.lane.b32.xlu0 %v3622, 118
  %v3667 = vpop.permute.xlu0 %3666
  %3668 = vrot.lane.b32.xlu0 %v3624, 118
  %v3669 = vpop.permute.xlu0 %3668
  %3670 = vrot.lane.b32.xlu0 %v3623, 118
  %v3671 = vpop.permute.xlu0 %3670
  %3672 = vrot.lane.b32.xlu0 %v3625, 118
  %v3673 = vpop.permute.xlu0 %3672
  %v3674 = vsel %vm66, %v3667, %v3669
  %v3675 = vsel %vm66, %v3671, %v3673
  %3678 = vrot.lane.b32.xlu0 %v3622, 117
  %v3679 = vpop.permute.xlu0 %3678
  %3680 = vrot.lane.b32.xlu0 %v3624, 117
  %v3681 = vpop.permute.xlu0 %3680
  %3682 = vrot.lane.b32.xlu0 %v3623, 117
  %v3683 = vpop.permute.xlu0 %3682
  %3684 = vrot.lane.b32.xlu0 %v3625, 117
  %v3685 = vpop.permute.xlu0 %3684
  %v3686 = vsel %vm79, %v3679, %v3681
  %v3687 = vsel %vm79, %v3683, %v3685
  %3690 = vrot.lane.b32.xlu0 %v3622, 110
  %v3691 = vpop.permute.xlu0 %3690
  %3692 = vrot.lane.b32.xlu0 %v3624, 110
  %v3693 = vpop.permute.xlu0 %3692
  %3694 = vrot.lane.b32.xlu0 %v3623, 110
  %v3695 = vpop.permute.xlu0 %3694
  %3696 = vrot.lane.b32.xlu0 %v3625, 110
  %v3697 = vpop.permute.xlu0 %3696
  %v3698 = vsel %vm92, %v3691, %v3693
  %v3699 = vsel %vm92, %v3695, %v3697
  %3702 = vrot.lane.b32.xlu0 %v3622, 109
  %v3703 = vpop.permute.xlu0 %3702
  %3704 = vrot.lane.b32.xlu0 %v3624, 109
  %v3705 = vpop.permute.xlu0 %3704
  %3706 = vrot.lane.b32.xlu0 %v3623, 109
  %v3707 = vpop.permute.xlu0 %3706
  %3708 = vrot.lane.b32.xlu0 %v3625, 109
  %v3709 = vpop.permute.xlu0 %3708
  %v3710 = vsel %vm105, %v3703, %v3705
  %v3711 = vsel %vm105, %v3707, %v3709
  %3714 = vrot.lane.b32.xlu0 %v3622, 108
  %v3715 = vpop.permute.xlu0 %3714
  %3716 = vrot.lane.b32.xlu0 %v3624, 108
  %v3717 = vpop.permute.xlu0 %3716
  %3718 = vrot.lane.b32.xlu0 %v3623, 108
  %v3719 = vpop.permute.xlu0 %3718
  %3720 = vrot.lane.b32.xlu0 %v3625, 108
  %v3721 = vpop.permute.xlu0 %3720
  %v3722 = vsel %vm118, %v3715, %v3717
  %v3723 = vsel %vm118, %v3719, %v3721
  %v3726 = vmax.f32 %v3622, 0.0
  %v3727 = vmax.f32 %v3623, 0.0
  %v3728 = vmax.f32 %v3638, 0.0
  %v3729 = vmax.f32 %v3639, 0.0
  %v3730 = vmax.f32 %v3650, 0.0
  %v3731 = vmax.f32 %v3651, 0.0
  %v3732 = vmax.f32 %v3662, 0.0
  %v3733 = vmax.f32 %v3663, 0.0
  %v3734 = vmax.f32 %v3674, 0.0
  %v3735 = vmax.f32 %v3675, 0.0
  %v3736 = vmax.f32 %v3686, 0.0
  %v3737 = vmax.f32 %v3687, 0.0
  %v3738 = vmax.f32 %v3698, 0.0
  %v3739 = vmax.f32 %v3699, 0.0
  %v3740 = vmax.f32 %v3710, 0.0
  %v3741 = vmax.f32 %v3711, 0.0
  %v3742 = vmax.f32 %v3722, 0.0
  %v3743 = vmax.f32 %v3723, 0.0
  %s3744 = scalar_lea.vmem %s0, 544
  %v3745 = vld [vmem:[%s3744] sm:$0xff]
  %v3746 = vld [vmem:[%s3744 + $0x8] sm:$0xff]
  %v3747 = vld [vmem:[%s3744 + $0x10] sm:$0xff]
  %v3748 = vld [vmem:[%s3744 + $0x18] sm:$0xff]
  %v3750 = vsel %vm145, %v3746, 0
  %v3753 = vsel %vm145, %v3748, 0
  %3755 = vmatprep.subr.mxu0 0.0
  %3756 = vmatpush1.msra.mxu0 %v3726
  %3757 = vmatprep.subr.mxu0 0.0
  %3758 = vmatpush1.msra.mxu0 %v3727
  %3759 = vmatprep.subr.mxu0 0.0
  %3760 = vmatpush1.msra.mxu0 %v3728
  %3761 = vmatprep.subr.mxu0 0.0
  %3762 = vmatpush1.msra.mxu0 %v3729
  %3763 = vmatprep.subr.mxu0 0.0
  %3764 = vmatpush1.msra.mxu0 %v3730
  %3765 = vmatprep.subr.mxu0 0.0
  %3766 = vmatpush1.msra.mxu0 %v3731
  %3767 = vmatprep.subr.mxu0 0.0
  %3768 = vmatpush1.msra.mxu0 %v3732
  %3769 = vmatprep.subr.mxu0 0.0
  %3770 = vmatpush1.msra.mxu0 %v3733
  %3771 = vmatprep.subr.mxu0 0.0
  %3772 = vmatpush1.msra.mxu0 %v3734
  %3773 = vmatprep.subr.mxu0 0.0
  %3774 = vmatpush1.msra.mxu0 %v3735
  %3775 = vmatprep.subr.mxu0 0.0
  %3776 = vmatpush1.msra.mxu0 %v3736
  %3777 = vmatprep.subr.mxu0 0.0
  %3778 = vmatpush1.msra.mxu0 %v3737
  %3779 = vmatprep.subr.mxu0 0.0
  %3780 = vmatpush1.msra.mxu0 %v3738
  %3781 = vmatprep.subr.mxu0 0.0
  %3782 = vmatpush1.msra.mxu0 %v3739
  %3783 = vmatprep.subr.mxu0 0.0
  %3784 = vmatpush1.msra.mxu0 %v3740
  %3785 = vmatprep.subr.mxu0 0.0
  %3786 = vmatpush1.msra.mxu0 %v3741
  %3787 = vmatprep.subr.mxu0 0.0
  %3788 = vmatpush1.msra.mxu0 %v3742
  %3789 = vmatprep.subr.mxu0 0.0
  %3790 = vmatpush1.msra.mxu0 %v3743
  %3791 = vmatprep.subr.mxu0 0.0
  %3792 = vmatpush1.msra.mxu0 0.0
  %3793 = vmatprep.subr.mxu0 0.0
  %3794 = vmatpush1.msra.mxu0 0.0
  %3795 = vmatprep.subr.mxu0 0.0
  %3796 = vmatpush1.msra.mxu0 0.0
  %3797 = vmatprep.subr.mxu0 0.0
  %3798 = vmatpush1.msra.mxu0 0.0
  %3799 = vmatprep.subr.mxu0 0.0
  %3800 = vmatpush1.msra.mxu0 0.0
  %3801 = vmatprep.subr.mxu0 0.0
  %3802 = vmatpush1.msra.mxu0 0.0
  %3803 = vmatprep.subr.mxu0 0.0
  %3804 = vmatpush1.msra.mxu0 0.0
  %3805 = vmatprep.subr.mxu0 0.0
  %3806 = vmatpush1.msra.mxu0 0.0
  %3807 = vmatprep.subr.mxu0 0.0
  %3808 = vmatpush1.msra.mxu0 0.0
  %3809 = vmatprep.subr.mxu0 0.0
  %3810 = vmatpush1.msra.mxu0 0.0
  %3811 = vmatprep.subr.mxu0 0.0
  %3812 = vmatpush1.msra.mxu0 0.0
  %3813 = vmatprep.subr.mxu0 0.0
  %3814 = vmatpush1.msra.mxu0 0.0
  %3815 = vmatprep.subr.mxu0 0.0
  %3816 = vmatpush1.msra.mxu0 0.0
  %3817 = vmatprep.subr.mxu0 0.0
  %3818 = vmatpush1.msra.mxu0 0.0
  %3819 = vmatprep.mubr.f32.mxu0 %v3750
  %3820 = vmatmul.mubr.f32.gmra.mrb[0].mxu0 %v3745
  %v3821 = vpop.f32.mrb[0].mxu0
  %v3822 = vadd.f32 0.0, %v3821
  %v3823 = vpop.f32.mrb[0].mxu0
  %3824 = vmatprep.mubr.f32.mxu0 %v3753
  %3825 = vmatmul.mubr.f32.gmra.mrb[0].mxu0 %v3747
  %v3826 = vpop.f32.mrb[0].mxu0
  %v3827 = vadd.f32 0.0, %v3826
  %v3828 = vpop.f32.mrb[0].mxu0
  %3829 = vdwg.mxu0
  %s3830 = scalar_lea.vmem %s2, 272
  %3831 = vst [vmem:[%s3830] sm:$0xff] %v3822
  %3832 = vst [vmem:[%s3830 + $0x8] sm:$0xff] %v3827
  %s3833 = scalar_lea.vmem %s1, 576
  %v3834 = vld [vmem:[%s3833] sm:$0xff]
  %v3835 = vld [vmem:[%s3833 + $0x10] sm:$0xff]
  %v3836 = vld [vmem:[%s3833 + $0x8] sm:$0xff]
  %v3837 = vld [vmem:[%s3833 + $0x18] sm:$0xff]
  %3842 = vrot.lane.b32.xlu0 %v3834, 127
  %v3843 = vpop.permute.xlu0 %3842
  %3844 = vrot.lane.b32.xlu0 %v3836, 127
  %v3845 = vpop.permute.xlu0 %3844
  %3846 = vrot.lane.b32.xlu0 %v3835, 127
  %v3847 = vpop.permute.xlu0 %3846
  %3848 = vrot.lane.b32.xlu0 %v3837, 127
  %v3849 = vpop.permute.xlu0 %3848
  %v3850 = vsel %vm27, %v3843, %v3845
  %v3851 = vsel %vm27, %v3847, %v3849
  %3854 = vrot.lane.b32.xlu0 %v3834, 126
  %v3855 = vpop.permute.xlu0 %3854
  %3856 = vrot.lane.b32.xlu0 %v3836, 126
  %v3857 = vpop.permute.xlu0 %3856
  %3858 = vrot.lane.b32.xlu0 %v3835, 126
  %v3859 = vpop.permute.xlu0 %3858
  %3860 = vrot.lane.b32.xlu0 %v3837, 126
  %v3861 = vpop.permute.xlu0 %3860
  %v3862 = vsel %vm40, %v3855, %v3857
  %v3863 = vsel %vm40, %v3859, %v3861
  %3866 = vrot.lane.b32.xlu0 %v3834, 119
  %v3867 = vpop.permute.xlu0 %3866
  %3868 = vrot.lane.b32.xlu0 %v3836, 119
  %v3869 = vpop.permute.xlu0 %3868
  %3870 = vrot.lane.b32.xlu0 %v3835, 119
  %v3871 = vpop.permute.xlu0 %3870
  %3872 = vrot.lane.b32.xlu0 %v3837, 119
  %v3873 = vpop.permute.xlu0 %3872
  %v3874 = vsel %vm53, %v3867, %v3869
  %v3875 = vsel %vm53, %v3871, %v3873
  %3878 = vrot.lane.b32.xlu0 %v3834, 118
  %v3879 = vpop.permute.xlu0 %3878
  %3880 = vrot.lane.b32.xlu0 %v3836, 118
  %v3881 = vpop.permute.xlu0 %3880
  %3882 = vrot.lane.b32.xlu0 %v3835, 118
  %v3883 = vpop.permute.xlu0 %3882
  %3884 = vrot.lane.b32.xlu0 %v3837, 118
  %v3885 = vpop.permute.xlu0 %3884
  %v3886 = vsel %vm66, %v3879, %v3881
  %v3887 = vsel %vm66, %v3883, %v3885
  %3890 = vrot.lane.b32.xlu0 %v3834, 117
  %v3891 = vpop.permute.xlu0 %3890
  %3892 = vrot.lane.b32.xlu0 %v3836, 117
  %v3893 = vpop.permute.xlu0 %3892
  %3894 = vrot.lane.b32.xlu0 %v3835, 117
  %v3895 = vpop.permute.xlu0 %3894
  %3896 = vrot.lane.b32.xlu0 %v3837, 117
  %v3897 = vpop.permute.xlu0 %3896
  %v3898 = vsel %vm79, %v3891, %v3893
  %v3899 = vsel %vm79, %v3895, %v3897
  %3902 = vrot.lane.b32.xlu0 %v3834, 110
  %v3903 = vpop.permute.xlu0 %3902
  %3904 = vrot.lane.b32.xlu0 %v3836, 110
  %v3905 = vpop.permute.xlu0 %3904
  %3906 = vrot.lane.b32.xlu0 %v3835, 110
  %v3907 = vpop.permute.xlu0 %3906
  %3908 = vrot.lane.b32.xlu0 %v3837, 110
  %v3909 = vpop.permute.xlu0 %3908
  %v3910 = vsel %vm92, %v3903, %v3905
  %v3911 = vsel %vm92, %v3907, %v3909
  %3914 = vrot.lane.b32.xlu0 %v3834, 109
  %v3915 = vpop.permute.xlu0 %3914
  %3916 = vrot.lane.b32.xlu0 %v3836, 109
  %v3917 = vpop.permute.xlu0 %3916
  %3918 = vrot.lane.b32.xlu0 %v3835, 109
  %v3919 = vpop.permute.xlu0 %3918
  %3920 = vrot.lane.b32.xlu0 %v3837, 109
  %v3921 = vpop.permute.xlu0 %3920
  %v3922 = vsel %vm105, %v3915, %v3917
  %v3923 = vsel %vm105, %v3919, %v3921
  %3926 = vrot.lane.b32.xlu0 %v3834, 108
  %v3927 = vpop.permute.xlu0 %3926
  %3928 = vrot.lane.b32.xlu0 %v3836, 108
  %v3929 = vpop.permute.xlu0 %3928
  %3930 = vrot.lane.b32.xlu0 %v3835, 108
  %v3931 = vpop.permute.xlu0 %3930
  %3932 = vrot.lane.b32.xlu0 %v3837, 108
  %v3933 = vpop.permute.xlu0 %3932
  %v3934 = vsel %vm118, %v3927, %v3929
  %v3935 = vsel %vm118, %v3931, %v3933
  %v3938 = vmax.f32 %v3834, 0.0
  %v3939 = vmax.f32 %v3835, 0.0
  %v3940 = vmax.f32 %v3850, 0.0
  %v3941 = vmax.f32 %v3851, 0.0
  %v3942 = vmax.f32 %v3862, 0.0
  %v3943 = vmax.f32 %v3863, 0.0
  %v3944 = vmax.f32 %v3874, 0.0
  %v3945 = vmax.f32 %v3875, 0.0
  %v3946 = vmax.f32 %v3886, 0.0
  %v3947 = vmax.f32 %v3887, 0.0
  %v3948 = vmax.f32 %v3898, 0.0
  %v3949 = vmax.f32 %v3899, 0.0
  %v3950 = vmax.f32 %v3910, 0.0
  %v3951 = vmax.f32 %v3911, 0.0
  %v3952 = vmax.f32 %v3922, 0.0
  %v3953 = vmax.f32 %v3923, 0.0
  %v3954 = vmax.f32 %v3934, 0.0
  %v3955 = vmax.f32 %v3935, 0.0
  %s3956 = scalar_lea.vmem %s0, 576
  %v3957 = vld [vmem:[%s3956] sm:$0xff]
  %v3958 = vld [vmem:[%s3956 + $0x8] sm:$0xff]
  %v3959 = vld [vmem:[%s3956 + $0x10] sm:$0xff]
  %v3960 = vld [vmem:[%s3956 + $0x18] sm:$0xff]
  %v3962 = vsel %vm145, %v3958, 0
  %v3965 = vsel %vm145, %v3960, 0
  %3967 = vmatprep.subr.mxu0 0.0
  %3968 = vmatpush1.msra.mxu0 %v3938
  %3969 = vmatprep.subr.mxu0 0.0
  %3970 = vmatpush1.msra.mxu0 %v3939
  %3971 = vmatprep.subr.mxu0 0.0
  %3972 = vmatpush1.msra.mxu0 %v3940
  %3973 = vmatprep.subr.mxu0 0.0
  %3974 = vmatpush1.msra.mxu0 %v3941
  %3975 = vmatprep.subr.mxu0 0.0
  %3976 = vmatpush1.msra.mxu0 %v3942
  %3977 = vmatprep.subr.mxu0 0.0
  %3978 = vmatpush1.msra.mxu0 %v3943
  %3979 = vmatprep.subr.mxu0 0.0
  %3980 = vmatpush1.msra.mxu0 %v3944
  %3981 = vmatprep.subr.mxu0 0.0
  %3982 = vmatpush1.msra.mxu0 %v3945
  %3983 = vmatprep.subr.mxu0 0.0
  %3984 = vmatpush1.msra.mxu0 %v3946
  %3985 = vmatprep.subr.mxu0 0.0
  %3986 = vmatpush1.msra.mxu0 %v3947
  %3987 = vmatprep.subr.mxu0 0.0
  %3988 = vmatpush1.msra.mxu0 %v3948
  %3989 = vmatprep.subr.mxu0 0.0
  %3990 = vmatpush1.msra.mxu0 %v3949
  %3991 = vmatprep.subr.mxu0 0.0
  %3992 = vmatpush1.msra.mxu0 %v3950
  %3993 = vmatprep.subr.mxu0 0.0
  %3994 = vmatpush1.msra.mxu0 %v3951
  %3995 = vmatprep.subr.mxu0 0.0
  %3996 = vmatpush1.msra.mxu0 %v3952
  %3997 = vmatprep.subr.mxu0 0.0
  %3998 = vmatpush1.msra.mxu0 %v3953
  %3999 = vmatprep.subr.mxu0 0.0
  %4000 = vmatpush1.msra.mxu0 %v3954
  %4001 = vmatprep.subr.mxu0 0.0
  %4002 = vmatpush1.msra.mxu0 %v3955
  %4003 = vmatprep.subr.mxu0 0.0
  %4004 = vmatpush1.msra.mxu0 0.0
  %4005 = vmatprep.subr.mxu0 0.0
  %4006 = vmatpush1.msra.mxu0 0.0
  %4007 = vmatprep.subr.mxu0 0.0
  %4008 = vmatpush1.msra.mxu0 0.0
  %4009 = vmatprep.subr.mxu0 0.0
  %4010 = vmatpush1.msra.mxu0 0.0
  %4011 = vmatprep.subr.mxu0 0.0
  %4012 = vmatpush1.msra.mxu0 0.0
  %4013 = vmatprep.subr.mxu0 0.0
  %4014 = vmatpush1.msra.mxu0 0.0
  %4015 = vmatprep.subr.mxu0 0.0
  %4016 = vmatpush1.msra.mxu0 0.0
  %4017 = vmatprep.subr.mxu0 0.0
  %4018 = vmatpush1.msra.mxu0 0.0
  %4019 = vmatprep.subr.mxu0 0.0
  %4020 = vmatpush1.msra.mxu0 0.0
  %4021 = vmatprep.subr.mxu0 0.0
  %4022 = vmatpush1.msra.mxu0 0.0
  %4023 = vmatprep.subr.mxu0 0.0
  %4024 = vmatpush1.msra.mxu0 0.0
  %4025 = vmatprep.subr.mxu0 0.0
  %4026 = vmatpush1.msra.mxu0 0.0
  %4027 = vmatprep.subr.mxu0 0.0
  %4028 = vmatpush1.msra.mxu0 0.0
  %4029 = vmatprep.subr.mxu0 0.0
  %4030 = vmatpush1.msra.mxu0 0.0
  %4031 = vmatprep.mubr.f32.mxu0 %v3962
  %4032 = vmatmul.mubr.f32.gmra.mrb[0].mxu0 %v3957
  %v4033 = vpop.f32.mrb[0].mxu0
  %v4034 = vadd.f32 0.0, %v4033
  %v4035 = vpop.f32.mrb[0].mxu0
  %4036 = vmatprep.mubr.f32.mxu0 %v3965
  %4037 = vmatmul.mubr.f32.gmra.mrb[0].mxu0 %v3959
  %v4038 = vpop.f32.mrb[0].mxu0
  %v4039 = vadd.f32 0.0, %v4038
  %v4040 = vpop.f32.mrb[0].mxu0
  %4041 = vdwg.mxu0
  %s4042 = scalar_lea.vmem %s2, 288
  %4043 = vst [vmem:[%s4042] sm:$0xff] %v4034
  %4044 = vst [vmem:[%s4042 + $0x8] sm:$0xff] %v4039
  %s4045 = scalar_lea.vmem %s1, 608
  %v4046 = vld [vmem:[%s4045] sm:$0xff]
  %v4047 = vld [vmem:[%s4045 + $0x10] sm:$0xff]
  %v4048 = vld [vmem:[%s4045 + $0x8] sm:$0xff]
  %v4049 = vld [vmem:[%s4045 + $0x18] sm:$0xff]
  %4054 = vrot.lane.b32.xlu0 %v4046, 127
  %v4055 = vpop.permute.xlu0 %4054
  %4056 = vrot.lane.b32.xlu0 %v4048, 127
  %v4057 = vpop.permute.xlu0 %4056
  %4058 = vrot.lane.b32.xlu0 %v4047, 127
  %v4059 = vpop.permute.xlu0 %4058
  %4060 = vrot.lane.b32.xlu0 %v4049, 127
  %v4061 = vpop.permute.xlu0 %4060
  %v4062 = vsel %vm27, %v4055, %v4057
  %v4063 = vsel %vm27, %v4059, %v4061
  %4066 = vrot.lane.b32.xlu0 %v4046, 126
  %v4067 = vpop.permute.xlu0 %4066
  %4068 = vrot.lane.b32.xlu0 %v4048, 126
  %v4069 = vpop.permute.xlu0 %4068
  %4070 = vrot.lane.b32.xlu0 %v4047, 126
  %v4071 = vpop.permute.xlu0 %4070
  %4072 = vrot.lane.b32.xlu0 %v4049, 126
  %v4073 = vpop.permute.xlu0 %4072
  %v4074 = vsel %vm40, %v4067, %v4069
  %v4075 = vsel %vm40, %v4071, %v4073
  %4078 = vrot.lane.b32.xlu0 %v4046, 119
  %v4079 = vpop.permute.xlu0 %4078
  %4080 = vrot.lane.b32.xlu0 %v4048, 119
  %v4081 = vpop.permute.xlu0 %4080
  %4082 = vrot.lane.b32.xlu0 %v4047, 119
  %v4083 = vpop.permute.xlu0 %4082
  %4084 = vrot.lane.b32.xlu0 %v4049, 119
  %v4085 = vpop.permute.xlu0 %4084
  %v4086 = vsel %vm53, %v4079, %v4081
  %v4087 = vsel %vm53, %v4083, %v4085
  %4090 = vrot.lane.b32.xlu0 %v4046, 118
  %v4091 = vpop.permute.xlu0 %4090
  %4092 = vrot.lane.b32.xlu0 %v4048, 118
  %v4093 = vpop.permute.xlu0 %4092
  %4094 = vrot.lane.b32.xlu0 %v4047, 118
  %v4095 = vpop.permute.xlu0 %4094
  %4096 = vrot.lane.b32.xlu0 %v4049, 118
  %v4097 = vpop.permute.xlu0 %4096
  %v4098 = vsel %vm66, %v4091, %v4093
  %v4099 = vsel %vm66, %v4095, %v4097
  %4102 = vrot.lane.b32.xlu0 %v4046, 117
  %v4103 = vpop.permute.xlu0 %4102
  %4104 = vrot.lane.b32.xlu0 %v4048, 117
  %v4105 = vpop.permute.xlu0 %4104
  %4106 = vrot.lane.b32.xlu0 %v4047, 117
  %v4107 = vpop.permute.xlu0 %4106
  %4108 = vrot.lane.b32.xlu0 %v4049, 117
  %v4109 = vpop.permute.xlu0 %4108
  %v4110 = vsel %vm79, %v4103, %v4105
  %v4111 = vsel %vm79, %v4107, %v4109
  %4114 = vrot.lane.b32.xlu0 %v4046, 110
  %v4115 = vpop.permute.xlu0 %4114
  %4116 = vrot.lane.b32.xlu0 %v4048, 110
  %v4117 = vpop.permute.xlu0 %4116
  %4118 = vrot.lane.b32.xlu0 %v4047, 110
  %v4119 = vpop.permute.xlu0 %4118
  %4120 = vrot.lane.b32.xlu0 %v4049, 110
  %v4121 = vpop.permute.xlu0 %4120
  %v4122 = vsel %vm92, %v4115, %v4117
  %v4123 = vsel %vm92, %v4119, %v4121
  %4126 = vrot.lane.b32.xlu0 %v4046, 109
  %v4127 = vpop.permute.xlu0 %4126
  %4128 = vrot.lane.b32.xlu0 %v4048, 109
  %v4129 = vpop.permute.xlu0 %4128
  %4130 = vrot.lane.b32.xlu0 %v4047, 109
  %v4131 = vpop.permute.xlu0 %4130
  %4132 = vrot.lane.b32.xlu0 %v4049, 109
  %v4133 = vpop.permute.xlu0 %4132
  %v4134 = vsel %vm105, %v4127, %v4129
  %v4135 = vsel %vm105, %v4131, %v4133
  %4138 = vrot.lane.b32.xlu0 %v4046, 108
  %v4139 = vpop.permute.xlu0 %4138
  %4140 = vrot.lane.b32.xlu0 %v4048, 108
  %v4141 = vpop.permute.xlu0 %4140
  %4142 = vrot.lane.b32.xlu0 %v4047, 108
  %v4143 = vpop.permute.xlu0 %4142
  %4144 = vrot.lane.b32.xlu0 %v4049, 108
  %v4145 = vpop.permute.xlu0 %4144
  %v4146 = vsel %vm118, %v4139, %v4141
  %v4147 = vsel %vm118, %v4143, %v4145
  %v4150 = vmax.f32 %v4046, 0.0
  %v4151 = vmax.f32 %v4047, 0.0
  %v4152 = vmax.f32 %v4062, 0.0
  %v4153 = vmax.f32 %v4063, 0.0
  %v4154 = vmax.f32 %v4074, 0.0
  %v4155 = vmax.f32 %v4075, 0.0
  %v4156 = vmax.f32 %v4086, 0.0
  %v4157 = vmax.f32 %v4087, 0.0
  %v4158 = vmax.f32 %v4098, 0.0
  %v4159 = vmax.f32 %v4099, 0.0
  %v4160 = vmax.f32 %v4110, 0.0
  %v4161 = vmax.f32 %v4111, 0.0
  %v4162 = vmax.f32 %v4122, 0.0
  %v4163 = vmax.f32 %v4123, 0.0
  %v4164 = vmax.f32 %v4134, 0.0
  %v4165 = vmax.f32 %v4135, 0.0
  %v4166 = vmax.f32 %v4146, 0.0
  %v4167 = vmax.f32 %v4147, 0.0
  %s4168 = scalar_lea.vmem %s0, 608
  %v4169 = vld [vmem:[%s4168] sm:$0xff]
  %v4170 = vld [vmem:[%s4168 + $0x8] sm:$0xff]
  %v4171 = vld [vmem:[%s4168 + $0x10] sm:$0xff]
  %v4172 = vld [vmem:[%s4168 + $0x18] sm:$0xff]
  %v4174 = vsel %vm145, %v4170, 0
  %v4177 = vsel %vm145, %v4172, 0
  %4179 = vmatprep.subr.mxu0 0.0
  %4180 = vmatpush1.msra.mxu0 %v4150
  %4181 = vmatprep.subr.mxu0 0.0
  %4182 = vmatpush1.msra.mxu0 %v4151
  %4183 = vmatprep.subr.mxu0 0.0
  %4184 = vmatpush1.msra.mxu0 %v4152
  %4185 = vmatprep.subr.mxu0 0.0
  %4186 = vmatpush1.msra.mxu0 %v4153
  %4187 = vmatprep.subr.mxu0 0.0
  %4188 = vmatpush1.msra.mxu0 %v4154
  %4189 = vmatprep.subr.mxu0 0.0
  %4190 = vmatpush1.msra.mxu0 %v4155
  %4191 = vmatprep.subr.mxu0 0.0
  %4192 = vmatpush1.msra.mxu0 %v4156
  %4193 = vmatprep.subr.mxu0 0.0
  %4194 = vmatpush1.msra.mxu0 %v4157
  %4195 = vmatprep.subr.mxu0 0.0
  %4196 = vmatpush1.msra.mxu0 %v4158
  %4197 = vmatprep.subr.mxu0 0.0
  %4198 = vmatpush1.msra.mxu0 %v4159
  %4199 = vmatprep.subr.mxu0 0.0
  %4200 = vmatpush1.msra.mxu0 %v4160
  %4201 = vmatprep.subr.mxu0 0.0
  %4202 = vmatpush1.msra.mxu0 %v4161
  %4203 = vmatprep.subr.mxu0 0.0
  %4204 = vmatpush1.msra.mxu0 %v4162
  %4205 = vmatprep.subr.mxu0 0.0
  %4206 = vmatpush1.msra.mxu0 %v4163
  %4207 = vmatprep.subr.mxu0 0.0
  %4208 = vmatpush1.msra.mxu0 %v4164
  %4209 = vmatprep.subr.mxu0 0.0
  %4210 = vmatpush1.msra.mxu0 %v4165
  %4211 = vmatprep.subr.mxu0 0.0
  %4212 = vmatpush1.msra.mxu0 %v4166
  %4213 = vmatprep.subr.mxu0 0.0
  %4214 = vmatpush1.msra.mxu0 %v4167
  %4215 = vmatprep.subr.mxu0 0.0
  %4216 = vmatpush1.msra.mxu0 0.0
  %4217 = vmatprep.subr.mxu0 0.0
  %4218 = vmatpush1.msra.mxu0 0.0
  %4219 = vmatprep.subr.mxu0 0.0
  %4220 = vmatpush1.msra.mxu0 0.0
  %4221 = vmatprep.subr.mxu0 0.0
  %4222 = vmatpush1.msra.mxu0 0.0
  %4223 = vmatprep.subr.mxu0 0.0
  %4224 = vmatpush1.msra.mxu0 0.0
  %4225 = vmatprep.subr.mxu0 0.0
  %4226 = vmatpush1.msra.mxu0 0.0
  %4227 = vmatprep.subr.mxu0 0.0
  %4228 = vmatpush1.msra.mxu0 0.0
  %4229 = vmatprep.subr.mxu0 0.0
  %4230 = vmatpush1.msra.mxu0 0.0
  %4231 = vmatprep.subr.mxu0 0.0
  %4232 = vmatpush1.msra.mxu0 0.0
  %4233 = vmatprep.subr.mxu0 0.0
  %4234 = vmatpush1.msra.mxu0 0.0
  %4235 = vmatprep.subr.mxu0 0.0
  %4236 = vmatpush1.msra.mxu0 0.0
  %4237 = vmatprep.subr.mxu0 0.0
  %4238 = vmatpush1.msra.mxu0 0.0
  %4239 = vmatprep.subr.mxu0 0.0
  %4240 = vmatpush1.msra.mxu0 0.0
  %4241 = vmatprep.subr.mxu0 0.0
  %4242 = vmatpush1.msra.mxu0 0.0
  %4243 = vmatprep.mubr.f32.mxu0 %v4174
  %4244 = vmatmul.mubr.f32.gmra.mrb[0].mxu0 %v4169
  %v4245 = vpop.f32.mrb[0].mxu0
  %v4246 = vadd.f32 0.0, %v4245
  %v4247 = vpop.f32.mrb[0].mxu0
  %4248 = vmatprep.mubr.f32.mxu0 %v4177
  %4249 = vmatmul.mubr.f32.gmra.mrb[0].mxu0 %v4171
  %v4250 = vpop.f32.mrb[0].mxu0
  %v4251 = vadd.f32 0.0, %v4250
  %v4252 = vpop.f32.mrb[0].mxu0
  %4253 = vdwg.mxu0
  %s4254 = scalar_lea.vmem %s2, 304
  %4255 = vst [vmem:[%s4254] sm:$0xff] %v4246
  %4256 = vst [vmem:[%s4254 + $0x8] sm:$0xff] %v4251
  %s4257 = scalar_lea.vmem %s1, 640
  %v4258 = vld [vmem:[%s4257] sm:$0xff]
  %v4259 = vld [vmem:[%s4257 + $0x10] sm:$0xff]
  %v4260 = vld [vmem:[%s4257 + $0x8] sm:$0xff]
  %v4261 = vld [vmem:[%s4257 + $0x18] sm:$0xff]
  %4266 = vrot.lane.b32.xlu0 %v4258, 127
  %v4267 = vpop.permute.xlu0 %4266
  %4268 = vrot.lane.b32.xlu0 %v4260, 127
  %v4269 = vpop.permute.xlu0 %4268
  %4270 = vrot.lane.b32.xlu0 %v4259, 127
  %v4271 = vpop.permute.xlu0 %4270
  %4272 = vrot.lane.b32.xlu0 %v4261, 127
  %v4273 = vpop.permute.xlu0 %4272
  %v4274 = vsel %vm27, %v4267, %v4269
  %v4275 = vsel %vm27, %v4271, %v4273
  %4278 = vrot.lane.b32.xlu0 %v4258, 126
  %v4279 = vpop.permute.xlu0 %4278
  %4280 = vrot.lane.b32.xlu0 %v4260, 126
  %v4281 = vpop.permute.xlu0 %4280
  %4282 = vrot.lane.b32.xlu0 %v4259, 126
  %v4283 = vpop.permute.xlu0 %4282
  %4284 = vrot.lane.b32.xlu0 %v4261, 126
  %v4285 = vpop.permute.xlu0 %4284
  %v4286 = vsel %vm40, %v4279, %v4281
  %v4287 = vsel %vm40, %v4283, %v4285
  %4290 = vrot.lane.b32.xlu0 %v4258, 119
  %v4291 = vpop.permute.xlu0 %4290
  %4292 = vrot.lane.b32.xlu0 %v4260, 119
  %v4293 = vpop.permute.xlu0 %4292
  %4294 = vrot.lane.b32.xlu0 %v4259, 119
  %v4295 = vpop.permute.xlu0 %4294
  %4296 = vrot.lane.b32.xlu0 %v4261, 119
  %v4297 = vpop.permute.xlu0 %4296
  %v4298 = vsel %vm53, %v4291, %v4293
  %v4299 = vsel %vm53, %v4295, %v4297
  %4302 = vrot.lane.b32.xlu0 %v4258, 118
  %v4303 = vpop.permute.xlu0 %4302
  %4304 = vrot.lane.b32.xlu0 %v4260, 118
  %v4305 = vpop.permute.xlu0 %4304
  %4306 = vrot.lane.b32.xlu0 %v4259, 118
  %v4307 = vpop.permute.xlu0 %4306
  %4308 = vrot.lane.b32.xlu0 %v4261, 118
  %v4309 = vpop.permute.xlu0 %4308
  %v4310 = vsel %vm66, %v4303, %v4305
  %v4311 = vsel %vm66, %v4307, %v4309
  %4314 = vrot.lane.b32.xlu0 %v4258, 117
  %v4315 = vpop.permute.xlu0 %4314
  %4316 = vrot.lane.b32.xlu0 %v4260, 117
  %v4317 = vpop.permute.xlu0 %4316
  %4318 = vrot.lane.b32.xlu0 %v4259, 117
  %v4319 = vpop.permute.xlu0 %4318
  %4320 = vrot.lane.b32.xlu0 %v4261, 117
  %v4321 = vpop.permute.xlu0 %4320
  %v4322 = vsel %vm79, %v4315, %v4317
  %v4323 = vsel %vm79, %v4319, %v4321
  %4326 = vrot.lane.b32.xlu0 %v4258, 110
  %v4327 = vpop.permute.xlu0 %4326
  %4328 = vrot.lane.b32.xlu0 %v4260, 110
  %v4329 = vpop.permute.xlu0 %4328
  %4330 = vrot.lane.b32.xlu0 %v4259, 110
  %v4331 = vpop.permute.xlu0 %4330
  %4332 = vrot.lane.b32.xlu0 %v4261, 110
  %v4333 = vpop.permute.xlu0 %4332
  %v4334 = vsel %vm92, %v4327, %v4329
  %v4335 = vsel %vm92, %v4331, %v4333
  %4338 = vrot.lane.b32.xlu0 %v4258, 109
  %v4339 = vpop.permute.xlu0 %4338
  %4340 = vrot.lane.b32.xlu0 %v4260, 109
  %v4341 = vpop.permute.xlu0 %4340
  %4342 = vrot.lane.b32.xlu0 %v4259, 109
  %v4343 = vpop.permute.xlu0 %4342
  %4344 = vrot.lane.b32.xlu0 %v4261, 109
  %v4345 = vpop.permute.xlu0 %4344
  %v4346 = vsel %vm105, %v4339, %v4341
  %v4347 = vsel %vm105, %v4343, %v4345
  %4350 = vrot.lane.b32.xlu0 %v4258, 108
  %v4351 = vpop.permute.xlu0 %4350
  %4352 = vrot.lane.b32.xlu0 %v4260, 108
  %v4353 = vpop.permute.xlu0 %4352
  %4354 = vrot.lane.b32.xlu0 %v4259, 108
  %v4355 = vpop.permute.xlu0 %4354
  %4356 = vrot.lane.b32.xlu0 %v4261, 108
  %v4357 = vpop.permute.xlu0 %4356
  %v4358 = vsel %vm118, %v4351, %v4353
  %v4359 = vsel %vm118, %v4355, %v4357
  %v4362 = vmax.f32 %v4258, 0.0
  %v4363 = vmax.f32 %v4259, 0.0
  %v4364 = vmax.f32 %v4274, 0.0
  %v4365 = vmax.f32 %v4275, 0.0
  %v4366 = vmax.f32 %v4286, 0.0
  %v4367 = vmax.f32 %v4287, 0.0
  %v4368 = vmax.f32 %v4298, 0.0
  %v4369 = vmax.f32 %v4299, 0.0
  %v4370 = vmax.f32 %v4310, 0.0
  %v4371 = vmax.f32 %v4311, 0.0
  %v4372 = vmax.f32 %v4322, 0.0
  %v4373 = vmax.f32 %v4323, 0.0
  %v4374 = vmax.f32 %v4334, 0.0
  %v4375 = vmax.f32 %v4335, 0.0
  %v4376 = vmax.f32 %v4346, 0.0
  %v4377 = vmax.f32 %v4347, 0.0
  %v4378 = vmax.f32 %v4358, 0.0
  %v4379 = vmax.f32 %v4359, 0.0
  %s4380 = scalar_lea.vmem %s0, 640
  %v4381 = vld [vmem:[%s4380] sm:$0xff]
  %v4382 = vld [vmem:[%s4380 + $0x8] sm:$0xff]
  %v4383 = vld [vmem:[%s4380 + $0x10] sm:$0xff]
  %v4384 = vld [vmem:[%s4380 + $0x18] sm:$0xff]
  %v4386 = vsel %vm145, %v4382, 0
  %v4389 = vsel %vm145, %v4384, 0
  %4391 = vmatprep.subr.mxu0 0.0
  %4392 = vmatpush1.msra.mxu0 %v4362
  %4393 = vmatprep.subr.mxu0 0.0
  %4394 = vmatpush1.msra.mxu0 %v4363
  %4395 = vmatprep.subr.mxu0 0.0
  %4396 = vmatpush1.msra.mxu0 %v4364
  %4397 = vmatprep.subr.mxu0 0.0
  %4398 = vmatpush1.msra.mxu0 %v4365
  %4399 = vmatprep.subr.mxu0 0.0
  %4400 = vmatpush1.msra.mxu0 %v4366
  %4401 = vmatprep.subr.mxu0 0.0
  %4402 = vmatpush1.msra.mxu0 %v4367
  %4403 = vmatprep.subr.mxu0 0.0
  %4404 = vmatpush1.msra.mxu0 %v4368
  %4405 = vmatprep.subr.mxu0 0.0
  %4406 = vmatpush1.msra.mxu0 %v4369
  %4407 = vmatprep.subr.mxu0 0.0
  %4408 = vmatpush1.msra.mxu0 %v4370
  %4409 = vmatprep.subr.mxu0 0.0
  %4410 = vmatpush1.msra.mxu0 %v4371
  %4411 = vmatprep.subr.mxu0 0.0
  %4412 = vmatpush1.msra.mxu0 %v4372
  %4413 = vmatprep.subr.mxu0 0.0
  %4414 = vmatpush1.msra.mxu0 %v4373
  %4415 = vmatprep.subr.mxu0 0.0
  %4416 = vmatpush1.msra.mxu0 %v4374
  %4417 = vmatprep.subr.mxu0 0.0
  %4418 = vmatpush1.msra.mxu0 %v4375
  %4419 = vmatprep.subr.mxu0 0.0
  %4420 = vmatpush1.msra.mxu0 %v4376
  %4421 = vmatprep.subr.mxu0 0.0
  %4422 = vmatpush1.msra.mxu0 %v4377
  %4423 = vmatprep.subr.mxu0 0.0
  %4424 = vmatpush1.msra.mxu0 %v4378
  %4425 = vmatprep.subr.mxu0 0.0
  %4426 = vmatpush1.msra.mxu0 %v4379
  %4427 = vmatprep.subr.mxu0 0.0
  %4428 = vmatpush1.msra.mxu0 0.0
  %4429 = vmatprep.subr.mxu0 0.0
  %4430 = vmatpush1.msra.mxu0 0.0
  %4431 = vmatprep.subr.mxu0 0.0
  %4432 = vmatpush1.msra.mxu0 0.0
  %4433 = vmatprep.subr.mxu0 0.0
  %4434 = vmatpush1.msra.mxu0 0.0
  %4435 = vmatprep.subr.mxu0 0.0
  %4436 = vmatpush1.msra.mxu0 0.0
  %4437 = vmatprep.subr.mxu0 0.0
  %4438 = vmatpush1.msra.mxu0 0.0
  %4439 = vmatprep.subr.mxu0 0.0
  %4440 = vmatpush1.msra.mxu0 0.0
  %4441 = vmatprep.subr.mxu0 0.0
  %4442 = vmatpush1.msra.mxu0 0.0
  %4443 = vmatprep.subr.mxu0 0.0
  %4444 = vmatpush1.msra.mxu0 0.0
  %4445 = vmatprep.subr.mxu0 0.0
  %4446 = vmatpush1.msra.mxu0 0.0
  %4447 = vmatprep.subr.mxu0 0.0
  %4448 = vmatpush1.msra.mxu0 0.0
  %4449 = vmatprep.subr.mxu0 0.0
  %4450 = vmatpush1.msra.mxu0 0.0
  %4451 = vmatprep.subr.mxu0 0.0
  %4452 = vmatpush1.msra.mxu0 0.0
  %4453 = vmatprep.subr.mxu0 0.0
  %4454 = vmatpush1.msra.mxu0 0.0
  %4455 = vmatprep.mubr.f32.mxu0 %v4386
  %4456 = vmatmul.mubr.f32.gmra.mrb[0].mxu0 %v4381
  %v4457 = vpop.f32.mrb[0].mxu0
  %v4458 = vadd.f32 0.0, %v4457
  %v4459 = vpop.f32.mrb[0].mxu0
  %4460 = vmatprep.mubr.f32.mxu0 %v4389
  %4461 = vmatmul.mubr.f32.gmra.mrb[0].mxu0 %v4383
  %v4462 = vpop.f32.mrb[0].mxu0
  %v4463 = vadd.f32 0.0, %v4462
  %v4464 = vpop.f32.mrb[0].mxu0
  %4465 = vdwg.mxu0
  %s4466 = scalar_lea.vmem %s2, 320
  %4467 = vst [vmem:[%s4466] sm:$0xff] %v4458
  %4468 = vst [vmem:[%s4466 + $0x8] sm:$0xff] %v4463
  %s4469 = scalar_lea.vmem %s1, 672
  %v4470 = vld [vmem:[%s4469] sm:$0xff]
  %v4471 = vld [vmem:[%s4469 + $0x10] sm:$0xff]
  %v4472 = vld [vmem:[%s4469 + $0x8] sm:$0xff]
  %v4473 = vld [vmem:[%s4469 + $0x18] sm:$0xff]
  %4478 = vrot.lane.b32.xlu0 %v4470, 127
  %v4479 = vpop.permute.xlu0 %4478
  %4480 = vrot.lane.b32.xlu0 %v4472, 127
  %v4481 = vpop.permute.xlu0 %4480
  %4482 = vrot.lane.b32.xlu0 %v4471, 127
  %v4483 = vpop.permute.xlu0 %4482
  %4484 = vrot.lane.b32.xlu0 %v4473, 127
  %v4485 = vpop.permute.xlu0 %4484
  %v4486 = vsel %vm27, %v4479, %v4481
  %v4487 = vsel %vm27, %v4483, %v4485
  %4490 = vrot.lane.b32.xlu0 %v4470, 126
  %v4491 = vpop.permute.xlu0 %4490
  %4492 = vrot.lane.b32.xlu0 %v4472, 126
  %v4493 = vpop.permute.xlu0 %4492
  %4494 = vrot.lane.b32.xlu0 %v4471, 126
  %v4495 = vpop.permute.xlu0 %4494
  %4496 = vrot.lane.b32.xlu0 %v4473, 126
  %v4497 = vpop.permute.xlu0 %4496
  %v4498 = vsel %vm40, %v4491, %v4493
  %v4499 = vsel %vm40, %v4495, %v4497
  %4502 = vrot.lane.b32.xlu0 %v4470, 119
  %v4503 = vpop.permute.xlu0 %4502
  %4504 = vrot.lane.b32.xlu0 %v4472, 119
  %v4505 = vpop.permute.xlu0 %4504
  %4506 = vrot.lane.b32.xlu0 %v4471, 119
  %v4507 = vpop.permute.xlu0 %4506
  %4508 = vrot.lane.b32.xlu0 %v4473, 119
  %v4509 = vpop.permute.xlu0 %4508
  %v4510 = vsel %vm53, %v4503, %v4505
  %v4511 = vsel %vm53, %v4507, %v4509
  %4514 = vrot.lane.b32.xlu0 %v4470, 118
  %v4515 = vpop.permute.xlu0 %4514
  %4516 = vrot.lane.b32.xlu0 %v4472, 118
  %v4517 = vpop.permute.xlu0 %4516
  %4518 = vrot.lane.b32.xlu0 %v4471, 118
  %v4519 = vpop.permute.xlu0 %4518
  %4520 = vrot.lane.b32.xlu0 %v4473, 118
  %v4521 = vpop.permute.xlu0 %4520
  %v4522 = vsel %vm66, %v4515, %v4517
  %v4523 = vsel %vm66, %v4519, %v4521
  %4526 = vrot.lane.b32.xlu0 %v4470, 117
  %v4527 = vpop.permute.xlu0 %4526
  %4528 = vrot.lane.b32.xlu0 %v4472, 117
  %v4529 = vpop.permute.xlu0 %4528
  %4530 = vrot.lane.b32.xlu0 %v4471, 117
  %v4531 = vpop.permute.xlu0 %4530
  %4532 = vrot.lane.b32.xlu0 %v4473, 117
  %v4533 = vpop.permute.xlu0 %4532
  %v4534 = vsel %vm79, %v4527, %v4529
  %v4535 = vsel %vm79, %v4531, %v4533
  %4538 = vrot.lane.b32.xlu0 %v4470, 110
  %v4539 = vpop.permute.xlu0 %4538
  %4540 = vrot.lane.b32.xlu0 %v4472, 110
  %v4541 = vpop.permute.xlu0 %4540
  %4542 = vrot.lane.b32.xlu0 %v4471, 110
  %v4543 = vpop.permute.xlu0 %4542
  %4544 = vrot.lane.b32.xlu0 %v4473, 110
  %v4545 = vpop.permute.xlu0 %4544
  %v4546 = vsel %vm92, %v4539, %v4541
  %v4547 = vsel %vm92, %v4543, %v4545
  %4550 = vrot.lane.b32.xlu0 %v4470, 109
  %v4551 = vpop.permute.xlu0 %4550
  %4552 = vrot.lane.b32.xlu0 %v4472, 109
  %v4553 = vpop.permute.xlu0 %4552
  %4554 = vrot.lane.b32.xlu0 %v4471, 109
  %v4555 = vpop.permute.xlu0 %4554
  %4556 = vrot.lane.b32.xlu0 %v4473, 109
  %v4557 = vpop.permute.xlu0 %4556
  %v4558 = vsel %vm105, %v4551, %v4553
  %v4559 = vsel %vm105, %v4555, %v4557
  %4562 = vrot.lane.b32.xlu0 %v4470, 108
  %v4563 = vpop.permute.xlu0 %4562
  %4564 = vrot.lane.b32.xlu0 %v4472, 108
  %v4565 = vpop.permute.xlu0 %4564
  %4566 = vrot.lane.b32.xlu0 %v4471, 108
  %v4567 = vpop.permute.xlu0 %4566
  %4568 = vrot.lane.b32.xlu0 %v4473, 108
  %v4569 = vpop.permute.xlu0 %4568
  %v4570 = vsel %vm118, %v4563, %v4565
  %v4571 = vsel %vm118, %v4567, %v4569
  %v4574 = vmax.f32 %v4470, 0.0
  %v4575 = vmax.f32 %v4471, 0.0
  %v4576 = vmax.f32 %v4486, 0.0
  %v4577 = vmax.f32 %v4487, 0.0
  %v4578 = vmax.f32 %v4498, 0.0
  %v4579 = vmax.f32 %v4499, 0.0
  %v4580 = vmax.f32 %v4510, 0.0
  %v4581 = vmax.f32 %v4511, 0.0
  %v4582 = vmax.f32 %v4522, 0.0
  %v4583 = vmax.f32 %v4523, 0.0
  %v4584 = vmax.f32 %v4534, 0.0
  %v4585 = vmax.f32 %v4535, 0.0
  %v4586 = vmax.f32 %v4546, 0.0
  %v4587 = vmax.f32 %v4547, 0.0
  %v4588 = vmax.f32 %v4558, 0.0
  %v4589 = vmax.f32 %v4559, 0.0
  %v4590 = vmax.f32 %v4570, 0.0
  %v4591 = vmax.f32 %v4571, 0.0
  %s4592 = scalar_lea.vmem %s0, 672
  %v4593 = vld [vmem:[%s4592] sm:$0xff]
  %v4594 = vld [vmem:[%s4592 + $0x8] sm:$0xff]
  %v4595 = vld [vmem:[%s4592 + $0x10] sm:$0xff]
  %v4596 = vld [vmem:[%s4592 + $0x18] sm:$0xff]
  %v4598 = vsel %vm145, %v4594, 0
  %v4601 = vsel %vm145, %v4596, 0
  %4603 = vmatprep.subr.mxu0 0.0
  %4604 = vmatpush1.msra.mxu0 %v4574
  %4605 = vmatprep.subr.mxu0 0.0
  %4606 = vmatpush1.msra.mxu0 %v4575
  %4607 = vmatprep.subr.mxu0 0.0
  %4608 = vmatpush1.msra.mxu0 %v4576
  %4609 = vmatprep.subr.mxu0 0.0
  %4610 = vmatpush1.msra.mxu0 %v4577
  %4611 = vmatprep.subr.mxu0 0.0
  %4612 = vmatpush1.msra.mxu0 %v4578
  %4613 = vmatprep.subr.mxu0 0.0
  %4614 = vmatpush1.msra.mxu0 %v4579
  %4615 = vmatprep.subr.mxu0 0.0
  %4616 = vmatpush1.msra.mxu0 %v4580
  %4617 = vmatprep.subr.mxu0 0.0
  %4618 = vmatpush1.msra.mxu0 %v4581
  %4619 = vmatprep.subr.mxu0 0.0
  %4620 = vmatpush1.msra.mxu0 %v4582
  %4621 = vmatprep.subr.mxu0 0.0
  %4622 = vmatpush1.msra.mxu0 %v4583
  %4623 = vmatprep.subr.mxu0 0.0
  %4624 = vmatpush1.msra.mxu0 %v4584
  %4625 = vmatprep.subr.mxu0 0.0
  %4626 = vmatpush1.msra.mxu0 %v4585
  %4627 = vmatprep.subr.mxu0 0.0
  %4628 = vmatpush1.msra.mxu0 %v4586
  %4629 = vmatprep.subr.mxu0 0.0
  %4630 = vmatpush1.msra.mxu0 %v4587
  %4631 = vmatprep.subr.mxu0 0.0
  %4632 = vmatpush1.msra.mxu0 %v4588
  %4633 = vmatprep.subr.mxu0 0.0
  %4634 = vmatpush1.msra.mxu0 %v4589
  %4635 = vmatprep.subr.mxu0 0.0
  %4636 = vmatpush1.msra.mxu0 %v4590
  %4637 = vmatprep.subr.mxu0 0.0
  %4638 = vmatpush1.msra.mxu0 %v4591
  %4639 = vmatprep.subr.mxu0 0.0
  %4640 = vmatpush1.msra.mxu0 0.0
  %4641 = vmatprep.subr.mxu0 0.0
  %4642 = vmatpush1.msra.mxu0 0.0
  %4643 = vmatprep.subr.mxu0 0.0
  %4644 = vmatpush1.msra.mxu0 0.0
  %4645 = vmatprep.subr.mxu0 0.0
  %4646 = vmatpush1.msra.mxu0 0.0
  %4647 = vmatprep.subr.mxu0 0.0
  %4648 = vmatpush1.msra.mxu0 0.0
  %4649 = vmatprep.subr.mxu0 0.0
  %4650 = vmatpush1.msra.mxu0 0.0
  %4651 = vmatprep.subr.mxu0 0.0
  %4652 = vmatpush1.msra.mxu0 0.0
  %4653 = vmatprep.subr.mxu0 0.0
  %4654 = vmatpush1.msra.mxu0 0.0
  %4655 = vmatprep.subr.mxu0 0.0
  %4656 = vmatpush1.msra.mxu0 0.0
  %4657 = vmatprep.subr.mxu0 0.0
  %4658 = vmatpush1.msra.mxu0 0.0
  %4659 = vmatprep.subr.mxu0 0.0
  %4660 = vmatpush1.msra.mxu0 0.0
  %4661 = vmatprep.subr.mxu0 0.0
  %4662 = vmatpush1.msra.mxu0 0.0
  %4663 = vmatprep.subr.mxu0 0.0
  %4664 = vmatpush1.msra.mxu0 0.0
  %4665 = vmatprep.subr.mxu0 0.0
  %4666 = vmatpush1.msra.mxu0 0.0
  %4667 = vmatprep.mubr.f32.mxu0 %v4598
  %4668 = vmatmul.mubr.f32.gmra.mrb[0].mxu0 %v4593
  %v4669 = vpop.f32.mrb[0].mxu0
  %v4670 = vadd.f32 0.0, %v4669
  %v4671 = vpop.f32.mrb[0].mxu0
  %4672 = vmatprep.mubr.f32.mxu0 %v4601
  %4673 = vmatmul.mubr.f32.gmra.mrb[0].mxu0 %v4595
  %v4674 = vpop.f32.mrb[0].mxu0
  %v4675 = vadd.f32 0.0, %v4674
  %v4676 = vpop.f32.mrb[0].mxu0
  %4677 = vdwg.mxu0
  %s4678 = scalar_lea.vmem %s2, 336
  %4679 = vst [vmem:[%s4678] sm:$0xff] %v4670
  %4680 = vst [vmem:[%s4678 + $0x8] sm:$0xff] %v4675
  %s4681 = scalar_lea.vmem %s1, 704
  %v4682 = vld [vmem:[%s4681] sm:$0xff]
  %v4683 = vld [vmem:[%s4681 + $0x10] sm:$0xff]
  %v4684 = vld [vmem:[%s4681 + $0x8] sm:$0xff]
  %v4685 = vld [vmem:[%s4681 + $0x18] sm:$0xff]
  %4690 = vrot.lane.b32.xlu0 %v4682, 127
  %v4691 = vpop.permute.xlu0 %4690
  %4692 = vrot.lane.b32.xlu0 %v4684, 127
  %v4693 = vpop.permute.xlu0 %4692
  %4694 = vrot.lane.b32.xlu0 %v4683, 127
  %v4695 = vpop.permute.xlu0 %4694
  %4696 = vrot.lane.b32.xlu0 %v4685, 127
  %v4697 = vpop.permute.xlu0 %4696
  %v4698 = vsel %vm27, %v4691, %v4693
  %v4699 = vsel %vm27, %v4695, %v4697
  %4702 = vrot.lane.b32.xlu0 %v4682, 126
  %v4703 = vpop.permute.xlu0 %4702
  %4704 = vrot.lane.b32.xlu0 %v4684, 126
  %v4705 = vpop.permute.xlu0 %4704
  %4706 = vrot.lane.b32.xlu0 %v4683, 126
  %v4707 = vpop.permute.xlu0 %4706
  %4708 = vrot.lane.b32.xlu0 %v4685, 126
  %v4709 = vpop.permute.xlu0 %4708
  %v4710 = vsel %vm40, %v4703, %v4705
  %v4711 = vsel %vm40, %v4707, %v4709
  %4714 = vrot.lane.b32.xlu0 %v4682, 119
  %v4715 = vpop.permute.xlu0 %4714
  %4716 = vrot.lane.b32.xlu0 %v4684, 119
  %v4717 = vpop.permute.xlu0 %4716
  %4718 = vrot.lane.b32.xlu0 %v4683, 119
  %v4719 = vpop.permute.xlu0 %4718
  %4720 = vrot.lane.b32.xlu0 %v4685, 119
  %v4721 = vpop.permute.xlu0 %4720
  %v4722 = vsel %vm53, %v4715, %v4717
  %v4723 = vsel %vm53, %v4719, %v4721
  %4726 = vrot.lane.b32.xlu0 %v4682, 118
  %v4727 = vpop.permute.xlu0 %4726
  %4728 = vrot.lane.b32.xlu0 %v4684, 118
  %v4729 = vpop.permute.xlu0 %4728
  %4730 = vrot.lane.b32.xlu0 %v4683, 118
  %v4731 = vpop.permute.xlu0 %4730
  %4732 = vrot.lane.b32.xlu0 %v4685, 118
  %v4733 = vpop.permute.xlu0 %4732
  %v4734 = vsel %vm66, %v4727, %v4729
  %v4735 = vsel %vm66, %v4731, %v4733
  %4738 = vrot.lane.b32.xlu0 %v4682, 117
  %v4739 = vpop.permute.xlu0 %4738
  %4740 = vrot.lane.b32.xlu0 %v4684, 117
  %v4741 = vpop.permute.xlu0 %4740
  %4742 = vrot.lane.b32.xlu0 %v4683, 117
  %v4743 = vpop.permute.xlu0 %4742
  %4744 = vrot.lane.b32.xlu0 %v4685, 117
  %v4745 = vpop.permute.xlu0 %4744
  %v4746 = vsel %vm79, %v4739, %v4741
  %v4747 = vsel %vm79, %v4743, %v4745
  %4750 = vrot.lane.b32.xlu0 %v4682, 110
  %v4751 = vpop.permute.xlu0 %4750
  %4752 = vrot.lane.b32.xlu0 %v4684, 110
  %v4753 = vpop.permute.xlu0 %4752
  %4754 = vrot.lane.b32.xlu0 %v4683, 110
  %v4755 = vpop.permute.xlu0 %4754
  %4756 = vrot.lane.b32.xlu0 %v4685, 110
  %v4757 = vpop.permute.xlu0 %4756
  %v4758 = vsel %vm92, %v4751, %v4753
  %v4759 = vsel %vm92, %v4755, %v4757
  %4762 = vrot.lane.b32.xlu0 %v4682, 109
  %v4763 = vpop.permute.xlu0 %4762
  %4764 = vrot.lane.b32.xlu0 %v4684, 109
  %v4765 = vpop.permute.xlu0 %4764
  %4766 = vrot.lane.b32.xlu0 %v4683, 109
  %v4767 = vpop.permute.xlu0 %4766
  %4768 = vrot.lane.b32.xlu0 %v4685, 109
  %v4769 = vpop.permute.xlu0 %4768
  %v4770 = vsel %vm105, %v4763, %v4765
  %v4771 = vsel %vm105, %v4767, %v4769
  %4774 = vrot.lane.b32.xlu0 %v4682, 108
  %v4775 = vpop.permute.xlu0 %4774
  %4776 = vrot.lane.b32.xlu0 %v4684, 108
  %v4777 = vpop.permute.xlu0 %4776
  %4778 = vrot.lane.b32.xlu0 %v4683, 108
  %v4779 = vpop.permute.xlu0 %4778
  %4780 = vrot.lane.b32.xlu0 %v4685, 108
  %v4781 = vpop.permute.xlu0 %4780
  %v4782 = vsel %vm118, %v4775, %v4777
  %v4783 = vsel %vm118, %v4779, %v4781
  %v4786 = vmax.f32 %v4682, 0.0
  %v4787 = vmax.f32 %v4683, 0.0
  %v4788 = vmax.f32 %v4698, 0.0
  %v4789 = vmax.f32 %v4699, 0.0
  %v4790 = vmax.f32 %v4710, 0.0
  %v4791 = vmax.f32 %v4711, 0.0
  %v4792 = vmax.f32 %v4722, 0.0
  %v4793 = vmax.f32 %v4723, 0.0
  %v4794 = vmax.f32 %v4734, 0.0
  %v4795 = vmax.f32 %v4735, 0.0
  %v4796 = vmax.f32 %v4746, 0.0
  %v4797 = vmax.f32 %v4747, 0.0
  %v4798 = vmax.f32 %v4758, 0.0
  %v4799 = vmax.f32 %v4759, 0.0
  %v4800 = vmax.f32 %v4770, 0.0
  %v4801 = vmax.f32 %v4771, 0.0
  %v4802 = vmax.f32 %v4782, 0.0
  %v4803 = vmax.f32 %v4783, 0.0
  %s4804 = scalar_lea.vmem %s0, 704
  %v4805 = vld [vmem:[%s4804] sm:$0xff]
  %v4806 = vld [vmem:[%s4804 + $0x8] sm:$0xff]
  %v4807 = vld [vmem:[%s4804 + $0x10] sm:$0xff]
  %v4808 = vld [vmem:[%s4804 + $0x18] sm:$0xff]
  %v4810 = vsel %vm145, %v4806, 0
  %v4813 = vsel %vm145, %v4808, 0
  %4815 = vmatprep.subr.mxu0 0.0
  %4816 = vmatpush1.msra.mxu0 %v4786
  %4817 = vmatprep.subr.mxu0 0.0
  %4818 = vmatpush1.msra.mxu0 %v4787
  %4819 = vmatprep.subr.mxu0 0.0
  %4820 = vmatpush1.msra.mxu0 %v4788
  %4821 = vmatprep.subr.mxu0 0.0
  %4822 = vmatpush1.msra.mxu0 %v4789
  %4823 = vmatprep.subr.mxu0 0.0
  %4824 = vmatpush1.msra.mxu0 %v4790
  %4825 = vmatprep.subr.mxu0 0.0
  %4826 = vmatpush1.msra.mxu0 %v4791
  %4827 = vmatprep.subr.mxu0 0.0
  %4828 = vmatpush1.msra.mxu0 %v4792
  %4829 = vmatprep.subr.mxu0 0.0
  %4830 = vmatpush1.msra.mxu0 %v4793
  %4831 = vmatprep.subr.mxu0 0.0
  %4832 = vmatpush1.msra.mxu0 %v4794
  %4833 = vmatprep.subr.mxu0 0.0
  %4834 = vmatpush1.msra.mxu0 %v4795
  %4835 = vmatprep.subr.mxu0 0.0
  %4836 = vmatpush1.msra.mxu0 %v4796
  %4837 = vmatprep.subr.mxu0 0.0
  %4838 = vmatpush1.msra.mxu0 %v4797
  %4839 = vmatprep.subr.mxu0 0.0
  %4840 = vmatpush1.msra.mxu0 %v4798
  %4841 = vmatprep.subr.mxu0 0.0
  %4842 = vmatpush1.msra.mxu0 %v4799
  %4843 = vmatprep.subr.mxu0 0.0
  %4844 = vmatpush1.msra.mxu0 %v4800
  %4845 = vmatprep.subr.mxu0 0.0
  %4846 = vmatpush1.msra.mxu0 %v4801
  %4847 = vmatprep.subr.mxu0 0.0
  %4848 = vmatpush1.msra.mxu0 %v4802
  %4849 = vmatprep.subr.mxu0 0.0
  %4850 = vmatpush1.msra.mxu0 %v4803
  %4851 = vmatprep.subr.mxu0 0.0
  %4852 = vmatpush1.msra.mxu0 0.0
  %4853 = vmatprep.subr.mxu0 0.0
  %4854 = vmatpush1.msra.mxu0 0.0
  %4855 = vmatprep.subr.mxu0 0.0
  %4856 = vmatpush1.msra.mxu0 0.0
  %4857 = vmatprep.subr.mxu0 0.0
  %4858 = vmatpush1.msra.mxu0 0.0
  %4859 = vmatprep.subr.mxu0 0.0
  %4860 = vmatpush1.msra.mxu0 0.0
  %4861 = vmatprep.subr.mxu0 0.0
  %4862 = vmatpush1.msra.mxu0 0.0
  %4863 = vmatprep.subr.mxu0 0.0
  %4864 = vmatpush1.msra.mxu0 0.0
  %4865 = vmatprep.subr.mxu0 0.0
  %4866 = vmatpush1.msra.mxu0 0.0
  %4867 = vmatprep.subr.mxu0 0.0
  %4868 = vmatpush1.msra.mxu0 0.0
  %4869 = vmatprep.subr.mxu0 0.0
  %4870 = vmatpush1.msra.mxu0 0.0
  %4871 = vmatprep.subr.mxu0 0.0
  %4872 = vmatpush1.msra.mxu0 0.0
  %4873 = vmatprep.subr.mxu0 0.0
  %4874 = vmatpush1.msra.mxu0 0.0
  %4875 = vmatprep.subr.mxu0 0.0
  %4876 = vmatpush1.msra.mxu0 0.0
  %4877 = vmatprep.subr.mxu0 0.0
  %4878 = vmatpush1.msra.mxu0 0.0
  %4879 = vmatprep.mubr.f32.mxu0 %v4810
  %4880 = vmatmul.mubr.f32.gmra.mrb[0].mxu0 %v4805
  %v4881 = vpop.f32.mrb[0].mxu0
  %v4882 = vadd.f32 0.0, %v4881
  %v4883 = vpop.f32.mrb[0].mxu0
  %4884 = vmatprep.mubr.f32.mxu0 %v4813
  %4885 = vmatmul.mubr.f32.gmra.mrb[0].mxu0 %v4807
  %v4886 = vpop.f32.mrb[0].mxu0
  %v4887 = vadd.f32 0.0, %v4886
  %v4888 = vpop.f32.mrb[0].mxu0
  %4889 = vdwg.mxu0
  %s4890 = scalar_lea.vmem %s2, 352
  %4891 = vst [vmem:[%s4890] sm:$0xff] %v4882
  %4892 = vst [vmem:[%s4890 + $0x8] sm:$0xff] %v4887
  %s4893 = scalar_lea.vmem %s1, 736
  %v4894 = vld [vmem:[%s4893] sm:$0xff]
  %v4895 = vld [vmem:[%s4893 + $0x10] sm:$0xff]
  %v4896 = vld [vmem:[%s4893 + $0x8] sm:$0xff]
  %v4897 = vld [vmem:[%s4893 + $0x18] sm:$0xff]
  %4902 = vrot.lane.b32.xlu0 %v4894, 127
  %v4903 = vpop.permute.xlu0 %4902
  %4904 = vrot.lane.b32.xlu0 %v4896, 127
  %v4905 = vpop.permute.xlu0 %4904
  %4906 = vrot.lane.b32.xlu0 %v4895, 127
  %v4907 = vpop.permute.xlu0 %4906
  %4908 = vrot.lane.b32.xlu0 %v4897, 127
  %v4909 = vpop.permute.xlu0 %4908
  %v4910 = vsel %vm27, %v4903, %v4905
  %v4911 = vsel %vm27, %v4907, %v4909
  %4914 = vrot.lane.b32.xlu0 %v4894, 126
  %v4915 = vpop.permute.xlu0 %4914
  %4916 = vrot.lane.b32.xlu0 %v4896, 126
  %v4917 = vpop.permute.xlu0 %4916
  %4918 = vrot.lane.b32.xlu0 %v4895, 126
  %v4919 = vpop.permute.xlu0 %4918
  %4920 = vrot.lane.b32.xlu0 %v4897, 126
  %v4921 = vpop.permute.xlu0 %4920
  %v4922 = vsel %vm40, %v4915, %v4917
  %v4923 = vsel %vm40, %v4919, %v4921
  %4926 = vrot.lane.b32.xlu0 %v4894, 119
  %v4927 = vpop.permute.xlu0 %4926
  %4928 = vrot.lane.b32.xlu0 %v4896, 119
  %v4929 = vpop.permute.xlu0 %4928
  %4930 = vrot.lane.b32.xlu0 %v4895, 119
  %v4931 = vpop.permute.xlu0 %4930
  %4932 = vrot.lane.b32.xlu0 %v4897, 119
  %v4933 = vpop.permute.xlu0 %4932
  %v4934 = vsel %vm53, %v4927, %v4929
  %v4935 = vsel %vm53, %v4931, %v4933
  %4938 = vrot.lane.b32.xlu0 %v4894, 118
  %v4939 = vpop.permute.xlu0 %4938
  %4940 = vrot.lane.b32.xlu0 %v4896, 118
  %v4941 = vpop.permute.xlu0 %4940
  %4942 = vrot.lane.b32.xlu0 %v4895, 118
  %v4943 = vpop.permute.xlu0 %4942
  %4944 = vrot.lane.b32.xlu0 %v4897, 118
  %v4945 = vpop.permute.xlu0 %4944
  %v4946 = vsel %vm66, %v4939, %v4941
  %v4947 = vsel %vm66, %v4943, %v4945
  %4950 = vrot.lane.b32.xlu0 %v4894, 117
  %v4951 = vpop.permute.xlu0 %4950
  %4952 = vrot.lane.b32.xlu0 %v4896, 117
  %v4953 = vpop.permute.xlu0 %4952
  %4954 = vrot.lane.b32.xlu0 %v4895, 117
  %v4955 = vpop.permute.xlu0 %4954
  %4956 = vrot.lane.b32.xlu0 %v4897, 117
  %v4957 = vpop.permute.xlu0 %4956
  %v4958 = vsel %vm79, %v4951, %v4953
  %v4959 = vsel %vm79, %v4955, %v4957
  %4962 = vrot.lane.b32.xlu0 %v4894, 110
  %v4963 = vpop.permute.xlu0 %4962
  %4964 = vrot.lane.b32.xlu0 %v4896, 110
  %v4965 = vpop.permute.xlu0 %4964
  %4966 = vrot.lane.b32.xlu0 %v4895, 110
  %v4967 = vpop.permute.xlu0 %4966
  %4968 = vrot.lane.b32.xlu0 %v4897, 110
  %v4969 = vpop.permute.xlu0 %4968
  %v4970 = vsel %vm92, %v4963, %v4965
  %v4971 = vsel %vm92, %v4967, %v4969
  %4974 = vrot.lane.b32.xlu0 %v4894, 109
  %v4975 = vpop.permute.xlu0 %4974
  %4976 = vrot.lane.b32.xlu0 %v4896, 109
  %v4977 = vpop.permute.xlu0 %4976
  %4978 = vrot.lane.b32.xlu0 %v4895, 109
  %v4979 = vpop.permute.xlu0 %4978
  %4980 = vrot.lane.b32.xlu0 %v4897, 109
  %v4981 = vpop.permute.xlu0 %4980
  %v4982 = vsel %vm105, %v4975, %v4977
  %v4983 = vsel %vm105, %v4979, %v4981
  %4986 = vrot.lane.b32.xlu0 %v4894, 108
  %v4987 = vpop.permute.xlu0 %4986
  %4988 = vrot.lane.b32.xlu0 %v4896, 108
  %v4989 = vpop.permute.xlu0 %4988
  %4990 = vrot.lane.b32.xlu0 %v4895, 108
  %v4991 = vpop.permute.xlu0 %4990
  %4992 = vrot.lane.b32.xlu0 %v4897, 108
  %v4993 = vpop.permute.xlu0 %4992
  %v4994 = vsel %vm118, %v4987, %v4989
  %v4995 = vsel %vm118, %v4991, %v4993
  %v4998 = vmax.f32 %v4894, 0.0
  %v4999 = vmax.f32 %v4895, 0.0
  %v5000 = vmax.f32 %v4910, 0.0
  %v5001 = vmax.f32 %v4911, 0.0
  %v5002 = vmax.f32 %v4922, 0.0
  %v5003 = vmax.f32 %v4923, 0.0
  %v5004 = vmax.f32 %v4934, 0.0
  %v5005 = vmax.f32 %v4935, 0.0
  %v5006 = vmax.f32 %v4946, 0.0
  %v5007 = vmax.f32 %v4947, 0.0
  %v5008 = vmax.f32 %v4958, 0.0
  %v5009 = vmax.f32 %v4959, 0.0
  %v5010 = vmax.f32 %v4970, 0.0
  %v5011 = vmax.f32 %v4971, 0.0
  %v5012 = vmax.f32 %v4982, 0.0
  %v5013 = vmax.f32 %v4983, 0.0
  %v5014 = vmax.f32 %v4994, 0.0
  %v5015 = vmax.f32 %v4995, 0.0
  %s5016 = scalar_lea.vmem %s0, 736
  %v5017 = vld [vmem:[%s5016] sm:$0xff]
  %v5018 = vld [vmem:[%s5016 + $0x8] sm:$0xff]
  %v5019 = vld [vmem:[%s5016 + $0x10] sm:$0xff]
  %v5020 = vld [vmem:[%s5016 + $0x18] sm:$0xff]
  %v5022 = vsel %vm145, %v5018, 0
  %v5025 = vsel %vm145, %v5020, 0
  %5027 = vmatprep.subr.mxu0 0.0
  %5028 = vmatpush1.msra.mxu0 %v4998
  %5029 = vmatprep.subr.mxu0 0.0
  %5030 = vmatpush1.msra.mxu0 %v4999
  %5031 = vmatprep.subr.mxu0 0.0
  %5032 = vmatpush1.msra.mxu0 %v5000
  %5033 = vmatprep.subr.mxu0 0.0
  %5034 = vmatpush1.msra.mxu0 %v5001
  %5035 = vmatprep.subr.mxu0 0.0
  %5036 = vmatpush1.msra.mxu0 %v5002
  %5037 = vmatprep.subr.mxu0 0.0
  %5038 = vmatpush1.msra.mxu0 %v5003
  %5039 = vmatprep.subr.mxu0 0.0
  %5040 = vmatpush1.msra.mxu0 %v5004
  %5041 = vmatprep.subr.mxu0 0.0
  %5042 = vmatpush1.msra.mxu0 %v5005
  %5043 = vmatprep.subr.mxu0 0.0
  %5044 = vmatpush1.msra.mxu0 %v5006
  %5045 = vmatprep.subr.mxu0 0.0
  %5046 = vmatpush1.msra.mxu0 %v5007
  %5047 = vmatprep.subr.mxu0 0.0
  %5048 = vmatpush1.msra.mxu0 %v5008
  %5049 = vmatprep.subr.mxu0 0.0
  %5050 = vmatpush1.msra.mxu0 %v5009
  %5051 = vmatprep.subr.mxu0 0.0
  %5052 = vmatpush1.msra.mxu0 %v5010
  %5053 = vmatprep.subr.mxu0 0.0
  %5054 = vmatpush1.msra.mxu0 %v5011
  %5055 = vmatprep.subr.mxu0 0.0
  %5056 = vmatpush1.msra.mxu0 %v5012
  %5057 = vmatprep.subr.mxu0 0.0
  %5058 = vmatpush1.msra.mxu0 %v5013
  %5059 = vmatprep.subr.mxu0 0.0
  %5060 = vmatpush1.msra.mxu0 %v5014
  %5061 = vmatprep.subr.mxu0 0.0
  %5062 = vmatpush1.msra.mxu0 %v5015
  %5063 = vmatprep.subr.mxu0 0.0
  %5064 = vmatpush1.msra.mxu0 0.0
  %5065 = vmatprep.subr.mxu0 0.0
  %5066 = vmatpush1.msra.mxu0 0.0
  %5067 = vmatprep.subr.mxu0 0.0
  %5068 = vmatpush1.msra.mxu0 0.0
  %5069 = vmatprep.subr.mxu0 0.0
  %5070 = vmatpush1.msra.mxu0 0.0
  %5071 = vmatprep.subr.mxu0 0.0
  %5072 = vmatpush1.msra.mxu0 0.0
  %5073 = vmatprep.subr.mxu0 0.0
  %5074 = vmatpush1.msra.mxu0 0.0
  %5075 = vmatprep.subr.mxu0 0.0
  %5076 = vmatpush1.msra.mxu0 0.0
  %5077 = vmatprep.subr.mxu0 0.0
  %5078 = vmatpush1.msra.mxu0 0.0
  %5079 = vmatprep.subr.mxu0 0.0
  %5080 = vmatpush1.msra.mxu0 0.0
  %5081 = vmatprep.subr.mxu0 0.0
  %5082 = vmatpush1.msra.mxu0 0.0
  %5083 = vmatprep.subr.mxu0 0.0
  %5084 = vmatpush1.msra.mxu0 0.0
  %5085 = vmatprep.subr.mxu0 0.0
  %5086 = vmatpush1.msra.mxu0 0.0
  %5087 = vmatprep.subr.mxu0 0.0
  %5088 = vmatpush1.msra.mxu0 0.0
  %5089 = vmatprep.subr.mxu0 0.0
  %5090 = vmatpush1.msra.mxu0 0.0
  %5091 = vmatprep.mubr.f32.mxu0 %v5022
  %5092 = vmatmul.mubr.f32.gmra.mrb[0].mxu0 %v5017
  %v5093 = vpop.f32.mrb[0].mxu0
  %v5094 = vadd.f32 0.0, %v5093
  %v5095 = vpop.f32.mrb[0].mxu0
  %5096 = vmatprep.mubr.f32.mxu0 %v5025
  %5097 = vmatmul.mubr.f32.gmra.mrb[0].mxu0 %v5019
  %v5098 = vpop.f32.mrb[0].mxu0
  %v5099 = vadd.f32 0.0, %v5098
  %v5100 = vpop.f32.mrb[0].mxu0
  %5101 = vdwg.mxu0
  %s5102 = scalar_lea.vmem %s2, 368
  %5103 = vst [vmem:[%s5102] sm:$0xff] %v5094
  %5104 = vst [vmem:[%s5102 + $0x8] sm:$0xff] %v5099
  %s5105 = scalar_lea.vmem %s1, 768
  %v5106 = vld [vmem:[%s5105] sm:$0xff]
  %v5107 = vld [vmem:[%s5105 + $0x10] sm:$0xff]
  %v5108 = vld [vmem:[%s5105 + $0x8] sm:$0xff]
  %v5109 = vld [vmem:[%s5105 + $0x18] sm:$0xff]
  %5114 = vrot.lane.b32.xlu0 %v5106, 127
  %v5115 = vpop.permute.xlu0 %5114
  %5116 = vrot.lane.b32.xlu0 %v5108, 127
  %v5117 = vpop.permute.xlu0 %5116
  %5118 = vrot.lane.b32.xlu0 %v5107, 127
  %v5119 = vpop.permute.xlu0 %5118
  %5120 = vrot.lane.b32.xlu0 %v5109, 127
  %v5121 = vpop.permute.xlu0 %5120
  %v5122 = vsel %vm27, %v5115, %v5117
  %v5123 = vsel %vm27, %v5119, %v5121
  %5126 = vrot.lane.b32.xlu0 %v5106, 126
  %v5127 = vpop.permute.xlu0 %5126
  %5128 = vrot.lane.b32.xlu0 %v5108, 126
  %v5129 = vpop.permute.xlu0 %5128
  %5130 = vrot.lane.b32.xlu0 %v5107, 126
  %v5131 = vpop.permute.xlu0 %5130
  %5132 = vrot.lane.b32.xlu0 %v5109, 126
  %v5133 = vpop.permute.xlu0 %5132
  %v5134 = vsel %vm40, %v5127, %v5129
  %v5135 = vsel %vm40, %v5131, %v5133
  %5138 = vrot.lane.b32.xlu0 %v5106, 119
  %v5139 = vpop.permute.xlu0 %5138
  %5140 = vrot.lane.b32.xlu0 %v5108, 119
  %v5141 = vpop.permute.xlu0 %5140
  %5142 = vrot.lane.b32.xlu0 %v5107, 119
  %v5143 = vpop.permute.xlu0 %5142
  %5144 = vrot.lane.b32.xlu0 %v5109, 119
  %v5145 = vpop.permute.xlu0 %5144
  %v5146 = vsel %vm53, %v5139, %v5141
  %v5147 = vsel %vm53, %v5143, %v5145
  %5150 = vrot.lane.b32.xlu0 %v5106, 118
  %v5151 = vpop.permute.xlu0 %5150
  %5152 = vrot.lane.b32.xlu0 %v5108, 118
  %v5153 = vpop.permute.xlu0 %5152
  %5154 = vrot.lane.b32.xlu0 %v5107, 118
  %v5155 = vpop.permute.xlu0 %5154
  %5156 = vrot.lane.b32.xlu0 %v5109, 118
  %v5157 = vpop.permute.xlu0 %5156
  %v5158 = vsel %vm66, %v5151, %v5153
  %v5159 = vsel %vm66, %v5155, %v5157
  %5162 = vrot.lane.b32.xlu0 %v5106, 117
  %v5163 = vpop.permute.xlu0 %5162
  %5164 = vrot.lane.b32.xlu0 %v5108, 117
  %v5165 = vpop.permute.xlu0 %5164
  %5166 = vrot.lane.b32.xlu0 %v5107, 117
  %v5167 = vpop.permute.xlu0 %5166
  %5168 = vrot.lane.b32.xlu0 %v5109, 117
  %v5169 = vpop.permute.xlu0 %5168
  %v5170 = vsel %vm79, %v5163, %v5165
  %v5171 = vsel %vm79, %v5167, %v5169
  %5174 = vrot.lane.b32.xlu0 %v5106, 110
  %v5175 = vpop.permute.xlu0 %5174
  %5176 = vrot.lane.b32.xlu0 %v5108, 110
  %v5177 = vpop.permute.xlu0 %5176
  %5178 = vrot.lane.b32.xlu0 %v5107, 110
  %v5179 = vpop.permute.xlu0 %5178
  %5180 = vrot.lane.b32.xlu0 %v5109, 110
  %v5181 = vpop.permute.xlu0 %5180
  %v5182 = vsel %vm92, %v5175, %v5177
  %v5183 = vsel %vm92, %v5179, %v5181
  %5186 = vrot.lane.b32.xlu0 %v5106, 109
  %v5187 = vpop.permute.xlu0 %5186
  %5188 = vrot.lane.b32.xlu0 %v5108, 109
  %v5189 = vpop.permute.xlu0 %5188
  %5190 = vrot.lane.b32.xlu0 %v5107, 109
  %v5191 = vpop.permute.xlu0 %5190
  %5192 = vrot.lane.b32.xlu0 %v5109, 109
  %v5193 = vpop.permute.xlu0 %5192
  %v5194 = vsel %vm105, %v5187, %v5189
  %v5195 = vsel %vm105, %v5191, %v5193
  %5198 = vrot.lane.b32.xlu0 %v5106, 108
  %v5199 = vpop.permute.xlu0 %5198
  %5200 = vrot.lane.b32.xlu0 %v5108, 108
  %v5201 = vpop.permute.xlu0 %5200
  %5202 = vrot.lane.b32.xlu0 %v5107, 108
  %v5203 = vpop.permute.xlu0 %5202
  %5204 = vrot.lane.b32.xlu0 %v5109, 108
  %v5205 = vpop.permute.xlu0 %5204
  %v5206 = vsel %vm118, %v5199, %v5201
  %v5207 = vsel %vm118, %v5203, %v5205
  %v5210 = vmax.f32 %v5106, 0.0
  %v5211 = vmax.f32 %v5107, 0.0
  %v5212 = vmax.f32 %v5122, 0.0
  %v5213 = vmax.f32 %v5123, 0.0
  %v5214 = vmax.f32 %v5134, 0.0
  %v5215 = vmax.f32 %v5135, 0.0
  %v5216 = vmax.f32 %v5146, 0.0
  %v5217 = vmax.f32 %v5147, 0.0
  %v5218 = vmax.f32 %v5158, 0.0
  %v5219 = vmax.f32 %v5159, 0.0
  %v5220 = vmax.f32 %v5170, 0.0
  %v5221 = vmax.f32 %v5171, 0.0
  %v5222 = vmax.f32 %v5182, 0.0
  %v5223 = vmax.f32 %v5183, 0.0
  %v5224 = vmax.f32 %v5194, 0.0
  %v5225 = vmax.f32 %v5195, 0.0
  %v5226 = vmax.f32 %v5206, 0.0
  %v5227 = vmax.f32 %v5207, 0.0
  %s5228 = scalar_lea.vmem %s0, 768
  %v5229 = vld [vmem:[%s5228] sm:$0xff]
  %v5230 = vld [vmem:[%s5228 + $0x8] sm:$0xff]
  %v5231 = vld [vmem:[%s5228 + $0x10] sm:$0xff]
  %v5232 = vld [vmem:[%s5228 + $0x18] sm:$0xff]
  %v5234 = vsel %vm145, %v5230, 0
  %v5237 = vsel %vm145, %v5232, 0
  %5239 = vmatprep.subr.mxu0 0.0
  %5240 = vmatpush1.msra.mxu0 %v5210
  %5241 = vmatprep.subr.mxu0 0.0
  %5242 = vmatpush1.msra.mxu0 %v5211
  %5243 = vmatprep.subr.mxu0 0.0
  %5244 = vmatpush1.msra.mxu0 %v5212
  %5245 = vmatprep.subr.mxu0 0.0
  %5246 = vmatpush1.msra.mxu0 %v5213
  %5247 = vmatprep.subr.mxu0 0.0
  %5248 = vmatpush1.msra.mxu0 %v5214
  %5249 = vmatprep.subr.mxu0 0.0
  %5250 = vmatpush1.msra.mxu0 %v5215
  %5251 = vmatprep.subr.mxu0 0.0
  %5252 = vmatpush1.msra.mxu0 %v5216
  %5253 = vmatprep.subr.mxu0 0.0
  %5254 = vmatpush1.msra.mxu0 %v5217
  %5255 = vmatprep.subr.mxu0 0.0
  %5256 = vmatpush1.msra.mxu0 %v5218
  %5257 = vmatprep.subr.mxu0 0.0
  %5258 = vmatpush1.msra.mxu0 %v5219
  %5259 = vmatprep.subr.mxu0 0.0
  %5260 = vmatpush1.msra.mxu0 %v5220
  %5261 = vmatprep.subr.mxu0 0.0
  %5262 = vmatpush1.msra.mxu0 %v5221
  %5263 = vmatprep.subr.mxu0 0.0
  %5264 = vmatpush1.msra.mxu0 %v5222
  %5265 = vmatprep.subr.mxu0 0.0
  %5266 = vmatpush1.msra.mxu0 %v5223
  %5267 = vmatprep.subr.mxu0 0.0
  %5268 = vmatpush1.msra.mxu0 %v5224
  %5269 = vmatprep.subr.mxu0 0.0
  %5270 = vmatpush1.msra.mxu0 %v5225
  %5271 = vmatprep.subr.mxu0 0.0
  %5272 = vmatpush1.msra.mxu0 %v5226
  %5273 = vmatprep.subr.mxu0 0.0
  %5274 = vmatpush1.msra.mxu0 %v5227
  %5275 = vmatprep.subr.mxu0 0.0
  %5276 = vmatpush1.msra.mxu0 0.0
  %5277 = vmatprep.subr.mxu0 0.0
  %5278 = vmatpush1.msra.mxu0 0.0
  %5279 = vmatprep.subr.mxu0 0.0
  %5280 = vmatpush1.msra.mxu0 0.0
  %5281 = vmatprep.subr.mxu0 0.0
  %5282 = vmatpush1.msra.mxu0 0.0
  %5283 = vmatprep.subr.mxu0 0.0
  %5284 = vmatpush1.msra.mxu0 0.0
  %5285 = vmatprep.subr.mxu0 0.0
  %5286 = vmatpush1.msra.mxu0 0.0
  %5287 = vmatprep.subr.mxu0 0.0
  %5288 = vmatpush1.msra.mxu0 0.0
  %5289 = vmatprep.subr.mxu0 0.0
  %5290 = vmatpush1.msra.mxu0 0.0
  %5291 = vmatprep.subr.mxu0 0.0
  %5292 = vmatpush1.msra.mxu0 0.0
  %5293 = vmatprep.subr.mxu0 0.0
  %5294 = vmatpush1.msra.mxu0 0.0
  %5295 = vmatprep.subr.mxu0 0.0
  %5296 = vmatpush1.msra.mxu0 0.0
  %5297 = vmatprep.subr.mxu0 0.0
  %5298 = vmatpush1.msra.mxu0 0.0
  %5299 = vmatprep.subr.mxu0 0.0
  %5300 = vmatpush1.msra.mxu0 0.0
  %5301 = vmatprep.subr.mxu0 0.0
  %5302 = vmatpush1.msra.mxu0 0.0
  %5303 = vmatprep.mubr.f32.mxu0 %v5234
  %5304 = vmatmul.mubr.f32.gmra.mrb[0].mxu0 %v5229
  %v5305 = vpop.f32.mrb[0].mxu0
  %v5306 = vadd.f32 0.0, %v5305
  %v5307 = vpop.f32.mrb[0].mxu0
  %5308 = vmatprep.mubr.f32.mxu0 %v5237
  %5309 = vmatmul.mubr.f32.gmra.mrb[0].mxu0 %v5231
  %v5310 = vpop.f32.mrb[0].mxu0
  %v5311 = vadd.f32 0.0, %v5310
  %v5312 = vpop.f32.mrb[0].mxu0
  %5313 = vdwg.mxu0
  %s5314 = scalar_lea.vmem %s2, 384
  %5315 = vst [vmem:[%s5314] sm:$0xff] %v5306
  %5316 = vst [vmem:[%s5314 + $0x8] sm:$0xff] %v5311
  // Predicated region
  $region10: #{relu_grouped_conv.1} parent=0 // pred_check
    _
  $region11: #{relu_grouped_conv.1} parent=0 // pred_check_branch
    %5318 = sbr.rel (0) target = $region13
  $region12: #{relu_grouped_conv.1} parent=0 // pred_region
    _
  $region13: #{relu_grouped_conv.1} parent=0 // pred_fallthru
    _
  // Predicated region
  $region14: #{relu_grouped_conv.1} parent=0 // pred_check
    _
  $region15: #{relu_grouped_conv.1} parent=0 // pred_check_branch
    %5320 = sbr.rel (0) target = $region17
  $region16: #{relu_grouped_conv.1} parent=0 // pred_region
    _
  $region17: #{relu_grouped_conv.1} parent=0 // pred_fallthru
    _

</llo_original>
